<compile_context>
chip_gen: v5e
topology: v5e:2x2
jax: 0.10.0
libtpu: 0.0.40
codegen_flags: <defaults>
</compile_context>

<pallas_src>
import math

import jax
import jax.numpy as jnp
from jax.experimental import pallas as pl
from jax.experimental.pallas import tpu as pltpu


def _round_up(x, m):
    return -(-x // m) * m


# ---------------------------------------------------------------- matmul ----
def _mm_kernel(a_ref, b_ref, o_ref):
    o_ref[...] = jnp.dot(a_ref[...], b_ref[...],
                         preferred_element_type=jnp.float32)


def pallas_matmul(a, b_pad, n_true):
    """(M, K) f32 activations @ pre-padded bf16 weight (Kp, Np) -> (M, n_true) f32.

    bf16 operands feed the MXU with f32 accumulation.  A is zero-padded only
    when (M, K) is not already aligned (only the tiny first layer needs it).
    """
    M, K = a.shape
    Kp, Np = b_pad.shape
    Mp = _round_up(max(M, 16), 16)               # bf16 sublane tile = 16
    if Mp == M and Kp == K:
        a_p = a.astype(jnp.bfloat16)
    else:
        a_p = jnp.zeros((Mp, Kp), jnp.bfloat16).at[:M, :K].set(
            a.astype(jnp.bfloat16))
    tn = next(t for t in (1024, 512, 256, 128) if Np % t == 0)
    out = pl.pallas_call(
        _mm_kernel,
        out_shape=jax.ShapeDtypeStruct((Mp, Np), jnp.float32),
        grid=(Np // tn,),
        in_specs=[pl.BlockSpec((Mp, Kp), lambda j: (0, 0)),   # A resident
                  pl.BlockSpec((Kp, tn), lambda j: (0, j))],
        out_specs=pl.BlockSpec((Mp, tn), lambda j: (0, j)),
        compiler_params=pltpu.CompilerParams(
            dimension_semantics=("parallel",)),
    )(a_p, b_pad)
    return out[:M, :n_true]


# -------------------------------------------------- ConvTranspose2d (NHWC) --
def conv_transpose2d_nhwc(x, w_pad, stride, padding, k, cout):
    """x: (N, Hin, Win, Cin) NHWC; w_pad: pre-packed bf16 (Kp, k*k*Cout padded)."""
    N, Hin, Win, Cin = x.shape
    Hout = (Hin - 1) * stride - 2 * padding + k
    Wout = (Win - 1) * stride - 2 * padding + k
    m = pallas_matmul(x.reshape(N * Hin * Win, Cin), w_pad, k * k * cout)
    m = m.reshape(N, Hin, Win, k, k, cout)

    if Hin == 1 and Win == 1 and stride == 1 and padding == 0:
        return m.reshape(N, k, k, cout)            # first layer: pure reshape

    if stride == 2 and k == 4:
        # Parity-grouped col2im: for each output parity (py, px), the 4
        # contributing taps accumulate into a dense (Hin+1, Win+1) buffer;
        # the 4 buffers are interleaved back with a stack+reshape.
        groups = []
        for py in range(2):
            row = []
            for px in range(2):
                buf = (
                    jnp.pad(m[:, :, :, py,     px,     :], ((0, 0), (0, 1), (0, 1), (0, 0)))
                  + jnp.pad(m[:, :, :, py + 2, px,     :], ((0, 0), (1, 0), (0, 1), (0, 0)))
                  + jnp.pad(m[:, :, :, py,     px + 2, :], ((0, 0), (0, 1), (1, 0), (0, 0)))
                  + jnp.pad(m[:, :, :, py + 2, px + 2, :], ((0, 0), (1, 0), (1, 0), (0, 0))))
                row.append(buf)
            groups.append(jnp.stack(row, axis=3))   # (N, Hin+1, Win+1, 2, C)
        full = jnp.stack(groups, axis=2)            # (N, Hin+1, 2, Win+1, 2, C)
        out = full.reshape(N, 2 * Hin + 2, 2 * Win + 2, cout)
        return out[:, padding:padding + Hout, padding:padding + Wout, :]

    # General fallback (unused for this model): strided scatter-add col2im.
    out = jnp.zeros((N, Hout + 2 * padding, Wout + 2 * padding, cout),
                    jnp.float32)
    hi = (Hin - 1) * stride + 1
    wi = (Win - 1) * stride + 1
    for ky in range(k):
        for kx in range(k):
            out = out.at[:, ky:ky + hi:stride, kx:kx + wi:stride, :].add(
                m[:, :, :, ky, kx, :])
    return out[:, padding:padding + Hout, padding:padding + Wout, :]


# -------------------------------------------- BatchNorm2d (train) + LeakyReLU
def _bn_lrelu_kernel(x_ref, g_ref, b_ref, o_ref):
    x = x_ref[...]                                           # (P, tc) lane-dense
    mean = jnp.mean(x, axis=0, keepdims=True)
    var = jnp.mean(jnp.square(x - mean), axis=0, keepdims=True)   # biased var
    y = (x - mean) * jax.lax.rsqrt(var + 1e-5) * g_ref[...] + b_ref[...]
    o_ref[...] = jnp.where(y >= 0, y, 0.01 * y)              # LeakyReLU(0.01)


def bn_leaky_relu_nhwc(x, gamma, beta):
    # TODO(synk): running-mean/var buffer updates (training side effect) not modeled.
    N, H, W, C = x.shape
    P = N * H * W
    x2 = x.reshape(P, C)
    tc = 256 if C % 256 == 0 else C
    out = pl.pallas_call(
        _bn_lrelu_kernel,
        out_shape=jax.ShapeDtypeStruct((P, C), jnp.float32),
        grid=(C // tc,),
        in_specs=[pl.BlockSpec((P, tc), lambda j: (0, j)),
                  pl.BlockSpec((1, tc), lambda j: (0, j)),
                  pl.BlockSpec((1, tc), lambda j: (0, j))],
        out_specs=pl.BlockSpec((P, tc), lambda j: (0, j)),
        compiler_params=pltpu.CompilerParams(
            dimension_semantics=("parallel",)),
    )(x2, gamma.reshape(1, C), beta.reshape(1, C))
    return out.reshape(N, H, W, C)


# ---------------------------------------------------------- bias + Tanh -----
def _bias_tanh_kernel(x_ref, b_ref, o_ref):
    o_ref[...] = jnp.tanh(x_ref[...] + b_ref[...])


def bias_tanh_nhwc(x, bias):
    N, H, W, C = x.shape
    P = N * H * W
    x2 = x.reshape(P, C)
    tp = 512 if P % 512 == 0 else P
    out = pl.pallas_call(
        _bias_tanh_kernel,
        out_shape=jax.ShapeDtypeStruct((P, C), jnp.float32),
        grid=(P // tp,),
        in_specs=[pl.BlockSpec((tp, C), lambda i: (i, 0)),
                  pl.BlockSpec((1, C), lambda i: (0, 0))],
        out_specs=pl.BlockSpec((tp, C), lambda i: (i, 0)),
        compiler_params=pltpu.CompilerParams(
            dimension_semantics=("parallel",)),
    )(x2, bias.reshape(1, C))
    return out.reshape(N, H, W, C)


# ---------------------------------------------------------- Generator -------
def _prep_weight(w):
    """PyTorch (Cin, Cout, k, k) -> packed (Cin_pad, k*k*Cout_pad) bf16, static."""
    cin, cout, k, _ = w.shape
    wm = jnp.transpose(w, (0, 2, 3, 1)).reshape(cin, k * k * cout)
    kp = _round_up(cin, 128)
    np_ = _round_up(k * k * cout, 128)
    if (kp, np_) != (cin, k * k * cout):
        wm = jnp.zeros((kp, np_), jnp.float32).at[:cin, :k * k * cout].set(wm)
    return wm.astype(jnp.bfloat16)


def init_generator_params(key, image_size):
    """Deterministic synthetic init; shapes exactly as the PyTorch module."""
    log2_sz = int(math.log2(image_size))
    params, config = [], []
    # layer 0: ConvTranspose2d(100, 1024, 4, 1, 0, bias=False) + BN + LeakyReLU
    key, k0 = jax.random.split(key)
    w = 0.02 * jax.random.normal(k0, (100, 1024, 4, 4), jnp.float32)
    params.append(dict(w=_prep_weight(w),
                       gamma=jnp.ones((1024,), jnp.float32),
                       beta=jnp.zeros((1024,), jnp.float32)))
    config.append(("bn_lrelu", 1, 0, 4, 1024))
    # middle layers: ConvTranspose2d(2^(10-i), 2^(9-i), 4, 2, 1) + BN + LeakyReLU
    for i in range(log2_sz - 3):
        cin, cout = 2 ** (10 - i), 2 ** (9 - i)
        key, kk = jax.random.split(key)
        w = 0.02 * jax.random.normal(kk, (cin, cout, 4, 4), jnp.float32)
        params.append(dict(w=_prep_weight(w),
                           gamma=jnp.ones((cout,), jnp.float32),
                           beta=jnp.zeros((cout,), jnp.float32)))
        config.append(("bn_lrelu", 2, 1, 4, cout))
    # final layer: ConvTranspose2d(2^(10-log2+3), 3, 4, 2, 1) (bias) + Tanh
    cin = 2 ** (10 - log2_sz + 3)
    key, k1, k2 = jax.random.split(key, 3)
    w = 0.02 * jax.random.normal(k1, (cin, 3, 4, 4), jnp.float32)
    params.append(dict(w=_prep_weight(w),
                       b=0.02 * jax.random.normal(k2, (3,), jnp.float32)))
    config.append(("tanh", 2, 1, 4, 3))
    return params, tuple(config)


def generator_forward(params, z, config):
    x = jnp.transpose(z, (0, 2, 3, 1)).astype(jnp.float32)   # NCHW -> NHWC once
    for p, (kind, stride, padding, k, cout) in zip(params, config):
        x = conv_transpose2d_nhwc(x, p["w"], stride, padding, k, cout)
        if kind == "bn_lrelu":
            x = bn_leaky_relu_nhwc(x, p["gamma"], p["beta"])
        else:
            x = bias_tanh_nhwc(x, p["b"])
    return jnp.transpose(x, (0, 3, 1, 2))                     # NHWC -> NCHW


if __name__ == "__main__":
    image_size = 16                       # Generator(image_size=16)
    key = jax.random.PRNGKey(0)
    key, kz = jax.random.split(key)
    z = jax.random.normal(kz, (2, 100, 1, 1), jnp.float32)    # NCHW latent
    params, config = init_generator_params(key, image_size)
    fwd = jax.jit(generator_forward, static_argnums=(2,))
    out = jax.block_until_ready(fwd(params, z, config))
    assert out.shape == (2, 3, image_size, image_size), out.shape
    assert bool(jnp.all(jnp.isfinite(out)))
    print("KERNEL_OK")
</pallas_src>

<mosaic_0001>
module attributes {stable_mosaic.version = 11 : i64} {
  func.func @_mm_kernel(%arg0: i32, %arg1: memref<16x128xbf16, #tpu.memory_space<vmem>>, %arg2: memref<128x1024xbf16, #tpu.memory_space<vmem>>, %arg3: memref<16x1024xf32, #tpu.memory_space<vmem>>) attributes {dimension_semantics = [#tpu.dimension_semantics<parallel>], iteration_bounds = array<i64: 16>, scalar_prefetch = 0 : i64, scratch_operands = 0 : i64, tpu.core_type = #tpu.core_type<tc>, window_params = [{pipeline_mode = #tpu.pipeline_mode<synchronous>, transform_indices = @transform_0, window_bounds = array<i64: 16, 128>}, {transform_indices = @transform_1, window_bounds = array<i64: 128, 1024>}, {transform_indices = @transform_2, window_bounds = array<i64: 16, 1024>}]} {
    %c0 = arith.constant 0 : index
    %c0_0 = arith.constant 0 : index
    %0 = vector.load %arg1[%c0, %c0_0] : memref<16x128xbf16, #tpu.memory_space<vmem>>, vector<16x128xbf16>
    %c0_1 = arith.constant 0 : index
    %c0_2 = arith.constant 0 : index
    %1 = vector.load %arg2[%c0_1, %c0_2] : memref<128x1024xbf16, #tpu.memory_space<vmem>>, vector<128x1024xbf16>
    %cst = arith.constant dense<0.000000e+00> : vector<16x1024xf32>
    %2 = tpu.matmul %0, %1, %cst {dimension_numbers = #tpu.dot_dimension_numbers<[1], [0], [0], [1], [0, 0, 1, 1], [], []>} : vector<16x128xbf16>, vector<128x1024xbf16>, vector<16x1024xf32> -> vector<16x1024xf32>
    %c0_3 = arith.constant 0 : index
    %c0_4 = arith.constant 0 : index
    %3 = vector.load %arg3[%c0_3, %c0_4] : memref<16x1024xf32, #tpu.memory_space<vmem>>, vector<16x1024xf32>
    tpu.vector_store %arg3[%c0_3, %c0_4], %2 {strides = array<i32>} : memref<16x1024xf32, #tpu.memory_space<vmem>>, vector<16x1024xf32>,
    return
  }
  func.func @transform_0(%arg0: i32) -> (i32, i32) {
    %c0_i32 = arith.constant 0 : i32
    %c0_i32_0 = arith.constant 0 : i32
    %c0_i32_1 = arith.constant 0 : i32
    return %c0_i32, %c0_i32_0 : i32, i32
  }
  func.func @transform_1(%arg0: i32) -> (i32, i32) {
    %c0_i32 = arith.constant 0 : i32
    %c0_i32_0 = arith.constant 0 : i32
    return %c0_i32, %arg0 : i32, i32
  }
  func.func @transform_2(%arg0: i32) -> (i32, i32) {
    %c0_i32 = arith.constant 0 : i32
    %c0_i32_0 = arith.constant 0 : i32
    return %c0_i32, %arg0 : i32, i32
  }
}

module attributes {stable_mosaic.version = 11 : i64} {
  func.func @_mm_kernel(%arg0: i32, %arg1: memref<32x1024xbf16, #tpu.memory_space<vmem>>, %arg2: memref<1024x1024xbf16, #tpu.memory_space<vmem>>, %arg3: memref<32x1024xf32, #tpu.memory_space<vmem>>) attributes {dimension_semantics = [#tpu.dimension_semantics<parallel>], iteration_bounds = array<i64: 8>, scalar_prefetch = 0 : i64, scratch_operands = 0 : i64, tpu.core_type = #tpu.core_type<tc>, window_params = [{pipeline_mode = #tpu.pipeline_mode<synchronous>, transform_indices = @transform_0, window_bounds = array<i64: 32, 1024>}, {transform_indices = @transform_1, window_bounds = array<i64: 1024, 1024>}, {transform_indices = @transform_2, window_bounds = array<i64: 32, 1024>}]} {
    %c0 = arith.constant 0 : index
    %c0_0 = arith.constant 0 : index
    %0 = vector.load %arg1[%c0, %c0_0] : memref<32x1024xbf16, #tpu.memory_space<vmem>>, vector<32x1024xbf16>
    %c0_1 = arith.constant 0 : index
    %c0_2 = arith.constant 0 : index
    %1 = vector.load %arg2[%c0_1, %c0_2] : memref<1024x1024xbf16, #tpu.memory_space<vmem>>, vector<1024x1024xbf16>
    %cst = arith.constant dense<0.000000e+00> : vector<32x1024xf32>
    %2 = tpu.matmul %0, %1, %cst {dimension_numbers = #tpu.dot_dimension_numbers<[1], [0], [0], [1], [0, 0, 1, 1], [], []>} : vector<32x1024xbf16>, vector<1024x1024xbf16>, vector<32x1024xf32> -> vector<32x1024xf32>
    %c0_3 = arith.constant 0 : index
    %c0_4 = arith.constant 0 : index
    %3 = vector.load %arg3[%c0_3, %c0_4] : memref<32x1024xf32, #tpu.memory_space<vmem>>, vector<32x1024xf32>
    tpu.vector_store %arg3[%c0_3, %c0_4], %2 {strides = array<i32>} : memref<32x1024xf32, #tpu.memory_space<vmem>>, vector<32x1024xf32>,
    return
  }
  func.func @transform_0(%arg0: i32) -> (i32, i32) {
    %c0_i32 = arith.constant 0 : i32
    %c0_i32_0 = arith.constant 0 : i32
    %c0_i32_1 = arith.constant 0 : i32
    return %c0_i32, %c0_i32_0 : i32, i32
  }
  func.func @transform_1(%arg0: i32) -> (i32, i32) {
    %c0_i32 = arith.constant 0 : i32
    %c0_i32_0 = arith.constant 0 : i32
    return %c0_i32, %arg0 : i32, i32
  }
  func.func @transform_2(%arg0: i32) -> (i32, i32) {
    %c0_i32 = arith.constant 0 : i32
    %c0_i32_0 = arith.constant 0 : i32
    return %c0_i32, %arg0 : i32, i32
  }
}

module attributes {stable_mosaic.version = 11 : i64} {
  func.func @_bn_lrelu_kernel(%arg0: i32, %arg1: memref<32x256xf32, #tpu.memory_space<vmem>>, %arg2: memref<1x256xf32, #tpu.memory_space<vmem>>, %arg3: memref<1x256xf32, #tpu.memory_space<vmem>>, %arg4: memref<32x256xf32, #tpu.memory_space<vmem>>) attributes {dimension_semantics = [#tpu.dimension_semantics<parallel>], iteration_bounds = array<i64: 4>, scalar_prefetch = 0 : i64, scratch_operands = 0 : i64, tpu.core_type = #tpu.core_type<tc>, window_params = [{transform_indices = @transform_0, window_bounds = array<i64: 32, 256>}, {transform_indices = @transform_1, window_bounds = array<i64: 1, 256>}, {transform_indices = @transform_2, window_bounds = array<i64: 1, 256>}, {transform_indices = @transform_3, window_bounds = array<i64: 32, 256>}]} {
    %c0 = arith.constant 0 : index
    %c0_0 = arith.constant 0 : index
    %0 = vector.load %arg1[%c0, %c0_0] : memref<32x256xf32, #tpu.memory_space<vmem>>, vector<32x256xf32>
    %cst = arith.constant dense<0.000000e+00> : vector<256xf32>
    %1 = vector.multi_reduction <add>, %0, %cst [0] : vector<32x256xf32> to vector<256xf32>
    %2 = vector.shape_cast %1 : vector<256xf32> to vector<1x256xf32>
    %cst_1 = arith.constant 3.200000e+01 : f32
    %3 = vector.broadcast %cst_1 : f32 to vector<1x256xf32>
    %4 = arith.divf %2, %3 : vector<1x256xf32>
    %5 = vector.broadcast %4 : vector<1x256xf32> to vector<32x256xf32>
    %6 = arith.subf %0, %5 : vector<32x256xf32>
    %7 = arith.mulf %6, %6 : vector<32x256xf32>
    %cst_2 = arith.constant dense<0.000000e+00> : vector<256xf32>
    %8 = vector.multi_reduction <add>, %7, %cst_2 [0] : vector<32x256xf32> to vector<256xf32>
    %9 = vector.shape_cast %8 : vector<256xf32> to vector<1x256xf32>
    %cst_3 = arith.constant 3.200000e+01 : f32
    %10 = vector.broadcast %cst_3 : f32 to vector<1x256xf32>
    %11 = arith.divf %9, %10 : vector<1x256xf32>
    %12 = vector.broadcast %4 : vector<1x256xf32> to vector<32x256xf32>
    %13 = arith.subf %0, %12 : vector<32x256xf32>
    %cst_4 = arith.constant 9.99999974E-6 : f32
    %14 = vector.broadcast %cst_4 : f32 to vector<1x256xf32>
    %15 = arith.addf %11, %14 : vector<1x256xf32>
    %16 = math.rsqrt %15 : vector<1x256xf32>
    %17 = vector.broadcast %16 : vector<1x256xf32> to vector<32x256xf32>
    %18 = arith.mulf %13, %17 : vector<32x256xf32>
    %c0_5 = arith.constant 0 : index
    %c0_6 = arith.constant 0 : index
    %19 = vector.load %arg2[%c0_5, %c0_6] : memref<1x256xf32, #tpu.memory_space<vmem>>, vector<1x256xf32>
    %20 = vector.broadcast %19 : vector<1x256xf32> to vector<32x256xf32>
    %21 = arith.mulf %18, %20 : vector<32x256xf32>
    %c0_7 = arith.constant 0 : index
    %c0_8 = arith.constant 0 : index
    %22 = vector.load %arg3[%c0_7, %c0_8] : memref<1x256xf32, #tpu.memory_space<vmem>>, vector<1x256xf32>
    %23 = vector.broadcast %22 : vector<1x256xf32> to vector<32x256xf32>
    %24 = arith.addf %21, %23 : vector<32x256xf32>
    %cst_9 = arith.constant 0.000000e+00 : f32
    %25 = vector.broadcast %cst_9 : f32 to vector<32x256xf32>
    %26 = arith.cmpf oge, %24, %25 : vector<32x256xf32>
    %cst_10 = arith.constant 0.00999999977 : f32
    %27 = vector.broadcast %cst_10 : f32 to vector<32x256xf32>
    %28 = arith.mulf %27, %24 : vector<32x256xf32>
    %29 = arith.select %26, %24, %28 : vector<32x256xi1>, vector<32x256xf32>
    %c0_11 = arith.constant 0 : index
    %c0_12 = arith.constant 0 : index
    %30 = vector.load %arg4[%c0_11, %c0_12] : memref<32x256xf32, #tpu.memory_space<vmem>>, vector<32x256xf32>
    tpu.vector_store %arg4[%c0_11, %c0_12], %29 {strides = array<i32>} : memref<32x256xf32, #tpu.memory_space<vmem>>, vector<32x256xf32>,
    return
  }
  func.func @transform_0(%arg0: i32) -> (i32, i32) {
    %c0_i32 = arith.constant 0 : i32
    %c0_i32_0 = arith.constant 0 : i32
    return %c0_i32, %arg0 : i32, i32
  }
  func.func @transform_1(%arg0: i32) -> (i32, i32) {
    %c0_i32 = arith.constant 0 : i32
    %c0_i32_0 = arith.constant 0 : i32
    return %c0_i32, %arg0 : i32, i32
  }
  func.func @transform_2(%arg0: i32) -> (i32, i32) {
    %c0_i32 = arith.constant 0 : i32
    %c0_i32_0 = arith.constant 0 : i32
    return %c0_i32, %arg0 : i32, i32
  }
  func.func @transform_3(%arg0: i32) -> (i32, i32) {
    %c0_i32 = arith.constant 0 : i32
    %c0_i32_0 = arith.constant 0 : i32
    return %c0_i32, %arg0 : i32, i32
  }
}

module attributes {stable_mosaic.version = 11 : i64} {
  func.func @_bn_lrelu_kernel(%arg0: i32, %arg1: memref<128x256xf32, #tpu.memory_space<vmem>>, %arg2: memref<1x256xf32, #tpu.memory_space<vmem>>, %arg3: memref<1x256xf32, #tpu.memory_space<vmem>>, %arg4: memref<128x256xf32, #tpu.memory_space<vmem>>) attributes {dimension_semantics = [#tpu.dimension_semantics<parallel>], iteration_bounds = array<i64: 2>, scalar_prefetch = 0 : i64, scratch_operands = 0 : i64, tpu.core_type = #tpu.core_type<tc>, window_params = [{transform_indices = @transform_0, window_bounds = array<i64: 128, 256>}, {transform_indices = @transform_1, window_bounds = array<i64: 1, 256>}, {transform_indices = @transform_2, window_bounds = array<i64: 1, 256>}, {transform_indices = @transform_3, window_bounds = array<i64: 128, 256>}]} {
    %c0 = arith.constant 0 : index
    %c0_0 = arith.constant 0 : index
    %0 = vector.load %arg1[%c0, %c0_0] : memref<128x256xf32, #tpu.memory_space<vmem>>, vector<128x256xf32>
    %cst = arith.constant dense<0.000000e+00> : vector<256xf32>
    %1 = vector.multi_reduction <add>, %0, %cst [0] : vector<128x256xf32> to vector<256xf32>
    %2 = vector.shape_cast %1 : vector<256xf32> to vector<1x256xf32>
    %cst_1 = arith.constant 1.280000e+02 : f32
    %3 = vector.broadcast %cst_1 : f32 to vector<1x256xf32>
    %4 = arith.divf %2, %3 : vector<1x256xf32>
    %5 = vector.broadcast %4 : vector<1x256xf32> to vector<128x256xf32>
    %6 = arith.subf %0, %5 : vector<128x256xf32>
    %7 = arith.mulf %6, %6 : vector<128x256xf32>
    %cst_2 = arith.constant dense<0.000000e+00> : vector<256xf32>
    %8 = vector.multi_reduction <add>, %7, %cst_2 [0] : vector<128x256xf32> to vector<256xf32>
    %9 = vector.shape_cast %8 : vector<256xf32> to vector<1x256xf32>
    %cst_3 = arith.constant 1.280000e+02 : f32
    %10 = vector.broadcast %cst_3 : f32 to vector<1x256xf32>
    %11 = arith.divf %9, %10 : vector<1x256xf32>
    %12 = vector.broadcast %4 : vector<1x256xf32> to vector<128x256xf32>
    %13 = arith.subf %0, %12 : vector<128x256xf32>
    %cst_4 = arith.constant 9.99999974E-6 : f32
    %14 = vector.broadcast %cst_4 : f32 to vector<1x256xf32>
    %15 = arith.addf %11, %14 : vector<1x256xf32>
    %16 = math.rsqrt %15 : vector<1x256xf32>
    %17 = vector.broadcast %16 : vector<1x256xf32> to vector<128x256xf32>
    %18 = arith.mulf %13, %17 : vector<128x256xf32>
    %c0_5 = arith.constant 0 : index
    %c0_6 = arith.constant 0 : index
    %19 = vector.load %arg2[%c0_5, %c0_6] : memref<1x256xf32, #tpu.memory_space<vmem>>, vector<1x256xf32>
    %20 = vector.broadcast %19 : vector<1x256xf32> to vector<128x256xf32>
    %21 = arith.mulf %18, %20 : vector<128x256xf32>
    %c0_7 = arith.constant 0 : index
    %c0_8 = arith.constant 0 : index
    %22 = vector.load %arg3[%c0_7, %c0_8] : memref<1x256xf32, #tpu.memory_space<vmem>>, vector<1x256xf32>
    %23 = vector.broadcast %22 : vector<1x256xf32> to vector<128x256xf32>
    %24 = arith.addf %21, %23 : vector<128x256xf32>
    %cst_9 = arith.constant 0.000000e+00 : f32
    %25 = vector.broadcast %cst_9 : f32 to vector<128x256xf32>
    %26 = arith.cmpf oge, %24, %25 : vector<128x256xf32>
    %cst_10 = arith.constant 0.00999999977 : f32
    %27 = vector.broadcast %cst_10 : f32 to vector<128x256xf32>
    %28 = arith.mulf %27, %24 : vector<128x256xf32>
    %29 = arith.select %26, %24, %28 : vector<128x256xi1>, vector<128x256xf32>
    %c0_11 = arith.constant 0 : index
    %c0_12 = arith.constant 0 : index
    %30 = vector.load %arg4[%c0_11, %c0_12] : memref<128x256xf32, #tpu.memory_space<vmem>>, vector<128x256xf32>
    tpu.vector_store %arg4[%c0_11, %c0_12], %29 {strides = array<i32>} : memref<128x256xf32, #tpu.memory_space<vmem>>, vector<128x256xf32>,
    return
  }
  func.func @transform_0(%arg0: i32) -> (i32, i32) {
    %c0_i32 = arith.constant 0 : i32
    %c0_i32_0 = arith.constant 0 : i32
    return %c0_i32, %arg0 : i32, i32
  }
  func.func @transform_1(%arg0: i32) -> (i32, i32) {
    %c0_i32 = arith.constant 0 : i32
    %c0_i32_0 = arith.constant 0 : i32
    return %c0_i32, %arg0 : i32, i32
  }
  func.func @transform_2(%arg0: i32) -> (i32, i32) {
    %c0_i32 = arith.constant 0 : i32
    %c0_i32_0 = arith.constant 0 : i32
    return %c0_i32, %arg0 : i32, i32
  }
  func.func @transform_3(%arg0: i32) -> (i32, i32) {
    %c0_i32 = arith.constant 0 : i32
    %c0_i32_0 = arith.constant 0 : i32
    return %c0_i32, %arg0 : i32, i32
  }
}

module attributes {stable_mosaic.version = 11 : i64} {
  func.func @_mm_kernel(%arg0: i32, %arg1: memref<128x512xbf16, #tpu.memory_space<vmem>>, %arg2: memref<512x128xbf16, #tpu.memory_space<vmem>>, %arg3: memref<128x128xf32, #tpu.memory_space<vmem>>) attributes {dimension_semantics = [#tpu.dimension_semantics<parallel>], iteration_bounds = array<i64: 1>, scalar_prefetch = 0 : i64, scratch_operands = 0 : i64, tpu.core_type = #tpu.core_type<tc>, window_params = [{pipeline_mode = #tpu.pipeline_mode<synchronous>, transform_indices = @transform_0, window_bounds = array<i64: 128, 512>}, {transform_indices = @transform_1, window_bounds = array<i64: 512, 128>}, {transform_indices = @transform_2, window_bounds = array<i64: 128, 128>}]} {
    %c0 = arith.constant 0 : index
    %c0_0 = arith.constant 0 : index
    %0 = vector.load %arg1[%c0, %c0_0] : memref<128x512xbf16, #tpu.memory_space<vmem>>, vector<128x512xbf16>
    %c0_1 = arith.constant 0 : index
    %c0_2 = arith.constant 0 : index
    %1 = vector.load %arg2[%c0_1, %c0_2] : memref<512x128xbf16, #tpu.memory_space<vmem>>, vector<512x128xbf16>
    %cst = arith.constant dense<0.000000e+00> : vector<128x128xf32>
    %2 = tpu.matmul %0, %1, %cst {dimension_numbers = #tpu.dot_dimension_numbers<[1], [0], [0], [1], [0, 0, 1, 1], [], []>} : vector<128x512xbf16>, vector<512x128xbf16>, vector<128x128xf32> -> vector<128x128xf32>
    %c0_3 = arith.constant 0 : index
    %c0_4 = arith.constant 0 : index
    %3 = vector.load %arg3[%c0_3, %c0_4] : memref<128x128xf32, #tpu.memory_space<vmem>>, vector<128x128xf32>
    tpu.vector_store %arg3[%c0_3, %c0_4], %2 {strides = array<i32>} : memref<128x128xf32, #tpu.memory_space<vmem>>, vector<128x128xf32>,
    return
  }
  func.func @transform_0(%arg0: i32) -> (i32, i32) {
    %c0_i32 = arith.constant 0 : i32
    %c0_i32_0 = arith.constant 0 : i32
    %c0_i32_1 = arith.constant 0 : i32
    return %c0_i32, %c0_i32_0 : i32, i32
  }
  func.func @transform_1(%arg0: i32) -> (i32, i32) {
    %c0_i32 = arith.constant 0 : i32
    %c0_i32_0 = arith.constant 0 : i32
    return %c0_i32, %arg0 : i32, i32
  }
  func.func @transform_2(%arg0: i32) -> (i32, i32) {
    %c0_i32 = arith.constant 0 : i32
    %c0_i32_0 = arith.constant 0 : i32
    return %c0_i32, %arg0 : i32, i32
  }
}

module attributes {stable_mosaic.version = 11 : i64} {
  func.func @_bias_tanh_kernel(%arg0: i32, %arg1: memref<512x3xf32, #tpu.memory_space<vmem>>, %arg2: memref<1x3xf32, #tpu.memory_space<vmem>>, %arg3: memref<512x3xf32, #tpu.memory_space<vmem>>) attributes {dimension_semantics = [#tpu.dimension_semantics<parallel>], iteration_bounds = array<i64: 1>, scalar_prefetch = 0 : i64, scratch_operands = 0 : i64, tpu.core_type = #tpu.core_type<tc>, window_params = [{transform_indices = @transform_0, window_bounds = array<i64: 512, 3>}, {pipeline_mode = #tpu.pipeline_mode<synchronous>, transform_indices = @transform_1, window_bounds = array<i64: 1, 3>}, {transform_indices = @transform_2, window_bounds = array<i64: 512, 3>}]} {
    %c0 = arith.constant 0 : index
    %c0_0 = arith.constant 0 : index
    %0 = vector.load %arg1[%c0, %c0_0] : memref<512x3xf32, #tpu.memory_space<vmem>>, vector<512x3xf32>
    %c0_1 = arith.constant 0 : index
    %c0_2 = arith.constant 0 : index
    %1 = vector.load %arg2[%c0_1, %c0_2] : memref<1x3xf32, #tpu.memory_space<vmem>>, vector<1x3xf32>
    %2 = vector.broadcast %1 : vector<1x3xf32> to vector<512x3xf32>
    %3 = arith.addf %0, %2 : vector<512x3xf32>
    %4 = math.tanh %3 : vector<512x3xf32>
    %c0_3 = arith.constant 0 : index
    %c0_4 = arith.constant 0 : index
    %5 = vector.load %arg3[%c0_3, %c0_4] : memref<512x3xf32, #tpu.memory_space<vmem>>, vector<512x3xf32>
    tpu.vector_store %arg3[%c0_3, %c0_4], %4 {strides = array<i32>} : memref<512x3xf32, #tpu.memory_space<vmem>>, vector<512x3xf32>,
    return
  }
  func.func @transform_0(%arg0: i32) -> (i32, i32) {
    %c0_i32 = arith.constant 0 : i32
    %c0_i32_0 = arith.constant 0 : i32
    return %arg0, %c0_i32 : i32, i32
  }
  func.func @transform_1(%arg0: i32) -> (i32, i32) {
    %c0_i32 = arith.constant 0 : i32
    %c0_i32_0 = arith.constant 0 : i32
    %c0_i32_1 = arith.constant 0 : i32
    return %c0_i32, %c0_i32_0 : i32, i32
  }
  func.func @transform_2(%arg0: i32) -> (i32, i32) {
    %c0_i32 = arith.constant 0 : i32
    %c0_i32_0 = arith.constant 0 : i32
    return %arg0, %c0_i32 : i32, i32
  }
}

</mosaic_0001>

<llo_original>
// kernel: generator_forward.6
$region0: #{generator_forward.6}
  #allocation0 [shape = 'u32[]', space=smem, size = 0x4, offset = 0x4, fixed_abs, tag = 'smem constant byte address 0x4 - core index']
  #allocation1 [shape = 'u32[72,128]{1,0:T(1,128)}', space=vmem, size = 0x9000, scoped, tag = 'internal scratch']
  %s0 = inlined_call_operand.vmem [shape: bf16[16,128], index: 0, kind: input, shape index: {}]
  %s1 = inlined_call_operand.hbm [shape: bf16[128,16384], index: 1, kind: input, shape index: {}]
  %s2 = inlined_call_operand.vmem [shape: f32[16,16384], index: 2, kind: output, shape index: {}]
  %s3 = sld [smem:[#allocation0]]
  $region64: #{generator_forward.6} parent=0
    _
  %s5 = ssub.s32 1, %s3
  %s6 = scalar_select 0, %s5, %s3
  $region1: #{generator_forward.6} parent=0
    #allocation2 [shape = 'u8[524288]{0}', space=vmem, size = 0x80000, scoped, tag = 'input window, operand 1']
    #allocation3 [shape = 's32[2]{0}', space=sflag, size = 0x8, scoped, tag = 'scoped memory for generator_forward.6']
    #allocation4 [shape = 'u8[131072]{0}', space=vmem, size = 0x20000, scoped, tag = 'output window, operand 0']
    %7 = vsyncpa [#allocation3], 0
    %s8 = scalar_lea.sflag [#allocation3], 1
    %9 = vsyncpa %s8, 0
    loop: start=0, step=1, limit=18
    $region2: #{generator_forward.6} parent=1 // loop_pre_header
      _
    $region3: #{generator_forward.6} parent=1 // loop_header
      %s11 = sphi 0, %s15
      %p12 = scmp.ge.s32.totalorder %s11, 18
      %s19 = sphi 0, %s19
      %s21 = sphi 0, %s19
      %s22 = sphi 0, %s21
      %s36 = sphi 0, %s22
      %s42 = sphi 0, %s44
      %s45 = sphi 0, %s42
      %s46 = sphi 0, %s45
      %s62 = sphi 0, %s46
      %s68 = sphi 0, %s70
      %s71 = sphi 0, %s68
      %s72 = sphi 0, %s71
      %s88 = sphi 0, %s72
    $region4: #{generator_forward.6} parent=1 // loop_header_branch
      %14 = sbr.rel (%p12) target = $region8
    $region5: #{generator_forward.6} parent=1 // loop_body
      %s16 = ssub.s32 %s11, 1
      %s17 = ssub.s32 %s11, 2
      %s18 = sadd.s32 %s11, 1
      %s20 = sadd.s32 %s19, 1
      %p23 = scmp.eq.s32.totalorder %s11, 15
      %p24 = scmp.ne.s32.totalorder %s19, %s21
      %p25 = scmp.eq.s32.totalorder %s11, 0
      %p26 = por %p24, %p25
      %p27 = scmp.ne.s32.totalorder %s19, %s21
      %p28 = scmp.eq.s32.totalorder %s16, 15
      %p29 = por %p27, %p28
      %p30 = scmp.ne.s32.totalorder %s21, %s22
      %p31 = scmp.eq.s32.totalorder %s16, 0
      %p32 = por %p30, %p31
      %p33 = scmp.ne.s32.totalorder %s21, %s22
      %p34 = scmp.eq.s32.totalorder %s17, 15
      %p35 = por %p33, %p34
      %p37 = scmp.ne.s32.totalorder %s22, %s36
      %p38 = scmp.eq.s32.totalorder %s17, 0
      %p39 = por %p37, %p38
      %s40 = ssub.s32 %s11, %s18
      %p41 = scmp.eq.s32.totalorder %s40, 0
      %s43 = sadd.s32 %s42, 1
      %s44 = scalar_select %p41, %s42, %s43
      %p47 = pneg %p41
      %p48 = scmp.eq.s32.totalorder %s11, 15
      %p49 = por %p47, %p48
      %p50 = scmp.ne.s32.totalorder %s42, %s45
      %p51 = scmp.eq.s32.totalorder %s11, 0
      %p52 = por %p50, %p51
      %p53 = scmp.ne.s32.totalorder %s42, %s45
      %p54 = scmp.eq.s32.totalorder %s16, 15
      %p55 = por %p53, %p54
      %p56 = scmp.ne.s32.totalorder %s45, %s46
      %p57 = scmp.eq.s32.totalorder %s16, 0
      %p58 = por %p56, %p57
      %p59 = scmp.ne.s32.totalorder %s45, %s46
      %p60 = scmp.eq.s32.totalorder %s17, 15
      %p61 = por %p59, %p60
      %p63 = scmp.ne.s32.totalorder %s46, %s62
      %p64 = scmp.eq.s32.totalorder %s17, 0
      %p65 = por %p63, %p64
      %s66 = ssub.s32 %s11, %s18
      %p67 = scmp.eq.s32.totalorder %s66, 0
      %s69 = sadd.s32 %s68, 1
      %s70 = scalar_select %p67, %s68, %s69
      %p73 = pneg %p67
      %p74 = scmp.eq.s32.totalorder %s11, 15
      %p75 = por %p73, %p74
      %p76 = scmp.ne.s32.totalorder %s68, %s71
      %p77 = scmp.eq.s32.totalorder %s11, 0
      %p78 = por %p76, %p77
      %p79 = scmp.ne.s32.totalorder %s68, %s71
      %p80 = scmp.eq.s32.totalorder %s16, 15
      %p81 = por %p79, %p80
      %p82 = scmp.ne.s32.totalorder %s71, %s72
      %p83 = scmp.eq.s32.totalorder %s16, 0
      %p84 = por %p82, %p83
      %p85 = scmp.ne.s32.totalorder %s71, %s72
      %p86 = scmp.eq.s32.totalorder %s17, 15
      %p87 = por %p85, %p86
      %p89 = scmp.ne.s32.totalorder %s72, %s88
      %p90 = scmp.eq.s32.totalorder %s17, 0
      %p91 = por %p89, %p90
      %p92 = scmp.le.s32.totalorder 1, %s11
      %p93 = scmp.lt.s32.totalorder %s11, 17
      %p94 = pnand %p92, %p93
      %p95 = pneg %p94
      // Predicated region
      $region9: #{generator_forward.6} parent=5 // pred_check
        _
      $region10: #{generator_forward.6} parent=5 // pred_check_branch
        %97 = sbr.rel (%p94) target = $region12
      $region11: #{generator_forward.6} parent=5 // pred_region
        %s98 = ssub.s32 %s11, 1
        // Predicated region
        $region13: #{generator_forward.6} parent=11 // pred_check
          %p99 = pneg %p32
        $region14: #{generator_forward.6} parent=11 // pred_check_branch
          %101 = sbr.rel (%p99) target = $region16
        $region15: #{generator_forward.6} parent=11 // pred_region
          _
        $region16: #{generator_forward.6} parent=11 // pred_fallthru
          _
      $region12: #{generator_forward.6} parent=5 // pred_fallthru
        _
      %p102 = scmp.lt.s32.totalorder %s11, 16
      // Predicated region
      $region17: #{generator_forward.6} parent=5 // pred_check
        %p103 = pneg %p102
      $region18: #{generator_forward.6} parent=5 // pred_check_branch
        %105 = sbr.rel (%p103) target = $region20
      $region19: #{generator_forward.6} parent=5 // pred_region
        // Predicated region
        $region21: #{generator_forward.6} parent=19 // pred_check
          %p106 = pneg %p52
        $region22: #{generator_forward.6} parent=19 // pred_check_branch
          %108 = sbr.rel (%p106) target = $region24
        $region23: #{generator_forward.6} parent=19 // pred_region
          %s109 = sand.u32 %s42, 1
          %s110 = scalar_lea.sflag [#allocation3], %s109
          %s111 = sand.u32 %s42, 1
          %s112 = smul.addr %s111, 512
          %s113 = scalar_lea.vmem [#allocation2], %s112
          %s114 = smul.u32 8, %s11
          %116 = vsyncadd %s110, 0
          %s117 = smul.addr %s114, 4
          %s118 = scalar_lea.hbm %s1, %s117
          %s119 = sshll.u32 %s118, 4
          %s120 = int_to_ptr.hbm [resolvable:$true] %s119
          %s121 = sshll.u32 %s113, 4
          %s122 = int_to_ptr.vmem [resolvable:$true] %s121
          %127 = dma.hbm_to_vmem [thread:$0]  %s120, 8192, %s122, %s110, 8192, 512, 32
        $region24: #{generator_forward.6} parent=19 // pred_fallthru
          _
      $region20: #{generator_forward.6} parent=5 // pred_fallthru
        _
      %p128 = scmp.le.s32.totalorder 1, %s11
      %p129 = scmp.lt.s32.totalorder %s11, 17
      %p130 = pnand %p128, %p129
      %p131 = pneg %p130
      // Predicated region
      $region25: #{generator_forward.6} parent=5 // pred_check
        _
      $region26: #{generator_forward.6} parent=5 // pred_check_branch
        %133 = sbr.rel (%p130) target = $region28
      $region27: #{generator_forward.6} parent=5 // pred_region
        %s134 = ssub.s32 %s11, 1
        %s135 = sand.u32 %s45, 1
        %s136 = scalar_lea.sflag [#allocation3], %s135
        %s137 = sand.u32 %s45, 1
        %s138 = smul.addr %s137, 512
        %s139 = scalar_lea.vmem [#allocation2], %s138
        // Predicated region
        $region29: #{generator_forward.6} parent=27 // pred_check
          %p140 = pneg %p58
        $region30: #{generator_forward.6} parent=27 // pred_check_branch
          %142 = sbr.rel (%p140) target = $region32
        $region31: #{generator_forward.6} parent=27 // pred_region
          %144 = dma.done %s136, 8192
        $region32: #{generator_forward.6} parent=27 // pred_fallthru
          _
        %p145 = pneg %p32
        %p146 = pneg %p29
        %s147 = sand.u32 %s45, 1
        %s148 = scalar_lea.sflag [#allocation3], %s147
        %s149 = sand.u32 %s45, 1
        %s150 = smul.addr %s149, 512
        %s151 = scalar_lea.vmem [#allocation2], %s150
        %p152 = pneg %p58
        %p153 = pneg %p55
        %p154 = pneg %p84
        %p155 = pneg %p81
        %s156 = sand.u32 %s71, 1
        %s157 = sand.u32 %s71, 1
        %s158 = smul.addr %s157, 128
        %s159 = scalar_lea.vmem [#allocation4], %s158
        %s160 = smul.u32 8, %s16
        %s161 = smul.u32 8, %s16
        %v162 = vld [vmem:[%s0] sm:$0xf]
        %v163 = vld [vmem:[%s0 + $0x4] sm:$0xf]
        %v164 = vld [vmem:[%s139] sm:$0xff]
        %v165 = vld [vmem:[%s139 + $0x8] sm:$0xff]
        %v166 = vld [vmem:[%s139 + $0x10] sm:$0xff]
        %v167 = vld [vmem:[%s139 + $0x18] sm:$0xff]
        %v168 = vld [vmem:[%s139 + $0x20] sm:$0xff]
        %v169 = vld [vmem:[%s139 + $0x28] sm:$0xff]
        %v170 = vld [vmem:[%s139 + $0x30] sm:$0xff]
        %v171 = vld [vmem:[%s139 + $0x38] sm:$0xff]
        %v172 = vld [vmem:[%s139 + $0x40] sm:$0xff]
        %v173 = vld [vmem:[%s139 + $0x48] sm:$0xff]
        %v174 = vld [vmem:[%s139 + $0x50] sm:$0xff]
        %v175 = vld [vmem:[%s139 + $0x58] sm:$0xff]
        %v176 = vld [vmem:[%s139 + $0x60] sm:$0xff]
        %v177 = vld [vmem:[%s139 + $0x68] sm:$0xff]
        %v178 = vld [vmem:[%s139 + $0x70] sm:$0xff]
        %v179 = vld [vmem:[%s139 + $0x78] sm:$0xff]
        %v180 = vld [vmem:[%s139 + $0x80] sm:$0xff]
        %v181 = vld [vmem:[%s139 + $0x88] sm:$0xff]
        %v182 = vld [vmem:[%s139 + $0x90] sm:$0xff]
        %v183 = vld [vmem:[%s139 + $0x98] sm:$0xff]
        %v184 = vld [vmem:[%s139 + $0xa0] sm:$0xff]
        %v185 = vld [vmem:[%s139 + $0xa8] sm:$0xff]
        %v186 = vld [vmem:[%s139 + $0xb0] sm:$0xff]
        %v187 = vld [vmem:[%s139 + $0xb8] sm:$0xff]
        %v188 = vld [vmem:[%s139 + $0xc0] sm:$0xff]
        %v189 = vld [vmem:[%s139 + $0xc8] sm:$0xff]
        %v190 = vld [vmem:[%s139 + $0xd0] sm:$0xff]
        %v191 = vld [vmem:[%s139 + $0xd8] sm:$0xff]
        %v192 = vld [vmem:[%s139 + $0xe0] sm:$0xff]
        %v193 = vld [vmem:[%s139 + $0xe8] sm:$0xff]
        %v194 = vld [vmem:[%s139 + $0xf0] sm:$0xff]
        %v195 = vld [vmem:[%s139 + $0xf8] sm:$0xff]
        %v196 = vld [vmem:[%s139 + $0x100] sm:$0xff]
        %v197 = vld [vmem:[%s139 + $0x108] sm:$0xff]
        %v198 = vld [vmem:[%s139 + $0x110] sm:$0xff]
        %v199 = vld [vmem:[%s139 + $0x118] sm:$0xff]
        %v200 = vld [vmem:[%s139 + $0x120] sm:$0xff]
        %v201 = vld [vmem:[%s139 + $0x128] sm:$0xff]
        %v202 = vld [vmem:[%s139 + $0x130] sm:$0xff]
        %v203 = vld [vmem:[%s139 + $0x138] sm:$0xff]
        %v204 = vld [vmem:[%s139 + $0x140] sm:$0xff]
        %v205 = vld [vmem:[%s139 + $0x148] sm:$0xff]
        %v206 = vld [vmem:[%s139 + $0x150] sm:$0xff]
        %v207 = vld [vmem:[%s139 + $0x158] sm:$0xff]
        %v208 = vld [vmem:[%s139 + $0x160] sm:$0xff]
        %v209 = vld [vmem:[%s139 + $0x168] sm:$0xff]
        %v210 = vld [vmem:[%s139 + $0x170] sm:$0xff]
        %v211 = vld [vmem:[%s139 + $0x178] sm:$0xff]
        %v212 = vld [vmem:[%s139 + $0x180] sm:$0xff]
        %v213 = vld [vmem:[%s139 + $0x188] sm:$0xff]
        %v214 = vld [vmem:[%s139 + $0x190] sm:$0xff]
        %v215 = vld [vmem:[%s139 + $0x198] sm:$0xff]
        %v216 = vld [vmem:[%s139 + $0x1a0] sm:$0xff]
        %v217 = vld [vmem:[%s139 + $0x1a8] sm:$0xff]
        %v218 = vld [vmem:[%s139 + $0x1b0] sm:$0xff]
        %v219 = vld [vmem:[%s139 + $0x1b8] sm:$0xff]
        %v220 = vld [vmem:[%s139 + $0x1c0] sm:$0xff]
        %v221 = vld [vmem:[%s139 + $0x1c8] sm:$0xff]
        %v222 = vld [vmem:[%s139 + $0x1d0] sm:$0xff]
        %v223 = vld [vmem:[%s139 + $0x1d8] sm:$0xff]
        %v224 = vld [vmem:[%s139 + $0x1e0] sm:$0xff]
        %v225 = vld [vmem:[%s139 + $0x1e8] sm:$0xff]
        %v226 = vld [vmem:[%s139 + $0x1f0] sm:$0xff]
        %v227 = vld [vmem:[%s139 + $0x1f8] sm:$0xff]
        %v230 = vunpack.c.l.b16 %v162
        %v231 = vunpack.c.l.b16 %v163
        %v232 = vpack.c.b16 %v231, %v230
        %v298 = vunpack.c.l.b16 %v164
        %v299 = vunpack.c.h.b16 %v164
        %v300 = vunpack.c.l.b16 %v165
        %v301 = vunpack.c.h.b16 %v165
        %v302 = vunpack.c.l.b16 %v166
        %v303 = vunpack.c.h.b16 %v166
        %v304 = vunpack.c.l.b16 %v167
        %v305 = vunpack.c.h.b16 %v167
        %v306 = vunpack.c.l.b16 %v168
        %v307 = vunpack.c.h.b16 %v168
        %v308 = vunpack.c.l.b16 %v169
        %v309 = vunpack.c.h.b16 %v169
        %v310 = vunpack.c.l.b16 %v170
        %v311 = vunpack.c.h.b16 %v170
        %v312 = vunpack.c.l.b16 %v171
        %v313 = vunpack.c.h.b16 %v171
        %v314 = vunpack.c.l.b16 %v172
        %v315 = vunpack.c.h.b16 %v172
        %v316 = vunpack.c.l.b16 %v173
        %v317 = vunpack.c.h.b16 %v173
        %v318 = vunpack.c.l.b16 %v174
        %v319 = vunpack.c.h.b16 %v174
        %v320 = vunpack.c.l.b16 %v175
        %v321 = vunpack.c.h.b16 %v175
        %v322 = vunpack.c.l.b16 %v176
        %v323 = vunpack.c.h.b16 %v176
        %v324 = vunpack.c.l.b16 %v177
        %v325 = vunpack.c.h.b16 %v177
        %v326 = vunpack.c.l.b16 %v178
        %v327 = vunpack.c.h.b16 %v178
        %v328 = vunpack.c.l.b16 %v179
        %v329 = vunpack.c.h.b16 %v179
        %v330 = vunpack.c.l.b16 %v180
        %v331 = vunpack.c.h.b16 %v180
        %v332 = vunpack.c.l.b16 %v181
        %v333 = vunpack.c.h.b16 %v181
        %v334 = vunpack.c.l.b16 %v182
        %v335 = vunpack.c.h.b16 %v182
        %v336 = vunpack.c.l.b16 %v183
        %v337 = vunpack.c.h.b16 %v183
        %v338 = vunpack.c.l.b16 %v184
        %v339 = vunpack.c.h.b16 %v184
        %v340 = vunpack.c.l.b16 %v185
        %v341 = vunpack.c.h.b16 %v185
        %v342 = vunpack.c.l.b16 %v186
        %v343 = vunpack.c.h.b16 %v186
        %v344 = vunpack.c.l.b16 %v187
        %v345 = vunpack.c.h.b16 %v187
        %v346 = vunpack.c.l.b16 %v188
        %v347 = vunpack.c.h.b16 %v188
        %v348 = vunpack.c.l.b16 %v189
        %v349 = vunpack.c.h.b16 %v189
        %v350 = vunpack.c.l.b16 %v190
        %v351 = vunpack.c.h.b16 %v190
        %v352 = vunpack.c.l.b16 %v191
        %v353 = vunpack.c.h.b16 %v191
        %v354 = vunpack.c.l.b16 %v192
        %v355 = vunpack.c.h.b16 %v192
        %v356 = vunpack.c.l.b16 %v193
        %v357 = vunpack.c.h.b16 %v193
        %v358 = vunpack.c.l.b16 %v194
        %v359 = vunpack.c.h.b16 %v194
        %v360 = vunpack.c.l.b16 %v195
        %v361 = vunpack.c.h.b16 %v195
        %v362 = vunpack.c.l.b16 %v196
        %v363 = vunpack.c.h.b16 %v196
        %v364 = vunpack.c.l.b16 %v197
        %v365 = vunpack.c.h.b16 %v197
        %v366 = vunpack.c.l.b16 %v198
        %v367 = vunpack.c.h.b16 %v198
        %v368 = vunpack.c.l.b16 %v199
        %v369 = vunpack.c.h.b16 %v199
        %v370 = vunpack.c.l.b16 %v200
        %v371 = vunpack.c.h.b16 %v200
        %v372 = vunpack.c.l.b16 %v201
        %v373 = vunpack.c.h.b16 %v201
        %v374 = vunpack.c.l.b16 %v202
        %v375 = vunpack.c.h.b16 %v202
        %v376 = vunpack.c.l.b16 %v203
        %v377 = vunpack.c.h.b16 %v203
        %v378 = vunpack.c.l.b16 %v204
        %v379 = vunpack.c.h.b16 %v204
        %v380 = vunpack.c.l.b16 %v205
        %v381 = vunpack.c.h.b16 %v205
        %v382 = vunpack.c.l.b16 %v206
        %v383 = vunpack.c.h.b16 %v206
        %v384 = vunpack.c.l.b16 %v207
        %v385 = vunpack.c.h.b16 %v207
        %v386 = vunpack.c.l.b16 %v208
        %v387 = vunpack.c.h.b16 %v208
        %v388 = vunpack.c.l.b16 %v209
        %v389 = vunpack.c.h.b16 %v209
        %v390 = vunpack.c.l.b16 %v210
        %v391 = vunpack.c.h.b16 %v210
        %v392 = vunpack.c.l.b16 %v211
        %v393 = vunpack.c.h.b16 %v211
        %v394 = vunpack.c.l.b16 %v212
        %v395 = vunpack.c.h.b16 %v212
        %v396 = vunpack.c.l.b16 %v213
        %v397 = vunpack.c.h.b16 %v213
        %v398 = vunpack.c.l.b16 %v214
        %v399 = vunpack.c.h.b16 %v214
        %v400 = vunpack.c.l.b16 %v215
        %v401 = vunpack.c.h.b16 %v215
        %v402 = vunpack.c.l.b16 %v216
        %v403 = vunpack.c.h.b16 %v216
        %v404 = vunpack.c.l.b16 %v217
        %v405 = vunpack.c.h.b16 %v217
        %v406 = vunpack.c.l.b16 %v218
        %v407 = vunpack.c.h.b16 %v218
        %v408 = vunpack.c.l.b16 %v219
        %v409 = vunpack.c.h.b16 %v219
        %v410 = vunpack.c.l.b16 %v220
        %v411 = vunpack.c.h.b16 %v220
        %v412 = vunpack.c.l.b16 %v221
        %v413 = vunpack.c.h.b16 %v221
        %v414 = vunpack.c.l.b16 %v222
        %v415 = vunpack.c.h.b16 %v222
        %v416 = vunpack.c.l.b16 %v223
        %v417 = vunpack.c.h.b16 %v223
        %v418 = vunpack.c.l.b16 %v224
        %v419 = vunpack.c.h.b16 %v224
        %v420 = vunpack.c.l.b16 %v225
        %v421 = vunpack.c.h.b16 %v225
        %v422 = vunpack.c.l.b16 %v226
        %v423 = vunpack.c.h.b16 %v226
        %v424 = vunpack.c.l.b16 %v227
        %v425 = vunpack.c.h.b16 %v227
        %v426 = vpack.c.b16 %v306, %v298
        %v427 = vpack.c.b16 %v307, %v299
        %v428 = vpack.c.b16 %v308, %v300
        %v429 = vpack.c.b16 %v309, %v301
        %v430 = vpack.c.b16 %v310, %v302
        %v431 = vpack.c.b16 %v311, %v303
        %v432 = vpack.c.b16 %v312, %v304
        %v433 = vpack.c.b16 %v313, %v305
        %v434 = vpack.c.b16 %v322, %v314
        %v435 = vpack.c.b16 %v323, %v315
        %v436 = vpack.c.b16 %v324, %v316
        %v437 = vpack.c.b16 %v325, %v317
        %v438 = vpack.c.b16 %v326, %v318
        %v439 = vpack.c.b16 %v327, %v319
        %v440 = vpack.c.b16 %v328, %v320
        %v441 = vpack.c.b16 %v329, %v321
        %v442 = vpack.c.b16 %v338, %v330
        %v443 = vpack.c.b16 %v339, %v331
        %v444 = vpack.c.b16 %v340, %v332
        %v445 = vpack.c.b16 %v341, %v333
        %v446 = vpack.c.b16 %v342, %v334
        %v447 = vpack.c.b16 %v343, %v335
        %v448 = vpack.c.b16 %v344, %v336
        %v449 = vpack.c.b16 %v345, %v337
        %v450 = vpack.c.b16 %v354, %v346
        %v451 = vpack.c.b16 %v355, %v347
        %v452 = vpack.c.b16 %v356, %v348
        %v453 = vpack.c.b16 %v357, %v349
        %v454 = vpack.c.b16 %v358, %v350
        %v455 = vpack.c.b16 %v359, %v351
        %v456 = vpack.c.b16 %v360, %v352
        %v457 = vpack.c.b16 %v361, %v353
        %v458 = vpack.c.b16 %v370, %v362
        %v459 = vpack.c.b16 %v371, %v363
        %v460 = vpack.c.b16 %v372, %v364
        %v461 = vpack.c.b16 %v373, %v365
        %v462 = vpack.c.b16 %v374, %v366
        %v463 = vpack.c.b16 %v375, %v367
        %v464 = vpack.c.b16 %v376, %v368
        %v465 = vpack.c.b16 %v377, %v369
        %v466 = vpack.c.b16 %v386, %v378
        %v467 = vpack.c.b16 %v387, %v379
        %v468 = vpack.c.b16 %v388, %v380
        %v469 = vpack.c.b16 %v389, %v381
        %v470 = vpack.c.b16 %v390, %v382
        %v471 = vpack.c.b16 %v391, %v383
        %v472 = vpack.c.b16 %v392, %v384
        %v473 = vpack.c.b16 %v393, %v385
        %v474 = vpack.c.b16 %v402, %v394
        %v475 = vpack.c.b16 %v403, %v395
        %v476 = vpack.c.b16 %v404, %v396
        %v477 = vpack.c.b16 %v405, %v397
        %v478 = vpack.c.b16 %v406, %v398
        %v479 = vpack.c.b16 %v407, %v399
        %v480 = vpack.c.b16 %v408, %v400
        %v481 = vpack.c.b16 %v409, %v401
        %v482 = vpack.c.b16 %v418, %v410
        %v483 = vpack.c.b16 %v419, %v411
        %v484 = vpack.c.b16 %v420, %v412
        %v485 = vpack.c.b16 %v421, %v413
        %v486 = vpack.c.b16 %v422, %v414
        %v487 = vpack.c.b16 %v423, %v415
        %v488 = vpack.c.b16 %v424, %v416
        %v489 = vpack.c.b16 %v425, %v417
        %554 = vmatpush.bf16.msra.mxu0 %v482
        %555 = vmatpush.bf16.msra.mxu0 %v474
        %556 = vmatpush.bf16.msra.mxu0 %v466
        %557 = vmatpush.bf16.msra.mxu0 %v458
        %558 = vmatpush.bf16.msra.mxu0 %v450
        %559 = vmatpush.bf16.msra.mxu0 %v442
        %560 = vmatpush.bf16.msra.mxu0 %v434
        %561 = vmatpush.bf16.msra.mxu0 %v426
        %562 = vmatmul.bf16.gmra.mxu0 %v232
        %v563 = vpop.f32.mrf.mxu0
        %v564 = vadd.f32 0.0, %v563
        %v565 = vpop.f32.mrf.mxu0
        %v566 = vadd.f32 0.0, %v565
        %567 = vdwg.mxu0
        %568 = vmatpush.bf16.msra.mxu0 %v483
        %569 = vmatpush.bf16.msra.mxu0 %v475
        %570 = vmatpush.bf16.msra.mxu0 %v467
        %571 = vmatpush.bf16.msra.mxu0 %v459
        %572 = vmatpush.bf16.msra.mxu0 %v451
        %573 = vmatpush.bf16.msra.mxu0 %v443
        %574 = vmatpush.bf16.msra.mxu0 %v435
        %575 = vmatpush.bf16.msra.mxu0 %v427
        %576 = vmatmul.bf16.gmra.mxu0 %v232
        %v577 = vpop.f32.mrf.mxu0
        %v578 = vadd.f32 0.0, %v577
        %v579 = vpop.f32.mrf.mxu0
        %v580 = vadd.f32 0.0, %v579
        %581 = vdwg.mxu0
        %582 = vmatpush.bf16.msra.mxu0 %v484
        %583 = vmatpush.bf16.msra.mxu0 %v476
        %584 = vmatpush.bf16.msra.mxu0 %v468
        %585 = vmatpush.bf16.msra.mxu0 %v460
        %586 = vmatpush.bf16.msra.mxu0 %v452
        %587 = vmatpush.bf16.msra.mxu0 %v444
        %588 = vmatpush.bf16.msra.mxu0 %v436
        %589 = vmatpush.bf16.msra.mxu0 %v428
        %590 = vmatmul.bf16.gmra.mxu0 %v232
        %v591 = vpop.f32.mrf.mxu0
        %v592 = vadd.f32 0.0, %v591
        %v593 = vpop.f32.mrf.mxu0
        %v594 = vadd.f32 0.0, %v593
        %595 = vdwg.mxu0
        %596 = vmatpush.bf16.msra.mxu0 %v485
        %597 = vmatpush.bf16.msra.mxu0 %v477
        %598 = vmatpush.bf16.msra.mxu0 %v469
        %599 = vmatpush.bf16.msra.mxu0 %v461
        %600 = vmatpush.bf16.msra.mxu0 %v453
        %601 = vmatpush.bf16.msra.mxu0 %v445
        %602 = vmatpush.bf16.msra.mxu0 %v437
        %603 = vmatpush.bf16.msra.mxu0 %v429
        %604 = vmatmul.bf16.gmra.mxu0 %v232
        %v605 = vpop.f32.mrf.mxu0
        %v606 = vadd.f32 0.0, %v605
        %v607 = vpop.f32.mrf.mxu0
        %v608 = vadd.f32 0.0, %v607
        %609 = vdwg.mxu0
        %610 = vmatpush.bf16.msra.mxu0 %v486
        %611 = vmatpush.bf16.msra.mxu0 %v478
        %612 = vmatpush.bf16.msra.mxu0 %v470
        %613 = vmatpush.bf16.msra.mxu0 %v462
        %614 = vmatpush.bf16.msra.mxu0 %v454
        %615 = vmatpush.bf16.msra.mxu0 %v446
        %616 = vmatpush.bf16.msra.mxu0 %v438
        %617 = vmatpush.bf16.msra.mxu0 %v430
        %618 = vmatmul.bf16.gmra.mxu0 %v232
        %v619 = vpop.f32.mrf.mxu0
        %v620 = vadd.f32 0.0, %v619
        %v621 = vpop.f32.mrf.mxu0
        %v622 = vadd.f32 0.0, %v621
        %623 = vdwg.mxu0
        %624 = vmatpush.bf16.msra.mxu0 %v487
        %625 = vmatpush.bf16.msra.mxu0 %v479
        %626 = vmatpush.bf16.msra.mxu0 %v471
        %627 = vmatpush.bf16.msra.mxu0 %v463
        %628 = vmatpush.bf16.msra.mxu0 %v455
        %629 = vmatpush.bf16.msra.mxu0 %v447
        %630 = vmatpush.bf16.msra.mxu0 %v439
        %631 = vmatpush.bf16.msra.mxu0 %v431
        %632 = vmatmul.bf16.gmra.mxu0 %v232
        %v633 = vpop.f32.mrf.mxu0
        %v634 = vadd.f32 0.0, %v633
        %v635 = vpop.f32.mrf.mxu0
        %v636 = vadd.f32 0.0, %v635
        %637 = vdwg.mxu0
        %638 = vmatpush.bf16.msra.mxu0 %v488
        %639 = vmatpush.bf16.msra.mxu0 %v480
        %640 = vmatpush.bf16.msra.mxu0 %v472
        %641 = vmatpush.bf16.msra.mxu0 %v464
        %642 = vmatpush.bf16.msra.mxu0 %v456
        %643 = vmatpush.bf16.msra.mxu0 %v448
        %644 = vmatpush.bf16.msra.mxu0 %v440
        %645 = vmatpush.bf16.msra.mxu0 %v432
        %646 = vmatmul.bf16.gmra.mxu0 %v232
        %v647 = vpop.f32.mrf.mxu0
        %v648 = vadd.f32 0.0, %v647
        %v649 = vpop.f32.mrf.mxu0
        %v650 = vadd.f32 0.0, %v649
        %651 = vdwg.mxu0
        %652 = vmatpush.bf16.msra.mxu0 %v489
        %653 = vmatpush.bf16.msra.mxu0 %v481
        %654 = vmatpush.bf16.msra.mxu0 %v473
        %655 = vmatpush.bf16.msra.mxu0 %v465
        %656 = vmatpush.bf16.msra.mxu0 %v457
        %657 = vmatpush.bf16.msra.mxu0 %v449
        %658 = vmatpush.bf16.msra.mxu0 %v441
        %659 = vmatpush.bf16.msra.mxu0 %v433
        %660 = vmatmul.bf16.gmra.mxu0 %v232
        %v661 = vpop.f32.mrf.mxu0
        %v662 = vadd.f32 0.0, %v661
        %v663 = vpop.f32.mrf.mxu0
        %v664 = vadd.f32 0.0, %v663
        %665 = vdwg.mxu0
        %666 = vst [vmem:[%s159] sm:$0xff] %v564
        %667 = vst [vmem:[%s159 + $0x8] sm:$0xff] %v578
        %668 = vst [vmem:[%s159 + $0x10] sm:$0xff] %v592
        %669 = vst [vmem:[%s159 + $0x18] sm:$0xff] %v606
        %670 = vst [vmem:[%s159 + $0x20] sm:$0xff] %v620
        %671 = vst [vmem:[%s159 + $0x28] sm:$0xff] %v634
        %672 = vst [vmem:[%s159 + $0x30] sm:$0xff] %v648
        %673 = vst [vmem:[%s159 + $0x38] sm:$0xff] %v662
        %674 = vst [vmem:[%s159 + $0x40] sm:$0xff] %v566
        %675 = vst [vmem:[%s159 + $0x48] sm:$0xff] %v580
        %676 = vst [vmem:[%s159 + $0x50] sm:$0xff] %v594
        %677 = vst [vmem:[%s159 + $0x58] sm:$0xff] %v608
        %678 = vst [vmem:[%s159 + $0x60] sm:$0xff] %v622
        %679 = vst [vmem:[%s159 + $0x68] sm:$0xff] %v636
        %680 = vst [vmem:[%s159 + $0x70] sm:$0xff] %v650
        %681 = vst [vmem:[%s159 + $0x78] sm:$0xff] %v664
        %s682 = sand.u32 %s71, 1
        %s683 = sand.u32 %s71, 1
        %s684 = smul.addr %s683, 128
        %s685 = scalar_lea.vmem [#allocation4], %s684
        // Predicated region
        $region33: #{generator_forward.6} parent=27 // pred_check
          %p686 = pneg %p81
        $region34: #{generator_forward.6} parent=27 // pred_check_branch
          %688 = sbr.rel (%p686) target = $region36
        $region35: #{generator_forward.6} parent=27 // pred_region
          %s689 = smul.u32 8, %s16
          %s690 = smul.addr %s689, 8
          %s691 = scalar_lea.vmem %s2, %s690
          // Predicated region
          $region37: #{generator_forward.6} parent=35 // pred_check
            _
          $region38: #{generator_forward.6} parent=35 // pred_check_branch
            %693 = sbr.rel (0) target = $region40
          $region39: #{generator_forward.6} parent=35 // pred_region
            // Predicated region
            $region41: #{generator_forward.6} parent=39 // pred_check
              _
            $region42: #{generator_forward.6} parent=39 // pred_check_branch
              %695 = sbr.rel (0) target = $region44
            $region43: #{generator_forward.6} parent=39 // pred_region
              loop: start=0, step=1, limit=1
              $region45: #{generator_forward.6} parent=43 // loop_pre_header
                _
              $region46: #{generator_forward.6} parent=43 // loop_header
                %s697 = sphi 0, %s701
                %p698 = scmp.ge.s32.totalorder %s697, 1
                %s702 = sphi %s685, %s685
                %s703 = sphi %s691, %s691
              $region47: #{generator_forward.6} parent=43 // loop_header_branch
                %700 = sbr.rel (%p698) target = $region51
              $region48: #{generator_forward.6} parent=43 // loop_body
                %v704 = vld [vmem:[%s702] sm:$0xff]
                %705 = vst [vmem:[%s703] sm:$0xff] %v704
                %v706 = vld [vmem:[%s702 + $0x8] sm:$0xff]
                %707 = vst [vmem:[%s703 + $0x8] sm:$0xff] %v706
                %v708 = vld [vmem:[%s702 + $0x10] sm:$0xff]
                %709 = vst [vmem:[%s703 + $0x10] sm:$0xff] %v708
                %v710 = vld [vmem:[%s702 + $0x18] sm:$0xff]
                %711 = vst [vmem:[%s703 + $0x18] sm:$0xff] %v710
                %v712 = vld [vmem:[%s702 + $0x20] sm:$0xff]
                %713 = vst [vmem:[%s703 + $0x20] sm:$0xff] %v712
                %v714 = vld [vmem:[%s702 + $0x28] sm:$0xff]
                %715 = vst [vmem:[%s703 + $0x28] sm:$0xff] %v714
                %v716 = vld [vmem:[%s702 + $0x30] sm:$0xff]
                %717 = vst [vmem:[%s703 + $0x30] sm:$0xff] %v716
                %v718 = vld [vmem:[%s702 + $0x38] sm:$0xff]
                %719 = vst [vmem:[%s703 + $0x38] sm:$0xff] %v718
                %v720 = vld [vmem:[%s702 + $0x40] sm:$0xff]
                %721 = vst [vmem:[%s703 + $0x400] sm:$0xff] %v720
                %v722 = vld [vmem:[%s702 + $0x48] sm:$0xff]
                %723 = vst [vmem:[%s703 + $0x408] sm:$0xff] %v722
                %v724 = vld [vmem:[%s702 + $0x50] sm:$0xff]
                %725 = vst [vmem:[%s703 + $0x410] sm:$0xff] %v724
                %v726 = vld [vmem:[%s702 + $0x58] sm:$0xff]
                %727 = vst [vmem:[%s703 + $0x418] sm:$0xff] %v726
                %v728 = vld [vmem:[%s702 + $0x60] sm:$0xff]
                %729 = vst [vmem:[%s703 + $0x420] sm:$0xff] %v728
                %v730 = vld [vmem:[%s702 + $0x68] sm:$0xff]
                %731 = vst [vmem:[%s703 + $0x428] sm:$0xff] %v730
                %v732 = vld [vmem:[%s702 + $0x70] sm:$0xff]
                %733 = vst [vmem:[%s703 + $0x430] sm:$0xff] %v732
                %v734 = vld [vmem:[%s702 + $0x78] sm:$0xff]
                %735 = vst [vmem:[%s703 + $0x438] sm:$0xff] %v734
              $region49: #{generator_forward.6} parent=43 // loop_footer
                %s701 = sadd.s32 1, %s697
              $region50: #{generator_forward.6} parent=43 // loop_footer_branch
                %696 = sbr.rel target = $region46
              $region51: #{generator_forward.6} parent=43 // loop_exit
                _
            $region44: #{generator_forward.6} parent=39 // pred_fallthru
              _
            // Predicated region
            $region52: #{generator_forward.6} parent=39 // pred_check
              _
            $region53: #{generator_forward.6} parent=39 // pred_check_branch
              %737 = sbr.rel target = $region55
            $region54: #{generator_forward.6} parent=39 // pred_region
              _
            $region55: #{generator_forward.6} parent=39 // pred_fallthru
              _
          $region40: #{generator_forward.6} parent=35 // pred_fallthru
            _
          %738 = vnop
        $region36: #{generator_forward.6} parent=27 // pred_fallthru
          _
      $region28: #{generator_forward.6} parent=5 // pred_fallthru
        _
      %p739 = scmp.le.s32.totalorder 2, %s11
      // Predicated region
      $region56: #{generator_forward.6} parent=5 // pred_check
        %p740 = pneg %p739
      $region57: #{generator_forward.6} parent=5 // pred_check_branch
        %742 = sbr.rel (%p740) target = $region59
      $region58: #{generator_forward.6} parent=5 // pred_region
        %s743 = ssub.s32 %s11, 2
        // Predicated region
        $region60: #{generator_forward.6} parent=58 // pred_check
          %p744 = pneg %p87
        $region61: #{generator_forward.6} parent=58 // pred_check_branch
          %746 = sbr.rel (%p744) target = $region63
        $region62: #{generator_forward.6} parent=58 // pred_region
          %s747 = sand.u32 %s72, 1
          %s748 = sand.u32 %s72, 1
          %s749 = smul.addr %s748, 128
          %s750 = scalar_lea.vmem [#allocation4], %s749
        $region63: #{generator_forward.6} parent=58 // pred_fallthru
          _
      $region59: #{generator_forward.6} parent=5 // pred_fallthru
        _
    $region6: #{generator_forward.6} parent=1 // loop_footer
      %s15 = sadd.s32 1, %s11
    $region7: #{generator_forward.6} parent=1 // loop_footer_branch
      %10 = sbr.rel target = $region3
    $region8: #{generator_forward.6} parent=1 // loop_exit
      _
    %751 = vsyncpa [#allocation3], 1
    %s752 = scalar_lea.sflag [#allocation3], 1
    %753 = vsyncpa %s752, 1

// kernel: generator_forward.7
$region0: #{generator_forward.7}
  #allocation0 [shape = 'u32[]', space=smem, size = 0x4, offset = 0x4, fixed_abs, tag = 'smem constant byte address 0x4 - core index']
  #allocation1 [shape = 'u32[72,128]{1,0:T(1,128)}', space=vmem, size = 0x9000, scoped, tag = 'internal scratch']
  %s0 = inlined_call_operand.vmem [shape: f32[32,1024], index: 0, kind: input, shape index: {}]
  %s1 = inlined_call_operand.hbm [shape: f32[1,1024], index: 1, kind: input, shape index: {}]
  %s2 = inlined_call_operand.hbm [shape: f32[1,1024], index: 2, kind: input, shape index: {}]
  %s3 = inlined_call_operand.vmem [shape: f32[32,1024], index: 3, kind: output, shape index: {}]
  %s4 = sld [smem:[#allocation0]]
  $region95: #{generator_forward.7} parent=0
    _
  %s6 = ssub.s32 1, %s4
  %s7 = scalar_select 0, %s6, %s4
  $region1: #{generator_forward.7} parent=0
    #allocation2 [shape = 'u8[65536]{0}', space=vmem, size = 0x10000, scoped, tag = 'input window, operand 0']
    #allocation3 [shape = 'u8[2048]{0}', space=vmem, size = 0x800, scoped, tag = 'input window, operand 1']
    #allocation4 [shape = 's32[2]{0}', space=sflag, size = 0x8, scoped, tag = 'scoped memory for generator_forward.7']
    #allocation5 [shape = 'u8[2048]{0}', space=vmem, size = 0x800, scoped, tag = 'input window, operand 2']
    #allocation6 [shape = 's32[2]{0}', space=sflag, size = 0x8, scoped, tag = 'scoped memory for generator_forward.7']
    #allocation7 [shape = 'u8[65536]{0}', space=vmem, size = 0x10000, scoped, tag = 'output window, operand 0']
    %8 = vsyncpa [#allocation4], 0
    %s9 = scalar_lea.sflag [#allocation4], 1
    %10 = vsyncpa %s9, 0
    %11 = vsyncpa [#allocation6], 0
    %s12 = scalar_lea.sflag [#allocation6], 1
    %13 = vsyncpa %s12, 0
    loop: start=0, step=1, limit=6
    $region2: #{generator_forward.7} parent=1 // loop_pre_header
      _
    $region3: #{generator_forward.7} parent=1 // loop_header
      %s15 = sphi 0, %s19
      %p16 = scmp.ge.s32.totalorder %s15, 6
      %s25 = sphi 0, %s27
      %s28 = sphi 0, %s25
      %s29 = sphi 0, %s28
      %s45 = sphi 0, %s29
      %s51 = sphi 0, %s53
      %s54 = sphi 0, %s51
      %s55 = sphi 0, %s54
      %s71 = sphi 0, %s55
      %s77 = sphi 0, %s79
      %s80 = sphi 0, %s77
      %s81 = sphi 0, %s80
      %s97 = sphi 0, %s81
      %s103 = sphi 0, %s105
      %s106 = sphi 0, %s103
      %s107 = sphi 0, %s106
      %s123 = sphi 0, %s107
    $region4: #{generator_forward.7} parent=1 // loop_header_branch
      %18 = sbr.rel (%p16) target = $region8
    $region5: #{generator_forward.7} parent=1 // loop_body
      %s20 = ssub.s32 %s15, 1
      %s21 = ssub.s32 %s15, 2
      %s22 = sadd.s32 %s15, 1
      %s23 = ssub.s32 %s15, %s22
      %p24 = scmp.eq.s32.totalorder %s23, 0
      %s26 = sadd.s32 %s25, 1
      %s27 = scalar_select %p24, %s25, %s26
      %p30 = pneg %p24
      %p31 = scmp.eq.s32.totalorder %s15, 3
      %p32 = por %p30, %p31
      %p33 = scmp.ne.s32.totalorder %s25, %s28
      %p34 = scmp.eq.s32.totalorder %s15, 0
      %p35 = por %p33, %p34
      %p36 = scmp.ne.s32.totalorder %s25, %s28
      %p37 = scmp.eq.s32.totalorder %s20, 3
      %p38 = por %p36, %p37
      %p39 = scmp.ne.s32.totalorder %s28, %s29
      %p40 = scmp.eq.s32.totalorder %s20, 0
      %p41 = por %p39, %p40
      %p42 = scmp.ne.s32.totalorder %s28, %s29
      %p43 = scmp.eq.s32.totalorder %s21, 3
      %p44 = por %p42, %p43
      %p46 = scmp.ne.s32.totalorder %s29, %s45
      %p47 = scmp.eq.s32.totalorder %s21, 0
      %p48 = por %p46, %p47
      %s49 = ssub.s32 %s15, %s22
      %p50 = scmp.eq.s32.totalorder %s49, 0
      %s52 = sadd.s32 %s51, 1
      %s53 = scalar_select %p50, %s51, %s52
      %p56 = pneg %p50
      %p57 = scmp.eq.s32.totalorder %s15, 3
      %p58 = por %p56, %p57
      %p59 = scmp.ne.s32.totalorder %s51, %s54
      %p60 = scmp.eq.s32.totalorder %s15, 0
      %p61 = por %p59, %p60
      %p62 = scmp.ne.s32.totalorder %s51, %s54
      %p63 = scmp.eq.s32.totalorder %s20, 3
      %p64 = por %p62, %p63
      %p65 = scmp.ne.s32.totalorder %s54, %s55
      %p66 = scmp.eq.s32.totalorder %s20, 0
      %p67 = por %p65, %p66
      %p68 = scmp.ne.s32.totalorder %s54, %s55
      %p69 = scmp.eq.s32.totalorder %s21, 3
      %p70 = por %p68, %p69
      %p72 = scmp.ne.s32.totalorder %s55, %s71
      %p73 = scmp.eq.s32.totalorder %s21, 0
      %p74 = por %p72, %p73
      %s75 = ssub.s32 %s15, %s22
      %p76 = scmp.eq.s32.totalorder %s75, 0
      %s78 = sadd.s32 %s77, 1
      %s79 = scalar_select %p76, %s77, %s78
      %p82 = pneg %p76
      %p83 = scmp.eq.s32.totalorder %s15, 3
      %p84 = por %p82, %p83
      %p85 = scmp.ne.s32.totalorder %s77, %s80
      %p86 = scmp.eq.s32.totalorder %s15, 0
      %p87 = por %p85, %p86
      %p88 = scmp.ne.s32.totalorder %s77, %s80
      %p89 = scmp.eq.s32.totalorder %s20, 3
      %p90 = por %p88, %p89
      %p91 = scmp.ne.s32.totalorder %s80, %s81
      %p92 = scmp.eq.s32.totalorder %s20, 0
      %p93 = por %p91, %p92
      %p94 = scmp.ne.s32.totalorder %s80, %s81
      %p95 = scmp.eq.s32.totalorder %s21, 3
      %p96 = por %p94, %p95
      %p98 = scmp.ne.s32.totalorder %s81, %s97
      %p99 = scmp.eq.s32.totalorder %s21, 0
      %p100 = por %p98, %p99
      %s101 = ssub.s32 %s15, %s22
      %p102 = scmp.eq.s32.totalorder %s101, 0
      %s104 = sadd.s32 %s103, 1
      %s105 = scalar_select %p102, %s103, %s104
      %p108 = pneg %p102
      %p109 = scmp.eq.s32.totalorder %s15, 3
      %p110 = por %p108, %p109
      %p111 = scmp.ne.s32.totalorder %s103, %s106
      %p112 = scmp.eq.s32.totalorder %s15, 0
      %p113 = por %p111, %p112
      %p114 = scmp.ne.s32.totalorder %s103, %s106
      %p115 = scmp.eq.s32.totalorder %s20, 3
      %p116 = por %p114, %p115
      %p117 = scmp.ne.s32.totalorder %s106, %s107
      %p118 = scmp.eq.s32.totalorder %s20, 0
      %p119 = por %p117, %p118
      %p120 = scmp.ne.s32.totalorder %s106, %s107
      %p121 = scmp.eq.s32.totalorder %s21, 3
      %p122 = por %p120, %p121
      %p124 = scmp.ne.s32.totalorder %s107, %s123
      %p125 = scmp.eq.s32.totalorder %s21, 0
      %p126 = por %p124, %p125
      %p127 = scmp.le.s32.totalorder 1, %s15
      %p128 = scmp.lt.s32.totalorder %s15, 5
      %p129 = pnand %p127, %p128
      %p130 = pneg %p129
      // Predicated region
      $region9: #{generator_forward.7} parent=5 // pred_check
        _
      $region10: #{generator_forward.7} parent=5 // pred_check_branch
        %132 = sbr.rel (%p129) target = $region12
      $region11: #{generator_forward.7} parent=5 // pred_region
        %s133 = ssub.s32 %s15, 1
      $region12: #{generator_forward.7} parent=5 // pred_fallthru
        _
      %p134 = scmp.lt.s32.totalorder %s15, 4
      // Predicated region
      $region13: #{generator_forward.7} parent=5 // pred_check
        %p135 = pneg %p134
      $region14: #{generator_forward.7} parent=5 // pred_check_branch
        %137 = sbr.rel (%p135) target = $region16
      $region15: #{generator_forward.7} parent=5 // pred_region
        // Predicated region
        $region17: #{generator_forward.7} parent=15 // pred_check
          %p138 = pneg %p35
        $region18: #{generator_forward.7} parent=15 // pred_check_branch
          %140 = sbr.rel (%p138) target = $region20
        $region19: #{generator_forward.7} parent=15 // pred_region
          %s141 = sand.u32 %s25, 1
          %s142 = sand.u32 %s25, 1
          %s143 = smul.addr %s142, 64
          %s144 = scalar_lea.vmem [#allocation2], %s143
          %s145 = smul.u32 2, %s15
          %s146 = smul.addr %s145, 8
          %s147 = scalar_lea.vmem %s0, %s146
          // Predicated region
          $region21: #{generator_forward.7} parent=19 // pred_check
            _
          $region22: #{generator_forward.7} parent=19 // pred_check_branch
            %149 = sbr.rel (0) target = $region24
          $region23: #{generator_forward.7} parent=19 // pred_region
            // Predicated region
            $region25: #{generator_forward.7} parent=23 // pred_check
              _
            $region26: #{generator_forward.7} parent=23 // pred_check_branch
              %151 = sbr.rel (0) target = $region28
            $region27: #{generator_forward.7} parent=23 // pred_region
              loop: start=0, step=1, limit=1
              $region29: #{generator_forward.7} parent=27 // loop_pre_header
                _
              $region30: #{generator_forward.7} parent=27 // loop_header
                %s153 = sphi 0, %s157
                %p154 = scmp.ge.s32.totalorder %s153, 1
                %s158 = sphi %s147, %s147
                %s159 = sphi %s144, %s144
              $region31: #{generator_forward.7} parent=27 // loop_header_branch
                %156 = sbr.rel (%p154) target = $region35
              $region32: #{generator_forward.7} parent=27 // loop_body
                %v160 = vld [vmem:[%s158] sm:$0xff]
                %161 = vst [vmem:[%s159] sm:$0xff] %v160
                %v162 = vld [vmem:[%s158 + $0x8] sm:$0xff]
                %163 = vst [vmem:[%s159 + $0x8] sm:$0xff] %v162
                %v164 = vld [vmem:[%s158 + $0x40] sm:$0xff]
                %165 = vst [vmem:[%s159 + $0x10] sm:$0xff] %v164
                %v166 = vld [vmem:[%s158 + $0x48] sm:$0xff]
                %167 = vst [vmem:[%s159 + $0x18] sm:$0xff] %v166
                %v168 = vld [vmem:[%s158 + $0x80] sm:$0xff]
                %169 = vst [vmem:[%s159 + $0x20] sm:$0xff] %v168
                %v170 = vld [vmem:[%s158 + $0x88] sm:$0xff]
                %171 = vst [vmem:[%s159 + $0x28] sm:$0xff] %v170
                %v172 = vld [vmem:[%s158 + $0xc0] sm:$0xff]
                %173 = vst [vmem:[%s159 + $0x30] sm:$0xff] %v172
                %v174 = vld [vmem:[%s158 + $0xc8] sm:$0xff]
                %175 = vst [vmem:[%s159 + $0x38] sm:$0xff] %v174
              $region33: #{generator_forward.7} parent=27 // loop_footer
                %s157 = sadd.s32 1, %s153
              $region34: #{generator_forward.7} parent=27 // loop_footer_branch
                %152 = sbr.rel target = $region30
              $region35: #{generator_forward.7} parent=27 // loop_exit
                _
            $region28: #{generator_forward.7} parent=23 // pred_fallthru
              _
            // Predicated region
            $region36: #{generator_forward.7} parent=23 // pred_check
              _
            $region37: #{generator_forward.7} parent=23 // pred_check_branch
              %177 = sbr.rel target = $region39
            $region38: #{generator_forward.7} parent=23 // pred_region
              _
            $region39: #{generator_forward.7} parent=23 // pred_fallthru
              _
          $region24: #{generator_forward.7} parent=19 // pred_fallthru
            _
          %178 = vnop
        $region20: #{generator_forward.7} parent=15 // pred_fallthru
          _
        // Predicated region
        $region40: #{generator_forward.7} parent=15 // pred_check
          %p179 = pneg %p61
        $region41: #{generator_forward.7} parent=15 // pred_check_branch
          %181 = sbr.rel (%p179) target = $region43
        $region42: #{generator_forward.7} parent=15 // pred_region
          %s182 = sand.u32 %s51, 1
          %s183 = scalar_lea.sflag [#allocation4], %s182
          %s184 = sand.u32 %s51, 1
          %s185 = smul.addr %s184, 2
          %s186 = scalar_lea.vmem [#allocation3], %s185
          %s187 = smul.u32 2, %s15
          %189 = vsyncadd %s183, 0
          %s190 = scalar_lea.hbm %s1, %s187
          %s192 = sshll.u32 %s190, 4
          %s193 = int_to_ptr.hbm [resolvable:$true] %s192
          %s194 = sshll.u32 %s186, 4
          %s195 = int_to_ptr.vmem [resolvable:$true] %s194
          %197 = dma.hbm_to_vmem [thread:$0]  %s193, 32, %s195, %s183
        $region43: #{generator_forward.7} parent=15 // pred_fallthru
          _
        // Predicated region
        $region44: #{generator_forward.7} parent=15 // pred_check
          %p198 = pneg %p87
        $region45: #{generator_forward.7} parent=15 // pred_check_branch
          %200 = sbr.rel (%p198) target = $region47
        $region46: #{generator_forward.7} parent=15 // pred_region
          %s201 = sand.u32 %s77, 1
          %s202 = scalar_lea.sflag [#allocation6], %s201
          %s203 = sand.u32 %s77, 1
          %s204 = smul.addr %s203, 2
          %s205 = scalar_lea.vmem [#allocation5], %s204
          %s206 = smul.u32 2, %s15
          %208 = vsyncadd %s202, 0
          %s209 = scalar_lea.hbm %s2, %s206
          %s211 = sshll.u32 %s209, 4
          %s212 = int_to_ptr.hbm [resolvable:$true] %s211
          %s213 = sshll.u32 %s205, 4
          %s214 = int_to_ptr.vmem [resolvable:$true] %s213
          %216 = dma.hbm_to_vmem [thread:$0]  %s212, 32, %s214, %s202
        $region47: #{generator_forward.7} parent=15 // pred_fallthru
          _
      $region16: #{generator_forward.7} parent=5 // pred_fallthru
        _
      %p217 = scmp.le.s32.totalorder 1, %s15
      %p218 = scmp.lt.s32.totalorder %s15, 5
      %p219 = pnand %p217, %p218
      %p220 = pneg %p219
      // Predicated region
      $region48: #{generator_forward.7} parent=5 // pred_check
        _
      $region49: #{generator_forward.7} parent=5 // pred_check_branch
        %222 = sbr.rel (%p219) target = $region51
      $region50: #{generator_forward.7} parent=5 // pred_region
        %s223 = ssub.s32 %s15, 1
        %s224 = sand.u32 %s28, 1
        %s225 = sand.u32 %s28, 1
        %s226 = smul.addr %s225, 64
        %s227 = scalar_lea.vmem [#allocation2], %s226
        // Predicated region
        $region52: #{generator_forward.7} parent=50 // pred_check
          %p228 = pneg %p41
        $region53: #{generator_forward.7} parent=50 // pred_check_branch
          %230 = sbr.rel (%p228) target = $region55
        $region54: #{generator_forward.7} parent=50 // pred_region
          _
        $region55: #{generator_forward.7} parent=50 // pred_fallthru
          _
        %s231 = sand.u32 %s54, 1
        %s232 = scalar_lea.sflag [#allocation4], %s231
        %s233 = sand.u32 %s54, 1
        %s234 = smul.addr %s233, 2
        %s235 = scalar_lea.vmem [#allocation3], %s234
        // Predicated region
        $region56: #{generator_forward.7} parent=50 // pred_check
          %p236 = pneg %p67
        $region57: #{generator_forward.7} parent=50 // pred_check_branch
          %238 = sbr.rel (%p236) target = $region59
        $region58: #{generator_forward.7} parent=50 // pred_region
          %240 = dma.done %s232, 32
        $region59: #{generator_forward.7} parent=50 // pred_fallthru
          _
        %s241 = sand.u32 %s80, 1
        %s242 = scalar_lea.sflag [#allocation6], %s241
        %s243 = sand.u32 %s80, 1
        %s244 = smul.addr %s243, 2
        %s245 = scalar_lea.vmem [#allocation5], %s244
        // Predicated region
        $region60: #{generator_forward.7} parent=50 // pred_check
          %p246 = pneg %p93
        $region61: #{generator_forward.7} parent=50 // pred_check_branch
          %248 = sbr.rel (%p246) target = $region63
        $region62: #{generator_forward.7} parent=50 // pred_region
          %250 = dma.done %s242, 32
        $region63: #{generator_forward.7} parent=50 // pred_fallthru
          _
        %s251 = sand.u32 %s28, 1
        %s252 = sand.u32 %s28, 1
        %s253 = smul.addr %s252, 64
        %s254 = scalar_lea.vmem [#allocation2], %s253
        %p255 = pneg %p41
        %p256 = pneg %p38
        %s257 = sand.u32 %s54, 1
        %s258 = scalar_lea.sflag [#allocation4], %s257
        %s259 = sand.u32 %s54, 1
        %s260 = smul.addr %s259, 2
        %s261 = scalar_lea.vmem [#allocation3], %s260
        %p262 = pneg %p67
        %p263 = pneg %p64
        %s264 = sand.u32 %s80, 1
        %s265 = scalar_lea.sflag [#allocation6], %s264
        %s266 = sand.u32 %s80, 1
        %s267 = smul.addr %s266, 2
        %s268 = scalar_lea.vmem [#allocation5], %s267
        %p269 = pneg %p93
        %p270 = pneg %p90
        %p271 = pneg %p119
        %p272 = pneg %p116
        %s273 = sand.u32 %s106, 1
        %s274 = sand.u32 %s106, 1
        %s275 = smul.addr %s274, 64
        %s276 = scalar_lea.vmem [#allocation7], %s275
        %s277 = smul.u32 2, %s20
        %s278 = smul.u32 2, %s20
        %s279 = smul.u32 2, %s20
        %s280 = smul.u32 2, %s20
        %v281 = vld [vmem:[%s227] sm:$0xff]
        %v282 = vld [vmem:[%s227 + $0x8] sm:$0xff]
        %v283 = vld [vmem:[%s227 + $0x10] sm:$0xff]
        %v284 = vld [vmem:[%s227 + $0x18] sm:$0xff]
        %v285 = vld [vmem:[%s227 + $0x20] sm:$0xff]
        %v286 = vld [vmem:[%s227 + $0x28] sm:$0xff]
        %v287 = vld [vmem:[%s227 + $0x30] sm:$0xff]
        %v288 = vld [vmem:[%s227 + $0x38] sm:$0xff]
        %v289 = vadd.f32 %v281, %v283
        %v290 = vadd.f32 %v289, %v285
        %v291 = vadd.f32 %v290, %v287
        %v292 = vrot.slane %v291, 4
        %v293 = vadd.f32 %v291, %v292
        %v294 = vrot.slane %v293, 2
        %v295 = vadd.f32 %v293, %v294
        %v296 = vrot.slane %v295, 1
        %v297 = vadd.f32 %v295, %v296
        %v298 = vadd.f32 %v282, %v284
        %v299 = vadd.f32 %v298, %v286
        %v300 = vadd.f32 %v299, %v288
        %v301 = vrot.slane %v300, 4
        %v302 = vadd.f32 %v300, %v301
        %v303 = vrot.slane %v302, 2
        %v304 = vadd.f32 %v302, %v303
        %v305 = vrot.slane %v304, 1
        %v306 = vadd.f32 %v304, %v305
        %v307 = vrcp.pop 32.0
        %v308 = vmul.f32 32.0, %v307
        %v309 = vsub.f32 1.0, %v308
        %v310 = vmul.f32 %v307, %v309
        %v311 = vadd.f32 %v307, %v310
        %vm312 = vweird.f32 %v307
        %v313 = vsel %vm312, %v307, %v311
        %v314 = vmul.f32 %v297, %v313
        %v315 = vmul.f32 %v306, %v313
        %v316 = vsub.f32 %v281, %v314
        %v317 = vsub.f32 %v282, %v315
        %v318 = vsub.f32 %v283, %v314
        %v319 = vsub.f32 %v284, %v315
        %v320 = vsub.f32 %v285, %v314
        %v321 = vsub.f32 %v286, %v315
        %v322 = vsub.f32 %v287, %v314
        %v323 = vsub.f32 %v288, %v315
        %v324 = vmul.f32 %v316, %v316
        %v325 = vmul.f32 %v317, %v317
        %v326 = vmul.f32 %v318, %v318
        %v327 = vmul.f32 %v319, %v319
        %v328 = vmul.f32 %v320, %v320
        %v329 = vmul.f32 %v321, %v321
        %v330 = vmul.f32 %v322, %v322
        %v331 = vmul.f32 %v323, %v323
        %v332 = vadd.f32 %v324, %v326
        %v333 = vadd.f32 %v332, %v328
        %v334 = vadd.f32 %v333, %v330
        %v335 = vrot.slane %v334, 4
        %v336 = vadd.f32 %v334, %v335
        %v337 = vrot.slane %v336, 2
        %v338 = vadd.f32 %v336, %v337
        %v339 = vrot.slane %v338, 1
        %v340 = vadd.f32 %v338, %v339
        %v341 = vadd.f32 %v325, %v327
        %v342 = vadd.f32 %v341, %v329
        %v343 = vadd.f32 %v342, %v331
        %v344 = vrot.slane %v343, 4
        %v345 = vadd.f32 %v343, %v344
        %v346 = vrot.slane %v345, 2
        %v347 = vadd.f32 %v345, %v346
        %v348 = vrot.slane %v347, 1
        %v349 = vadd.f32 %v347, %v348
        %v350 = vmul.f32 %v340, %v313
        %v351 = vmul.f32 %v349, %v313
        %v352 = vadd.f32 %v350, 1e-05
        %v353 = vadd.f32 %v351, 1e-05
        %v354 = vrsqrt.pop %v352
        %v355 = vmul.f32 %v354, %v352
        %v356 = vmul.f32 %v355, %v354
        %v357 = vmul.f32 0.5, %v356
        %v358 = vsub.f32 1.5, %v357
        %v359 = vmul.f32 %v354, %v358
        %vm360 = vweird.f32 %v352
        %vm361 = vweird.f32 %v354
        %vm362 = vmor %vm360, %vm361
        %v363 = vsel %vm362, %v354, %v359
        %v364 = vrsqrt.pop %v353
        %v365 = vmul.f32 %v364, %v353
        %v366 = vmul.f32 %v365, %v364
        %v367 = vmul.f32 0.5, %v366
        %v368 = vsub.f32 1.5, %v367
        %v369 = vmul.f32 %v364, %v368
        %vm370 = vweird.f32 %v353
        %vm371 = vweird.f32 %v364
        %vm372 = vmor %vm370, %vm371
        %v373 = vsel %vm372, %v364, %v369
        %v374 = vmul.f32 %v316, %v363
        %v375 = vmul.f32 %v317, %v373
        %v376 = vmul.f32 %v318, %v363
        %v377 = vmul.f32 %v319, %v373
        %v378 = vmul.f32 %v320, %v363
        %v379 = vmul.f32 %v321, %v373
        %v380 = vmul.f32 %v322, %v363
        %v381 = vmul.f32 %v323, %v373
        %v382 = vld [vmem:[%s235] sm:$0x3]
        %v384 = vperm.slane %v382, 0
        %v385 = vperm.slane %v382, 1
        %v388 = vmul.f32 %v374, %v384
        %v389 = vmul.f32 %v375, %v385
        %v390 = vmul.f32 %v376, %v384
        %v391 = vmul.f32 %v377, %v385
        %v392 = vmul.f32 %v378, %v384
        %v393 = vmul.f32 %v379, %v385
        %v394 = vmul.f32 %v380, %v384
        %v395 = vmul.f32 %v381, %v385
        %v396 = vld [vmem:[%s245] sm:$0x3]
        %v398 = vperm.slane %v396, 0
        %v399 = vperm.slane %v396, 1
        %v402 = vadd.f32 %v388, %v398
        %v403 = vadd.f32 %v389, %v399
        %v404 = vadd.f32 %v390, %v398
        %v405 = vadd.f32 %v391, %v399
        %v406 = vadd.f32 %v392, %v398
        %v407 = vadd.f32 %v393, %v399
        %v408 = vadd.f32 %v394, %v398
        %v409 = vadd.f32 %v395, %v399
        %vm410 = vcmp.ge.f32.partialorder %v402, 0.0
        %vm411 = vcmp.ge.f32.partialorder %v403, 0.0
        %vm412 = vcmp.ge.f32.partialorder %v404, 0.0
        %vm413 = vcmp.ge.f32.partialorder %v405, 0.0
        %vm414 = vcmp.ge.f32.partialorder %v406, 0.0
        %vm415 = vcmp.ge.f32.partialorder %v407, 0.0
        %vm416 = vcmp.ge.f32.partialorder %v408, 0.0
        %vm417 = vcmp.ge.f32.partialorder %v409, 0.0
        %v418 = vmul.f32 %v402, 0.01
        %v419 = vmul.f32 %v403, 0.01
        %v420 = vmul.f32 %v404, 0.01
        %v421 = vmul.f32 %v405, 0.01
        %v422 = vmul.f32 %v406, 0.01
        %v423 = vmul.f32 %v407, 0.01
        %v424 = vmul.f32 %v408, 0.01
        %v425 = vmul.f32 %v409, 0.01
        %v426 = vsel %vm410, %v402, %v418
        %v427 = vsel %vm411, %v403, %v419
        %v428 = vsel %vm412, %v404, %v420
        %v429 = vsel %vm413, %v405, %v421
        %v430 = vsel %vm414, %v406, %v422
        %v431 = vsel %vm415, %v407, %v423
        %v432 = vsel %vm416, %v408, %v424
        %v433 = vsel %vm417, %v409, %v425
        %434 = vst [vmem:[%s276] sm:$0xff] %v426
        %435 = vst [vmem:[%s276 + $0x8] sm:$0xff] %v427
        %436 = vst [vmem:[%s276 + $0x10] sm:$0xff] %v428
        %437 = vst [vmem:[%s276 + $0x18] sm:$0xff] %v429
        %438 = vst [vmem:[%s276 + $0x20] sm:$0xff] %v430
        %439 = vst [vmem:[%s276 + $0x28] sm:$0xff] %v431
        %440 = vst [vmem:[%s276 + $0x30] sm:$0xff] %v432
        %441 = vst [vmem:[%s276 + $0x38] sm:$0xff] %v433
        %s442 = sand.u32 %s106, 1
        %s443 = sand.u32 %s106, 1
        %s444 = smul.addr %s443, 64
        %s445 = scalar_lea.vmem [#allocation7], %s444
        // Predicated region
        $region64: #{generator_forward.7} parent=50 // pred_check
          %p446 = pneg %p116
        $region65: #{generator_forward.7} parent=50 // pred_check_branch
          %448 = sbr.rel (%p446) target = $region67
        $region66: #{generator_forward.7} parent=50 // pred_region
          %s449 = smul.u32 2, %s20
          %s450 = smul.addr %s449, 8
          %s451 = scalar_lea.vmem %s3, %s450
          // Predicated region
          $region68: #{generator_forward.7} parent=66 // pred_check
            _
          $region69: #{generator_forward.7} parent=66 // pred_check_branch
            %453 = sbr.rel (0) target = $region71
          $region70: #{generator_forward.7} parent=66 // pred_region
            // Predicated region
            $region72: #{generator_forward.7} parent=70 // pred_check
              _
            $region73: #{generator_forward.7} parent=70 // pred_check_branch
              %455 = sbr.rel (0) target = $region75
            $region74: #{generator_forward.7} parent=70 // pred_region
              loop: start=0, step=1, limit=1
              $region76: #{generator_forward.7} parent=74 // loop_pre_header
                _
              $region77: #{generator_forward.7} parent=74 // loop_header
                %s457 = sphi 0, %s461
                %p458 = scmp.ge.s32.totalorder %s457, 1
                %s462 = sphi %s445, %s445
                %s463 = sphi %s451, %s451
              $region78: #{generator_forward.7} parent=74 // loop_header_branch
                %460 = sbr.rel (%p458) target = $region82
              $region79: #{generator_forward.7} parent=74 // loop_body
                %v464 = vld [vmem:[%s462] sm:$0xff]
                %465 = vst [vmem:[%s463] sm:$0xff] %v464
                %v466 = vld [vmem:[%s462 + $0x8] sm:$0xff]
                %467 = vst [vmem:[%s463 + $0x8] sm:$0xff] %v466
                %v468 = vld [vmem:[%s462 + $0x10] sm:$0xff]
                %469 = vst [vmem:[%s463 + $0x40] sm:$0xff] %v468
                %v470 = vld [vmem:[%s462 + $0x18] sm:$0xff]
                %471 = vst [vmem:[%s463 + $0x48] sm:$0xff] %v470
                %v472 = vld [vmem:[%s462 + $0x20] sm:$0xff]
                %473 = vst [vmem:[%s463 + $0x80] sm:$0xff] %v472
                %v474 = vld [vmem:[%s462 + $0x28] sm:$0xff]
                %475 = vst [vmem:[%s463 + $0x88] sm:$0xff] %v474
                %v476 = vld [vmem:[%s462 + $0x30] sm:$0xff]
                %477 = vst [vmem:[%s463 + $0xc0] sm:$0xff] %v476
                %v478 = vld [vmem:[%s462 + $0x38] sm:$0xff]
                %479 = vst [vmem:[%s463 + $0xc8] sm:$0xff] %v478
              $region80: #{generator_forward.7} parent=74 // loop_footer
                %s461 = sadd.s32 1, %s457
              $region81: #{generator_forward.7} parent=74 // loop_footer_branch
                %456 = sbr.rel target = $region77
              $region82: #{generator_forward.7} parent=74 // loop_exit
                _
            $region75: #{generator_forward.7} parent=70 // pred_fallthru
              _
            // Predicated region
            $region83: #{generator_forward.7} parent=70 // pred_check
              _
            $region84: #{generator_forward.7} parent=70 // pred_check_branch
              %481 = sbr.rel target = $region86
            $region85: #{generator_forward.7} parent=70 // pred_region
              _
            $region86: #{generator_forward.7} parent=70 // pred_fallthru
              _
          $region71: #{generator_forward.7} parent=66 // pred_fallthru
            _
          %482 = vnop
        $region67: #{generator_forward.7} parent=50 // pred_fallthru
          _
      $region51: #{generator_forward.7} parent=5 // pred_fallthru
        _
      %p483 = scmp.le.s32.totalorder 2, %s15
      // Predicated region
      $region87: #{generator_forward.7} parent=5 // pred_check
        %p484 = pneg %p483
      $region88: #{generator_forward.7} parent=5 // pred_check_branch
        %486 = sbr.rel (%p484) target = $region90
      $region89: #{generator_forward.7} parent=5 // pred_region
        %s487 = ssub.s32 %s15, 2
        // Predicated region
        $region91: #{generator_forward.7} parent=89 // pred_check
          %p488 = pneg %p122
        $region92: #{generator_forward.7} parent=89 // pred_check_branch
          %490 = sbr.rel (%p488) target = $region94
        $region93: #{generator_forward.7} parent=89 // pred_region
          %s491 = sand.u32 %s107, 1
          %s492 = sand.u32 %s107, 1
          %s493 = smul.addr %s492, 64
          %s494 = scalar_lea.vmem [#allocation7], %s493
        $region94: #{generator_forward.7} parent=89 // pred_fallthru
          _
      $region90: #{generator_forward.7} parent=5 // pred_fallthru
        _
    $region6: #{generator_forward.7} parent=1 // loop_footer
      %s19 = sadd.s32 1, %s15
    $region7: #{generator_forward.7} parent=1 // loop_footer_branch
      %14 = sbr.rel target = $region3
    $region8: #{generator_forward.7} parent=1 // loop_exit
      _
    %495 = vsyncpa [#allocation4], 1
    %s496 = scalar_lea.sflag [#allocation4], 1
    %497 = vsyncpa %s496, 1
    %498 = vsyncpa [#allocation6], 1
    %s499 = scalar_lea.sflag [#allocation6], 1
    %500 = vsyncpa %s499, 1

// kernel: generator_forward.8
$region0: #{generator_forward.8}
  #allocation0 [shape = 'u32[]', space=smem, size = 0x4, offset = 0x4, fixed_abs, tag = 'smem constant byte address 0x4 - core index']
  #allocation1 [shape = 'u32[72,128]{1,0:T(1,128)}', space=vmem, size = 0x9000, scoped, tag = 'internal scratch']
  %s0 = inlined_call_operand.vmem [shape: bf16[32,1024], index: 0, kind: input, shape index: {}]
  %s1 = inlined_call_operand.hbm [shape: bf16[1024,8192], index: 1, kind: input, shape index: {}]
  %s2 = inlined_call_operand.vmem [shape: f32[32,8192], index: 2, kind: output, shape index: {}]
  %s3 = sld [smem:[#allocation0]]
  $region64: #{generator_forward.8} parent=0
    _
  %s5 = ssub.s32 1, %s3
  %s6 = scalar_select 0, %s5, %s3
  $region1: #{generator_forward.8} parent=0
    #allocation2 [shape = 'u8[4194304]{0}', space=vmem, size = 0x400000, scoped, tag = 'input window, operand 1']
    #allocation3 [shape = 's32[2]{0}', space=sflag, size = 0x8, scoped, tag = 'scoped memory for generator_forward.8']
    #allocation4 [shape = 'u8[262144]{0}', space=vmem, size = 0x40000, scoped, tag = 'output window, operand 0']
    %7 = vsyncpa [#allocation3], 0
    %s8 = scalar_lea.sflag [#allocation3], 1
    %9 = vsyncpa %s8, 0
    loop: start=0, step=1, limit=10
    $region2: #{generator_forward.8} parent=1 // loop_pre_header
      _
    $region3: #{generator_forward.8} parent=1 // loop_header
      %s11 = sphi 0, %s15
      %p12 = scmp.ge.s32.totalorder %s11, 10
      %s19 = sphi 0, %s19
      %s21 = sphi 0, %s19
      %s22 = sphi 0, %s21
      %s36 = sphi 0, %s22
      %s42 = sphi 0, %s44
      %s45 = sphi 0, %s42
      %s46 = sphi 0, %s45
      %s62 = sphi 0, %s46
      %s68 = sphi 0, %s70
      %s71 = sphi 0, %s68
      %s72 = sphi 0, %s71
      %s88 = sphi 0, %s72
    $region4: #{generator_forward.8} parent=1 // loop_header_branch
      %14 = sbr.rel (%p12) target = $region8
    $region5: #{generator_forward.8} parent=1 // loop_body
      %s16 = ssub.s32 %s11, 1
      %s17 = ssub.s32 %s11, 2
      %s18 = sadd.s32 %s11, 1
      %s20 = sadd.s32 %s19, 1
      %p23 = scmp.eq.s32.totalorder %s11, 7
      %p24 = scmp.ne.s32.totalorder %s19, %s21
      %p25 = scmp.eq.s32.totalorder %s11, 0
      %p26 = por %p24, %p25
      %p27 = scmp.ne.s32.totalorder %s19, %s21
      %p28 = scmp.eq.s32.totalorder %s16, 7
      %p29 = por %p27, %p28
      %p30 = scmp.ne.s32.totalorder %s21, %s22
      %p31 = scmp.eq.s32.totalorder %s16, 0
      %p32 = por %p30, %p31
      %p33 = scmp.ne.s32.totalorder %s21, %s22
      %p34 = scmp.eq.s32.totalorder %s17, 7
      %p35 = por %p33, %p34
      %p37 = scmp.ne.s32.totalorder %s22, %s36
      %p38 = scmp.eq.s32.totalorder %s17, 0
      %p39 = por %p37, %p38
      %s40 = ssub.s32 %s11, %s18
      %p41 = scmp.eq.s32.totalorder %s40, 0
      %s43 = sadd.s32 %s42, 1
      %s44 = scalar_select %p41, %s42, %s43
      %p47 = pneg %p41
      %p48 = scmp.eq.s32.totalorder %s11, 7
      %p49 = por %p47, %p48
      %p50 = scmp.ne.s32.totalorder %s42, %s45
      %p51 = scmp.eq.s32.totalorder %s11, 0
      %p52 = por %p50, %p51
      %p53 = scmp.ne.s32.totalorder %s42, %s45
      %p54 = scmp.eq.s32.totalorder %s16, 7
      %p55 = por %p53, %p54
      %p56 = scmp.ne.s32.totalorder %s45, %s46
      %p57 = scmp.eq.s32.totalorder %s16, 0
      %p58 = por %p56, %p57
      %p59 = scmp.ne.s32.totalorder %s45, %s46
      %p60 = scmp.eq.s32.totalorder %s17, 7
      %p61 = por %p59, %p60
      %p63 = scmp.ne.s32.totalorder %s46, %s62
      %p64 = scmp.eq.s32.totalorder %s17, 0
      %p65 = por %p63, %p64
      %s66 = ssub.s32 %s11, %s18
      %p67 = scmp.eq.s32.totalorder %s66, 0
      %s69 = sadd.s32 %s68, 1
      %s70 = scalar_select %p67, %s68, %s69
      %p73 = pneg %p67
      %p74 = scmp.eq.s32.totalorder %s11, 7
      %p75 = por %p73, %p74
      %p76 = scmp.ne.s32.totalorder %s68, %s71
      %p77 = scmp.eq.s32.totalorder %s11, 0
      %p78 = por %p76, %p77
      %p79 = scmp.ne.s32.totalorder %s68, %s71
      %p80 = scmp.eq.s32.totalorder %s16, 7
      %p81 = por %p79, %p80
      %p82 = scmp.ne.s32.totalorder %s71, %s72
      %p83 = scmp.eq.s32.totalorder %s16, 0
      %p84 = por %p82, %p83
      %p85 = scmp.ne.s32.totalorder %s71, %s72
      %p86 = scmp.eq.s32.totalorder %s17, 7
      %p87 = por %p85, %p86
      %p89 = scmp.ne.s32.totalorder %s72, %s88
      %p90 = scmp.eq.s32.totalorder %s17, 0
      %p91 = por %p89, %p90
      %p92 = scmp.le.s32.totalorder 1, %s11
      %p93 = scmp.lt.s32.totalorder %s11, 9
      %p94 = pnand %p92, %p93
      %p95 = pneg %p94
      // Predicated region
      $region9: #{generator_forward.8} parent=5 // pred_check
        _
      $region10: #{generator_forward.8} parent=5 // pred_check_branch
        %97 = sbr.rel (%p94) target = $region12
      $region11: #{generator_forward.8} parent=5 // pred_region
        %s98 = ssub.s32 %s11, 1
        // Predicated region
        $region13: #{generator_forward.8} parent=11 // pred_check
          %p99 = pneg %p32
        $region14: #{generator_forward.8} parent=11 // pred_check_branch
          %101 = sbr.rel (%p99) target = $region16
        $region15: #{generator_forward.8} parent=11 // pred_region
          _
        $region16: #{generator_forward.8} parent=11 // pred_fallthru
          _
      $region12: #{generator_forward.8} parent=5 // pred_fallthru
        _
      %p102 = scmp.lt.s32.totalorder %s11, 8
      // Predicated region
      $region17: #{generator_forward.8} parent=5 // pred_check
        %p103 = pneg %p102
      $region18: #{generator_forward.8} parent=5 // pred_check_branch
        %105 = sbr.rel (%p103) target = $region20
      $region19: #{generator_forward.8} parent=5 // pred_region
        // Predicated region
        $region21: #{generator_forward.8} parent=19 // pred_check
          %p106 = pneg %p52
        $region22: #{generator_forward.8} parent=19 // pred_check_branch
          %108 = sbr.rel (%p106) target = $region24
        $region23: #{generator_forward.8} parent=19 // pred_region
          %s109 = sand.u32 %s42, 1
          %s110 = scalar_lea.sflag [#allocation3], %s109
          %s111 = sand.u32 %s42, 1
          %s112 = smul.addr %s111, 4096
          %s113 = scalar_lea.vmem [#allocation2], %s112
          %s114 = smul.u32 8, %s11
          %116 = vsyncadd %s110, 0
          %s117 = smul.addr %s114, 4
          %s118 = scalar_lea.hbm %s1, %s117
          %s119 = sshll.u32 %s118, 4
          %s120 = int_to_ptr.hbm [resolvable:$true] %s119
          %s121 = sshll.u32 %s113, 4
          %s122 = int_to_ptr.vmem [resolvable:$true] %s121
          %127 = dma.hbm_to_vmem [thread:$0]  %s120, 65536, %s122, %s110, 4096, 512, 32
        $region24: #{generator_forward.8} parent=19 // pred_fallthru
          _
      $region20: #{generator_forward.8} parent=5 // pred_fallthru
        _
      %p128 = scmp.le.s32.totalorder 1, %s11
      %p129 = scmp.lt.s32.totalorder %s11, 9
      %p130 = pnand %p128, %p129
      %p131 = pneg %p130
      // Predicated region
      $region25: #{generator_forward.8} parent=5 // pred_check
        _
      $region26: #{generator_forward.8} parent=5 // pred_check_branch
        %133 = sbr.rel (%p130) target = $region28
      $region27: #{generator_forward.8} parent=5 // pred_region
        %s134 = ssub.s32 %s11, 1
        %s135 = sand.u32 %s45, 1
        %s136 = scalar_lea.sflag [#allocation3], %s135
        %s137 = sand.u32 %s45, 1
        %s138 = smul.addr %s137, 4096
        %s139 = scalar_lea.vmem [#allocation2], %s138
        // Predicated region
        $region29: #{generator_forward.8} parent=27 // pred_check
          %p140 = pneg %p58
        $region30: #{generator_forward.8} parent=27 // pred_check_branch
          %142 = sbr.rel (%p140) target = $region32
        $region31: #{generator_forward.8} parent=27 // pred_region
          %144 = dma.done %s136, 65536
        $region32: #{generator_forward.8} parent=27 // pred_fallthru
          _
        %p145 = pneg %p32
        %p146 = pneg %p29
        %s147 = sand.u32 %s45, 1
        %s148 = scalar_lea.sflag [#allocation3], %s147
        %s149 = sand.u32 %s45, 1
        %s150 = smul.addr %s149, 4096
        %s151 = scalar_lea.vmem [#allocation2], %s150
        %p152 = pneg %p58
        %p153 = pneg %p55
        %p154 = pneg %p84
        %p155 = pneg %p81
        %s156 = sand.u32 %s71, 1
        %s157 = sand.u32 %s71, 1
        %s158 = smul.addr %s157, 256
        %s159 = scalar_lea.vmem [#allocation4], %s158
        %s160 = smul.u32 8, %s16
        %s161 = smul.u32 8, %s16
        %v162 = vld [vmem:[%s0] sm:$0xff]
        %v163 = vld [vmem:[%s0 + $0x8] sm:$0xff]
        %v164 = vld [vmem:[%s0 + $0x10] sm:$0xff]
        %v165 = vld [vmem:[%s0 + $0x18] sm:$0xff]
        %v166 = vld [vmem:[%s0 + $0x20] sm:$0xff]
        %v167 = vld [vmem:[%s0 + $0x28] sm:$0xff]
        %v168 = vld [vmem:[%s0 + $0x30] sm:$0xff]
        %v169 = vld [vmem:[%s0 + $0x38] sm:$0xff]
        %v170 = vld [vmem:[%s0 + $0x40] sm:$0xff]
        %v171 = vld [vmem:[%s0 + $0x48] sm:$0xff]
        %v172 = vld [vmem:[%s0 + $0x50] sm:$0xff]
        %v173 = vld [vmem:[%s0 + $0x58] sm:$0xff]
        %v174 = vld [vmem:[%s0 + $0x60] sm:$0xff]
        %v175 = vld [vmem:[%s0 + $0x68] sm:$0xff]
        %v176 = vld [vmem:[%s0 + $0x70] sm:$0xff]
        %v177 = vld [vmem:[%s0 + $0x78] sm:$0xff]
        %v178 = vld [vmem:[%s139] sm:$0xff]
        %v179 = vld [vmem:[%s139 + $0x8] sm:$0xff]
        %v180 = vld [vmem:[%s139 + $0x10] sm:$0xff]
        %v181 = vld [vmem:[%s139 + $0x18] sm:$0xff]
        %v182 = vld [vmem:[%s139 + $0x20] sm:$0xff]
        %v183 = vld [vmem:[%s139 + $0x28] sm:$0xff]
        %v184 = vld [vmem:[%s139 + $0x30] sm:$0xff]
        %v185 = vld [vmem:[%s139 + $0x38] sm:$0xff]
        %v186 = vld [vmem:[%s139 + $0x40] sm:$0xff]
        %v187 = vld [vmem:[%s139 + $0x48] sm:$0xff]
        %v188 = vld [vmem:[%s139 + $0x50] sm:$0xff]
        %v189 = vld [vmem:[%s139 + $0x58] sm:$0xff]
        %v190 = vld [vmem:[%s139 + $0x60] sm:$0xff]
        %v191 = vld [vmem:[%s139 + $0x68] sm:$0xff]
        %v192 = vld [vmem:[%s139 + $0x70] sm:$0xff]
        %v193 = vld [vmem:[%s139 + $0x78] sm:$0xff]
        %v194 = vld [vmem:[%s139 + $0x80] sm:$0xff]
        %v195 = vld [vmem:[%s139 + $0x88] sm:$0xff]
        %v196 = vld [vmem:[%s139 + $0x90] sm:$0xff]
        %v197 = vld [vmem:[%s139 + $0x98] sm:$0xff]
        %v198 = vld [vmem:[%s139 + $0xa0] sm:$0xff]
        %v199 = vld [vmem:[%s139 + $0xa8] sm:$0xff]
        %v200 = vld [vmem:[%s139 + $0xb0] sm:$0xff]
        %v201 = vld [vmem:[%s139 + $0xb8] sm:$0xff]
        %v202 = vld [vmem:[%s139 + $0xc0] sm:$0xff]
        %v203 = vld [vmem:[%s139 + $0xc8] sm:$0xff]
        %v204 = vld [vmem:[%s139 + $0xd0] sm:$0xff]
        %v205 = vld [vmem:[%s139 + $0xd8] sm:$0xff]
        %v206 = vld [vmem:[%s139 + $0xe0] sm:$0xff]
        %v207 = vld [vmem:[%s139 + $0xe8] sm:$0xff]
        %v208 = vld [vmem:[%s139 + $0xf0] sm:$0xff]
        %v209 = vld [vmem:[%s139 + $0xf8] sm:$0xff]
        %v210 = vld [vmem:[%s139 + $0x100] sm:$0xff]
        %v211 = vld [vmem:[%s139 + $0x108] sm:$0xff]
        %v212 = vld [vmem:[%s139 + $0x110] sm:$0xff]
        %v213 = vld [vmem:[%s139 + $0x118] sm:$0xff]
        %v214 = vld [vmem:[%s139 + $0x120] sm:$0xff]
        %v215 = vld [vmem:[%s139 + $0x128] sm:$0xff]
        %v216 = vld [vmem:[%s139 + $0x130] sm:$0xff]
        %v217 = vld [vmem:[%s139 + $0x138] sm:$0xff]
        %v218 = vld [vmem:[%s139 + $0x140] sm:$0xff]
        %v219 = vld [vmem:[%s139 + $0x148] sm:$0xff]
        %v220 = vld [vmem:[%s139 + $0x150] sm:$0xff]
        %v221 = vld [vmem:[%s139 + $0x158] sm:$0xff]
        %v222 = vld [vmem:[%s139 + $0x160] sm:$0xff]
        %v223 = vld [vmem:[%s139 + $0x168] sm:$0xff]
        %v224 = vld [vmem:[%s139 + $0x170] sm:$0xff]
        %v225 = vld [vmem:[%s139 + $0x178] sm:$0xff]
        %v226 = vld [vmem:[%s139 + $0x180] sm:$0xff]
        %v227 = vld [vmem:[%s139 + $0x188] sm:$0xff]
        %v228 = vld [vmem:[%s139 + $0x190] sm:$0xff]
        %v229 = vld [vmem:[%s139 + $0x198] sm:$0xff]
        %v230 = vld [vmem:[%s139 + $0x1a0] sm:$0xff]
        %v231 = vld [vmem:[%s139 + $0x1a8] sm:$0xff]
        %v232 = vld [vmem:[%s139 + $0x1b0] sm:$0xff]
        %v233 = vld [vmem:[%s139 + $0x1b8] sm:$0xff]
        %v234 = vld [vmem:[%s139 + $0x1c0] sm:$0xff]
        %v235 = vld [vmem:[%s139 + $0x1c8] sm:$0xff]
        %v236 = vld [vmem:[%s139 + $0x1d0] sm:$0xff]
        %v237 = vld [vmem:[%s139 + $0x1d8] sm:$0xff]
        %v238 = vld [vmem:[%s139 + $0x1e0] sm:$0xff]
        %v239 = vld [vmem:[%s139 + $0x1e8] sm:$0xff]
        %v240 = vld [vmem:[%s139 + $0x1f0] sm:$0xff]
        %v241 = vld [vmem:[%s139 + $0x1f8] sm:$0xff]
        %v242 = vld [vmem:[%s139 + $0x200] sm:$0xff]
        %v243 = vld [vmem:[%s139 + $0x208] sm:$0xff]
        %v244 = vld [vmem:[%s139 + $0x210] sm:$0xff]
        %v245 = vld [vmem:[%s139 + $0x218] sm:$0xff]
        %v246 = vld [vmem:[%s139 + $0x220] sm:$0xff]
        %v247 = vld [vmem:[%s139 + $0x228] sm:$0xff]
        %v248 = vld [vmem:[%s139 + $0x230] sm:$0xff]
        %v249 = vld [vmem:[%s139 + $0x238] sm:$0xff]
        %v250 = vld [vmem:[%s139 + $0x240] sm:$0xff]
        %v251 = vld [vmem:[%s139 + $0x248] sm:$0xff]
        %v252 = vld [vmem:[%s139 + $0x250] sm:$0xff]
        %v253 = vld [vmem:[%s139 + $0x258] sm:$0xff]
        %v254 = vld [vmem:[%s139 + $0x260] sm:$0xff]
        %v255 = vld [vmem:[%s139 + $0x268] sm:$0xff]
        %v256 = vld [vmem:[%s139 + $0x270] sm:$0xff]
        %v257 = vld [vmem:[%s139 + $0x278] sm:$0xff]
        %v258 = vld [vmem:[%s139 + $0x280] sm:$0xff]
        %v259 = vld [vmem:[%s139 + $0x288] sm:$0xff]
        %v260 = vld [vmem:[%s139 + $0x290] sm:$0xff]
        %v261 = vld [vmem:[%s139 + $0x298] sm:$0xff]
        %v262 = vld [vmem:[%s139 + $0x2a0] sm:$0xff]
        %v263 = vld [vmem:[%s139 + $0x2a8] sm:$0xff]
        %v264 = vld [vmem:[%s139 + $0x2b0] sm:$0xff]
        %v265 = vld [vmem:[%s139 + $0x2b8] sm:$0xff]
        %v266 = vld [vmem:[%s139 + $0x2c0] sm:$0xff]
        %v267 = vld [vmem:[%s139 + $0x2c8] sm:$0xff]
        %v268 = vld [vmem:[%s139 + $0x2d0] sm:$0xff]
        %v269 = vld [vmem:[%s139 + $0x2d8] sm:$0xff]
        %v270 = vld [vmem:[%s139 + $0x2e0] sm:$0xff]
        %v271 = vld [vmem:[%s139 + $0x2e8] sm:$0xff]
        %v272 = vld [vmem:[%s139 + $0x2f0] sm:$0xff]
        %v273 = vld [vmem:[%s139 + $0x2f8] sm:$0xff]
        %v274 = vld [vmem:[%s139 + $0x300] sm:$0xff]
        %v275 = vld [vmem:[%s139 + $0x308] sm:$0xff]
        %v276 = vld [vmem:[%s139 + $0x310] sm:$0xff]
        %v277 = vld [vmem:[%s139 + $0x318] sm:$0xff]
        %v278 = vld [vmem:[%s139 + $0x320] sm:$0xff]
        %v279 = vld [vmem:[%s139 + $0x328] sm:$0xff]
        %v280 = vld [vmem:[%s139 + $0x330] sm:$0xff]
        %v281 = vld [vmem:[%s139 + $0x338] sm:$0xff]
        %v282 = vld [vmem:[%s139 + $0x340] sm:$0xff]
        %v283 = vld [vmem:[%s139 + $0x348] sm:$0xff]
        %v284 = vld [vmem:[%s139 + $0x350] sm:$0xff]
        %v285 = vld [vmem:[%s139 + $0x358] sm:$0xff]
        %v286 = vld [vmem:[%s139 + $0x360] sm:$0xff]
        %v287 = vld [vmem:[%s139 + $0x368] sm:$0xff]
        %v288 = vld [vmem:[%s139 + $0x370] sm:$0xff]
        %v289 = vld [vmem:[%s139 + $0x378] sm:$0xff]
        %v290 = vld [vmem:[%s139 + $0x380] sm:$0xff]
        %v291 = vld [vmem:[%s139 + $0x388] sm:$0xff]
        %v292 = vld [vmem:[%s139 + $0x390] sm:$0xff]
        %v293 = vld [vmem:[%s139 + $0x398] sm:$0xff]
        %v294 = vld [vmem:[%s139 + $0x3a0] sm:$0xff]
        %v295 = vld [vmem:[%s139 + $0x3a8] sm:$0xff]
        %v296 = vld [vmem:[%s139 + $0x3b0] sm:$0xff]
        %v297 = vld [vmem:[%s139 + $0x3b8] sm:$0xff]
        %v298 = vld [vmem:[%s139 + $0x3c0] sm:$0xff]
        %v299 = vld [vmem:[%s139 + $0x3c8] sm:$0xff]
        %v300 = vld [vmem:[%s139 + $0x3d0] sm:$0xff]
        %v301 = vld [vmem:[%s139 + $0x3d8] sm:$0xff]
        %v302 = vld [vmem:[%s139 + $0x3e0] sm:$0xff]
        %v303 = vld [vmem:[%s139 + $0x3e8] sm:$0xff]
        %v304 = vld [vmem:[%s139 + $0x3f0] sm:$0xff]
        %v305 = vld [vmem:[%s139 + $0x3f8] sm:$0xff]
        %v306 = vld [vmem:[%s139 + $0x400] sm:$0xff]
        %v307 = vld [vmem:[%s139 + $0x408] sm:$0xff]
        %v308 = vld [vmem:[%s139 + $0x410] sm:$0xff]
        %v309 = vld [vmem:[%s139 + $0x418] sm:$0xff]
        %v310 = vld [vmem:[%s139 + $0x420] sm:$0xff]
        %v311 = vld [vmem:[%s139 + $0x428] sm:$0xff]
        %v312 = vld [vmem:[%s139 + $0x430] sm:$0xff]
        %v313 = vld [vmem:[%s139 + $0x438] sm:$0xff]
        %v314 = vld [vmem:[%s139 + $0x440] sm:$0xff]
        %v315 = vld [vmem:[%s139 + $0x448] sm:$0xff]
        %v316 = vld [vmem:[%s139 + $0x450] sm:$0xff]
        %v317 = vld [vmem:[%s139 + $0x458] sm:$0xff]
        %v318 = vld [vmem:[%s139 + $0x460] sm:$0xff]
        %v319 = vld [vmem:[%s139 + $0x468] sm:$0xff]
        %v320 = vld [vmem:[%s139 + $0x470] sm:$0xff]
        %v321 = vld [vmem:[%s139 + $0x478] sm:$0xff]
        %v322 = vld [vmem:[%s139 + $0x480] sm:$0xff]
        %v323 = vld [vmem:[%s139 + $0x488] sm:$0xff]
        %v324 = vld [vmem:[%s139 + $0x490] sm:$0xff]
        %v325 = vld [vmem:[%s139 + $0x498] sm:$0xff]
        %v326 = vld [vmem:[%s139 + $0x4a0] sm:$0xff]
        %v327 = vld [vmem:[%s139 + $0x4a8] sm:$0xff]
        %v328 = vld [vmem:[%s139 + $0x4b0] sm:$0xff]
        %v329 = vld [vmem:[%s139 + $0x4b8] sm:$0xff]
        %v330 = vld [vmem:[%s139 + $0x4c0] sm:$0xff]
        %v331 = vld [vmem:[%s139 + $0x4c8] sm:$0xff]
        %v332 = vld [vmem:[%s139 + $0x4d0] sm:$0xff]
        %v333 = vld [vmem:[%s139 + $0x4d8] sm:$0xff]
        %v334 = vld [vmem:[%s139 + $0x4e0] sm:$0xff]
        %v335 = vld [vmem:[%s139 + $0x4e8] sm:$0xff]
        %v336 = vld [vmem:[%s139 + $0x4f0] sm:$0xff]
        %v337 = vld [vmem:[%s139 + $0x4f8] sm:$0xff]
        %v338 = vld [vmem:[%s139 + $0x500] sm:$0xff]
        %v339 = vld [vmem:[%s139 + $0x508] sm:$0xff]
        %v340 = vld [vmem:[%s139 + $0x510] sm:$0xff]
        %v341 = vld [vmem:[%s139 + $0x518] sm:$0xff]
        %v342 = vld [vmem:[%s139 + $0x520] sm:$0xff]
        %v343 = vld [vmem:[%s139 + $0x528] sm:$0xff]
        %v344 = vld [vmem:[%s139 + $0x530] sm:$0xff]
        %v345 = vld [vmem:[%s139 + $0x538] sm:$0xff]
        %v346 = vld [vmem:[%s139 + $0x540] sm:$0xff]
        %v347 = vld [vmem:[%s139 + $0x548] sm:$0xff]
        %v348 = vld [vmem:[%s139 + $0x550] sm:$0xff]
        %v349 = vld [vmem:[%s139 + $0x558] sm:$0xff]
        %v350 = vld [vmem:[%s139 + $0x560] sm:$0xff]
        %v351 = vld [vmem:[%s139 + $0x568] sm:$0xff]
        %v352 = vld [vmem:[%s139 + $0x570] sm:$0xff]
        %v353 = vld [vmem:[%s139 + $0x578] sm:$0xff]
        %v354 = vld [vmem:[%s139 + $0x580] sm:$0xff]
        %v355 = vld [vmem:[%s139 + $0x588] sm:$0xff]
        %v356 = vld [vmem:[%s139 + $0x590] sm:$0xff]
        %v357 = vld [vmem:[%s139 + $0x598] sm:$0xff]
        %v358 = vld [vmem:[%s139 + $0x5a0] sm:$0xff]
        %v359 = vld [vmem:[%s139 + $0x5a8] sm:$0xff]
        %v360 = vld [vmem:[%s139 + $0x5b0] sm:$0xff]
        %v361 = vld [vmem:[%s139 + $0x5b8] sm:$0xff]
        %v362 = vld [vmem:[%s139 + $0x5c0] sm:$0xff]
        %v363 = vld [vmem:[%s139 + $0x5c8] sm:$0xff]
        %v364 = vld [vmem:[%s139 + $0x5d0] sm:$0xff]
        %v365 = vld [vmem:[%s139 + $0x5d8] sm:$0xff]
        %v366 = vld [vmem:[%s139 + $0x5e0] sm:$0xff]
        %v367 = vld [vmem:[%s139 + $0x5e8] sm:$0xff]
        %v368 = vld [vmem:[%s139 + $0x5f0] sm:$0xff]
        %v369 = vld [vmem:[%s139 + $0x5f8] sm:$0xff]
        %v370 = vld [vmem:[%s139 + $0x600] sm:$0xff]
        %v371 = vld [vmem:[%s139 + $0x608] sm:$0xff]
        %v372 = vld [vmem:[%s139 + $0x610] sm:$0xff]
        %v373 = vld [vmem:[%s139 + $0x618] sm:$0xff]
        %v374 = vld [vmem:[%s139 + $0x620] sm:$0xff]
        %v375 = vld [vmem:[%s139 + $0x628] sm:$0xff]
        %v376 = vld [vmem:[%s139 + $0x630] sm:$0xff]
        %v377 = vld [vmem:[%s139 + $0x638] sm:$0xff]
        %v378 = vld [vmem:[%s139 + $0x640] sm:$0xff]
        %v379 = vld [vmem:[%s139 + $0x648] sm:$0xff]
        %v380 = vld [vmem:[%s139 + $0x650] sm:$0xff]
        %v381 = vld [vmem:[%s139 + $0x658] sm:$0xff]
        %v382 = vld [vmem:[%s139 + $0x660] sm:$0xff]
        %v383 = vld [vmem:[%s139 + $0x668] sm:$0xff]
        %v384 = vld [vmem:[%s139 + $0x670] sm:$0xff]
        %v385 = vld [vmem:[%s139 + $0x678] sm:$0xff]
        %v386 = vld [vmem:[%s139 + $0x680] sm:$0xff]
        %v387 = vld [vmem:[%s139 + $0x688] sm:$0xff]
        %v388 = vld [vmem:[%s139 + $0x690] sm:$0xff]
        %v389 = vld [vmem:[%s139 + $0x698] sm:$0xff]
        %v390 = vld [vmem:[%s139 + $0x6a0] sm:$0xff]
        %v391 = vld [vmem:[%s139 + $0x6a8] sm:$0xff]
        %v392 = vld [vmem:[%s139 + $0x6b0] sm:$0xff]
        %v393 = vld [vmem:[%s139 + $0x6b8] sm:$0xff]
        %v394 = vld [vmem:[%s139 + $0x6c0] sm:$0xff]
        %v395 = vld [vmem:[%s139 + $0x6c8] sm:$0xff]
        %v396 = vld [vmem:[%s139 + $0x6d0] sm:$0xff]
        %v397 = vld [vmem:[%s139 + $0x6d8] sm:$0xff]
        %v398 = vld [vmem:[%s139 + $0x6e0] sm:$0xff]
        %v399 = vld [vmem:[%s139 + $0x6e8] sm:$0xff]
        %v400 = vld [vmem:[%s139 + $0x6f0] sm:$0xff]
        %v401 = vld [vmem:[%s139 + $0x6f8] sm:$0xff]
        %v402 = vld [vmem:[%s139 + $0x700] sm:$0xff]
        %v403 = vld [vmem:[%s139 + $0x708] sm:$0xff]
        %v404 = vld [vmem:[%s139 + $0x710] sm:$0xff]
        %v405 = vld [vmem:[%s139 + $0x718] sm:$0xff]
        %v406 = vld [vmem:[%s139 + $0x720] sm:$0xff]
        %v407 = vld [vmem:[%s139 + $0x728] sm:$0xff]
        %v408 = vld [vmem:[%s139 + $0x730] sm:$0xff]
        %v409 = vld [vmem:[%s139 + $0x738] sm:$0xff]
        %v410 = vld [vmem:[%s139 + $0x740] sm:$0xff]
        %v411 = vld [vmem:[%s139 + $0x748] sm:$0xff]
        %v412 = vld [vmem:[%s139 + $0x750] sm:$0xff]
        %v413 = vld [vmem:[%s139 + $0x758] sm:$0xff]
        %v414 = vld [vmem:[%s139 + $0x760] sm:$0xff]
        %v415 = vld [vmem:[%s139 + $0x768] sm:$0xff]
        %v416 = vld [vmem:[%s139 + $0x770] sm:$0xff]
        %v417 = vld [vmem:[%s139 + $0x778] sm:$0xff]
        %v418 = vld [vmem:[%s139 + $0x780] sm:$0xff]
        %v419 = vld [vmem:[%s139 + $0x788] sm:$0xff]
        %v420 = vld [vmem:[%s139 + $0x790] sm:$0xff]
        %v421 = vld [vmem:[%s139 + $0x798] sm:$0xff]
        %v422 = vld [vmem:[%s139 + $0x7a0] sm:$0xff]
        %v423 = vld [vmem:[%s139 + $0x7a8] sm:$0xff]
        %v424 = vld [vmem:[%s139 + $0x7b0] sm:$0xff]
        %v425 = vld [vmem:[%s139 + $0x7b8] sm:$0xff]
        %v426 = vld [vmem:[%s139 + $0x7c0] sm:$0xff]
        %v427 = vld [vmem:[%s139 + $0x7c8] sm:$0xff]
        %v428 = vld [vmem:[%s139 + $0x7d0] sm:$0xff]
        %v429 = vld [vmem:[%s139 + $0x7d8] sm:$0xff]
        %v430 = vld [vmem:[%s139 + $0x7e0] sm:$0xff]
        %v431 = vld [vmem:[%s139 + $0x7e8] sm:$0xff]
        %v432 = vld [vmem:[%s139 + $0x7f0] sm:$0xff]
        %v433 = vld [vmem:[%s139 + $0x7f8] sm:$0xff]
        %v434 = vld [vmem:[%s139 + $0x800] sm:$0xff]
        %v435 = vld [vmem:[%s139 + $0x808] sm:$0xff]
        %v436 = vld [vmem:[%s139 + $0x810] sm:$0xff]
        %v437 = vld [vmem:[%s139 + $0x818] sm:$0xff]
        %v438 = vld [vmem:[%s139 + $0x820] sm:$0xff]
        %v439 = vld [vmem:[%s139 + $0x828] sm:$0xff]
        %v440 = vld [vmem:[%s139 + $0x830] sm:$0xff]
        %v441 = vld [vmem:[%s139 + $0x838] sm:$0xff]
        %v442 = vld [vmem:[%s139 + $0x840] sm:$0xff]
        %v443 = vld [vmem:[%s139 + $0x848] sm:$0xff]
        %v444 = vld [vmem:[%s139 + $0x850] sm:$0xff]
        %v445 = vld [vmem:[%s139 + $0x858] sm:$0xff]
        %v446 = vld [vmem:[%s139 + $0x860] sm:$0xff]
        %v447 = vld [vmem:[%s139 + $0x868] sm:$0xff]
        %v448 = vld [vmem:[%s139 + $0x870] sm:$0xff]
        %v449 = vld [vmem:[%s139 + $0x878] sm:$0xff]
        %v450 = vld [vmem:[%s139 + $0x880] sm:$0xff]
        %v451 = vld [vmem:[%s139 + $0x888] sm:$0xff]
        %v452 = vld [vmem:[%s139 + $0x890] sm:$0xff]
        %v453 = vld [vmem:[%s139 + $0x898] sm:$0xff]
        %v454 = vld [vmem:[%s139 + $0x8a0] sm:$0xff]
        %v455 = vld [vmem:[%s139 + $0x8a8] sm:$0xff]
        %v456 = vld [vmem:[%s139 + $0x8b0] sm:$0xff]
        %v457 = vld [vmem:[%s139 + $0x8b8] sm:$0xff]
        %v458 = vld [vmem:[%s139 + $0x8c0] sm:$0xff]
        %v459 = vld [vmem:[%s139 + $0x8c8] sm:$0xff]
        %v460 = vld [vmem:[%s139 + $0x8d0] sm:$0xff]
        %v461 = vld [vmem:[%s139 + $0x8d8] sm:$0xff]
        %v462 = vld [vmem:[%s139 + $0x8e0] sm:$0xff]
        %v463 = vld [vmem:[%s139 + $0x8e8] sm:$0xff]
        %v464 = vld [vmem:[%s139 + $0x8f0] sm:$0xff]
        %v465 = vld [vmem:[%s139 + $0x8f8] sm:$0xff]
        %v466 = vld [vmem:[%s139 + $0x900] sm:$0xff]
        %v467 = vld [vmem:[%s139 + $0x908] sm:$0xff]
        %v468 = vld [vmem:[%s139 + $0x910] sm:$0xff]
        %v469 = vld [vmem:[%s139 + $0x918] sm:$0xff]
        %v470 = vld [vmem:[%s139 + $0x920] sm:$0xff]
        %v471 = vld [vmem:[%s139 + $0x928] sm:$0xff]
        %v472 = vld [vmem:[%s139 + $0x930] sm:$0xff]
        %v473 = vld [vmem:[%s139 + $0x938] sm:$0xff]
        %v474 = vld [vmem:[%s139 + $0x940] sm:$0xff]
        %v475 = vld [vmem:[%s139 + $0x948] sm:$0xff]
        %v476 = vld [vmem:[%s139 + $0x950] sm:$0xff]
        %v477 = vld [vmem:[%s139 + $0x958] sm:$0xff]
        %v478 = vld [vmem:[%s139 + $0x960] sm:$0xff]
        %v479 = vld [vmem:[%s139 + $0x968] sm:$0xff]
        %v480 = vld [vmem:[%s139 + $0x970] sm:$0xff]
        %v481 = vld [vmem:[%s139 + $0x978] sm:$0xff]
        %v482 = vld [vmem:[%s139 + $0x980] sm:$0xff]
        %v483 = vld [vmem:[%s139 + $0x988] sm:$0xff]
        %v484 = vld [vmem:[%s139 + $0x990] sm:$0xff]
        %v485 = vld [vmem:[%s139 + $0x998] sm:$0xff]
        %v486 = vld [vmem:[%s139 + $0x9a0] sm:$0xff]
        %v487 = vld [vmem:[%s139 + $0x9a8] sm:$0xff]
        %v488 = vld [vmem:[%s139 + $0x9b0] sm:$0xff]
        %v489 = vld [vmem:[%s139 + $0x9b8] sm:$0xff]
        %v490 = vld [vmem:[%s139 + $0x9c0] sm:$0xff]
        %v491 = vld [vmem:[%s139 + $0x9c8] sm:$0xff]
        %v492 = vld [vmem:[%s139 + $0x9d0] sm:$0xff]
        %v493 = vld [vmem:[%s139 + $0x9d8] sm:$0xff]
        %v494 = vld [vmem:[%s139 + $0x9e0] sm:$0xff]
        %v495 = vld [vmem:[%s139 + $0x9e8] sm:$0xff]
        %v496 = vld [vmem:[%s139 + $0x9f0] sm:$0xff]
        %v497 = vld [vmem:[%s139 + $0x9f8] sm:$0xff]
        %v498 = vld [vmem:[%s139 + $0xa00] sm:$0xff]
        %v499 = vld [vmem:[%s139 + $0xa08] sm:$0xff]
        %v500 = vld [vmem:[%s139 + $0xa10] sm:$0xff]
        %v501 = vld [vmem:[%s139 + $0xa18] sm:$0xff]
        %v502 = vld [vmem:[%s139 + $0xa20] sm:$0xff]
        %v503 = vld [vmem:[%s139 + $0xa28] sm:$0xff]
        %v504 = vld [vmem:[%s139 + $0xa30] sm:$0xff]
        %v505 = vld [vmem:[%s139 + $0xa38] sm:$0xff]
        %v506 = vld [vmem:[%s139 + $0xa40] sm:$0xff]
        %v507 = vld [vmem:[%s139 + $0xa48] sm:$0xff]
        %v508 = vld [vmem:[%s139 + $0xa50] sm:$0xff]
        %v509 = vld [vmem:[%s139 + $0xa58] sm:$0xff]
        %v510 = vld [vmem:[%s139 + $0xa60] sm:$0xff]
        %v511 = vld [vmem:[%s139 + $0xa68] sm:$0xff]
        %v512 = vld [vmem:[%s139 + $0xa70] sm:$0xff]
        %v513 = vld [vmem:[%s139 + $0xa78] sm:$0xff]
        %v514 = vld [vmem:[%s139 + $0xa80] sm:$0xff]
        %v515 = vld [vmem:[%s139 + $0xa88] sm:$0xff]
        %v516 = vld [vmem:[%s139 + $0xa90] sm:$0xff]
        %v517 = vld [vmem:[%s139 + $0xa98] sm:$0xff]
        %v518 = vld [vmem:[%s139 + $0xaa0] sm:$0xff]
        %v519 = vld [vmem:[%s139 + $0xaa8] sm:$0xff]
        %v520 = vld [vmem:[%s139 + $0xab0] sm:$0xff]
        %v521 = vld [vmem:[%s139 + $0xab8] sm:$0xff]
        %v522 = vld [vmem:[%s139 + $0xac0] sm:$0xff]
        %v523 = vld [vmem:[%s139 + $0xac8] sm:$0xff]
        %v524 = vld [vmem:[%s139 + $0xad0] sm:$0xff]
        %v525 = vld [vmem:[%s139 + $0xad8] sm:$0xff]
        %v526 = vld [vmem:[%s139 + $0xae0] sm:$0xff]
        %v527 = vld [vmem:[%s139 + $0xae8] sm:$0xff]
        %v528 = vld [vmem:[%s139 + $0xaf0] sm:$0xff]
        %v529 = vld [vmem:[%s139 + $0xaf8] sm:$0xff]
        %v530 = vld [vmem:[%s139 + $0xb00] sm:$0xff]
        %v531 = vld [vmem:[%s139 + $0xb08] sm:$0xff]
        %v532 = vld [vmem:[%s139 + $0xb10] sm:$0xff]
        %v533 = vld [vmem:[%s139 + $0xb18] sm:$0xff]
        %v534 = vld [vmem:[%s139 + $0xb20] sm:$0xff]
        %v535 = vld [vmem:[%s139 + $0xb28] sm:$0xff]
        %v536 = vld [vmem:[%s139 + $0xb30] sm:$0xff]
        %v537 = vld [vmem:[%s139 + $0xb38] sm:$0xff]
        %v538 = vld [vmem:[%s139 + $0xb40] sm:$0xff]
        %v539 = vld [vmem:[%s139 + $0xb48] sm:$0xff]
        %v540 = vld [vmem:[%s139 + $0xb50] sm:$0xff]
        %v541 = vld [vmem:[%s139 + $0xb58] sm:$0xff]
        %v542 = vld [vmem:[%s139 + $0xb60] sm:$0xff]
        %v543 = vld [vmem:[%s139 + $0xb68] sm:$0xff]
        %v544 = vld [vmem:[%s139 + $0xb70] sm:$0xff]
        %v545 = vld [vmem:[%s139 + $0xb78] sm:$0xff]
        %v546 = vld [vmem:[%s139 + $0xb80] sm:$0xff]
        %v547 = vld [vmem:[%s139 + $0xb88] sm:$0xff]
        %v548 = vld [vmem:[%s139 + $0xb90] sm:$0xff]
        %v549 = vld [vmem:[%s139 + $0xb98] sm:$0xff]
        %v550 = vld [vmem:[%s139 + $0xba0] sm:$0xff]
        %v551 = vld [vmem:[%s139 + $0xba8] sm:$0xff]
        %v552 = vld [vmem:[%s139 + $0xbb0] sm:$0xff]
        %v553 = vld [vmem:[%s139 + $0xbb8] sm:$0xff]
        %v554 = vld [vmem:[%s139 + $0xbc0] sm:$0xff]
        %v555 = vld [vmem:[%s139 + $0xbc8] sm:$0xff]
        %v556 = vld [vmem:[%s139 + $0xbd0] sm:$0xff]
        %v557 = vld [vmem:[%s139 + $0xbd8] sm:$0xff]
        %v558 = vld [vmem:[%s139 + $0xbe0] sm:$0xff]
        %v559 = vld [vmem:[%s139 + $0xbe8] sm:$0xff]
        %v560 = vld [vmem:[%s139 + $0xbf0] sm:$0xff]
        %v561 = vld [vmem:[%s139 + $0xbf8] sm:$0xff]
        %v562 = vld [vmem:[%s139 + $0xc00] sm:$0xff]
        %v563 = vld [vmem:[%s139 + $0xc08] sm:$0xff]
        %v564 = vld [vmem:[%s139 + $0xc10] sm:$0xff]
        %v565 = vld [vmem:[%s139 + $0xc18] sm:$0xff]
        %v566 = vld [vmem:[%s139 + $0xc20] sm:$0xff]
        %v567 = vld [vmem:[%s139 + $0xc28] sm:$0xff]
        %v568 = vld [vmem:[%s139 + $0xc30] sm:$0xff]
        %v569 = vld [vmem:[%s139 + $0xc38] sm:$0xff]
        %v570 = vld [vmem:[%s139 + $0xc40] sm:$0xff]
        %v571 = vld [vmem:[%s139 + $0xc48] sm:$0xff]
        %v572 = vld [vmem:[%s139 + $0xc50] sm:$0xff]
        %v573 = vld [vmem:[%s139 + $0xc58] sm:$0xff]
        %v574 = vld [vmem:[%s139 + $0xc60] sm:$0xff]
        %v575 = vld [vmem:[%s139 + $0xc68] sm:$0xff]
        %v576 = vld [vmem:[%s139 + $0xc70] sm:$0xff]
        %v577 = vld [vmem:[%s139 + $0xc78] sm:$0xff]
        %v578 = vld [vmem:[%s139 + $0xc80] sm:$0xff]
        %v579 = vld [vmem:[%s139 + $0xc88] sm:$0xff]
        %v580 = vld [vmem:[%s139 + $0xc90] sm:$0xff]
        %v581 = vld [vmem:[%s139 + $0xc98] sm:$0xff]
        %v582 = vld [vmem:[%s139 + $0xca0] sm:$0xff]
        %v583 = vld [vmem:[%s139 + $0xca8] sm:$0xff]
        %v584 = vld [vmem:[%s139 + $0xcb0] sm:$0xff]
        %v585 = vld [vmem:[%s139 + $0xcb8] sm:$0xff]
        %v586 = vld [vmem:[%s139 + $0xcc0] sm:$0xff]
        %v587 = vld [vmem:[%s139 + $0xcc8] sm:$0xff]
        %v588 = vld [vmem:[%s139 + $0xcd0] sm:$0xff]
        %v589 = vld [vmem:[%s139 + $0xcd8] sm:$0xff]
        %v590 = vld [vmem:[%s139 + $0xce0] sm:$0xff]
        %v591 = vld [vmem:[%s139 + $0xce8] sm:$0xff]
        %v592 = vld [vmem:[%s139 + $0xcf0] sm:$0xff]
        %v593 = vld [vmem:[%s139 + $0xcf8] sm:$0xff]
        %v594 = vld [vmem:[%s139 + $0xd00] sm:$0xff]
        %v595 = vld [vmem:[%s139 + $0xd08] sm:$0xff]
        %v596 = vld [vmem:[%s139 + $0xd10] sm:$0xff]
        %v597 = vld [vmem:[%s139 + $0xd18] sm:$0xff]
        %v598 = vld [vmem:[%s139 + $0xd20] sm:$0xff]
        %v599 = vld [vmem:[%s139 + $0xd28] sm:$0xff]
        %v600 = vld [vmem:[%s139 + $0xd30] sm:$0xff]
        %v601 = vld [vmem:[%s139 + $0xd38] sm:$0xff]
        %v602 = vld [vmem:[%s139 + $0xd40] sm:$0xff]
        %v603 = vld [vmem:[%s139 + $0xd48] sm:$0xff]
        %v604 = vld [vmem:[%s139 + $0xd50] sm:$0xff]
        %v605 = vld [vmem:[%s139 + $0xd58] sm:$0xff]
        %v606 = vld [vmem:[%s139 + $0xd60] sm:$0xff]
        %v607 = vld [vmem:[%s139 + $0xd68] sm:$0xff]
        %v608 = vld [vmem:[%s139 + $0xd70] sm:$0xff]
        %v609 = vld [vmem:[%s139 + $0xd78] sm:$0xff]
        %v610 = vld [vmem:[%s139 + $0xd80] sm:$0xff]
        %v611 = vld [vmem:[%s139 + $0xd88] sm:$0xff]
        %v612 = vld [vmem:[%s139 + $0xd90] sm:$0xff]
        %v613 = vld [vmem:[%s139 + $0xd98] sm:$0xff]
        %v614 = vld [vmem:[%s139 + $0xda0] sm:$0xff]
        %v615 = vld [vmem:[%s139 + $0xda8] sm:$0xff]
        %v616 = vld [vmem:[%s139 + $0xdb0] sm:$0xff]
        %v617 = vld [vmem:[%s139 + $0xdb8] sm:$0xff]
        %v618 = vld [vmem:[%s139 + $0xdc0] sm:$0xff]
        %v619 = vld [vmem:[%s139 + $0xdc8] sm:$0xff]
        %v620 = vld [vmem:[%s139 + $0xdd0] sm:$0xff]
        %v621 = vld [vmem:[%s139 + $0xdd8] sm:$0xff]
        %v622 = vld [vmem:[%s139 + $0xde0] sm:$0xff]
        %v623 = vld [vmem:[%s139 + $0xde8] sm:$0xff]
        %v624 = vld [vmem:[%s139 + $0xdf0] sm:$0xff]
        %v625 = vld [vmem:[%s139 + $0xdf8] sm:$0xff]
        %v626 = vld [vmem:[%s139 + $0xe00] sm:$0xff]
        %v627 = vld [vmem:[%s139 + $0xe08] sm:$0xff]
        %v628 = vld [vmem:[%s139 + $0xe10] sm:$0xff]
        %v629 = vld [vmem:[%s139 + $0xe18] sm:$0xff]
        %v630 = vld [vmem:[%s139 + $0xe20] sm:$0xff]
        %v631 = vld [vmem:[%s139 + $0xe28] sm:$0xff]
        %v632 = vld [vmem:[%s139 + $0xe30] sm:$0xff]
        %v633 = vld [vmem:[%s139 + $0xe38] sm:$0xff]
        %v634 = vld [vmem:[%s139 + $0xe40] sm:$0xff]
        %v635 = vld [vmem:[%s139 + $0xe48] sm:$0xff]
        %v636 = vld [vmem:[%s139 + $0xe50] sm:$0xff]
        %v637 = vld [vmem:[%s139 + $0xe58] sm:$0xff]
        %v638 = vld [vmem:[%s139 + $0xe60] sm:$0xff]
        %v639 = vld [vmem:[%s139 + $0xe68] sm:$0xff]
        %v640 = vld [vmem:[%s139 + $0xe70] sm:$0xff]
        %v641 = vld [vmem:[%s139 + $0xe78] sm:$0xff]
        %v642 = vld [vmem:[%s139 + $0xe80] sm:$0xff]
        %v643 = vld [vmem:[%s139 + $0xe88] sm:$0xff]
        %v644 = vld [vmem:[%s139 + $0xe90] sm:$0xff]
        %v645 = vld [vmem:[%s139 + $0xe98] sm:$0xff]
        %v646 = vld [vmem:[%s139 + $0xea0] sm:$0xff]
        %v647 = vld [vmem:[%s139 + $0xea8] sm:$0xff]
        %v648 = vld [vmem:[%s139 + $0xeb0] sm:$0xff]
        %v649 = vld [vmem:[%s139 + $0xeb8] sm:$0xff]
        %v650 = vld [vmem:[%s139 + $0xec0] sm:$0xff]
        %v651 = vld [vmem:[%s139 + $0xec8] sm:$0xff]
        %v652 = vld [vmem:[%s139 + $0xed0] sm:$0xff]
        %v653 = vld [vmem:[%s139 + $0xed8] sm:$0xff]
        %v654 = vld [vmem:[%s139 + $0xee0] sm:$0xff]
        %v655 = vld [vmem:[%s139 + $0xee8] sm:$0xff]
        %v656 = vld [vmem:[%s139 + $0xef0] sm:$0xff]
        %v657 = vld [vmem:[%s139 + $0xef8] sm:$0xff]
        %v658 = vld [vmem:[%s139 + $0xf00] sm:$0xff]
        %v659 = vld [vmem:[%s139 + $0xf08] sm:$0xff]
        %v660 = vld [vmem:[%s139 + $0xf10] sm:$0xff]
        %v661 = vld [vmem:[%s139 + $0xf18] sm:$0xff]
        %v662 = vld [vmem:[%s139 + $0xf20] sm:$0xff]
        %v663 = vld [vmem:[%s139 + $0xf28] sm:$0xff]
        %v664 = vld [vmem:[%s139 + $0xf30] sm:$0xff]
        %v665 = vld [vmem:[%s139 + $0xf38] sm:$0xff]
        %v666 = vld [vmem:[%s139 + $0xf40] sm:$0xff]
        %v667 = vld [vmem:[%s139 + $0xf48] sm:$0xff]
        %v668 = vld [vmem:[%s139 + $0xf50] sm:$0xff]
        %v669 = vld [vmem:[%s139 + $0xf58] sm:$0xff]
        %v670 = vld [vmem:[%s139 + $0xf60] sm:$0xff]
        %v671 = vld [vmem:[%s139 + $0xf68] sm:$0xff]
        %v672 = vld [vmem:[%s139 + $0xf70] sm:$0xff]
        %v673 = vld [vmem:[%s139 + $0xf78] sm:$0xff]
        %v674 = vld [vmem:[%s139 + $0xf80] sm:$0xff]
        %v675 = vld [vmem:[%s139 + $0xf88] sm:$0xff]
        %v676 = vld [vmem:[%s139 + $0xf90] sm:$0xff]
        %v677 = vld [vmem:[%s139 + $0xf98] sm:$0xff]
        %v678 = vld [vmem:[%s139 + $0xfa0] sm:$0xff]
        %v679 = vld [vmem:[%s139 + $0xfa8] sm:$0xff]
        %v680 = vld [vmem:[%s139 + $0xfb0] sm:$0xff]
        %v681 = vld [vmem:[%s139 + $0xfb8] sm:$0xff]
        %v682 = vld [vmem:[%s139 + $0xfc0] sm:$0xff]
        %v683 = vld [vmem:[%s139 + $0xfc8] sm:$0xff]
        %v684 = vld [vmem:[%s139 + $0xfd0] sm:$0xff]
        %v685 = vld [vmem:[%s139 + $0xfd8] sm:$0xff]
        %v686 = vld [vmem:[%s139 + $0xfe0] sm:$0xff]
        %v687 = vld [vmem:[%s139 + $0xfe8] sm:$0xff]
        %v688 = vld [vmem:[%s139 + $0xff0] sm:$0xff]
        %v689 = vld [vmem:[%s139 + $0xff8] sm:$0xff]
        %v706 = vunpack.c.l.b16 %v162
        %v707 = vunpack.c.h.b16 %v162
        %v708 = vunpack.c.l.b16 %v163
        %v709 = vunpack.c.h.b16 %v163
        %v710 = vunpack.c.l.b16 %v164
        %v711 = vunpack.c.h.b16 %v164
        %v712 = vunpack.c.l.b16 %v165
        %v713 = vunpack.c.h.b16 %v165
        %v714 = vunpack.c.l.b16 %v166
        %v715 = vunpack.c.h.b16 %v166
        %v716 = vunpack.c.l.b16 %v167
        %v717 = vunpack.c.h.b16 %v167
        %v718 = vunpack.c.l.b16 %v168
        %v719 = vunpack.c.h.b16 %v168
        %v720 = vunpack.c.l.b16 %v169
        %v721 = vunpack.c.h.b16 %v169
        %v722 = vunpack.c.l.b16 %v170
        %v723 = vunpack.c.h.b16 %v170
        %v724 = vunpack.c.l.b16 %v171
        %v725 = vunpack.c.h.b16 %v171
        %v726 = vunpack.c.l.b16 %v172
        %v727 = vunpack.c.h.b16 %v172
        %v728 = vunpack.c.l.b16 %v173
        %v729 = vunpack.c.h.b16 %v173
        %v730 = vunpack.c.l.b16 %v174
        %v731 = vunpack.c.h.b16 %v174
        %v732 = vunpack.c.l.b16 %v175
        %v733 = vunpack.c.h.b16 %v175
        %v734 = vunpack.c.l.b16 %v176
        %v735 = vunpack.c.h.b16 %v176
        %v736 = vunpack.c.l.b16 %v177
        %v737 = vunpack.c.h.b16 %v177
        %v738 = vpack.c.b16 %v714, %v706
        %v739 = vpack.c.b16 %v715, %v707
        %v740 = vpack.c.b16 %v716, %v708
        %v741 = vpack.c.b16 %v717, %v709
        %v742 = vpack.c.b16 %v718, %v710
        %v743 = vpack.c.b16 %v719, %v711
        %v744 = vpack.c.b16 %v720, %v712
        %v745 = vpack.c.b16 %v721, %v713
        %v746 = vpack.c.b16 %v730, %v722
        %v747 = vpack.c.b16 %v731, %v723
        %v748 = vpack.c.b16 %v732, %v724
        %v749 = vpack.c.b16 %v733, %v725
        %v750 = vpack.c.b16 %v734, %v726
        %v751 = vpack.c.b16 %v735, %v727
        %v752 = vpack.c.b16 %v736, %v728
        %v753 = vpack.c.b16 %v737, %v729
        %v1282 = vunpack.c.l.b16 %v178
        %v1283 = vunpack.c.h.b16 %v178
        %v1284 = vunpack.c.l.b16 %v179
        %v1285 = vunpack.c.h.b16 %v179
        %v1286 = vunpack.c.l.b16 %v180
        %v1287 = vunpack.c.h.b16 %v180
        %v1288 = vunpack.c.l.b16 %v181
        %v1289 = vunpack.c.h.b16 %v181
        %v1290 = vunpack.c.l.b16 %v182
        %v1291 = vunpack.c.h.b16 %v182
        %v1292 = vunpack.c.l.b16 %v183
        %v1293 = vunpack.c.h.b16 %v183
        %v1294 = vunpack.c.l.b16 %v184
        %v1295 = vunpack.c.h.b16 %v184
        %v1296 = vunpack.c.l.b16 %v185
        %v1297 = vunpack.c.h.b16 %v185
        %v1298 = vunpack.c.l.b16 %v186
        %v1299 = vunpack.c.h.b16 %v186
        %v1300 = vunpack.c.l.b16 %v187
        %v1301 = vunpack.c.h.b16 %v187
        %v1302 = vunpack.c.l.b16 %v188
        %v1303 = vunpack.c.h.b16 %v188
        %v1304 = vunpack.c.l.b16 %v189
        %v1305 = vunpack.c.h.b16 %v189
        %v1306 = vunpack.c.l.b16 %v190
        %v1307 = vunpack.c.h.b16 %v190
        %v1308 = vunpack.c.l.b16 %v191
        %v1309 = vunpack.c.h.b16 %v191
        %v1310 = vunpack.c.l.b16 %v192
        %v1311 = vunpack.c.h.b16 %v192
        %v1312 = vunpack.c.l.b16 %v193
        %v1313 = vunpack.c.h.b16 %v193
        %v1314 = vunpack.c.l.b16 %v194
        %v1315 = vunpack.c.h.b16 %v194
        %v1316 = vunpack.c.l.b16 %v195
        %v1317 = vunpack.c.h.b16 %v195
        %v1318 = vunpack.c.l.b16 %v196
        %v1319 = vunpack.c.h.b16 %v196
        %v1320 = vunpack.c.l.b16 %v197
        %v1321 = vunpack.c.h.b16 %v197
        %v1322 = vunpack.c.l.b16 %v198
        %v1323 = vunpack.c.h.b16 %v198
        %v1324 = vunpack.c.l.b16 %v199
        %v1325 = vunpack.c.h.b16 %v199
        %v1326 = vunpack.c.l.b16 %v200
        %v1327 = vunpack.c.h.b16 %v200
        %v1328 = vunpack.c.l.b16 %v201
        %v1329 = vunpack.c.h.b16 %v201
        %v1330 = vunpack.c.l.b16 %v202
        %v1331 = vunpack.c.h.b16 %v202
        %v1332 = vunpack.c.l.b16 %v203
        %v1333 = vunpack.c.h.b16 %v203
        %v1334 = vunpack.c.l.b16 %v204
        %v1335 = vunpack.c.h.b16 %v204
        %v1336 = vunpack.c.l.b16 %v205
        %v1337 = vunpack.c.h.b16 %v205
        %v1338 = vunpack.c.l.b16 %v206
        %v1339 = vunpack.c.h.b16 %v206
        %v1340 = vunpack.c.l.b16 %v207
        %v1341 = vunpack.c.h.b16 %v207
        %v1342 = vunpack.c.l.b16 %v208
        %v1343 = vunpack.c.h.b16 %v208
        %v1344 = vunpack.c.l.b16 %v209
        %v1345 = vunpack.c.h.b16 %v209
        %v1346 = vunpack.c.l.b16 %v210
        %v1347 = vunpack.c.h.b16 %v210
        %v1348 = vunpack.c.l.b16 %v211
        %v1349 = vunpack.c.h.b16 %v211
        %v1350 = vunpack.c.l.b16 %v212
        %v1351 = vunpack.c.h.b16 %v212
        %v1352 = vunpack.c.l.b16 %v213
        %v1353 = vunpack.c.h.b16 %v213
        %v1354 = vunpack.c.l.b16 %v214
        %v1355 = vunpack.c.h.b16 %v214
        %v1356 = vunpack.c.l.b16 %v215
        %v1357 = vunpack.c.h.b16 %v215
        %v1358 = vunpack.c.l.b16 %v216
        %v1359 = vunpack.c.h.b16 %v216
        %v1360 = vunpack.c.l.b16 %v217
        %v1361 = vunpack.c.h.b16 %v217
        %v1362 = vunpack.c.l.b16 %v218
        %v1363 = vunpack.c.h.b16 %v218
        %v1364 = vunpack.c.l.b16 %v219
        %v1365 = vunpack.c.h.b16 %v219
        %v1366 = vunpack.c.l.b16 %v220
        %v1367 = vunpack.c.h.b16 %v220
        %v1368 = vunpack.c.l.b16 %v221
        %v1369 = vunpack.c.h.b16 %v221
        %v1370 = vunpack.c.l.b16 %v222
        %v1371 = vunpack.c.h.b16 %v222
        %v1372 = vunpack.c.l.b16 %v223
        %v1373 = vunpack.c.h.b16 %v223
        %v1374 = vunpack.c.l.b16 %v224
        %v1375 = vunpack.c.h.b16 %v224
        %v1376 = vunpack.c.l.b16 %v225
        %v1377 = vunpack.c.h.b16 %v225
        %v1378 = vunpack.c.l.b16 %v226
        %v1379 = vunpack.c.h.b16 %v226
        %v1380 = vunpack.c.l.b16 %v227
        %v1381 = vunpack.c.h.b16 %v227
        %v1382 = vunpack.c.l.b16 %v228
        %v1383 = vunpack.c.h.b16 %v228
        %v1384 = vunpack.c.l.b16 %v229
        %v1385 = vunpack.c.h.b16 %v229
        %v1386 = vunpack.c.l.b16 %v230
        %v1387 = vunpack.c.h.b16 %v230
        %v1388 = vunpack.c.l.b16 %v231
        %v1389 = vunpack.c.h.b16 %v231
        %v1390 = vunpack.c.l.b16 %v232
        %v1391 = vunpack.c.h.b16 %v232
        %v1392 = vunpack.c.l.b16 %v233
        %v1393 = vunpack.c.h.b16 %v233
        %v1394 = vunpack.c.l.b16 %v234
        %v1395 = vunpack.c.h.b16 %v234
        %v1396 = vunpack.c.l.b16 %v235
        %v1397 = vunpack.c.h.b16 %v235
        %v1398 = vunpack.c.l.b16 %v236
        %v1399 = vunpack.c.h.b16 %v236
        %v1400 = vunpack.c.l.b16 %v237
        %v1401 = vunpack.c.h.b16 %v237
        %v1402 = vunpack.c.l.b16 %v238
        %v1403 = vunpack.c.h.b16 %v238
        %v1404 = vunpack.c.l.b16 %v239
        %v1405 = vunpack.c.h.b16 %v239
        %v1406 = vunpack.c.l.b16 %v240
        %v1407 = vunpack.c.h.b16 %v240
        %v1408 = vunpack.c.l.b16 %v241
        %v1409 = vunpack.c.h.b16 %v241
        %v1410 = vunpack.c.l.b16 %v242
        %v1411 = vunpack.c.h.b16 %v242
        %v1412 = vunpack.c.l.b16 %v243
        %v1413 = vunpack.c.h.b16 %v243
        %v1414 = vunpack.c.l.b16 %v244
        %v1415 = vunpack.c.h.b16 %v244
        %v1416 = vunpack.c.l.b16 %v245
        %v1417 = vunpack.c.h.b16 %v245
        %v1418 = vunpack.c.l.b16 %v246
        %v1419 = vunpack.c.h.b16 %v246
        %v1420 = vunpack.c.l.b16 %v247
        %v1421 = vunpack.c.h.b16 %v247
        %v1422 = vunpack.c.l.b16 %v248
        %v1423 = vunpack.c.h.b16 %v248
        %v1424 = vunpack.c.l.b16 %v249
        %v1425 = vunpack.c.h.b16 %v249
        %v1426 = vunpack.c.l.b16 %v250
        %v1427 = vunpack.c.h.b16 %v250
        %v1428 = vunpack.c.l.b16 %v251
        %v1429 = vunpack.c.h.b16 %v251
        %v1430 = vunpack.c.l.b16 %v252
        %v1431 = vunpack.c.h.b16 %v252
        %v1432 = vunpack.c.l.b16 %v253
        %v1433 = vunpack.c.h.b16 %v253
        %v1434 = vunpack.c.l.b16 %v254
        %v1435 = vunpack.c.h.b16 %v254
        %v1436 = vunpack.c.l.b16 %v255
        %v1437 = vunpack.c.h.b16 %v255
        %v1438 = vunpack.c.l.b16 %v256
        %v1439 = vunpack.c.h.b16 %v256
        %v1440 = vunpack.c.l.b16 %v257
        %v1441 = vunpack.c.h.b16 %v257
        %v1442 = vunpack.c.l.b16 %v258
        %v1443 = vunpack.c.h.b16 %v258
        %v1444 = vunpack.c.l.b16 %v259
        %v1445 = vunpack.c.h.b16 %v259
        %v1446 = vunpack.c.l.b16 %v260
        %v1447 = vunpack.c.h.b16 %v260
        %v1448 = vunpack.c.l.b16 %v261
        %v1449 = vunpack.c.h.b16 %v261
        %v1450 = vunpack.c.l.b16 %v262
        %v1451 = vunpack.c.h.b16 %v262
        %v1452 = vunpack.c.l.b16 %v263
        %v1453 = vunpack.c.h.b16 %v263
        %v1454 = vunpack.c.l.b16 %v264
        %v1455 = vunpack.c.h.b16 %v264
        %v1456 = vunpack.c.l.b16 %v265
        %v1457 = vunpack.c.h.b16 %v265
        %v1458 = vunpack.c.l.b16 %v266
        %v1459 = vunpack.c.h.b16 %v266
        %v1460 = vunpack.c.l.b16 %v267
        %v1461 = vunpack.c.h.b16 %v267
        %v1462 = vunpack.c.l.b16 %v268
        %v1463 = vunpack.c.h.b16 %v268
        %v1464 = vunpack.c.l.b16 %v269
        %v1465 = vunpack.c.h.b16 %v269
        %v1466 = vunpack.c.l.b16 %v270
        %v1467 = vunpack.c.h.b16 %v270
        %v1468 = vunpack.c.l.b16 %v271
        %v1469 = vunpack.c.h.b16 %v271
        %v1470 = vunpack.c.l.b16 %v272
        %v1471 = vunpack.c.h.b16 %v272
        %v1472 = vunpack.c.l.b16 %v273
        %v1473 = vunpack.c.h.b16 %v273
        %v1474 = vunpack.c.l.b16 %v274
        %v1475 = vunpack.c.h.b16 %v274
        %v1476 = vunpack.c.l.b16 %v275
        %v1477 = vunpack.c.h.b16 %v275
        %v1478 = vunpack.c.l.b16 %v276
        %v1479 = vunpack.c.h.b16 %v276
        %v1480 = vunpack.c.l.b16 %v277
        %v1481 = vunpack.c.h.b16 %v277
        %v1482 = vunpack.c.l.b16 %v278
        %v1483 = vunpack.c.h.b16 %v278
        %v1484 = vunpack.c.l.b16 %v279
        %v1485 = vunpack.c.h.b16 %v279
        %v1486 = vunpack.c.l.b16 %v280
        %v1487 = vunpack.c.h.b16 %v280
        %v1488 = vunpack.c.l.b16 %v281
        %v1489 = vunpack.c.h.b16 %v281
        %v1490 = vunpack.c.l.b16 %v282
        %v1491 = vunpack.c.h.b16 %v282
        %v1492 = vunpack.c.l.b16 %v283
        %v1493 = vunpack.c.h.b16 %v283
        %v1494 = vunpack.c.l.b16 %v284
        %v1495 = vunpack.c.h.b16 %v284
        %v1496 = vunpack.c.l.b16 %v285
        %v1497 = vunpack.c.h.b16 %v285
        %v1498 = vunpack.c.l.b16 %v286
        %v1499 = vunpack.c.h.b16 %v286
        %v1500 = vunpack.c.l.b16 %v287
        %v1501 = vunpack.c.h.b16 %v287
        %v1502 = vunpack.c.l.b16 %v288
        %v1503 = vunpack.c.h.b16 %v288
        %v1504 = vunpack.c.l.b16 %v289
        %v1505 = vunpack.c.h.b16 %v289
        %v1506 = vunpack.c.l.b16 %v290
        %v1507 = vunpack.c.h.b16 %v290
        %v1508 = vunpack.c.l.b16 %v291
        %v1509 = vunpack.c.h.b16 %v291
        %v1510 = vunpack.c.l.b16 %v292
        %v1511 = vunpack.c.h.b16 %v292
        %v1512 = vunpack.c.l.b16 %v293
        %v1513 = vunpack.c.h.b16 %v293
        %v1514 = vunpack.c.l.b16 %v294
        %v1515 = vunpack.c.h.b16 %v294
        %v1516 = vunpack.c.l.b16 %v295
        %v1517 = vunpack.c.h.b16 %v295
        %v1518 = vunpack.c.l.b16 %v296
        %v1519 = vunpack.c.h.b16 %v296
        %v1520 = vunpack.c.l.b16 %v297
        %v1521 = vunpack.c.h.b16 %v297
        %v1522 = vunpack.c.l.b16 %v298
        %v1523 = vunpack.c.h.b16 %v298
        %v1524 = vunpack.c.l.b16 %v299
        %v1525 = vunpack.c.h.b16 %v299
        %v1526 = vunpack.c.l.b16 %v300
        %v1527 = vunpack.c.h.b16 %v300
        %v1528 = vunpack.c.l.b16 %v301
        %v1529 = vunpack.c.h.b16 %v301
        %v1530 = vunpack.c.l.b16 %v302
        %v1531 = vunpack.c.h.b16 %v302
        %v1532 = vunpack.c.l.b16 %v303
        %v1533 = vunpack.c.h.b16 %v303
        %v1534 = vunpack.c.l.b16 %v304
        %v1535 = vunpack.c.h.b16 %v304
        %v1536 = vunpack.c.l.b16 %v305
        %v1537 = vunpack.c.h.b16 %v305
        %v1538 = vunpack.c.l.b16 %v306
        %v1539 = vunpack.c.h.b16 %v306
        %v1540 = vunpack.c.l.b16 %v307
        %v1541 = vunpack.c.h.b16 %v307
        %v1542 = vunpack.c.l.b16 %v308
        %v1543 = vunpack.c.h.b16 %v308
        %v1544 = vunpack.c.l.b16 %v309
        %v1545 = vunpack.c.h.b16 %v309
        %v1546 = vunpack.c.l.b16 %v310
        %v1547 = vunpack.c.h.b16 %v310
        %v1548 = vunpack.c.l.b16 %v311
        %v1549 = vunpack.c.h.b16 %v311
        %v1550 = vunpack.c.l.b16 %v312
        %v1551 = vunpack.c.h.b16 %v312
        %v1552 = vunpack.c.l.b16 %v313
        %v1553 = vunpack.c.h.b16 %v313
        %v1554 = vunpack.c.l.b16 %v314
        %v1555 = vunpack.c.h.b16 %v314
        %v1556 = vunpack.c.l.b16 %v315
        %v1557 = vunpack.c.h.b16 %v315
        %v1558 = vunpack.c.l.b16 %v316
        %v1559 = vunpack.c.h.b16 %v316
        %v1560 = vunpack.c.l.b16 %v317
        %v1561 = vunpack.c.h.b16 %v317
        %v1562 = vunpack.c.l.b16 %v318
        %v1563 = vunpack.c.h.b16 %v318
        %v1564 = vunpack.c.l.b16 %v319
        %v1565 = vunpack.c.h.b16 %v319
        %v1566 = vunpack.c.l.b16 %v320
        %v1567 = vunpack.c.h.b16 %v320
        %v1568 = vunpack.c.l.b16 %v321
        %v1569 = vunpack.c.h.b16 %v321
        %v1570 = vunpack.c.l.b16 %v322
        %v1571 = vunpack.c.h.b16 %v322
        %v1572 = vunpack.c.l.b16 %v323
        %v1573 = vunpack.c.h.b16 %v323
        %v1574 = vunpack.c.l.b16 %v324
        %v1575 = vunpack.c.h.b16 %v324
        %v1576 = vunpack.c.l.b16 %v325
        %v1577 = vunpack.c.h.b16 %v325
        %v1578 = vunpack.c.l.b16 %v326
        %v1579 = vunpack.c.h.b16 %v326
        %v1580 = vunpack.c.l.b16 %v327
        %v1581 = vunpack.c.h.b16 %v327
        %v1582 = vunpack.c.l.b16 %v328
        %v1583 = vunpack.c.h.b16 %v328
        %v1584 = vunpack.c.l.b16 %v329
        %v1585 = vunpack.c.h.b16 %v329
        %v1586 = vunpack.c.l.b16 %v330
        %v1587 = vunpack.c.h.b16 %v330
        %v1588 = vunpack.c.l.b16 %v331
        %v1589 = vunpack.c.h.b16 %v331
        %v1590 = vunpack.c.l.b16 %v332
        %v1591 = vunpack.c.h.b16 %v332
        %v1592 = vunpack.c.l.b16 %v333
        %v1593 = vunpack.c.h.b16 %v333
        %v1594 = vunpack.c.l.b16 %v334
        %v1595 = vunpack.c.h.b16 %v334
        %v1596 = vunpack.c.l.b16 %v335
        %v1597 = vunpack.c.h.b16 %v335
        %v1598 = vunpack.c.l.b16 %v336
        %v1599 = vunpack.c.h.b16 %v336
        %v1600 = vunpack.c.l.b16 %v337
        %v1601 = vunpack.c.h.b16 %v337
        %v1602 = vunpack.c.l.b16 %v338
        %v1603 = vunpack.c.h.b16 %v338
        %v1604 = vunpack.c.l.b16 %v339
        %v1605 = vunpack.c.h.b16 %v339
        %v1606 = vunpack.c.l.b16 %v340
        %v1607 = vunpack.c.h.b16 %v340
        %v1608 = vunpack.c.l.b16 %v341
        %v1609 = vunpack.c.h.b16 %v341
        %v1610 = vunpack.c.l.b16 %v342
        %v1611 = vunpack.c.h.b16 %v342
        %v1612 = vunpack.c.l.b16 %v343
        %v1613 = vunpack.c.h.b16 %v343
        %v1614 = vunpack.c.l.b16 %v344
        %v1615 = vunpack.c.h.b16 %v344
        %v1616 = vunpack.c.l.b16 %v345
        %v1617 = vunpack.c.h.b16 %v345
        %v1618 = vunpack.c.l.b16 %v346
        %v1619 = vunpack.c.h.b16 %v346
        %v1620 = vunpack.c.l.b16 %v347
        %v1621 = vunpack.c.h.b16 %v347
        %v1622 = vunpack.c.l.b16 %v348
        %v1623 = vunpack.c.h.b16 %v348
        %v1624 = vunpack.c.l.b16 %v349
        %v1625 = vunpack.c.h.b16 %v349
        %v1626 = vunpack.c.l.b16 %v350
        %v1627 = vunpack.c.h.b16 %v350
        %v1628 = vunpack.c.l.b16 %v351
        %v1629 = vunpack.c.h.b16 %v351
        %v1630 = vunpack.c.l.b16 %v352
        %v1631 = vunpack.c.h.b16 %v352
        %v1632 = vunpack.c.l.b16 %v353
        %v1633 = vunpack.c.h.b16 %v353
        %v1634 = vunpack.c.l.b16 %v354
        %v1635 = vunpack.c.h.b16 %v354
        %v1636 = vunpack.c.l.b16 %v355
        %v1637 = vunpack.c.h.b16 %v355
        %v1638 = vunpack.c.l.b16 %v356
        %v1639 = vunpack.c.h.b16 %v356
        %v1640 = vunpack.c.l.b16 %v357
        %v1641 = vunpack.c.h.b16 %v357
        %v1642 = vunpack.c.l.b16 %v358
        %v1643 = vunpack.c.h.b16 %v358
        %v1644 = vunpack.c.l.b16 %v359
        %v1645 = vunpack.c.h.b16 %v359
        %v1646 = vunpack.c.l.b16 %v360
        %v1647 = vunpack.c.h.b16 %v360
        %v1648 = vunpack.c.l.b16 %v361
        %v1649 = vunpack.c.h.b16 %v361
        %v1650 = vunpack.c.l.b16 %v362
        %v1651 = vunpack.c.h.b16 %v362
        %v1652 = vunpack.c.l.b16 %v363
        %v1653 = vunpack.c.h.b16 %v363
        %v1654 = vunpack.c.l.b16 %v364
        %v1655 = vunpack.c.h.b16 %v364
        %v1656 = vunpack.c.l.b16 %v365
        %v1657 = vunpack.c.h.b16 %v365
        %v1658 = vunpack.c.l.b16 %v366
        %v1659 = vunpack.c.h.b16 %v366
        %v1660 = vunpack.c.l.b16 %v367
        %v1661 = vunpack.c.h.b16 %v367
        %v1662 = vunpack.c.l.b16 %v368
        %v1663 = vunpack.c.h.b16 %v368
        %v1664 = vunpack.c.l.b16 %v369
        %v1665 = vunpack.c.h.b16 %v369
        %v1666 = vunpack.c.l.b16 %v370
        %v1667 = vunpack.c.h.b16 %v370
        %v1668 = vunpack.c.l.b16 %v371
        %v1669 = vunpack.c.h.b16 %v371
        %v1670 = vunpack.c.l.b16 %v372
        %v1671 = vunpack.c.h.b16 %v372
        %v1672 = vunpack.c.l.b16 %v373
        %v1673 = vunpack.c.h.b16 %v373
        %v1674 = vunpack.c.l.b16 %v374
        %v1675 = vunpack.c.h.b16 %v374
        %v1676 = vunpack.c.l.b16 %v375
        %v1677 = vunpack.c.h.b16 %v375
        %v1678 = vunpack.c.l.b16 %v376
        %v1679 = vunpack.c.h.b16 %v376
        %v1680 = vunpack.c.l.b16 %v377
        %v1681 = vunpack.c.h.b16 %v377
        %v1682 = vunpack.c.l.b16 %v378
        %v1683 = vunpack.c.h.b16 %v378
        %v1684 = vunpack.c.l.b16 %v379
        %v1685 = vunpack.c.h.b16 %v379
        %v1686 = vunpack.c.l.b16 %v380
        %v1687 = vunpack.c.h.b16 %v380
        %v1688 = vunpack.c.l.b16 %v381
        %v1689 = vunpack.c.h.b16 %v381
        %v1690 = vunpack.c.l.b16 %v382
        %v1691 = vunpack.c.h.b16 %v382
        %v1692 = vunpack.c.l.b16 %v383
        %v1693 = vunpack.c.h.b16 %v383
        %v1694 = vunpack.c.l.b16 %v384
        %v1695 = vunpack.c.h.b16 %v384
        %v1696 = vunpack.c.l.b16 %v385
        %v1697 = vunpack.c.h.b16 %v385
        %v1698 = vunpack.c.l.b16 %v386
        %v1699 = vunpack.c.h.b16 %v386
        %v1700 = vunpack.c.l.b16 %v387
        %v1701 = vunpack.c.h.b16 %v387
        %v1702 = vunpack.c.l.b16 %v388
        %v1703 = vunpack.c.h.b16 %v388
        %v1704 = vunpack.c.l.b16 %v389
        %v1705 = vunpack.c.h.b16 %v389
        %v1706 = vunpack.c.l.b16 %v390
        %v1707 = vunpack.c.h.b16 %v390
        %v1708 = vunpack.c.l.b16 %v391
        %v1709 = vunpack.c.h.b16 %v391
        %v1710 = vunpack.c.l.b16 %v392
        %v1711 = vunpack.c.h.b16 %v392
        %v1712 = vunpack.c.l.b16 %v393
        %v1713 = vunpack.c.h.b16 %v393
        %v1714 = vunpack.c.l.b16 %v394
        %v1715 = vunpack.c.h.b16 %v394
        %v1716 = vunpack.c.l.b16 %v395
        %v1717 = vunpack.c.h.b16 %v395
        %v1718 = vunpack.c.l.b16 %v396
        %v1719 = vunpack.c.h.b16 %v396
        %v1720 = vunpack.c.l.b16 %v397
        %v1721 = vunpack.c.h.b16 %v397
        %v1722 = vunpack.c.l.b16 %v398
        %v1723 = vunpack.c.h.b16 %v398
        %v1724 = vunpack.c.l.b16 %v399
        %v1725 = vunpack.c.h.b16 %v399
        %v1726 = vunpack.c.l.b16 %v400
        %v1727 = vunpack.c.h.b16 %v400
        %v1728 = vunpack.c.l.b16 %v401
        %v1729 = vunpack.c.h.b16 %v401
        %v1730 = vunpack.c.l.b16 %v402
        %v1731 = vunpack.c.h.b16 %v402
        %v1732 = vunpack.c.l.b16 %v403
        %v1733 = vunpack.c.h.b16 %v403
        %v1734 = vunpack.c.l.b16 %v404
        %v1735 = vunpack.c.h.b16 %v404
        %v1736 = vunpack.c.l.b16 %v405
        %v1737 = vunpack.c.h.b16 %v405
        %v1738 = vunpack.c.l.b16 %v406
        %v1739 = vunpack.c.h.b16 %v406
        %v1740 = vunpack.c.l.b16 %v407
        %v1741 = vunpack.c.h.b16 %v407
        %v1742 = vunpack.c.l.b16 %v408
        %v1743 = vunpack.c.h.b16 %v408
        %v1744 = vunpack.c.l.b16 %v409
        %v1745 = vunpack.c.h.b16 %v409
        %v1746 = vunpack.c.l.b16 %v410
        %v1747 = vunpack.c.h.b16 %v410
        %v1748 = vunpack.c.l.b16 %v411
        %v1749 = vunpack.c.h.b16 %v411
        %v1750 = vunpack.c.l.b16 %v412
        %v1751 = vunpack.c.h.b16 %v412
        %v1752 = vunpack.c.l.b16 %v413
        %v1753 = vunpack.c.h.b16 %v413
        %v1754 = vunpack.c.l.b16 %v414
        %v1755 = vunpack.c.h.b16 %v414
        %v1756 = vunpack.c.l.b16 %v415
        %v1757 = vunpack.c.h.b16 %v415
        %v1758 = vunpack.c.l.b16 %v416
        %v1759 = vunpack.c.h.b16 %v416
        %v1760 = vunpack.c.l.b16 %v417
        %v1761 = vunpack.c.h.b16 %v417
        %v1762 = vunpack.c.l.b16 %v418
        %v1763 = vunpack.c.h.b16 %v418
        %v1764 = vunpack.c.l.b16 %v419
        %v1765 = vunpack.c.h.b16 %v419
        %v1766 = vunpack.c.l.b16 %v420
        %v1767 = vunpack.c.h.b16 %v420
        %v1768 = vunpack.c.l.b16 %v421
        %v1769 = vunpack.c.h.b16 %v421
        %v1770 = vunpack.c.l.b16 %v422
        %v1771 = vunpack.c.h.b16 %v422
        %v1772 = vunpack.c.l.b16 %v423
        %v1773 = vunpack.c.h.b16 %v423
        %v1774 = vunpack.c.l.b16 %v424
        %v1775 = vunpack.c.h.b16 %v424
        %v1776 = vunpack.c.l.b16 %v425
        %v1777 = vunpack.c.h.b16 %v425
        %v1778 = vunpack.c.l.b16 %v426
        %v1779 = vunpack.c.h.b16 %v426
        %v1780 = vunpack.c.l.b16 %v427
        %v1781 = vunpack.c.h.b16 %v427
        %v1782 = vunpack.c.l.b16 %v428
        %v1783 = vunpack.c.h.b16 %v428
        %v1784 = vunpack.c.l.b16 %v429
        %v1785 = vunpack.c.h.b16 %v429
        %v1786 = vunpack.c.l.b16 %v430
        %v1787 = vunpack.c.h.b16 %v430
        %v1788 = vunpack.c.l.b16 %v431
        %v1789 = vunpack.c.h.b16 %v431
        %v1790 = vunpack.c.l.b16 %v432
        %v1791 = vunpack.c.h.b16 %v432
        %v1792 = vunpack.c.l.b16 %v433
        %v1793 = vunpack.c.h.b16 %v433
        %v1794 = vunpack.c.l.b16 %v434
        %v1795 = vunpack.c.h.b16 %v434
        %v1796 = vunpack.c.l.b16 %v435
        %v1797 = vunpack.c.h.b16 %v435
        %v1798 = vunpack.c.l.b16 %v436
        %v1799 = vunpack.c.h.b16 %v436
        %v1800 = vunpack.c.l.b16 %v437
        %v1801 = vunpack.c.h.b16 %v437
        %v1802 = vunpack.c.l.b16 %v438
        %v1803 = vunpack.c.h.b16 %v438
        %v1804 = vunpack.c.l.b16 %v439
        %v1805 = vunpack.c.h.b16 %v439
        %v1806 = vunpack.c.l.b16 %v440
        %v1807 = vunpack.c.h.b16 %v440
        %v1808 = vunpack.c.l.b16 %v441
        %v1809 = vunpack.c.h.b16 %v441
        %v1810 = vunpack.c.l.b16 %v442
        %v1811 = vunpack.c.h.b16 %v442
        %v1812 = vunpack.c.l.b16 %v443
        %v1813 = vunpack.c.h.b16 %v443
        %v1814 = vunpack.c.l.b16 %v444
        %v1815 = vunpack.c.h.b16 %v444
        %v1816 = vunpack.c.l.b16 %v445
        %v1817 = vunpack.c.h.b16 %v445
        %v1818 = vunpack.c.l.b16 %v446
        %v1819 = vunpack.c.h.b16 %v446
        %v1820 = vunpack.c.l.b16 %v447
        %v1821 = vunpack.c.h.b16 %v447
        %v1822 = vunpack.c.l.b16 %v448
        %v1823 = vunpack.c.h.b16 %v448
        %v1824 = vunpack.c.l.b16 %v449
        %v1825 = vunpack.c.h.b16 %v449
        %v1826 = vunpack.c.l.b16 %v450
        %v1827 = vunpack.c.h.b16 %v450
        %v1828 = vunpack.c.l.b16 %v451
        %v1829 = vunpack.c.h.b16 %v451
        %v1830 = vunpack.c.l.b16 %v452
        %v1831 = vunpack.c.h.b16 %v452
        %v1832 = vunpack.c.l.b16 %v453
        %v1833 = vunpack.c.h.b16 %v453
        %v1834 = vunpack.c.l.b16 %v454
        %v1835 = vunpack.c.h.b16 %v454
        %v1836 = vunpack.c.l.b16 %v455
        %v1837 = vunpack.c.h.b16 %v455
        %v1838 = vunpack.c.l.b16 %v456
        %v1839 = vunpack.c.h.b16 %v456
        %v1840 = vunpack.c.l.b16 %v457
        %v1841 = vunpack.c.h.b16 %v457
        %v1842 = vunpack.c.l.b16 %v458
        %v1843 = vunpack.c.h.b16 %v458
        %v1844 = vunpack.c.l.b16 %v459
        %v1845 = vunpack.c.h.b16 %v459
        %v1846 = vunpack.c.l.b16 %v460
        %v1847 = vunpack.c.h.b16 %v460
        %v1848 = vunpack.c.l.b16 %v461
        %v1849 = vunpack.c.h.b16 %v461
        %v1850 = vunpack.c.l.b16 %v462
        %v1851 = vunpack.c.h.b16 %v462
        %v1852 = vunpack.c.l.b16 %v463
        %v1853 = vunpack.c.h.b16 %v463
        %v1854 = vunpack.c.l.b16 %v464
        %v1855 = vunpack.c.h.b16 %v464
        %v1856 = vunpack.c.l.b16 %v465
        %v1857 = vunpack.c.h.b16 %v465
        %v1858 = vunpack.c.l.b16 %v466
        %v1859 = vunpack.c.h.b16 %v466
        %v1860 = vunpack.c.l.b16 %v467
        %v1861 = vunpack.c.h.b16 %v467
        %v1862 = vunpack.c.l.b16 %v468
        %v1863 = vunpack.c.h.b16 %v468
        %v1864 = vunpack.c.l.b16 %v469
        %v1865 = vunpack.c.h.b16 %v469
        %v1866 = vunpack.c.l.b16 %v470
        %v1867 = vunpack.c.h.b16 %v470
        %v1868 = vunpack.c.l.b16 %v471
        %v1869 = vunpack.c.h.b16 %v471
        %v1870 = vunpack.c.l.b16 %v472
        %v1871 = vunpack.c.h.b16 %v472
        %v1872 = vunpack.c.l.b16 %v473
        %v1873 = vunpack.c.h.b16 %v473
        %v1874 = vunpack.c.l.b16 %v474
        %v1875 = vunpack.c.h.b16 %v474
        %v1876 = vunpack.c.l.b16 %v475
        %v1877 = vunpack.c.h.b16 %v475
        %v1878 = vunpack.c.l.b16 %v476
        %v1879 = vunpack.c.h.b16 %v476
        %v1880 = vunpack.c.l.b16 %v477
        %v1881 = vunpack.c.h.b16 %v477
        %v1882 = vunpack.c.l.b16 %v478
        %v1883 = vunpack.c.h.b16 %v478
        %v1884 = vunpack.c.l.b16 %v479
        %v1885 = vunpack.c.h.b16 %v479
        %v1886 = vunpack.c.l.b16 %v480
        %v1887 = vunpack.c.h.b16 %v480
        %v1888 = vunpack.c.l.b16 %v481
        %v1889 = vunpack.c.h.b16 %v481
        %v1890 = vunpack.c.l.b16 %v482
        %v1891 = vunpack.c.h.b16 %v482
        %v1892 = vunpack.c.l.b16 %v483
        %v1893 = vunpack.c.h.b16 %v483
        %v1894 = vunpack.c.l.b16 %v484
        %v1895 = vunpack.c.h.b16 %v484
        %v1896 = vunpack.c.l.b16 %v485
        %v1897 = vunpack.c.h.b16 %v485
        %v1898 = vunpack.c.l.b16 %v486
        %v1899 = vunpack.c.h.b16 %v486
        %v1900 = vunpack.c.l.b16 %v487
        %v1901 = vunpack.c.h.b16 %v487
        %v1902 = vunpack.c.l.b16 %v488
        %v1903 = vunpack.c.h.b16 %v488
        %v1904 = vunpack.c.l.b16 %v489
        %v1905 = vunpack.c.h.b16 %v489
        %v1906 = vunpack.c.l.b16 %v490
        %v1907 = vunpack.c.h.b16 %v490
        %v1908 = vunpack.c.l.b16 %v491
        %v1909 = vunpack.c.h.b16 %v491
        %v1910 = vunpack.c.l.b16 %v492
        %v1911 = vunpack.c.h.b16 %v492
        %v1912 = vunpack.c.l.b16 %v493
        %v1913 = vunpack.c.h.b16 %v493
        %v1914 = vunpack.c.l.b16 %v494
        %v1915 = vunpack.c.h.b16 %v494
        %v1916 = vunpack.c.l.b16 %v495
        %v1917 = vunpack.c.h.b16 %v495
        %v1918 = vunpack.c.l.b16 %v496
        %v1919 = vunpack.c.h.b16 %v496
        %v1920 = vunpack.c.l.b16 %v497
        %v1921 = vunpack.c.h.b16 %v497
        %v1922 = vunpack.c.l.b16 %v498
        %v1923 = vunpack.c.h.b16 %v498
        %v1924 = vunpack.c.l.b16 %v499
        %v1925 = vunpack.c.h.b16 %v499
        %v1926 = vunpack.c.l.b16 %v500
        %v1927 = vunpack.c.h.b16 %v500
        %v1928 = vunpack.c.l.b16 %v501
        %v1929 = vunpack.c.h.b16 %v501
        %v1930 = vunpack.c.l.b16 %v502
        %v1931 = vunpack.c.h.b16 %v502
        %v1932 = vunpack.c.l.b16 %v503
        %v1933 = vunpack.c.h.b16 %v503
        %v1934 = vunpack.c.l.b16 %v504
        %v1935 = vunpack.c.h.b16 %v504
        %v1936 = vunpack.c.l.b16 %v505
        %v1937 = vunpack.c.h.b16 %v505
        %v1938 = vunpack.c.l.b16 %v506
        %v1939 = vunpack.c.h.b16 %v506
        %v1940 = vunpack.c.l.b16 %v507
        %v1941 = vunpack.c.h.b16 %v507
        %v1942 = vunpack.c.l.b16 %v508
        %v1943 = vunpack.c.h.b16 %v508
        %v1944 = vunpack.c.l.b16 %v509
        %v1945 = vunpack.c.h.b16 %v509
        %v1946 = vunpack.c.l.b16 %v510
        %v1947 = vunpack.c.h.b16 %v510
        %v1948 = vunpack.c.l.b16 %v511
        %v1949 = vunpack.c.h.b16 %v511
        %v1950 = vunpack.c.l.b16 %v512
        %v1951 = vunpack.c.h.b16 %v512
        %v1952 = vunpack.c.l.b16 %v513
        %v1953 = vunpack.c.h.b16 %v513
        %v1954 = vunpack.c.l.b16 %v514
        %v1955 = vunpack.c.h.b16 %v514
        %v1956 = vunpack.c.l.b16 %v515
        %v1957 = vunpack.c.h.b16 %v515
        %v1958 = vunpack.c.l.b16 %v516
        %v1959 = vunpack.c.h.b16 %v516
        %v1960 = vunpack.c.l.b16 %v517
        %v1961 = vunpack.c.h.b16 %v517
        %v1962 = vunpack.c.l.b16 %v518
        %v1963 = vunpack.c.h.b16 %v518
        %v1964 = vunpack.c.l.b16 %v519
        %v1965 = vunpack.c.h.b16 %v519
        %v1966 = vunpack.c.l.b16 %v520
        %v1967 = vunpack.c.h.b16 %v520
        %v1968 = vunpack.c.l.b16 %v521
        %v1969 = vunpack.c.h.b16 %v521
        %v1970 = vunpack.c.l.b16 %v522
        %v1971 = vunpack.c.h.b16 %v522
        %v1972 = vunpack.c.l.b16 %v523
        %v1973 = vunpack.c.h.b16 %v523
        %v1974 = vunpack.c.l.b16 %v524
        %v1975 = vunpack.c.h.b16 %v524
        %v1976 = vunpack.c.l.b16 %v525
        %v1977 = vunpack.c.h.b16 %v525
        %v1978 = vunpack.c.l.b16 %v526
        %v1979 = vunpack.c.h.b16 %v526
        %v1980 = vunpack.c.l.b16 %v527
        %v1981 = vunpack.c.h.b16 %v527
        %v1982 = vunpack.c.l.b16 %v528
        %v1983 = vunpack.c.h.b16 %v528
        %v1984 = vunpack.c.l.b16 %v529
        %v1985 = vunpack.c.h.b16 %v529
        %v1986 = vunpack.c.l.b16 %v530
        %v1987 = vunpack.c.h.b16 %v530
        %v1988 = vunpack.c.l.b16 %v531
        %v1989 = vunpack.c.h.b16 %v531
        %v1990 = vunpack.c.l.b16 %v532
        %v1991 = vunpack.c.h.b16 %v532
        %v1992 = vunpack.c.l.b16 %v533
        %v1993 = vunpack.c.h.b16 %v533
        %v1994 = vunpack.c.l.b16 %v534
        %v1995 = vunpack.c.h.b16 %v534
        %v1996 = vunpack.c.l.b16 %v535
        %v1997 = vunpack.c.h.b16 %v535
        %v1998 = vunpack.c.l.b16 %v536
        %v1999 = vunpack.c.h.b16 %v536
        %v2000 = vunpack.c.l.b16 %v537
        %v2001 = vunpack.c.h.b16 %v537
        %v2002 = vunpack.c.l.b16 %v538
        %v2003 = vunpack.c.h.b16 %v538
        %v2004 = vunpack.c.l.b16 %v539
        %v2005 = vunpack.c.h.b16 %v539
        %v2006 = vunpack.c.l.b16 %v540
        %v2007 = vunpack.c.h.b16 %v540
        %v2008 = vunpack.c.l.b16 %v541
        %v2009 = vunpack.c.h.b16 %v541
        %v2010 = vunpack.c.l.b16 %v542
        %v2011 = vunpack.c.h.b16 %v542
        %v2012 = vunpack.c.l.b16 %v543
        %v2013 = vunpack.c.h.b16 %v543
        %v2014 = vunpack.c.l.b16 %v544
        %v2015 = vunpack.c.h.b16 %v544
        %v2016 = vunpack.c.l.b16 %v545
        %v2017 = vunpack.c.h.b16 %v545
        %v2018 = vunpack.c.l.b16 %v546
        %v2019 = vunpack.c.h.b16 %v546
        %v2020 = vunpack.c.l.b16 %v547
        %v2021 = vunpack.c.h.b16 %v547
        %v2022 = vunpack.c.l.b16 %v548
        %v2023 = vunpack.c.h.b16 %v548
        %v2024 = vunpack.c.l.b16 %v549
        %v2025 = vunpack.c.h.b16 %v549
        %v2026 = vunpack.c.l.b16 %v550
        %v2027 = vunpack.c.h.b16 %v550
        %v2028 = vunpack.c.l.b16 %v551
        %v2029 = vunpack.c.h.b16 %v551
        %v2030 = vunpack.c.l.b16 %v552
        %v2031 = vunpack.c.h.b16 %v552
        %v2032 = vunpack.c.l.b16 %v553
        %v2033 = vunpack.c.h.b16 %v553
        %v2034 = vunpack.c.l.b16 %v554
        %v2035 = vunpack.c.h.b16 %v554
        %v2036 = vunpack.c.l.b16 %v555
        %v2037 = vunpack.c.h.b16 %v555
        %v2038 = vunpack.c.l.b16 %v556
        %v2039 = vunpack.c.h.b16 %v556
        %v2040 = vunpack.c.l.b16 %v557
        %v2041 = vunpack.c.h.b16 %v557
        %v2042 = vunpack.c.l.b16 %v558
        %v2043 = vunpack.c.h.b16 %v558
        %v2044 = vunpack.c.l.b16 %v559
        %v2045 = vunpack.c.h.b16 %v559
        %v2046 = vunpack.c.l.b16 %v560
        %v2047 = vunpack.c.h.b16 %v560
        %v2048 = vunpack.c.l.b16 %v561
        %v2049 = vunpack.c.h.b16 %v561
        %v2050 = vunpack.c.l.b16 %v562
        %v2051 = vunpack.c.h.b16 %v562
        %v2052 = vunpack.c.l.b16 %v563
        %v2053 = vunpack.c.h.b16 %v563
        %v2054 = vunpack.c.l.b16 %v564
        %v2055 = vunpack.c.h.b16 %v564
        %v2056 = vunpack.c.l.b16 %v565
        %v2057 = vunpack.c.h.b16 %v565
        %v2058 = vunpack.c.l.b16 %v566
        %v2059 = vunpack.c.h.b16 %v566
        %v2060 = vunpack.c.l.b16 %v567
        %v2061 = vunpack.c.h.b16 %v567
        %v2062 = vunpack.c.l.b16 %v568
        %v2063 = vunpack.c.h.b16 %v568
        %v2064 = vunpack.c.l.b16 %v569
        %v2065 = vunpack.c.h.b16 %v569
        %v2066 = vunpack.c.l.b16 %v570
        %v2067 = vunpack.c.h.b16 %v570
        %v2068 = vunpack.c.l.b16 %v571
        %v2069 = vunpack.c.h.b16 %v571
        %v2070 = vunpack.c.l.b16 %v572
        %v2071 = vunpack.c.h.b16 %v572
        %v2072 = vunpack.c.l.b16 %v573
        %v2073 = vunpack.c.h.b16 %v573
        %v2074 = vunpack.c.l.b16 %v574
        %v2075 = vunpack.c.h.b16 %v574
        %v2076 = vunpack.c.l.b16 %v575
        %v2077 = vunpack.c.h.b16 %v575
        %v2078 = vunpack.c.l.b16 %v576
        %v2079 = vunpack.c.h.b16 %v576
        %v2080 = vunpack.c.l.b16 %v577
        %v2081 = vunpack.c.h.b16 %v577
        %v2082 = vunpack.c.l.b16 %v578
        %v2083 = vunpack.c.h.b16 %v578
        %v2084 = vunpack.c.l.b16 %v579
        %v2085 = vunpack.c.h.b16 %v579
        %v2086 = vunpack.c.l.b16 %v580
        %v2087 = vunpack.c.h.b16 %v580
        %v2088 = vunpack.c.l.b16 %v581
        %v2089 = vunpack.c.h.b16 %v581
        %v2090 = vunpack.c.l.b16 %v582
        %v2091 = vunpack.c.h.b16 %v582
        %v2092 = vunpack.c.l.b16 %v583
        %v2093 = vunpack.c.h.b16 %v583
        %v2094 = vunpack.c.l.b16 %v584
        %v2095 = vunpack.c.h.b16 %v584
        %v2096 = vunpack.c.l.b16 %v585
        %v2097 = vunpack.c.h.b16 %v585
        %v2098 = vunpack.c.l.b16 %v586
        %v2099 = vunpack.c.h.b16 %v586
        %v2100 = vunpack.c.l.b16 %v587
        %v2101 = vunpack.c.h.b16 %v587
        %v2102 = vunpack.c.l.b16 %v588
        %v2103 = vunpack.c.h.b16 %v588
        %v2104 = vunpack.c.l.b16 %v589
        %v2105 = vunpack.c.h.b16 %v589
        %v2106 = vunpack.c.l.b16 %v590
        %v2107 = vunpack.c.h.b16 %v590
        %v2108 = vunpack.c.l.b16 %v591
        %v2109 = vunpack.c.h.b16 %v591
        %v2110 = vunpack.c.l.b16 %v592
        %v2111 = vunpack.c.h.b16 %v592
        %v2112 = vunpack.c.l.b16 %v593
        %v2113 = vunpack.c.h.b16 %v593
        %v2114 = vunpack.c.l.b16 %v594
        %v2115 = vunpack.c.h.b16 %v594
        %v2116 = vunpack.c.l.b16 %v595
        %v2117 = vunpack.c.h.b16 %v595
        %v2118 = vunpack.c.l.b16 %v596
        %v2119 = vunpack.c.h.b16 %v596
        %v2120 = vunpack.c.l.b16 %v597
        %v2121 = vunpack.c.h.b16 %v597
        %v2122 = vunpack.c.l.b16 %v598
        %v2123 = vunpack.c.h.b16 %v598
        %v2124 = vunpack.c.l.b16 %v599
        %v2125 = vunpack.c.h.b16 %v599
        %v2126 = vunpack.c.l.b16 %v600
        %v2127 = vunpack.c.h.b16 %v600
        %v2128 = vunpack.c.l.b16 %v601
        %v2129 = vunpack.c.h.b16 %v601
        %v2130 = vunpack.c.l.b16 %v602
        %v2131 = vunpack.c.h.b16 %v602
        %v2132 = vunpack.c.l.b16 %v603
        %v2133 = vunpack.c.h.b16 %v603
        %v2134 = vunpack.c.l.b16 %v604
        %v2135 = vunpack.c.h.b16 %v604
        %v2136 = vunpack.c.l.b16 %v605
        %v2137 = vunpack.c.h.b16 %v605
        %v2138 = vunpack.c.l.b16 %v606
        %v2139 = vunpack.c.h.b16 %v606
        %v2140 = vunpack.c.l.b16 %v607
        %v2141 = vunpack.c.h.b16 %v607
        %v2142 = vunpack.c.l.b16 %v608
        %v2143 = vunpack.c.h.b16 %v608
        %v2144 = vunpack.c.l.b16 %v609
        %v2145 = vunpack.c.h.b16 %v609
        %v2146 = vunpack.c.l.b16 %v610
        %v2147 = vunpack.c.h.b16 %v610
        %v2148 = vunpack.c.l.b16 %v611
        %v2149 = vunpack.c.h.b16 %v611
        %v2150 = vunpack.c.l.b16 %v612
        %v2151 = vunpack.c.h.b16 %v612
        %v2152 = vunpack.c.l.b16 %v613
        %v2153 = vunpack.c.h.b16 %v613
        %v2154 = vunpack.c.l.b16 %v614
        %v2155 = vunpack.c.h.b16 %v614
        %v2156 = vunpack.c.l.b16 %v615
        %v2157 = vunpack.c.h.b16 %v615
        %v2158 = vunpack.c.l.b16 %v616
        %v2159 = vunpack.c.h.b16 %v616
        %v2160 = vunpack.c.l.b16 %v617
        %v2161 = vunpack.c.h.b16 %v617
        %v2162 = vunpack.c.l.b16 %v618
        %v2163 = vunpack.c.h.b16 %v618
        %v2164 = vunpack.c.l.b16 %v619
        %v2165 = vunpack.c.h.b16 %v619
        %v2166 = vunpack.c.l.b16 %v620
        %v2167 = vunpack.c.h.b16 %v620
        %v2168 = vunpack.c.l.b16 %v621
        %v2169 = vunpack.c.h.b16 %v621
        %v2170 = vunpack.c.l.b16 %v622
        %v2171 = vunpack.c.h.b16 %v622
        %v2172 = vunpack.c.l.b16 %v623
        %v2173 = vunpack.c.h.b16 %v623
        %v2174 = vunpack.c.l.b16 %v624
        %v2175 = vunpack.c.h.b16 %v624
        %v2176 = vunpack.c.l.b16 %v625
        %v2177 = vunpack.c.h.b16 %v625
        %v2178 = vunpack.c.l.b16 %v626
        %v2179 = vunpack.c.h.b16 %v626
        %v2180 = vunpack.c.l.b16 %v627
        %v2181 = vunpack.c.h.b16 %v627
        %v2182 = vunpack.c.l.b16 %v628
        %v2183 = vunpack.c.h.b16 %v628
        %v2184 = vunpack.c.l.b16 %v629
        %v2185 = vunpack.c.h.b16 %v629
        %v2186 = vunpack.c.l.b16 %v630
        %v2187 = vunpack.c.h.b16 %v630
        %v2188 = vunpack.c.l.b16 %v631
        %v2189 = vunpack.c.h.b16 %v631
        %v2190 = vunpack.c.l.b16 %v632
        %v2191 = vunpack.c.h.b16 %v632
        %v2192 = vunpack.c.l.b16 %v633
        %v2193 = vunpack.c.h.b16 %v633
        %v2194 = vunpack.c.l.b16 %v634
        %v2195 = vunpack.c.h.b16 %v634
        %v2196 = vunpack.c.l.b16 %v635
        %v2197 = vunpack.c.h.b16 %v635
        %v2198 = vunpack.c.l.b16 %v636
        %v2199 = vunpack.c.h.b16 %v636
        %v2200 = vunpack.c.l.b16 %v637
        %v2201 = vunpack.c.h.b16 %v637
        %v2202 = vunpack.c.l.b16 %v638
        %v2203 = vunpack.c.h.b16 %v638
        %v2204 = vunpack.c.l.b16 %v639
        %v2205 = vunpack.c.h.b16 %v639
        %v2206 = vunpack.c.l.b16 %v640
        %v2207 = vunpack.c.h.b16 %v640
        %v2208 = vunpack.c.l.b16 %v641
        %v2209 = vunpack.c.h.b16 %v641
        %v2210 = vunpack.c.l.b16 %v642
        %v2211 = vunpack.c.h.b16 %v642
        %v2212 = vunpack.c.l.b16 %v643
        %v2213 = vunpack.c.h.b16 %v643
        %v2214 = vunpack.c.l.b16 %v644
        %v2215 = vunpack.c.h.b16 %v644
        %v2216 = vunpack.c.l.b16 %v645
        %v2217 = vunpack.c.h.b16 %v645
        %v2218 = vunpack.c.l.b16 %v646
        %v2219 = vunpack.c.h.b16 %v646
        %v2220 = vunpack.c.l.b16 %v647
        %v2221 = vunpack.c.h.b16 %v647
        %v2222 = vunpack.c.l.b16 %v648
        %v2223 = vunpack.c.h.b16 %v648
        %v2224 = vunpack.c.l.b16 %v649
        %v2225 = vunpack.c.h.b16 %v649
        %v2226 = vunpack.c.l.b16 %v650
        %v2227 = vunpack.c.h.b16 %v650
        %v2228 = vunpack.c.l.b16 %v651
        %v2229 = vunpack.c.h.b16 %v651
        %v2230 = vunpack.c.l.b16 %v652
        %v2231 = vunpack.c.h.b16 %v652
        %v2232 = vunpack.c.l.b16 %v653
        %v2233 = vunpack.c.h.b16 %v653
        %v2234 = vunpack.c.l.b16 %v654
        %v2235 = vunpack.c.h.b16 %v654
        %v2236 = vunpack.c.l.b16 %v655
        %v2237 = vunpack.c.h.b16 %v655
        %v2238 = vunpack.c.l.b16 %v656
        %v2239 = vunpack.c.h.b16 %v656
        %v2240 = vunpack.c.l.b16 %v657
        %v2241 = vunpack.c.h.b16 %v657
        %v2242 = vunpack.c.l.b16 %v658
        %v2243 = vunpack.c.h.b16 %v658
        %v2244 = vunpack.c.l.b16 %v659
        %v2245 = vunpack.c.h.b16 %v659
        %v2246 = vunpack.c.l.b16 %v660
        %v2247 = vunpack.c.h.b16 %v660
        %v2248 = vunpack.c.l.b16 %v661
        %v2249 = vunpack.c.h.b16 %v661
        %v2250 = vunpack.c.l.b16 %v662
        %v2251 = vunpack.c.h.b16 %v662
        %v2252 = vunpack.c.l.b16 %v663
        %v2253 = vunpack.c.h.b16 %v663
        %v2254 = vunpack.c.l.b16 %v664
        %v2255 = vunpack.c.h.b16 %v664
        %v2256 = vunpack.c.l.b16 %v665
        %v2257 = vunpack.c.h.b16 %v665
        %v2258 = vunpack.c.l.b16 %v666
        %v2259 = vunpack.c.h.b16 %v666
        %v2260 = vunpack.c.l.b16 %v667
        %v2261 = vunpack.c.h.b16 %v667
        %v2262 = vunpack.c.l.b16 %v668
        %v2263 = vunpack.c.h.b16 %v668
        %v2264 = vunpack.c.l.b16 %v669
        %v2265 = vunpack.c.h.b16 %v669
        %v2266 = vunpack.c.l.b16 %v670
        %v2267 = vunpack.c.h.b16 %v670
        %v2268 = vunpack.c.l.b16 %v671
        %v2269 = vunpack.c.h.b16 %v671
        %v2270 = vunpack.c.l.b16 %v672
        %v2271 = vunpack.c.h.b16 %v672
        %v2272 = vunpack.c.l.b16 %v673
        %v2273 = vunpack.c.h.b16 %v673
        %v2274 = vunpack.c.l.b16 %v674
        %v2275 = vunpack.c.h.b16 %v674
        %v2276 = vunpack.c.l.b16 %v675
        %v2277 = vunpack.c.h.b16 %v675
        %v2278 = vunpack.c.l.b16 %v676
        %v2279 = vunpack.c.h.b16 %v676
        %v2280 = vunpack.c.l.b16 %v677
        %v2281 = vunpack.c.h.b16 %v677
        %v2282 = vunpack.c.l.b16 %v678
        %v2283 = vunpack.c.h.b16 %v678
        %v2284 = vunpack.c.l.b16 %v679
        %v2285 = vunpack.c.h.b16 %v679
        %v2286 = vunpack.c.l.b16 %v680
        %v2287 = vunpack.c.h.b16 %v680
        %v2288 = vunpack.c.l.b16 %v681
        %v2289 = vunpack.c.h.b16 %v681
        %v2290 = vunpack.c.l.b16 %v682
        %v2291 = vunpack.c.h.b16 %v682
        %v2292 = vunpack.c.l.b16 %v683
        %v2293 = vunpack.c.h.b16 %v683
        %v2294 = vunpack.c.l.b16 %v684
        %v2295 = vunpack.c.h.b16 %v684
        %v2296 = vunpack.c.l.b16 %v685
        %v2297 = vunpack.c.h.b16 %v685
        %v2298 = vunpack.c.l.b16 %v686
        %v2299 = vunpack.c.h.b16 %v686
        %v2300 = vunpack.c.l.b16 %v687
        %v2301 = vunpack.c.h.b16 %v687
        %v2302 = vunpack.c.l.b16 %v688
        %v2303 = vunpack.c.h.b16 %v688
        %v2304 = vunpack.c.l.b16 %v689
        %v2305 = vunpack.c.h.b16 %v689
        %v2306 = vpack.c.b16 %v1290, %v1282
        %v2307 = vpack.c.b16 %v1291, %v1283
        %v2308 = vpack.c.b16 %v1292, %v1284
        %v2309 = vpack.c.b16 %v1293, %v1285
        %v2310 = vpack.c.b16 %v1294, %v1286
        %v2311 = vpack.c.b16 %v1295, %v1287
        %v2312 = vpack.c.b16 %v1296, %v1288
        %v2313 = vpack.c.b16 %v1297, %v1289
        %v2314 = vpack.c.b16 %v1306, %v1298
        %v2315 = vpack.c.b16 %v1307, %v1299
        %v2316 = vpack.c.b16 %v1308, %v1300
        %v2317 = vpack.c.b16 %v1309, %v1301
        %v2318 = vpack.c.b16 %v1310, %v1302
        %v2319 = vpack.c.b16 %v1311, %v1303
        %v2320 = vpack.c.b16 %v1312, %v1304
        %v2321 = vpack.c.b16 %v1313, %v1305
        %v2322 = vpack.c.b16 %v1322, %v1314
        %v2323 = vpack.c.b16 %v1323, %v1315
        %v2324 = vpack.c.b16 %v1324, %v1316
        %v2325 = vpack.c.b16 %v1325, %v1317
        %v2326 = vpack.c.b16 %v1326, %v1318
        %v2327 = vpack.c.b16 %v1327, %v1319
        %v2328 = vpack.c.b16 %v1328, %v1320
        %v2329 = vpack.c.b16 %v1329, %v1321
        %v2330 = vpack.c.b16 %v1338, %v1330
        %v2331 = vpack.c.b16 %v1339, %v1331
        %v2332 = vpack.c.b16 %v1340, %v1332
        %v2333 = vpack.c.b16 %v1341, %v1333
        %v2334 = vpack.c.b16 %v1342, %v1334
        %v2335 = vpack.c.b16 %v1343, %v1335
        %v2336 = vpack.c.b16 %v1344, %v1336
        %v2337 = vpack.c.b16 %v1345, %v1337
        %v2338 = vpack.c.b16 %v1354, %v1346
        %v2339 = vpack.c.b16 %v1355, %v1347
        %v2340 = vpack.c.b16 %v1356, %v1348
        %v2341 = vpack.c.b16 %v1357, %v1349
        %v2342 = vpack.c.b16 %v1358, %v1350
        %v2343 = vpack.c.b16 %v1359, %v1351
        %v2344 = vpack.c.b16 %v1360, %v1352
        %v2345 = vpack.c.b16 %v1361, %v1353
        %v2346 = vpack.c.b16 %v1370, %v1362
        %v2347 = vpack.c.b16 %v1371, %v1363
        %v2348 = vpack.c.b16 %v1372, %v1364
        %v2349 = vpack.c.b16 %v1373, %v1365
        %v2350 = vpack.c.b16 %v1374, %v1366
        %v2351 = vpack.c.b16 %v1375, %v1367
        %v2352 = vpack.c.b16 %v1376, %v1368
        %v2353 = vpack.c.b16 %v1377, %v1369
        %v2354 = vpack.c.b16 %v1386, %v1378
        %v2355 = vpack.c.b16 %v1387, %v1379
        %v2356 = vpack.c.b16 %v1388, %v1380
        %v2357 = vpack.c.b16 %v1389, %v1381
        %v2358 = vpack.c.b16 %v1390, %v1382
        %v2359 = vpack.c.b16 %v1391, %v1383
        %v2360 = vpack.c.b16 %v1392, %v1384
        %v2361 = vpack.c.b16 %v1393, %v1385
        %v2362 = vpack.c.b16 %v1402, %v1394
        %v2363 = vpack.c.b16 %v1403, %v1395
        %v2364 = vpack.c.b16 %v1404, %v1396
        %v2365 = vpack.c.b16 %v1405, %v1397
        %v2366 = vpack.c.b16 %v1406, %v1398
        %v2367 = vpack.c.b16 %v1407, %v1399
        %v2368 = vpack.c.b16 %v1408, %v1400
        %v2369 = vpack.c.b16 %v1409, %v1401
        %v2370 = vpack.c.b16 %v1418, %v1410
        %v2371 = vpack.c.b16 %v1419, %v1411
        %v2372 = vpack.c.b16 %v1420, %v1412
        %v2373 = vpack.c.b16 %v1421, %v1413
        %v2374 = vpack.c.b16 %v1422, %v1414
        %v2375 = vpack.c.b16 %v1423, %v1415
        %v2376 = vpack.c.b16 %v1424, %v1416
        %v2377 = vpack.c.b16 %v1425, %v1417
        %v2378 = vpack.c.b16 %v1434, %v1426
        %v2379 = vpack.c.b16 %v1435, %v1427
        %v2380 = vpack.c.b16 %v1436, %v1428
        %v2381 = vpack.c.b16 %v1437, %v1429
        %v2382 = vpack.c.b16 %v1438, %v1430
        %v2383 = vpack.c.b16 %v1439, %v1431
        %v2384 = vpack.c.b16 %v1440, %v1432
        %v2385 = vpack.c.b16 %v1441, %v1433
        %v2386 = vpack.c.b16 %v1450, %v1442
        %v2387 = vpack.c.b16 %v1451, %v1443
        %v2388 = vpack.c.b16 %v1452, %v1444
        %v2389 = vpack.c.b16 %v1453, %v1445
        %v2390 = vpack.c.b16 %v1454, %v1446
        %v2391 = vpack.c.b16 %v1455, %v1447
        %v2392 = vpack.c.b16 %v1456, %v1448
        %v2393 = vpack.c.b16 %v1457, %v1449
        %v2394 = vpack.c.b16 %v1466, %v1458
        %v2395 = vpack.c.b16 %v1467, %v1459
        %v2396 = vpack.c.b16 %v1468, %v1460
        %v2397 = vpack.c.b16 %v1469, %v1461
        %v2398 = vpack.c.b16 %v1470, %v1462
        %v2399 = vpack.c.b16 %v1471, %v1463
        %v2400 = vpack.c.b16 %v1472, %v1464
        %v2401 = vpack.c.b16 %v1473, %v1465
        %v2402 = vpack.c.b16 %v1482, %v1474
        %v2403 = vpack.c.b16 %v1483, %v1475
        %v2404 = vpack.c.b16 %v1484, %v1476
        %v2405 = vpack.c.b16 %v1485, %v1477
        %v2406 = vpack.c.b16 %v1486, %v1478
        %v2407 = vpack.c.b16 %v1487, %v1479
        %v2408 = vpack.c.b16 %v1488, %v1480
        %v2409 = vpack.c.b16 %v1489, %v1481
        %v2410 = vpack.c.b16 %v1498, %v1490
        %v2411 = vpack.c.b16 %v1499, %v1491
        %v2412 = vpack.c.b16 %v1500, %v1492
        %v2413 = vpack.c.b16 %v1501, %v1493
        %v2414 = vpack.c.b16 %v1502, %v1494
        %v2415 = vpack.c.b16 %v1503, %v1495
        %v2416 = vpack.c.b16 %v1504, %v1496
        %v2417 = vpack.c.b16 %v1505, %v1497
        %v2418 = vpack.c.b16 %v1514, %v1506
        %v2419 = vpack.c.b16 %v1515, %v1507
        %v2420 = vpack.c.b16 %v1516, %v1508
        %v2421 = vpack.c.b16 %v1517, %v1509
        %v2422 = vpack.c.b16 %v1518, %v1510
        %v2423 = vpack.c.b16 %v1519, %v1511
        %v2424 = vpack.c.b16 %v1520, %v1512
        %v2425 = vpack.c.b16 %v1521, %v1513
        %v2426 = vpack.c.b16 %v1530, %v1522
        %v2427 = vpack.c.b16 %v1531, %v1523
        %v2428 = vpack.c.b16 %v1532, %v1524
        %v2429 = vpack.c.b16 %v1533, %v1525
        %v2430 = vpack.c.b16 %v1534, %v1526
        %v2431 = vpack.c.b16 %v1535, %v1527
        %v2432 = vpack.c.b16 %v1536, %v1528
        %v2433 = vpack.c.b16 %v1537, %v1529
        %v2434 = vpack.c.b16 %v1546, %v1538
        %v2435 = vpack.c.b16 %v1547, %v1539
        %v2436 = vpack.c.b16 %v1548, %v1540
        %v2437 = vpack.c.b16 %v1549, %v1541
        %v2438 = vpack.c.b16 %v1550, %v1542
        %v2439 = vpack.c.b16 %v1551, %v1543
        %v2440 = vpack.c.b16 %v1552, %v1544
        %v2441 = vpack.c.b16 %v1553, %v1545
        %v2442 = vpack.c.b16 %v1562, %v1554
        %v2443 = vpack.c.b16 %v1563, %v1555
        %v2444 = vpack.c.b16 %v1564, %v1556
        %v2445 = vpack.c.b16 %v1565, %v1557
        %v2446 = vpack.c.b16 %v1566, %v1558
        %v2447 = vpack.c.b16 %v1567, %v1559
        %v2448 = vpack.c.b16 %v1568, %v1560
        %v2449 = vpack.c.b16 %v1569, %v1561
        %v2450 = vpack.c.b16 %v1578, %v1570
        %v2451 = vpack.c.b16 %v1579, %v1571
        %v2452 = vpack.c.b16 %v1580, %v1572
        %v2453 = vpack.c.b16 %v1581, %v1573
        %v2454 = vpack.c.b16 %v1582, %v1574
        %v2455 = vpack.c.b16 %v1583, %v1575
        %v2456 = vpack.c.b16 %v1584, %v1576
        %v2457 = vpack.c.b16 %v1585, %v1577
        %v2458 = vpack.c.b16 %v1594, %v1586
        %v2459 = vpack.c.b16 %v1595, %v1587
        %v2460 = vpack.c.b16 %v1596, %v1588
        %v2461 = vpack.c.b16 %v1597, %v1589
        %v2462 = vpack.c.b16 %v1598, %v1590
        %v2463 = vpack.c.b16 %v1599, %v1591
        %v2464 = vpack.c.b16 %v1600, %v1592
        %v2465 = vpack.c.b16 %v1601, %v1593
        %v2466 = vpack.c.b16 %v1610, %v1602
        %v2467 = vpack.c.b16 %v1611, %v1603
        %v2468 = vpack.c.b16 %v1612, %v1604
        %v2469 = vpack.c.b16 %v1613, %v1605
        %v2470 = vpack.c.b16 %v1614, %v1606
        %v2471 = vpack.c.b16 %v1615, %v1607
        %v2472 = vpack.c.b16 %v1616, %v1608
        %v2473 = vpack.c.b16 %v1617, %v1609
        %v2474 = vpack.c.b16 %v1626, %v1618
        %v2475 = vpack.c.b16 %v1627, %v1619
        %v2476 = vpack.c.b16 %v1628, %v1620
        %v2477 = vpack.c.b16 %v1629, %v1621
        %v2478 = vpack.c.b16 %v1630, %v1622
        %v2479 = vpack.c.b16 %v1631, %v1623
        %v2480 = vpack.c.b16 %v1632, %v1624
        %v2481 = vpack.c.b16 %v1633, %v1625
        %v2482 = vpack.c.b16 %v1642, %v1634
        %v2483 = vpack.c.b16 %v1643, %v1635
        %v2484 = vpack.c.b16 %v1644, %v1636
        %v2485 = vpack.c.b16 %v1645, %v1637
        %v2486 = vpack.c.b16 %v1646, %v1638
        %v2487 = vpack.c.b16 %v1647, %v1639
        %v2488 = vpack.c.b16 %v1648, %v1640
        %v2489 = vpack.c.b16 %v1649, %v1641
        %v2490 = vpack.c.b16 %v1658, %v1650
        %v2491 = vpack.c.b16 %v1659, %v1651
        %v2492 = vpack.c.b16 %v1660, %v1652
        %v2493 = vpack.c.b16 %v1661, %v1653
        %v2494 = vpack.c.b16 %v1662, %v1654
        %v2495 = vpack.c.b16 %v1663, %v1655
        %v2496 = vpack.c.b16 %v1664, %v1656
        %v2497 = vpack.c.b16 %v1665, %v1657
        %v2498 = vpack.c.b16 %v1674, %v1666
        %v2499 = vpack.c.b16 %v1675, %v1667
        %v2500 = vpack.c.b16 %v1676, %v1668
        %v2501 = vpack.c.b16 %v1677, %v1669
        %v2502 = vpack.c.b16 %v1678, %v1670
        %v2503 = vpack.c.b16 %v1679, %v1671
        %v2504 = vpack.c.b16 %v1680, %v1672
        %v2505 = vpack.c.b16 %v1681, %v1673
        %v2506 = vpack.c.b16 %v1690, %v1682
        %v2507 = vpack.c.b16 %v1691, %v1683
        %v2508 = vpack.c.b16 %v1692, %v1684
        %v2509 = vpack.c.b16 %v1693, %v1685
        %v2510 = vpack.c.b16 %v1694, %v1686
        %v2511 = vpack.c.b16 %v1695, %v1687
        %v2512 = vpack.c.b16 %v1696, %v1688
        %v2513 = vpack.c.b16 %v1697, %v1689
        %v2514 = vpack.c.b16 %v1706, %v1698
        %v2515 = vpack.c.b16 %v1707, %v1699
        %v2516 = vpack.c.b16 %v1708, %v1700
        %v2517 = vpack.c.b16 %v1709, %v1701
        %v2518 = vpack.c.b16 %v1710, %v1702
        %v2519 = vpack.c.b16 %v1711, %v1703
        %v2520 = vpack.c.b16 %v1712, %v1704
        %v2521 = vpack.c.b16 %v1713, %v1705
        %v2522 = vpack.c.b16 %v1722, %v1714
        %v2523 = vpack.c.b16 %v1723, %v1715
        %v2524 = vpack.c.b16 %v1724, %v1716
        %v2525 = vpack.c.b16 %v1725, %v1717
        %v2526 = vpack.c.b16 %v1726, %v1718
        %v2527 = vpack.c.b16 %v1727, %v1719
        %v2528 = vpack.c.b16 %v1728, %v1720
        %v2529 = vpack.c.b16 %v1729, %v1721
        %v2530 = vpack.c.b16 %v1738, %v1730
        %v2531 = vpack.c.b16 %v1739, %v1731
        %v2532 = vpack.c.b16 %v1740, %v1732
        %v2533 = vpack.c.b16 %v1741, %v1733
        %v2534 = vpack.c.b16 %v1742, %v1734
        %v2535 = vpack.c.b16 %v1743, %v1735
        %v2536 = vpack.c.b16 %v1744, %v1736
        %v2537 = vpack.c.b16 %v1745, %v1737
        %v2538 = vpack.c.b16 %v1754, %v1746
        %v2539 = vpack.c.b16 %v1755, %v1747
        %v2540 = vpack.c.b16 %v1756, %v1748
        %v2541 = vpack.c.b16 %v1757, %v1749
        %v2542 = vpack.c.b16 %v1758, %v1750
        %v2543 = vpack.c.b16 %v1759, %v1751
        %v2544 = vpack.c.b16 %v1760, %v1752
        %v2545 = vpack.c.b16 %v1761, %v1753
        %v2546 = vpack.c.b16 %v1770, %v1762
        %v2547 = vpack.c.b16 %v1771, %v1763
        %v2548 = vpack.c.b16 %v1772, %v1764
        %v2549 = vpack.c.b16 %v1773, %v1765
        %v2550 = vpack.c.b16 %v1774, %v1766
        %v2551 = vpack.c.b16 %v1775, %v1767
        %v2552 = vpack.c.b16 %v1776, %v1768
        %v2553 = vpack.c.b16 %v1777, %v1769
        %v2554 = vpack.c.b16 %v1786, %v1778
        %v2555 = vpack.c.b16 %v1787, %v1779
        %v2556 = vpack.c.b16 %v1788, %v1780
        %v2557 = vpack.c.b16 %v1789, %v1781
        %v2558 = vpack.c.b16 %v1790, %v1782
        %v2559 = vpack.c.b16 %v1791, %v1783
        %v2560 = vpack.c.b16 %v1792, %v1784
        %v2561 = vpack.c.b16 %v1793, %v1785
        %v2562 = vpack.c.b16 %v1802, %v1794
        %v2563 = vpack.c.b16 %v1803, %v1795
        %v2564 = vpack.c.b16 %v1804, %v1796
        %v2565 = vpack.c.b16 %v1805, %v1797
        %v2566 = vpack.c.b16 %v1806, %v1798
        %v2567 = vpack.c.b16 %v1807, %v1799
        %v2568 = vpack.c.b16 %v1808, %v1800
        %v2569 = vpack.c.b16 %v1809, %v1801
        %v2570 = vpack.c.b16 %v1818, %v1810
        %v2571 = vpack.c.b16 %v1819, %v1811
        %v2572 = vpack.c.b16 %v1820, %v1812
        %v2573 = vpack.c.b16 %v1821, %v1813
        %v2574 = vpack.c.b16 %v1822, %v1814
        %v2575 = vpack.c.b16 %v1823, %v1815
        %v2576 = vpack.c.b16 %v1824, %v1816
        %v2577 = vpack.c.b16 %v1825, %v1817
        %v2578 = vpack.c.b16 %v1834, %v1826
        %v2579 = vpack.c.b16 %v1835, %v1827
        %v2580 = vpack.c.b16 %v1836, %v1828
        %v2581 = vpack.c.b16 %v1837, %v1829
        %v2582 = vpack.c.b16 %v1838, %v1830
        %v2583 = vpack.c.b16 %v1839, %v1831
        %v2584 = vpack.c.b16 %v1840, %v1832
        %v2585 = vpack.c.b16 %v1841, %v1833
        %v2586 = vpack.c.b16 %v1850, %v1842
        %v2587 = vpack.c.b16 %v1851, %v1843
        %v2588 = vpack.c.b16 %v1852, %v1844
        %v2589 = vpack.c.b16 %v1853, %v1845
        %v2590 = vpack.c.b16 %v1854, %v1846
        %v2591 = vpack.c.b16 %v1855, %v1847
        %v2592 = vpack.c.b16 %v1856, %v1848
        %v2593 = vpack.c.b16 %v1857, %v1849
        %v2594 = vpack.c.b16 %v1866, %v1858
        %v2595 = vpack.c.b16 %v1867, %v1859
        %v2596 = vpack.c.b16 %v1868, %v1860
        %v2597 = vpack.c.b16 %v1869, %v1861
        %v2598 = vpack.c.b16 %v1870, %v1862
        %v2599 = vpack.c.b16 %v1871, %v1863
        %v2600 = vpack.c.b16 %v1872, %v1864
        %v2601 = vpack.c.b16 %v1873, %v1865
        %v2602 = vpack.c.b16 %v1882, %v1874
        %v2603 = vpack.c.b16 %v1883, %v1875
        %v2604 = vpack.c.b16 %v1884, %v1876
        %v2605 = vpack.c.b16 %v1885, %v1877
        %v2606 = vpack.c.b16 %v1886, %v1878
        %v2607 = vpack.c.b16 %v1887, %v1879
        %v2608 = vpack.c.b16 %v1888, %v1880
        %v2609 = vpack.c.b16 %v1889, %v1881
        %v2610 = vpack.c.b16 %v1898, %v1890
        %v2611 = vpack.c.b16 %v1899, %v1891
        %v2612 = vpack.c.b16 %v1900, %v1892
        %v2613 = vpack.c.b16 %v1901, %v1893
        %v2614 = vpack.c.b16 %v1902, %v1894
        %v2615 = vpack.c.b16 %v1903, %v1895
        %v2616 = vpack.c.b16 %v1904, %v1896
        %v2617 = vpack.c.b16 %v1905, %v1897
        %v2618 = vpack.c.b16 %v1914, %v1906
        %v2619 = vpack.c.b16 %v1915, %v1907
        %v2620 = vpack.c.b16 %v1916, %v1908
        %v2621 = vpack.c.b16 %v1917, %v1909
        %v2622 = vpack.c.b16 %v1918, %v1910
        %v2623 = vpack.c.b16 %v1919, %v1911
        %v2624 = vpack.c.b16 %v1920, %v1912
        %v2625 = vpack.c.b16 %v1921, %v1913
        %v2626 = vpack.c.b16 %v1930, %v1922
        %v2627 = vpack.c.b16 %v1931, %v1923
        %v2628 = vpack.c.b16 %v1932, %v1924
        %v2629 = vpack.c.b16 %v1933, %v1925
        %v2630 = vpack.c.b16 %v1934, %v1926
        %v2631 = vpack.c.b16 %v1935, %v1927
        %v2632 = vpack.c.b16 %v1936, %v1928
        %v2633 = vpack.c.b16 %v1937, %v1929
        %v2634 = vpack.c.b16 %v1946, %v1938
        %v2635 = vpack.c.b16 %v1947, %v1939
        %v2636 = vpack.c.b16 %v1948, %v1940
        %v2637 = vpack.c.b16 %v1949, %v1941
        %v2638 = vpack.c.b16 %v1950, %v1942
        %v2639 = vpack.c.b16 %v1951, %v1943
        %v2640 = vpack.c.b16 %v1952, %v1944
        %v2641 = vpack.c.b16 %v1953, %v1945
        %v2642 = vpack.c.b16 %v1962, %v1954
        %v2643 = vpack.c.b16 %v1963, %v1955
        %v2644 = vpack.c.b16 %v1964, %v1956
        %v2645 = vpack.c.b16 %v1965, %v1957
        %v2646 = vpack.c.b16 %v1966, %v1958
        %v2647 = vpack.c.b16 %v1967, %v1959
        %v2648 = vpack.c.b16 %v1968, %v1960
        %v2649 = vpack.c.b16 %v1969, %v1961
        %v2650 = vpack.c.b16 %v1978, %v1970
        %v2651 = vpack.c.b16 %v1979, %v1971
        %v2652 = vpack.c.b16 %v1980, %v1972
        %v2653 = vpack.c.b16 %v1981, %v1973
        %v2654 = vpack.c.b16 %v1982, %v1974
        %v2655 = vpack.c.b16 %v1983, %v1975
        %v2656 = vpack.c.b16 %v1984, %v1976
        %v2657 = vpack.c.b16 %v1985, %v1977
        %v2658 = vpack.c.b16 %v1994, %v1986
        %v2659 = vpack.c.b16 %v1995, %v1987
        %v2660 = vpack.c.b16 %v1996, %v1988
        %v2661 = vpack.c.b16 %v1997, %v1989
        %v2662 = vpack.c.b16 %v1998, %v1990
        %v2663 = vpack.c.b16 %v1999, %v1991
        %v2664 = vpack.c.b16 %v2000, %v1992
        %v2665 = vpack.c.b16 %v2001, %v1993
        %v2666 = vpack.c.b16 %v2010, %v2002
        %v2667 = vpack.c.b16 %v2011, %v2003
        %v2668 = vpack.c.b16 %v2012, %v2004
        %v2669 = vpack.c.b16 %v2013, %v2005
        %v2670 = vpack.c.b16 %v2014, %v2006
        %v2671 = vpack.c.b16 %v2015, %v2007
        %v2672 = vpack.c.b16 %v2016, %v2008
        %v2673 = vpack.c.b16 %v2017, %v2009
        %v2674 = vpack.c.b16 %v2026, %v2018
        %v2675 = vpack.c.b16 %v2027, %v2019
        %v2676 = vpack.c.b16 %v2028, %v2020
        %v2677 = vpack.c.b16 %v2029, %v2021
        %v2678 = vpack.c.b16 %v2030, %v2022
        %v2679 = vpack.c.b16 %v2031, %v2023
        %v2680 = vpack.c.b16 %v2032, %v2024
        %v2681 = vpack.c.b16 %v2033, %v2025
        %v2682 = vpack.c.b16 %v2042, %v2034
        %v2683 = vpack.c.b16 %v2043, %v2035
        %v2684 = vpack.c.b16 %v2044, %v2036
        %v2685 = vpack.c.b16 %v2045, %v2037
        %v2686 = vpack.c.b16 %v2046, %v2038
        %v2687 = vpack.c.b16 %v2047, %v2039
        %v2688 = vpack.c.b16 %v2048, %v2040
        %v2689 = vpack.c.b16 %v2049, %v2041
        %v2690 = vpack.c.b16 %v2058, %v2050
        %v2691 = vpack.c.b16 %v2059, %v2051
        %v2692 = vpack.c.b16 %v2060, %v2052
        %v2693 = vpack.c.b16 %v2061, %v2053
        %v2694 = vpack.c.b16 %v2062, %v2054
        %v2695 = vpack.c.b16 %v2063, %v2055
        %v2696 = vpack.c.b16 %v2064, %v2056
        %v2697 = vpack.c.b16 %v2065, %v2057
        %v2698 = vpack.c.b16 %v2074, %v2066
        %v2699 = vpack.c.b16 %v2075, %v2067
        %v2700 = vpack.c.b16 %v2076, %v2068
        %v2701 = vpack.c.b16 %v2077, %v2069
        %v2702 = vpack.c.b16 %v2078, %v2070
        %v2703 = vpack.c.b16 %v2079, %v2071
        %v2704 = vpack.c.b16 %v2080, %v2072
        %v2705 = vpack.c.b16 %v2081, %v2073
        %v2706 = vpack.c.b16 %v2090, %v2082
        %v2707 = vpack.c.b16 %v2091, %v2083
        %v2708 = vpack.c.b16 %v2092, %v2084
        %v2709 = vpack.c.b16 %v2093, %v2085
        %v2710 = vpack.c.b16 %v2094, %v2086
        %v2711 = vpack.c.b16 %v2095, %v2087
        %v2712 = vpack.c.b16 %v2096, %v2088
        %v2713 = vpack.c.b16 %v2097, %v2089
        %v2714 = vpack.c.b16 %v2106, %v2098
        %v2715 = vpack.c.b16 %v2107, %v2099
        %v2716 = vpack.c.b16 %v2108, %v2100
        %v2717 = vpack.c.b16 %v2109, %v2101
        %v2718 = vpack.c.b16 %v2110, %v2102
        %v2719 = vpack.c.b16 %v2111, %v2103
        %v2720 = vpack.c.b16 %v2112, %v2104
        %v2721 = vpack.c.b16 %v2113, %v2105
        %v2722 = vpack.c.b16 %v2122, %v2114
        %v2723 = vpack.c.b16 %v2123, %v2115
        %v2724 = vpack.c.b16 %v2124, %v2116
        %v2725 = vpack.c.b16 %v2125, %v2117
        %v2726 = vpack.c.b16 %v2126, %v2118
        %v2727 = vpack.c.b16 %v2127, %v2119
        %v2728 = vpack.c.b16 %v2128, %v2120
        %v2729 = vpack.c.b16 %v2129, %v2121
        %v2730 = vpack.c.b16 %v2138, %v2130
        %v2731 = vpack.c.b16 %v2139, %v2131
        %v2732 = vpack.c.b16 %v2140, %v2132
        %v2733 = vpack.c.b16 %v2141, %v2133
        %v2734 = vpack.c.b16 %v2142, %v2134
        %v2735 = vpack.c.b16 %v2143, %v2135
        %v2736 = vpack.c.b16 %v2144, %v2136
        %v2737 = vpack.c.b16 %v2145, %v2137
        %v2738 = vpack.c.b16 %v2154, %v2146
        %v2739 = vpack.c.b16 %v2155, %v2147
        %v2740 = vpack.c.b16 %v2156, %v2148
        %v2741 = vpack.c.b16 %v2157, %v2149
        %v2742 = vpack.c.b16 %v2158, %v2150
        %v2743 = vpack.c.b16 %v2159, %v2151
        %v2744 = vpack.c.b16 %v2160, %v2152
        %v2745 = vpack.c.b16 %v2161, %v2153
        %v2746 = vpack.c.b16 %v2170, %v2162
        %v2747 = vpack.c.b16 %v2171, %v2163
        %v2748 = vpack.c.b16 %v2172, %v2164
        %v2749 = vpack.c.b16 %v2173, %v2165
        %v2750 = vpack.c.b16 %v2174, %v2166
        %v2751 = vpack.c.b16 %v2175, %v2167
        %v2752 = vpack.c.b16 %v2176, %v2168
        %v2753 = vpack.c.b16 %v2177, %v2169
        %v2754 = vpack.c.b16 %v2186, %v2178
        %v2755 = vpack.c.b16 %v2187, %v2179
        %v2756 = vpack.c.b16 %v2188, %v2180
        %v2757 = vpack.c.b16 %v2189, %v2181
        %v2758 = vpack.c.b16 %v2190, %v2182
        %v2759 = vpack.c.b16 %v2191, %v2183
        %v2760 = vpack.c.b16 %v2192, %v2184
        %v2761 = vpack.c.b16 %v2193, %v2185
        %v2762 = vpack.c.b16 %v2202, %v2194
        %v2763 = vpack.c.b16 %v2203, %v2195
        %v2764 = vpack.c.b16 %v2204, %v2196
        %v2765 = vpack.c.b16 %v2205, %v2197
        %v2766 = vpack.c.b16 %v2206, %v2198
        %v2767 = vpack.c.b16 %v2207, %v2199
        %v2768 = vpack.c.b16 %v2208, %v2200
        %v2769 = vpack.c.b16 %v2209, %v2201
        %v2770 = vpack.c.b16 %v2218, %v2210
        %v2771 = vpack.c.b16 %v2219, %v2211
        %v2772 = vpack.c.b16 %v2220, %v2212
        %v2773 = vpack.c.b16 %v2221, %v2213
        %v2774 = vpack.c.b16 %v2222, %v2214
        %v2775 = vpack.c.b16 %v2223, %v2215
        %v2776 = vpack.c.b16 %v2224, %v2216
        %v2777 = vpack.c.b16 %v2225, %v2217
        %v2778 = vpack.c.b16 %v2234, %v2226
        %v2779 = vpack.c.b16 %v2235, %v2227
        %v2780 = vpack.c.b16 %v2236, %v2228
        %v2781 = vpack.c.b16 %v2237, %v2229
        %v2782 = vpack.c.b16 %v2238, %v2230
        %v2783 = vpack.c.b16 %v2239, %v2231
        %v2784 = vpack.c.b16 %v2240, %v2232
        %v2785 = vpack.c.b16 %v2241, %v2233
        %v2786 = vpack.c.b16 %v2250, %v2242
        %v2787 = vpack.c.b16 %v2251, %v2243
        %v2788 = vpack.c.b16 %v2252, %v2244
        %v2789 = vpack.c.b16 %v2253, %v2245
        %v2790 = vpack.c.b16 %v2254, %v2246
        %v2791 = vpack.c.b16 %v2255, %v2247
        %v2792 = vpack.c.b16 %v2256, %v2248
        %v2793 = vpack.c.b16 %v2257, %v2249
        %v2794 = vpack.c.b16 %v2266, %v2258
        %v2795 = vpack.c.b16 %v2267, %v2259
        %v2796 = vpack.c.b16 %v2268, %v2260
        %v2797 = vpack.c.b16 %v2269, %v2261
        %v2798 = vpack.c.b16 %v2270, %v2262
        %v2799 = vpack.c.b16 %v2271, %v2263
        %v2800 = vpack.c.b16 %v2272, %v2264
        %v2801 = vpack.c.b16 %v2273, %v2265
        %v2802 = vpack.c.b16 %v2282, %v2274
        %v2803 = vpack.c.b16 %v2283, %v2275
        %v2804 = vpack.c.b16 %v2284, %v2276
        %v2805 = vpack.c.b16 %v2285, %v2277
        %v2806 = vpack.c.b16 %v2286, %v2278
        %v2807 = vpack.c.b16 %v2287, %v2279
        %v2808 = vpack.c.b16 %v2288, %v2280
        %v2809 = vpack.c.b16 %v2289, %v2281
        %v2810 = vpack.c.b16 %v2298, %v2290
        %v2811 = vpack.c.b16 %v2299, %v2291
        %v2812 = vpack.c.b16 %v2300, %v2292
        %v2813 = vpack.c.b16 %v2301, %v2293
        %v2814 = vpack.c.b16 %v2302, %v2294
        %v2815 = vpack.c.b16 %v2303, %v2295
        %v2816 = vpack.c.b16 %v2304, %v2296
        %v2817 = vpack.c.b16 %v2305, %v2297
        %3330 = vmatpush.bf16.msra.mxu0 %v2362
        %3331 = vmatpush.bf16.msra.mxu0 %v2354
        %3332 = vmatpush.bf16.msra.mxu0 %v2346
        %3333 = vmatpush.bf16.msra.mxu0 %v2338
        %3334 = vmatpush.bf16.msra.mxu0 %v2330
        %3335 = vmatpush.bf16.msra.mxu0 %v2322
        %3336 = vmatpush.bf16.msra.mxu0 %v2314
        %3337 = vmatpush.bf16.msra.mxu0 %v2306
        %3338 = vmatmul.bf16.gmra.mxu0 %v738
        %v3339 = vpop.f32.mrf.mxu0
        %v3340 = vadd.f32 0.0, %v3339
        %v3341 = vpop.f32.mrf.mxu0
        %v3342 = vadd.f32 0.0, %v3341
        %3343 = vmatmul.bf16.gmra.mxu0 %v746
        %v3344 = vpop.f32.mrf.mxu0
        %v3345 = vadd.f32 0.0, %v3344
        %v3346 = vpop.f32.mrf.mxu0
        %v3347 = vadd.f32 0.0, %v3346
        %3348 = vdwg.mxu0
        %3349 = vmatpush.bf16.msra.mxu0 %v2426
        %3350 = vmatpush.bf16.msra.mxu0 %v2418
        %3351 = vmatpush.bf16.msra.mxu0 %v2410
        %3352 = vmatpush.bf16.msra.mxu0 %v2402
        %3353 = vmatpush.bf16.msra.mxu0 %v2394
        %3354 = vmatpush.bf16.msra.mxu0 %v2386
        %3355 = vmatpush.bf16.msra.mxu0 %v2378
        %3356 = vmatpush.bf16.msra.mxu0 %v2370
        %3357 = vmatmul.bf16.gmra.mxu0 %v739
        %v3358 = vpop.f32.mrf.mxu0
        %v3359 = vadd.f32 %v3340, %v3358
        %v3360 = vpop.f32.mrf.mxu0
        %v3361 = vadd.f32 %v3342, %v3360
        %3362 = vmatmul.bf16.gmra.mxu0 %v747
        %v3363 = vpop.f32.mrf.mxu0
        %v3364 = vadd.f32 %v3345, %v3363
        %v3365 = vpop.f32.mrf.mxu0
        %v3366 = vadd.f32 %v3347, %v3365
        %3367 = vdwg.mxu0
        %3368 = vmatpush.bf16.msra.mxu0 %v2490
        %3369 = vmatpush.bf16.msra.mxu0 %v2482
        %3370 = vmatpush.bf16.msra.mxu0 %v2474
        %3371 = vmatpush.bf16.msra.mxu0 %v2466
        %3372 = vmatpush.bf16.msra.mxu0 %v2458
        %3373 = vmatpush.bf16.msra.mxu0 %v2450
        %3374 = vmatpush.bf16.msra.mxu0 %v2442
        %3375 = vmatpush.bf16.msra.mxu0 %v2434
        %3376 = vmatmul.bf16.gmra.mxu0 %v740
        %v3377 = vpop.f32.mrf.mxu0
        %v3378 = vadd.f32 %v3359, %v3377
        %v3379 = vpop.f32.mrf.mxu0
        %v3380 = vadd.f32 %v3361, %v3379
        %3381 = vmatmul.bf16.gmra.mxu0 %v748
        %v3382 = vpop.f32.mrf.mxu0
        %v3383 = vadd.f32 %v3364, %v3382
        %v3384 = vpop.f32.mrf.mxu0
        %v3385 = vadd.f32 %v3366, %v3384
        %3386 = vdwg.mxu0
        %3387 = vmatpush.bf16.msra.mxu0 %v2554
        %3388 = vmatpush.bf16.msra.mxu0 %v2546
        %3389 = vmatpush.bf16.msra.mxu0 %v2538
        %3390 = vmatpush.bf16.msra.mxu0 %v2530
        %3391 = vmatpush.bf16.msra.mxu0 %v2522
        %3392 = vmatpush.bf16.msra.mxu0 %v2514
        %3393 = vmatpush.bf16.msra.mxu0 %v2506
        %3394 = vmatpush.bf16.msra.mxu0 %v2498
        %3395 = vmatmul.bf16.gmra.mxu0 %v741
        %v3396 = vpop.f32.mrf.mxu0
        %v3397 = vadd.f32 %v3378, %v3396
        %v3398 = vpop.f32.mrf.mxu0
        %v3399 = vadd.f32 %v3380, %v3398
        %3400 = vmatmul.bf16.gmra.mxu0 %v749
        %v3401 = vpop.f32.mrf.mxu0
        %v3402 = vadd.f32 %v3383, %v3401
        %v3403 = vpop.f32.mrf.mxu0
        %v3404 = vadd.f32 %v3385, %v3403
        %3405 = vdwg.mxu0
        %3406 = vmatpush.bf16.msra.mxu0 %v2618
        %3407 = vmatpush.bf16.msra.mxu0 %v2610
        %3408 = vmatpush.bf16.msra.mxu0 %v2602
        %3409 = vmatpush.bf16.msra.mxu0 %v2594
        %3410 = vmatpush.bf16.msra.mxu0 %v2586
        %3411 = vmatpush.bf16.msra.mxu0 %v2578
        %3412 = vmatpush.bf16.msra.mxu0 %v2570
        %3413 = vmatpush.bf16.msra.mxu0 %v2562
        %3414 = vmatmul.bf16.gmra.mxu0 %v742
        %v3415 = vpop.f32.mrf.mxu0
        %v3416 = vadd.f32 %v3397, %v3415
        %v3417 = vpop.f32.mrf.mxu0
        %v3418 = vadd.f32 %v3399, %v3417
        %3419 = vmatmul.bf16.gmra.mxu0 %v750
        %v3420 = vpop.f32.mrf.mxu0
        %v3421 = vadd.f32 %v3402, %v3420
        %v3422 = vpop.f32.mrf.mxu0
        %v3423 = vadd.f32 %v3404, %v3422
        %3424 = vdwg.mxu0
        %3425 = vmatpush.bf16.msra.mxu0 %v2682
        %3426 = vmatpush.bf16.msra.mxu0 %v2674
        %3427 = vmatpush.bf16.msra.mxu0 %v2666
        %3428 = vmatpush.bf16.msra.mxu0 %v2658
        %3429 = vmatpush.bf16.msra.mxu0 %v2650
        %3430 = vmatpush.bf16.msra.mxu0 %v2642
        %3431 = vmatpush.bf16.msra.mxu0 %v2634
        %3432 = vmatpush.bf16.msra.mxu0 %v2626
        %3433 = vmatmul.bf16.gmra.mxu0 %v743
        %v3434 = vpop.f32.mrf.mxu0
        %v3435 = vadd.f32 %v3416, %v3434
        %v3436 = vpop.f32.mrf.mxu0
        %v3437 = vadd.f32 %v3418, %v3436
        %3438 = vmatmul.bf16.gmra.mxu0 %v751
        %v3439 = vpop.f32.mrf.mxu0
        %v3440 = vadd.f32 %v3421, %v3439
        %v3441 = vpop.f32.mrf.mxu0
        %v3442 = vadd.f32 %v3423, %v3441
        %3443 = vdwg.mxu0
        %3444 = vmatpush.bf16.msra.mxu0 %v2746
        %3445 = vmatpush.bf16.msra.mxu0 %v2738
        %3446 = vmatpush.bf16.msra.mxu0 %v2730
        %3447 = vmatpush.bf16.msra.mxu0 %v2722
        %3448 = vmatpush.bf16.msra.mxu0 %v2714
        %3449 = vmatpush.bf16.msra.mxu0 %v2706
        %3450 = vmatpush.bf16.msra.mxu0 %v2698
        %3451 = vmatpush.bf16.msra.mxu0 %v2690
        %3452 = vmatmul.bf16.gmra.mxu0 %v744
        %v3453 = vpop.f32.mrf.mxu0
        %v3454 = vadd.f32 %v3435, %v3453
        %v3455 = vpop.f32.mrf.mxu0
        %v3456 = vadd.f32 %v3437, %v3455
        %3457 = vmatmul.bf16.gmra.mxu0 %v752
        %v3458 = vpop.f32.mrf.mxu0
        %v3459 = vadd.f32 %v3440, %v3458
        %v3460 = vpop.f32.mrf.mxu0
        %v3461 = vadd.f32 %v3442, %v3460
        %3462 = vdwg.mxu0
        %3463 = vmatpush.bf16.msra.mxu0 %v2810
        %3464 = vmatpush.bf16.msra.mxu0 %v2802
        %3465 = vmatpush.bf16.msra.mxu0 %v2794
        %3466 = vmatpush.bf16.msra.mxu0 %v2786
        %3467 = vmatpush.bf16.msra.mxu0 %v2778
        %3468 = vmatpush.bf16.msra.mxu0 %v2770
        %3469 = vmatpush.bf16.msra.mxu0 %v2762
        %3470 = vmatpush.bf16.msra.mxu0 %v2754
        %3471 = vmatmul.bf16.gmra.mxu0 %v745
        %v3472 = vpop.f32.mrf.mxu0
        %v3473 = vadd.f32 %v3454, %v3472
        %v3474 = vpop.f32.mrf.mxu0
        %v3475 = vadd.f32 %v3456, %v3474
        %3476 = vmatmul.bf16.gmra.mxu0 %v753
        %v3477 = vpop.f32.mrf.mxu0
        %v3478 = vadd.f32 %v3459, %v3477
        %v3479 = vpop.f32.mrf.mxu0
        %v3480 = vadd.f32 %v3461, %v3479
        %3481 = vdwg.mxu0
        %3482 = vmatpush.bf16.msra.mxu0 %v2363
        %3483 = vmatpush.bf16.msra.mxu0 %v2355
        %3484 = vmatpush.bf16.msra.mxu0 %v2347
        %3485 = vmatpush.bf16.msra.mxu0 %v2339
        %3486 = vmatpush.bf16.msra.mxu0 %v2331
        %3487 = vmatpush.bf16.msra.mxu0 %v2323
        %3488 = vmatpush.bf16.msra.mxu0 %v2315
        %3489 = vmatpush.bf16.msra.mxu0 %v2307
        %3490 = vmatmul.bf16.gmra.mxu0 %v738
        %v3491 = vpop.f32.mrf.mxu0
        %v3492 = vadd.f32 0.0, %v3491
        %v3493 = vpop.f32.mrf.mxu0
        %v3494 = vadd.f32 0.0, %v3493
        %3495 = vmatmul.bf16.gmra.mxu0 %v746
        %v3496 = vpop.f32.mrf.mxu0
        %v3497 = vadd.f32 0.0, %v3496
        %v3498 = vpop.f32.mrf.mxu0
        %v3499 = vadd.f32 0.0, %v3498
        %3500 = vdwg.mxu0
        %3501 = vmatpush.bf16.msra.mxu0 %v2427
        %3502 = vmatpush.bf16.msra.mxu0 %v2419
        %3503 = vmatpush.bf16.msra.mxu0 %v2411
        %3504 = vmatpush.bf16.msra.mxu0 %v2403
        %3505 = vmatpush.bf16.msra.mxu0 %v2395
        %3506 = vmatpush.bf16.msra.mxu0 %v2387
        %3507 = vmatpush.bf16.msra.mxu0 %v2379
        %3508 = vmatpush.bf16.msra.mxu0 %v2371
        %3509 = vmatmul.bf16.gmra.mxu0 %v739
        %v3510 = vpop.f32.mrf.mxu0
        %v3511 = vadd.f32 %v3492, %v3510
        %v3512 = vpop.f32.mrf.mxu0
        %v3513 = vadd.f32 %v3494, %v3512
        %3514 = vmatmul.bf16.gmra.mxu0 %v747
        %v3515 = vpop.f32.mrf.mxu0
        %v3516 = vadd.f32 %v3497, %v3515
        %v3517 = vpop.f32.mrf.mxu0
        %v3518 = vadd.f32 %v3499, %v3517
        %3519 = vdwg.mxu0
        %3520 = vmatpush.bf16.msra.mxu0 %v2491
        %3521 = vmatpush.bf16.msra.mxu0 %v2483
        %3522 = vmatpush.bf16.msra.mxu0 %v2475
        %3523 = vmatpush.bf16.msra.mxu0 %v2467
        %3524 = vmatpush.bf16.msra.mxu0 %v2459
        %3525 = vmatpush.bf16.msra.mxu0 %v2451
        %3526 = vmatpush.bf16.msra.mxu0 %v2443
        %3527 = vmatpush.bf16.msra.mxu0 %v2435
        %3528 = vmatmul.bf16.gmra.mxu0 %v740
        %v3529 = vpop.f32.mrf.mxu0
        %v3530 = vadd.f32 %v3511, %v3529
        %v3531 = vpop.f32.mrf.mxu0
        %v3532 = vadd.f32 %v3513, %v3531
        %3533 = vmatmul.bf16.gmra.mxu0 %v748
        %v3534 = vpop.f32.mrf.mxu0
        %v3535 = vadd.f32 %v3516, %v3534
        %v3536 = vpop.f32.mrf.mxu0
        %v3537 = vadd.f32 %v3518, %v3536
        %3538 = vdwg.mxu0
        %3539 = vmatpush.bf16.msra.mxu0 %v2555
        %3540 = vmatpush.bf16.msra.mxu0 %v2547
        %3541 = vmatpush.bf16.msra.mxu0 %v2539
        %3542 = vmatpush.bf16.msra.mxu0 %v2531
        %3543 = vmatpush.bf16.msra.mxu0 %v2523
        %3544 = vmatpush.bf16.msra.mxu0 %v2515
        %3545 = vmatpush.bf16.msra.mxu0 %v2507
        %3546 = vmatpush.bf16.msra.mxu0 %v2499
        %3547 = vmatmul.bf16.gmra.mxu0 %v741
        %v3548 = vpop.f32.mrf.mxu0
        %v3549 = vadd.f32 %v3530, %v3548
        %v3550 = vpop.f32.mrf.mxu0
        %v3551 = vadd.f32 %v3532, %v3550
        %3552 = vmatmul.bf16.gmra.mxu0 %v749
        %v3553 = vpop.f32.mrf.mxu0
        %v3554 = vadd.f32 %v3535, %v3553
        %v3555 = vpop.f32.mrf.mxu0
        %v3556 = vadd.f32 %v3537, %v3555
        %3557 = vdwg.mxu0
        %3558 = vmatpush.bf16.msra.mxu0 %v2619
        %3559 = vmatpush.bf16.msra.mxu0 %v2611
        %3560 = vmatpush.bf16.msra.mxu0 %v2603
        %3561 = vmatpush.bf16.msra.mxu0 %v2595
        %3562 = vmatpush.bf16.msra.mxu0 %v2587
        %3563 = vmatpush.bf16.msra.mxu0 %v2579
        %3564 = vmatpush.bf16.msra.mxu0 %v2571
        %3565 = vmatpush.bf16.msra.mxu0 %v2563
        %3566 = vmatmul.bf16.gmra.mxu0 %v742
        %v3567 = vpop.f32.mrf.mxu0
        %v3568 = vadd.f32 %v3549, %v3567
        %v3569 = vpop.f32.mrf.mxu0
        %v3570 = vadd.f32 %v3551, %v3569
        %3571 = vmatmul.bf16.gmra.mxu0 %v750
        %v3572 = vpop.f32.mrf.mxu0
        %v3573 = vadd.f32 %v3554, %v3572
        %v3574 = vpop.f32.mrf.mxu0
        %v3575 = vadd.f32 %v3556, %v3574
        %3576 = vdwg.mxu0
        %3577 = vmatpush.bf16.msra.mxu0 %v2683
        %3578 = vmatpush.bf16.msra.mxu0 %v2675
        %3579 = vmatpush.bf16.msra.mxu0 %v2667
        %3580 = vmatpush.bf16.msra.mxu0 %v2659
        %3581 = vmatpush.bf16.msra.mxu0 %v2651
        %3582 = vmatpush.bf16.msra.mxu0 %v2643
        %3583 = vmatpush.bf16.msra.mxu0 %v2635
        %3584 = vmatpush.bf16.msra.mxu0 %v2627
        %3585 = vmatmul.bf16.gmra.mxu0 %v743
        %v3586 = vpop.f32.mrf.mxu0
        %v3587 = vadd.f32 %v3568, %v3586
        %v3588 = vpop.f32.mrf.mxu0
        %v3589 = vadd.f32 %v3570, %v3588
        %3590 = vmatmul.bf16.gmra.mxu0 %v751
        %v3591 = vpop.f32.mrf.mxu0
        %v3592 = vadd.f32 %v3573, %v3591
        %v3593 = vpop.f32.mrf.mxu0
        %v3594 = vadd.f32 %v3575, %v3593
        %3595 = vdwg.mxu0
        %3596 = vmatpush.bf16.msra.mxu0 %v2747
        %3597 = vmatpush.bf16.msra.mxu0 %v2739
        %3598 = vmatpush.bf16.msra.mxu0 %v2731
        %3599 = vmatpush.bf16.msra.mxu0 %v2723
        %3600 = vmatpush.bf16.msra.mxu0 %v2715
        %3601 = vmatpush.bf16.msra.mxu0 %v2707
        %3602 = vmatpush.bf16.msra.mxu0 %v2699
        %3603 = vmatpush.bf16.msra.mxu0 %v2691
        %3604 = vmatmul.bf16.gmra.mxu0 %v744
        %v3605 = vpop.f32.mrf.mxu0
        %v3606 = vadd.f32 %v3587, %v3605
        %v3607 = vpop.f32.mrf.mxu0
        %v3608 = vadd.f32 %v3589, %v3607
        %3609 = vmatmul.bf16.gmra.mxu0 %v752
        %v3610 = vpop.f32.mrf.mxu0
        %v3611 = vadd.f32 %v3592, %v3610
        %v3612 = vpop.f32.mrf.mxu0
        %v3613 = vadd.f32 %v3594, %v3612
        %3614 = vdwg.mxu0
        %3615 = vmatpush.bf16.msra.mxu0 %v2811
        %3616 = vmatpush.bf16.msra.mxu0 %v2803
        %3617 = vmatpush.bf16.msra.mxu0 %v2795
        %3618 = vmatpush.bf16.msra.mxu0 %v2787
        %3619 = vmatpush.bf16.msra.mxu0 %v2779
        %3620 = vmatpush.bf16.msra.mxu0 %v2771
        %3621 = vmatpush.bf16.msra.mxu0 %v2763
        %3622 = vmatpush.bf16.msra.mxu0 %v2755
        %3623 = vmatmul.bf16.gmra.mxu0 %v745
        %v3624 = vpop.f32.mrf.mxu0
        %v3625 = vadd.f32 %v3606, %v3624
        %v3626 = vpop.f32.mrf.mxu0
        %v3627 = vadd.f32 %v3608, %v3626
        %3628 = vmatmul.bf16.gmra.mxu0 %v753
        %v3629 = vpop.f32.mrf.mxu0
        %v3630 = vadd.f32 %v3611, %v3629
        %v3631 = vpop.f32.mrf.mxu0
        %v3632 = vadd.f32 %v3613, %v3631
        %3633 = vdwg.mxu0
        %3634 = vmatpush.bf16.msra.mxu0 %v2364
        %3635 = vmatpush.bf16.msra.mxu0 %v2356
        %3636 = vmatpush.bf16.msra.mxu0 %v2348
        %3637 = vmatpush.bf16.msra.mxu0 %v2340
        %3638 = vmatpush.bf16.msra.mxu0 %v2332
        %3639 = vmatpush.bf16.msra.mxu0 %v2324
        %3640 = vmatpush.bf16.msra.mxu0 %v2316
        %3641 = vmatpush.bf16.msra.mxu0 %v2308
        %3642 = vmatmul.bf16.gmra.mxu0 %v738
        %v3643 = vpop.f32.mrf.mxu0
        %v3644 = vadd.f32 0.0, %v3643
        %v3645 = vpop.f32.mrf.mxu0
        %v3646 = vadd.f32 0.0, %v3645
        %3647 = vmatmul.bf16.gmra.mxu0 %v746
        %v3648 = vpop.f32.mrf.mxu0
        %v3649 = vadd.f32 0.0, %v3648
        %v3650 = vpop.f32.mrf.mxu0
        %v3651 = vadd.f32 0.0, %v3650
        %3652 = vdwg.mxu0
        %3653 = vmatpush.bf16.msra.mxu0 %v2428
        %3654 = vmatpush.bf16.msra.mxu0 %v2420
        %3655 = vmatpush.bf16.msra.mxu0 %v2412
        %3656 = vmatpush.bf16.msra.mxu0 %v2404
        %3657 = vmatpush.bf16.msra.mxu0 %v2396
        %3658 = vmatpush.bf16.msra.mxu0 %v2388
        %3659 = vmatpush.bf16.msra.mxu0 %v2380
        %3660 = vmatpush.bf16.msra.mxu0 %v2372
        %3661 = vmatmul.bf16.gmra.mxu0 %v739
        %v3662 = vpop.f32.mrf.mxu0
        %v3663 = vadd.f32 %v3644, %v3662
        %v3664 = vpop.f32.mrf.mxu0
        %v3665 = vadd.f32 %v3646, %v3664
        %3666 = vmatmul.bf16.gmra.mxu0 %v747
        %v3667 = vpop.f32.mrf.mxu0
        %v3668 = vadd.f32 %v3649, %v3667
        %v3669 = vpop.f32.mrf.mxu0
        %v3670 = vadd.f32 %v3651, %v3669
        %3671 = vdwg.mxu0
        %3672 = vmatpush.bf16.msra.mxu0 %v2492
        %3673 = vmatpush.bf16.msra.mxu0 %v2484
        %3674 = vmatpush.bf16.msra.mxu0 %v2476
        %3675 = vmatpush.bf16.msra.mxu0 %v2468
        %3676 = vmatpush.bf16.msra.mxu0 %v2460
        %3677 = vmatpush.bf16.msra.mxu0 %v2452
        %3678 = vmatpush.bf16.msra.mxu0 %v2444
        %3679 = vmatpush.bf16.msra.mxu0 %v2436
        %3680 = vmatmul.bf16.gmra.mxu0 %v740
        %v3681 = vpop.f32.mrf.mxu0
        %v3682 = vadd.f32 %v3663, %v3681
        %v3683 = vpop.f32.mrf.mxu0
        %v3684 = vadd.f32 %v3665, %v3683
        %3685 = vmatmul.bf16.gmra.mxu0 %v748
        %v3686 = vpop.f32.mrf.mxu0
        %v3687 = vadd.f32 %v3668, %v3686
        %v3688 = vpop.f32.mrf.mxu0
        %v3689 = vadd.f32 %v3670, %v3688
        %3690 = vdwg.mxu0
        %3691 = vmatpush.bf16.msra.mxu0 %v2556
        %3692 = vmatpush.bf16.msra.mxu0 %v2548
        %3693 = vmatpush.bf16.msra.mxu0 %v2540
        %3694 = vmatpush.bf16.msra.mxu0 %v2532
        %3695 = vmatpush.bf16.msra.mxu0 %v2524
        %3696 = vmatpush.bf16.msra.mxu0 %v2516
        %3697 = vmatpush.bf16.msra.mxu0 %v2508
        %3698 = vmatpush.bf16.msra.mxu0 %v2500
        %3699 = vmatmul.bf16.gmra.mxu0 %v741
        %v3700 = vpop.f32.mrf.mxu0
        %v3701 = vadd.f32 %v3682, %v3700
        %v3702 = vpop.f32.mrf.mxu0
        %v3703 = vadd.f32 %v3684, %v3702
        %3704 = vmatmul.bf16.gmra.mxu0 %v749
        %v3705 = vpop.f32.mrf.mxu0
        %v3706 = vadd.f32 %v3687, %v3705
        %v3707 = vpop.f32.mrf.mxu0
        %v3708 = vadd.f32 %v3689, %v3707
        %3709 = vdwg.mxu0
        %3710 = vmatpush.bf16.msra.mxu0 %v2620
        %3711 = vmatpush.bf16.msra.mxu0 %v2612
        %3712 = vmatpush.bf16.msra.mxu0 %v2604
        %3713 = vmatpush.bf16.msra.mxu0 %v2596
        %3714 = vmatpush.bf16.msra.mxu0 %v2588
        %3715 = vmatpush.bf16.msra.mxu0 %v2580
        %3716 = vmatpush.bf16.msra.mxu0 %v2572
        %3717 = vmatpush.bf16.msra.mxu0 %v2564
        %3718 = vmatmul.bf16.gmra.mxu0 %v742
        %v3719 = vpop.f32.mrf.mxu0
        %v3720 = vadd.f32 %v3701, %v3719
        %v3721 = vpop.f32.mrf.mxu0
        %v3722 = vadd.f32 %v3703, %v3721
        %3723 = vmatmul.bf16.gmra.mxu0 %v750
        %v3724 = vpop.f32.mrf.mxu0
        %v3725 = vadd.f32 %v3706, %v3724
        %v3726 = vpop.f32.mrf.mxu0
        %v3727 = vadd.f32 %v3708, %v3726
        %3728 = vdwg.mxu0
        %3729 = vmatpush.bf16.msra.mxu0 %v2684
        %3730 = vmatpush.bf16.msra.mxu0 %v2676
        %3731 = vmatpush.bf16.msra.mxu0 %v2668
        %3732 = vmatpush.bf16.msra.mxu0 %v2660
        %3733 = vmatpush.bf16.msra.mxu0 %v2652
        %3734 = vmatpush.bf16.msra.mxu0 %v2644
        %3735 = vmatpush.bf16.msra.mxu0 %v2636
        %3736 = vmatpush.bf16.msra.mxu0 %v2628
        %3737 = vmatmul.bf16.gmra.mxu0 %v743
        %v3738 = vpop.f32.mrf.mxu0
        %v3739 = vadd.f32 %v3720, %v3738
        %v3740 = vpop.f32.mrf.mxu0
        %v3741 = vadd.f32 %v3722, %v3740
        %3742 = vmatmul.bf16.gmra.mxu0 %v751
        %v3743 = vpop.f32.mrf.mxu0
        %v3744 = vadd.f32 %v3725, %v3743
        %v3745 = vpop.f32.mrf.mxu0
        %v3746 = vadd.f32 %v3727, %v3745
        %3747 = vdwg.mxu0
        %3748 = vmatpush.bf16.msra.mxu0 %v2748
        %3749 = vmatpush.bf16.msra.mxu0 %v2740
        %3750 = vmatpush.bf16.msra.mxu0 %v2732
        %3751 = vmatpush.bf16.msra.mxu0 %v2724
        %3752 = vmatpush.bf16.msra.mxu0 %v2716
        %3753 = vmatpush.bf16.msra.mxu0 %v2708
        %3754 = vmatpush.bf16.msra.mxu0 %v2700
        %3755 = vmatpush.bf16.msra.mxu0 %v2692
        %3756 = vmatmul.bf16.gmra.mxu0 %v744
        %v3757 = vpop.f32.mrf.mxu0
        %v3758 = vadd.f32 %v3739, %v3757
        %v3759 = vpop.f32.mrf.mxu0
        %v3760 = vadd.f32 %v3741, %v3759
        %3761 = vmatmul.bf16.gmra.mxu0 %v752
        %v3762 = vpop.f32.mrf.mxu0
        %v3763 = vadd.f32 %v3744, %v3762
        %v3764 = vpop.f32.mrf.mxu0
        %v3765 = vadd.f32 %v3746, %v3764
        %3766 = vdwg.mxu0
        %3767 = vmatpush.bf16.msra.mxu0 %v2812
        %3768 = vmatpush.bf16.msra.mxu0 %v2804
        %3769 = vmatpush.bf16.msra.mxu0 %v2796
        %3770 = vmatpush.bf16.msra.mxu0 %v2788
        %3771 = vmatpush.bf16.msra.mxu0 %v2780
        %3772 = vmatpush.bf16.msra.mxu0 %v2772
        %3773 = vmatpush.bf16.msra.mxu0 %v2764
        %3774 = vmatpush.bf16.msra.mxu0 %v2756
        %3775 = vmatmul.bf16.gmra.mxu0 %v745
        %v3776 = vpop.f32.mrf.mxu0
        %v3777 = vadd.f32 %v3758, %v3776
        %v3778 = vpop.f32.mrf.mxu0
        %v3779 = vadd.f32 %v3760, %v3778
        %3780 = vmatmul.bf16.gmra.mxu0 %v753
        %v3781 = vpop.f32.mrf.mxu0
        %v3782 = vadd.f32 %v3763, %v3781
        %v3783 = vpop.f32.mrf.mxu0
        %v3784 = vadd.f32 %v3765, %v3783
        %3785 = vdwg.mxu0
        %3786 = vmatpush.bf16.msra.mxu0 %v2365
        %3787 = vmatpush.bf16.msra.mxu0 %v2357
        %3788 = vmatpush.bf16.msra.mxu0 %v2349
        %3789 = vmatpush.bf16.msra.mxu0 %v2341
        %3790 = vmatpush.bf16.msra.mxu0 %v2333
        %3791 = vmatpush.bf16.msra.mxu0 %v2325
        %3792 = vmatpush.bf16.msra.mxu0 %v2317
        %3793 = vmatpush.bf16.msra.mxu0 %v2309
        %3794 = vmatmul.bf16.gmra.mxu0 %v738
        %v3795 = vpop.f32.mrf.mxu0
        %v3796 = vadd.f32 0.0, %v3795
        %v3797 = vpop.f32.mrf.mxu0
        %v3798 = vadd.f32 0.0, %v3797
        %3799 = vmatmul.bf16.gmra.mxu0 %v746
        %v3800 = vpop.f32.mrf.mxu0
        %v3801 = vadd.f32 0.0, %v3800
        %v3802 = vpop.f32.mrf.mxu0
        %v3803 = vadd.f32 0.0, %v3802
        %3804 = vdwg.mxu0
        %3805 = vmatpush.bf16.msra.mxu0 %v2429
        %3806 = vmatpush.bf16.msra.mxu0 %v2421
        %3807 = vmatpush.bf16.msra.mxu0 %v2413
        %3808 = vmatpush.bf16.msra.mxu0 %v2405
        %3809 = vmatpush.bf16.msra.mxu0 %v2397
        %3810 = vmatpush.bf16.msra.mxu0 %v2389
        %3811 = vmatpush.bf16.msra.mxu0 %v2381
        %3812 = vmatpush.bf16.msra.mxu0 %v2373
        %3813 = vmatmul.bf16.gmra.mxu0 %v739
        %v3814 = vpop.f32.mrf.mxu0
        %v3815 = vadd.f32 %v3796, %v3814
        %v3816 = vpop.f32.mrf.mxu0
        %v3817 = vadd.f32 %v3798, %v3816
        %3818 = vmatmul.bf16.gmra.mxu0 %v747
        %v3819 = vpop.f32.mrf.mxu0
        %v3820 = vadd.f32 %v3801, %v3819
        %v3821 = vpop.f32.mrf.mxu0
        %v3822 = vadd.f32 %v3803, %v3821
        %3823 = vdwg.mxu0
        %3824 = vmatpush.bf16.msra.mxu0 %v2493
        %3825 = vmatpush.bf16.msra.mxu0 %v2485
        %3826 = vmatpush.bf16.msra.mxu0 %v2477
        %3827 = vmatpush.bf16.msra.mxu0 %v2469
        %3828 = vmatpush.bf16.msra.mxu0 %v2461
        %3829 = vmatpush.bf16.msra.mxu0 %v2453
        %3830 = vmatpush.bf16.msra.mxu0 %v2445
        %3831 = vmatpush.bf16.msra.mxu0 %v2437
        %3832 = vmatmul.bf16.gmra.mxu0 %v740
        %v3833 = vpop.f32.mrf.mxu0
        %v3834 = vadd.f32 %v3815, %v3833
        %v3835 = vpop.f32.mrf.mxu0
        %v3836 = vadd.f32 %v3817, %v3835
        %3837 = vmatmul.bf16.gmra.mxu0 %v748
        %v3838 = vpop.f32.mrf.mxu0
        %v3839 = vadd.f32 %v3820, %v3838
        %v3840 = vpop.f32.mrf.mxu0
        %v3841 = vadd.f32 %v3822, %v3840
        %3842 = vdwg.mxu0
        %3843 = vmatpush.bf16.msra.mxu0 %v2557
        %3844 = vmatpush.bf16.msra.mxu0 %v2549
        %3845 = vmatpush.bf16.msra.mxu0 %v2541
        %3846 = vmatpush.bf16.msra.mxu0 %v2533
        %3847 = vmatpush.bf16.msra.mxu0 %v2525
        %3848 = vmatpush.bf16.msra.mxu0 %v2517
        %3849 = vmatpush.bf16.msra.mxu0 %v2509
        %3850 = vmatpush.bf16.msra.mxu0 %v2501
        %3851 = vmatmul.bf16.gmra.mxu0 %v741
        %v3852 = vpop.f32.mrf.mxu0
        %v3853 = vadd.f32 %v3834, %v3852
        %v3854 = vpop.f32.mrf.mxu0
        %v3855 = vadd.f32 %v3836, %v3854
        %3856 = vmatmul.bf16.gmra.mxu0 %v749
        %v3857 = vpop.f32.mrf.mxu0
        %v3858 = vadd.f32 %v3839, %v3857
        %v3859 = vpop.f32.mrf.mxu0
        %v3860 = vadd.f32 %v3841, %v3859
        %3861 = vdwg.mxu0
        %3862 = vmatpush.bf16.msra.mxu0 %v2621
        %3863 = vmatpush.bf16.msra.mxu0 %v2613
        %3864 = vmatpush.bf16.msra.mxu0 %v2605
        %3865 = vmatpush.bf16.msra.mxu0 %v2597
        %3866 = vmatpush.bf16.msra.mxu0 %v2589
        %3867 = vmatpush.bf16.msra.mxu0 %v2581
        %3868 = vmatpush.bf16.msra.mxu0 %v2573
        %3869 = vmatpush.bf16.msra.mxu0 %v2565
        %3870 = vmatmul.bf16.gmra.mxu0 %v742
        %v3871 = vpop.f32.mrf.mxu0
        %v3872 = vadd.f32 %v3853, %v3871
        %v3873 = vpop.f32.mrf.mxu0
        %v3874 = vadd.f32 %v3855, %v3873
        %3875 = vmatmul.bf16.gmra.mxu0 %v750
        %v3876 = vpop.f32.mrf.mxu0
        %v3877 = vadd.f32 %v3858, %v3876
        %v3878 = vpop.f32.mrf.mxu0
        %v3879 = vadd.f32 %v3860, %v3878
        %3880 = vdwg.mxu0
        %3881 = vmatpush.bf16.msra.mxu0 %v2685
        %3882 = vmatpush.bf16.msra.mxu0 %v2677
        %3883 = vmatpush.bf16.msra.mxu0 %v2669
        %3884 = vmatpush.bf16.msra.mxu0 %v2661
        %3885 = vmatpush.bf16.msra.mxu0 %v2653
        %3886 = vmatpush.bf16.msra.mxu0 %v2645
        %3887 = vmatpush.bf16.msra.mxu0 %v2637
        %3888 = vmatpush.bf16.msra.mxu0 %v2629
        %3889 = vmatmul.bf16.gmra.mxu0 %v743
        %v3890 = vpop.f32.mrf.mxu0
        %v3891 = vadd.f32 %v3872, %v3890
        %v3892 = vpop.f32.mrf.mxu0
        %v3893 = vadd.f32 %v3874, %v3892
        %3894 = vmatmul.bf16.gmra.mxu0 %v751
        %v3895 = vpop.f32.mrf.mxu0
        %v3896 = vadd.f32 %v3877, %v3895
        %v3897 = vpop.f32.mrf.mxu0
        %v3898 = vadd.f32 %v3879, %v3897
        %3899 = vdwg.mxu0
        %3900 = vmatpush.bf16.msra.mxu0 %v2749
        %3901 = vmatpush.bf16.msra.mxu0 %v2741
        %3902 = vmatpush.bf16.msra.mxu0 %v2733
        %3903 = vmatpush.bf16.msra.mxu0 %v2725
        %3904 = vmatpush.bf16.msra.mxu0 %v2717
        %3905 = vmatpush.bf16.msra.mxu0 %v2709
        %3906 = vmatpush.bf16.msra.mxu0 %v2701
        %3907 = vmatpush.bf16.msra.mxu0 %v2693
        %3908 = vmatmul.bf16.gmra.mxu0 %v744
        %v3909 = vpop.f32.mrf.mxu0
        %v3910 = vadd.f32 %v3891, %v3909
        %v3911 = vpop.f32.mrf.mxu0
        %v3912 = vadd.f32 %v3893, %v3911
        %3913 = vmatmul.bf16.gmra.mxu0 %v752
        %v3914 = vpop.f32.mrf.mxu0
        %v3915 = vadd.f32 %v3896, %v3914
        %v3916 = vpop.f32.mrf.mxu0
        %v3917 = vadd.f32 %v3898, %v3916
        %3918 = vdwg.mxu0
        %3919 = vmatpush.bf16.msra.mxu0 %v2813
        %3920 = vmatpush.bf16.msra.mxu0 %v2805
        %3921 = vmatpush.bf16.msra.mxu0 %v2797
        %3922 = vmatpush.bf16.msra.mxu0 %v2789
        %3923 = vmatpush.bf16.msra.mxu0 %v2781
        %3924 = vmatpush.bf16.msra.mxu0 %v2773
        %3925 = vmatpush.bf16.msra.mxu0 %v2765
        %3926 = vmatpush.bf16.msra.mxu0 %v2757
        %3927 = vmatmul.bf16.gmra.mxu0 %v745
        %v3928 = vpop.f32.mrf.mxu0
        %v3929 = vadd.f32 %v3910, %v3928
        %v3930 = vpop.f32.mrf.mxu0
        %v3931 = vadd.f32 %v3912, %v3930
        %3932 = vmatmul.bf16.gmra.mxu0 %v753
        %v3933 = vpop.f32.mrf.mxu0
        %v3934 = vadd.f32 %v3915, %v3933
        %v3935 = vpop.f32.mrf.mxu0
        %v3936 = vadd.f32 %v3917, %v3935
        %3937 = vdwg.mxu0
        %3938 = vmatpush.bf16.msra.mxu0 %v2366
        %3939 = vmatpush.bf16.msra.mxu0 %v2358
        %3940 = vmatpush.bf16.msra.mxu0 %v2350
        %3941 = vmatpush.bf16.msra.mxu0 %v2342
        %3942 = vmatpush.bf16.msra.mxu0 %v2334
        %3943 = vmatpush.bf16.msra.mxu0 %v2326
        %3944 = vmatpush.bf16.msra.mxu0 %v2318
        %3945 = vmatpush.bf16.msra.mxu0 %v2310
        %3946 = vmatmul.bf16.gmra.mxu0 %v738
        %v3947 = vpop.f32.mrf.mxu0
        %v3948 = vadd.f32 0.0, %v3947
        %v3949 = vpop.f32.mrf.mxu0
        %v3950 = vadd.f32 0.0, %v3949
        %3951 = vmatmul.bf16.gmra.mxu0 %v746
        %v3952 = vpop.f32.mrf.mxu0
        %v3953 = vadd.f32 0.0, %v3952
        %v3954 = vpop.f32.mrf.mxu0
        %v3955 = vadd.f32 0.0, %v3954
        %3956 = vdwg.mxu0
        %3957 = vmatpush.bf16.msra.mxu0 %v2430
        %3958 = vmatpush.bf16.msra.mxu0 %v2422
        %3959 = vmatpush.bf16.msra.mxu0 %v2414
        %3960 = vmatpush.bf16.msra.mxu0 %v2406
        %3961 = vmatpush.bf16.msra.mxu0 %v2398
        %3962 = vmatpush.bf16.msra.mxu0 %v2390
        %3963 = vmatpush.bf16.msra.mxu0 %v2382
        %3964 = vmatpush.bf16.msra.mxu0 %v2374
        %3965 = vmatmul.bf16.gmra.mxu0 %v739
        %v3966 = vpop.f32.mrf.mxu0
        %v3967 = vadd.f32 %v3948, %v3966
        %v3968 = vpop.f32.mrf.mxu0
        %v3969 = vadd.f32 %v3950, %v3968
        %3970 = vmatmul.bf16.gmra.mxu0 %v747
        %v3971 = vpop.f32.mrf.mxu0
        %v3972 = vadd.f32 %v3953, %v3971
        %v3973 = vpop.f32.mrf.mxu0
        %v3974 = vadd.f32 %v3955, %v3973
        %3975 = vdwg.mxu0
        %3976 = vmatpush.bf16.msra.mxu0 %v2494
        %3977 = vmatpush.bf16.msra.mxu0 %v2486
        %3978 = vmatpush.bf16.msra.mxu0 %v2478
        %3979 = vmatpush.bf16.msra.mxu0 %v2470
        %3980 = vmatpush.bf16.msra.mxu0 %v2462
        %3981 = vmatpush.bf16.msra.mxu0 %v2454
        %3982 = vmatpush.bf16.msra.mxu0 %v2446
        %3983 = vmatpush.bf16.msra.mxu0 %v2438
        %3984 = vmatmul.bf16.gmra.mxu0 %v740
        %v3985 = vpop.f32.mrf.mxu0
        %v3986 = vadd.f32 %v3967, %v3985
        %v3987 = vpop.f32.mrf.mxu0
        %v3988 = vadd.f32 %v3969, %v3987
        %3989 = vmatmul.bf16.gmra.mxu0 %v748
        %v3990 = vpop.f32.mrf.mxu0
        %v3991 = vadd.f32 %v3972, %v3990
        %v3992 = vpop.f32.mrf.mxu0
        %v3993 = vadd.f32 %v3974, %v3992
        %3994 = vdwg.mxu0
        %3995 = vmatpush.bf16.msra.mxu0 %v2558
        %3996 = vmatpush.bf16.msra.mxu0 %v2550
        %3997 = vmatpush.bf16.msra.mxu0 %v2542
        %3998 = vmatpush.bf16.msra.mxu0 %v2534
        %3999 = vmatpush.bf16.msra.mxu0 %v2526
        %4000 = vmatpush.bf16.msra.mxu0 %v2518
        %4001 = vmatpush.bf16.msra.mxu0 %v2510
        %4002 = vmatpush.bf16.msra.mxu0 %v2502
        %4003 = vmatmul.bf16.gmra.mxu0 %v741
        %v4004 = vpop.f32.mrf.mxu0
        %v4005 = vadd.f32 %v3986, %v4004
        %v4006 = vpop.f32.mrf.mxu0
        %v4007 = vadd.f32 %v3988, %v4006
        %4008 = vmatmul.bf16.gmra.mxu0 %v749
        %v4009 = vpop.f32.mrf.mxu0
        %v4010 = vadd.f32 %v3991, %v4009
        %v4011 = vpop.f32.mrf.mxu0
        %v4012 = vadd.f32 %v3993, %v4011
        %4013 = vdwg.mxu0
        %4014 = vmatpush.bf16.msra.mxu0 %v2622
        %4015 = vmatpush.bf16.msra.mxu0 %v2614
        %4016 = vmatpush.bf16.msra.mxu0 %v2606
        %4017 = vmatpush.bf16.msra.mxu0 %v2598
        %4018 = vmatpush.bf16.msra.mxu0 %v2590
        %4019 = vmatpush.bf16.msra.mxu0 %v2582
        %4020 = vmatpush.bf16.msra.mxu0 %v2574
        %4021 = vmatpush.bf16.msra.mxu0 %v2566
        %4022 = vmatmul.bf16.gmra.mxu0 %v742
        %v4023 = vpop.f32.mrf.mxu0
        %v4024 = vadd.f32 %v4005, %v4023
        %v4025 = vpop.f32.mrf.mxu0
        %v4026 = vadd.f32 %v4007, %v4025
        %4027 = vmatmul.bf16.gmra.mxu0 %v750
        %v4028 = vpop.f32.mrf.mxu0
        %v4029 = vadd.f32 %v4010, %v4028
        %v4030 = vpop.f32.mrf.mxu0
        %v4031 = vadd.f32 %v4012, %v4030
        %4032 = vdwg.mxu0
        %4033 = vmatpush.bf16.msra.mxu0 %v2686
        %4034 = vmatpush.bf16.msra.mxu0 %v2678
        %4035 = vmatpush.bf16.msra.mxu0 %v2670
        %4036 = vmatpush.bf16.msra.mxu0 %v2662
        %4037 = vmatpush.bf16.msra.mxu0 %v2654
        %4038 = vmatpush.bf16.msra.mxu0 %v2646
        %4039 = vmatpush.bf16.msra.mxu0 %v2638
        %4040 = vmatpush.bf16.msra.mxu0 %v2630
        %4041 = vmatmul.bf16.gmra.mxu0 %v743
        %v4042 = vpop.f32.mrf.mxu0
        %v4043 = vadd.f32 %v4024, %v4042
        %v4044 = vpop.f32.mrf.mxu0
        %v4045 = vadd.f32 %v4026, %v4044
        %4046 = vmatmul.bf16.gmra.mxu0 %v751
        %v4047 = vpop.f32.mrf.mxu0
        %v4048 = vadd.f32 %v4029, %v4047
        %v4049 = vpop.f32.mrf.mxu0
        %v4050 = vadd.f32 %v4031, %v4049
        %4051 = vdwg.mxu0
        %4052 = vmatpush.bf16.msra.mxu0 %v2750
        %4053 = vmatpush.bf16.msra.mxu0 %v2742
        %4054 = vmatpush.bf16.msra.mxu0 %v2734
        %4055 = vmatpush.bf16.msra.mxu0 %v2726
        %4056 = vmatpush.bf16.msra.mxu0 %v2718
        %4057 = vmatpush.bf16.msra.mxu0 %v2710
        %4058 = vmatpush.bf16.msra.mxu0 %v2702
        %4059 = vmatpush.bf16.msra.mxu0 %v2694
        %4060 = vmatmul.bf16.gmra.mxu0 %v744
        %v4061 = vpop.f32.mrf.mxu0
        %v4062 = vadd.f32 %v4043, %v4061
        %v4063 = vpop.f32.mrf.mxu0
        %v4064 = vadd.f32 %v4045, %v4063
        %4065 = vmatmul.bf16.gmra.mxu0 %v752
        %v4066 = vpop.f32.mrf.mxu0
        %v4067 = vadd.f32 %v4048, %v4066
        %v4068 = vpop.f32.mrf.mxu0
        %v4069 = vadd.f32 %v4050, %v4068
        %4070 = vdwg.mxu0
        %4071 = vmatpush.bf16.msra.mxu0 %v2814
        %4072 = vmatpush.bf16.msra.mxu0 %v2806
        %4073 = vmatpush.bf16.msra.mxu0 %v2798
        %4074 = vmatpush.bf16.msra.mxu0 %v2790
        %4075 = vmatpush.bf16.msra.mxu0 %v2782
        %4076 = vmatpush.bf16.msra.mxu0 %v2774
        %4077 = vmatpush.bf16.msra.mxu0 %v2766
        %4078 = vmatpush.bf16.msra.mxu0 %v2758
        %4079 = vmatmul.bf16.gmra.mxu0 %v745
        %v4080 = vpop.f32.mrf.mxu0
        %v4081 = vadd.f32 %v4062, %v4080
        %v4082 = vpop.f32.mrf.mxu0
        %v4083 = vadd.f32 %v4064, %v4082
        %4084 = vmatmul.bf16.gmra.mxu0 %v753
        %v4085 = vpop.f32.mrf.mxu0
        %v4086 = vadd.f32 %v4067, %v4085
        %v4087 = vpop.f32.mrf.mxu0
        %v4088 = vadd.f32 %v4069, %v4087
        %4089 = vdwg.mxu0
        %4090 = vmatpush.bf16.msra.mxu0 %v2367
        %4091 = vmatpush.bf16.msra.mxu0 %v2359
        %4092 = vmatpush.bf16.msra.mxu0 %v2351
        %4093 = vmatpush.bf16.msra.mxu0 %v2343
        %4094 = vmatpush.bf16.msra.mxu0 %v2335
        %4095 = vmatpush.bf16.msra.mxu0 %v2327
        %4096 = vmatpush.bf16.msra.mxu0 %v2319
        %4097 = vmatpush.bf16.msra.mxu0 %v2311
        %4098 = vmatmul.bf16.gmra.mxu0 %v738
        %v4099 = vpop.f32.mrf.mxu0
        %v4100 = vadd.f32 0.0, %v4099
        %v4101 = vpop.f32.mrf.mxu0
        %v4102 = vadd.f32 0.0, %v4101
        %4103 = vmatmul.bf16.gmra.mxu0 %v746
        %v4104 = vpop.f32.mrf.mxu0
        %v4105 = vadd.f32 0.0, %v4104
        %v4106 = vpop.f32.mrf.mxu0
        %v4107 = vadd.f32 0.0, %v4106
        %4108 = vdwg.mxu0
        %4109 = vmatpush.bf16.msra.mxu0 %v2431
        %4110 = vmatpush.bf16.msra.mxu0 %v2423
        %4111 = vmatpush.bf16.msra.mxu0 %v2415
        %4112 = vmatpush.bf16.msra.mxu0 %v2407
        %4113 = vmatpush.bf16.msra.mxu0 %v2399
        %4114 = vmatpush.bf16.msra.mxu0 %v2391
        %4115 = vmatpush.bf16.msra.mxu0 %v2383
        %4116 = vmatpush.bf16.msra.mxu0 %v2375
        %4117 = vmatmul.bf16.gmra.mxu0 %v739
        %v4118 = vpop.f32.mrf.mxu0
        %v4119 = vadd.f32 %v4100, %v4118
        %v4120 = vpop.f32.mrf.mxu0
        %v4121 = vadd.f32 %v4102, %v4120
        %4122 = vmatmul.bf16.gmra.mxu0 %v747
        %v4123 = vpop.f32.mrf.mxu0
        %v4124 = vadd.f32 %v4105, %v4123
        %v4125 = vpop.f32.mrf.mxu0
        %v4126 = vadd.f32 %v4107, %v4125
        %4127 = vdwg.mxu0
        %4128 = vmatpush.bf16.msra.mxu0 %v2495
        %4129 = vmatpush.bf16.msra.mxu0 %v2487
        %4130 = vmatpush.bf16.msra.mxu0 %v2479
        %4131 = vmatpush.bf16.msra.mxu0 %v2471
        %4132 = vmatpush.bf16.msra.mxu0 %v2463
        %4133 = vmatpush.bf16.msra.mxu0 %v2455
        %4134 = vmatpush.bf16.msra.mxu0 %v2447
        %4135 = vmatpush.bf16.msra.mxu0 %v2439
        %4136 = vmatmul.bf16.gmra.mxu0 %v740
        %v4137 = vpop.f32.mrf.mxu0
        %v4138 = vadd.f32 %v4119, %v4137
        %v4139 = vpop.f32.mrf.mxu0
        %v4140 = vadd.f32 %v4121, %v4139
        %4141 = vmatmul.bf16.gmra.mxu0 %v748
        %v4142 = vpop.f32.mrf.mxu0
        %v4143 = vadd.f32 %v4124, %v4142
        %v4144 = vpop.f32.mrf.mxu0
        %v4145 = vadd.f32 %v4126, %v4144
        %4146 = vdwg.mxu0
        %4147 = vmatpush.bf16.msra.mxu0 %v2559
        %4148 = vmatpush.bf16.msra.mxu0 %v2551
        %4149 = vmatpush.bf16.msra.mxu0 %v2543
        %4150 = vmatpush.bf16.msra.mxu0 %v2535
        %4151 = vmatpush.bf16.msra.mxu0 %v2527
        %4152 = vmatpush.bf16.msra.mxu0 %v2519
        %4153 = vmatpush.bf16.msra.mxu0 %v2511
        %4154 = vmatpush.bf16.msra.mxu0 %v2503
        %4155 = vmatmul.bf16.gmra.mxu0 %v741
        %v4156 = vpop.f32.mrf.mxu0
        %v4157 = vadd.f32 %v4138, %v4156
        %v4158 = vpop.f32.mrf.mxu0
        %v4159 = vadd.f32 %v4140, %v4158
        %4160 = vmatmul.bf16.gmra.mxu0 %v749
        %v4161 = vpop.f32.mrf.mxu0
        %v4162 = vadd.f32 %v4143, %v4161
        %v4163 = vpop.f32.mrf.mxu0
        %v4164 = vadd.f32 %v4145, %v4163
        %4165 = vdwg.mxu0
        %4166 = vmatpush.bf16.msra.mxu0 %v2623
        %4167 = vmatpush.bf16.msra.mxu0 %v2615
        %4168 = vmatpush.bf16.msra.mxu0 %v2607
        %4169 = vmatpush.bf16.msra.mxu0 %v2599
        %4170 = vmatpush.bf16.msra.mxu0 %v2591
        %4171 = vmatpush.bf16.msra.mxu0 %v2583
        %4172 = vmatpush.bf16.msra.mxu0 %v2575
        %4173 = vmatpush.bf16.msra.mxu0 %v2567
        %4174 = vmatmul.bf16.gmra.mxu0 %v742
        %v4175 = vpop.f32.mrf.mxu0
        %v4176 = vadd.f32 %v4157, %v4175
        %v4177 = vpop.f32.mrf.mxu0
        %v4178 = vadd.f32 %v4159, %v4177
        %4179 = vmatmul.bf16.gmra.mxu0 %v750
        %v4180 = vpop.f32.mrf.mxu0
        %v4181 = vadd.f32 %v4162, %v4180
        %v4182 = vpop.f32.mrf.mxu0
        %v4183 = vadd.f32 %v4164, %v4182
        %4184 = vdwg.mxu0
        %4185 = vmatpush.bf16.msra.mxu0 %v2687
        %4186 = vmatpush.bf16.msra.mxu0 %v2679
        %4187 = vmatpush.bf16.msra.mxu0 %v2671
        %4188 = vmatpush.bf16.msra.mxu0 %v2663
        %4189 = vmatpush.bf16.msra.mxu0 %v2655
        %4190 = vmatpush.bf16.msra.mxu0 %v2647
        %4191 = vmatpush.bf16.msra.mxu0 %v2639
        %4192 = vmatpush.bf16.msra.mxu0 %v2631
        %4193 = vmatmul.bf16.gmra.mxu0 %v743
        %v4194 = vpop.f32.mrf.mxu0
        %v4195 = vadd.f32 %v4176, %v4194
        %v4196 = vpop.f32.mrf.mxu0
        %v4197 = vadd.f32 %v4178, %v4196
        %4198 = vmatmul.bf16.gmra.mxu0 %v751
        %v4199 = vpop.f32.mrf.mxu0
        %v4200 = vadd.f32 %v4181, %v4199
        %v4201 = vpop.f32.mrf.mxu0
        %v4202 = vadd.f32 %v4183, %v4201
        %4203 = vdwg.mxu0
        %4204 = vmatpush.bf16.msra.mxu0 %v2751
        %4205 = vmatpush.bf16.msra.mxu0 %v2743
        %4206 = vmatpush.bf16.msra.mxu0 %v2735
        %4207 = vmatpush.bf16.msra.mxu0 %v2727
        %4208 = vmatpush.bf16.msra.mxu0 %v2719
        %4209 = vmatpush.bf16.msra.mxu0 %v2711
        %4210 = vmatpush.bf16.msra.mxu0 %v2703
        %4211 = vmatpush.bf16.msra.mxu0 %v2695
        %4212 = vmatmul.bf16.gmra.mxu0 %v744
        %v4213 = vpop.f32.mrf.mxu0
        %v4214 = vadd.f32 %v4195, %v4213
        %v4215 = vpop.f32.mrf.mxu0
        %v4216 = vadd.f32 %v4197, %v4215
        %4217 = vmatmul.bf16.gmra.mxu0 %v752
        %v4218 = vpop.f32.mrf.mxu0
        %v4219 = vadd.f32 %v4200, %v4218
        %v4220 = vpop.f32.mrf.mxu0
        %v4221 = vadd.f32 %v4202, %v4220
        %4222 = vdwg.mxu0
        %4223 = vmatpush.bf16.msra.mxu0 %v2815
        %4224 = vmatpush.bf16.msra.mxu0 %v2807
        %4225 = vmatpush.bf16.msra.mxu0 %v2799
        %4226 = vmatpush.bf16.msra.mxu0 %v2791
        %4227 = vmatpush.bf16.msra.mxu0 %v2783
        %4228 = vmatpush.bf16.msra.mxu0 %v2775
        %4229 = vmatpush.bf16.msra.mxu0 %v2767
        %4230 = vmatpush.bf16.msra.mxu0 %v2759
        %4231 = vmatmul.bf16.gmra.mxu0 %v745
        %v4232 = vpop.f32.mrf.mxu0
        %v4233 = vadd.f32 %v4214, %v4232
        %v4234 = vpop.f32.mrf.mxu0
        %v4235 = vadd.f32 %v4216, %v4234
        %4236 = vmatmul.bf16.gmra.mxu0 %v753
        %v4237 = vpop.f32.mrf.mxu0
        %v4238 = vadd.f32 %v4219, %v4237
        %v4239 = vpop.f32.mrf.mxu0
        %v4240 = vadd.f32 %v4221, %v4239
        %4241 = vdwg.mxu0
        %4242 = vmatpush.bf16.msra.mxu0 %v2368
        %4243 = vmatpush.bf16.msra.mxu0 %v2360
        %4244 = vmatpush.bf16.msra.mxu0 %v2352
        %4245 = vmatpush.bf16.msra.mxu0 %v2344
        %4246 = vmatpush.bf16.msra.mxu0 %v2336
        %4247 = vmatpush.bf16.msra.mxu0 %v2328
        %4248 = vmatpush.bf16.msra.mxu0 %v2320
        %4249 = vmatpush.bf16.msra.mxu0 %v2312
        %4250 = vmatmul.bf16.gmra.mxu0 %v738
        %v4251 = vpop.f32.mrf.mxu0
        %v4252 = vadd.f32 0.0, %v4251
        %v4253 = vpop.f32.mrf.mxu0
        %v4254 = vadd.f32 0.0, %v4253
        %4255 = vmatmul.bf16.gmra.mxu0 %v746
        %v4256 = vpop.f32.mrf.mxu0
        %v4257 = vadd.f32 0.0, %v4256
        %v4258 = vpop.f32.mrf.mxu0
        %v4259 = vadd.f32 0.0, %v4258
        %4260 = vdwg.mxu0
        %4261 = vmatpush.bf16.msra.mxu0 %v2432
        %4262 = vmatpush.bf16.msra.mxu0 %v2424
        %4263 = vmatpush.bf16.msra.mxu0 %v2416
        %4264 = vmatpush.bf16.msra.mxu0 %v2408
        %4265 = vmatpush.bf16.msra.mxu0 %v2400
        %4266 = vmatpush.bf16.msra.mxu0 %v2392
        %4267 = vmatpush.bf16.msra.mxu0 %v2384
        %4268 = vmatpush.bf16.msra.mxu0 %v2376
        %4269 = vmatmul.bf16.gmra.mxu0 %v739
        %v4270 = vpop.f32.mrf.mxu0
        %v4271 = vadd.f32 %v4252, %v4270
        %v4272 = vpop.f32.mrf.mxu0
        %v4273 = vadd.f32 %v4254, %v4272
        %4274 = vmatmul.bf16.gmra.mxu0 %v747
        %v4275 = vpop.f32.mrf.mxu0
        %v4276 = vadd.f32 %v4257, %v4275
        %v4277 = vpop.f32.mrf.mxu0
        %v4278 = vadd.f32 %v4259, %v4277
        %4279 = vdwg.mxu0
        %4280 = vmatpush.bf16.msra.mxu0 %v2496
        %4281 = vmatpush.bf16.msra.mxu0 %v2488
        %4282 = vmatpush.bf16.msra.mxu0 %v2480
        %4283 = vmatpush.bf16.msra.mxu0 %v2472
        %4284 = vmatpush.bf16.msra.mxu0 %v2464
        %4285 = vmatpush.bf16.msra.mxu0 %v2456
        %4286 = vmatpush.bf16.msra.mxu0 %v2448
        %4287 = vmatpush.bf16.msra.mxu0 %v2440
        %4288 = vmatmul.bf16.gmra.mxu0 %v740
        %v4289 = vpop.f32.mrf.mxu0
        %v4290 = vadd.f32 %v4271, %v4289
        %v4291 = vpop.f32.mrf.mxu0
        %v4292 = vadd.f32 %v4273, %v4291
        %4293 = vmatmul.bf16.gmra.mxu0 %v748
        %v4294 = vpop.f32.mrf.mxu0
        %v4295 = vadd.f32 %v4276, %v4294
        %v4296 = vpop.f32.mrf.mxu0
        %v4297 = vadd.f32 %v4278, %v4296
        %4298 = vdwg.mxu0
        %4299 = vmatpush.bf16.msra.mxu0 %v2560
        %4300 = vmatpush.bf16.msra.mxu0 %v2552
        %4301 = vmatpush.bf16.msra.mxu0 %v2544
        %4302 = vmatpush.bf16.msra.mxu0 %v2536
        %4303 = vmatpush.bf16.msra.mxu0 %v2528
        %4304 = vmatpush.bf16.msra.mxu0 %v2520
        %4305 = vmatpush.bf16.msra.mxu0 %v2512
        %4306 = vmatpush.bf16.msra.mxu0 %v2504
        %4307 = vmatmul.bf16.gmra.mxu0 %v741
        %v4308 = vpop.f32.mrf.mxu0
        %v4309 = vadd.f32 %v4290, %v4308
        %v4310 = vpop.f32.mrf.mxu0
        %v4311 = vadd.f32 %v4292, %v4310
        %4312 = vmatmul.bf16.gmra.mxu0 %v749
        %v4313 = vpop.f32.mrf.mxu0
        %v4314 = vadd.f32 %v4295, %v4313
        %v4315 = vpop.f32.mrf.mxu0
        %v4316 = vadd.f32 %v4297, %v4315
        %4317 = vdwg.mxu0
        %4318 = vmatpush.bf16.msra.mxu0 %v2624
        %4319 = vmatpush.bf16.msra.mxu0 %v2616
        %4320 = vmatpush.bf16.msra.mxu0 %v2608
        %4321 = vmatpush.bf16.msra.mxu0 %v2600
        %4322 = vmatpush.bf16.msra.mxu0 %v2592
        %4323 = vmatpush.bf16.msra.mxu0 %v2584
        %4324 = vmatpush.bf16.msra.mxu0 %v2576
        %4325 = vmatpush.bf16.msra.mxu0 %v2568
        %4326 = vmatmul.bf16.gmra.mxu0 %v742
        %v4327 = vpop.f32.mrf.mxu0
        %v4328 = vadd.f32 %v4309, %v4327
        %v4329 = vpop.f32.mrf.mxu0
        %v4330 = vadd.f32 %v4311, %v4329
        %4331 = vmatmul.bf16.gmra.mxu0 %v750
        %v4332 = vpop.f32.mrf.mxu0
        %v4333 = vadd.f32 %v4314, %v4332
        %v4334 = vpop.f32.mrf.mxu0
        %v4335 = vadd.f32 %v4316, %v4334
        %4336 = vdwg.mxu0
        %4337 = vmatpush.bf16.msra.mxu0 %v2688
        %4338 = vmatpush.bf16.msra.mxu0 %v2680
        %4339 = vmatpush.bf16.msra.mxu0 %v2672
        %4340 = vmatpush.bf16.msra.mxu0 %v2664
        %4341 = vmatpush.bf16.msra.mxu0 %v2656
        %4342 = vmatpush.bf16.msra.mxu0 %v2648
        %4343 = vmatpush.bf16.msra.mxu0 %v2640
        %4344 = vmatpush.bf16.msra.mxu0 %v2632
        %4345 = vmatmul.bf16.gmra.mxu0 %v743
        %v4346 = vpop.f32.mrf.mxu0
        %v4347 = vadd.f32 %v4328, %v4346
        %v4348 = vpop.f32.mrf.mxu0
        %v4349 = vadd.f32 %v4330, %v4348
        %4350 = vmatmul.bf16.gmra.mxu0 %v751
        %v4351 = vpop.f32.mrf.mxu0
        %v4352 = vadd.f32 %v4333, %v4351
        %v4353 = vpop.f32.mrf.mxu0
        %v4354 = vadd.f32 %v4335, %v4353
        %4355 = vdwg.mxu0
        %4356 = vmatpush.bf16.msra.mxu0 %v2752
        %4357 = vmatpush.bf16.msra.mxu0 %v2744
        %4358 = vmatpush.bf16.msra.mxu0 %v2736
        %4359 = vmatpush.bf16.msra.mxu0 %v2728
        %4360 = vmatpush.bf16.msra.mxu0 %v2720
        %4361 = vmatpush.bf16.msra.mxu0 %v2712
        %4362 = vmatpush.bf16.msra.mxu0 %v2704
        %4363 = vmatpush.bf16.msra.mxu0 %v2696
        %4364 = vmatmul.bf16.gmra.mxu0 %v744
        %v4365 = vpop.f32.mrf.mxu0
        %v4366 = vadd.f32 %v4347, %v4365
        %v4367 = vpop.f32.mrf.mxu0
        %v4368 = vadd.f32 %v4349, %v4367
        %4369 = vmatmul.bf16.gmra.mxu0 %v752
        %v4370 = vpop.f32.mrf.mxu0
        %v4371 = vadd.f32 %v4352, %v4370
        %v4372 = vpop.f32.mrf.mxu0
        %v4373 = vadd.f32 %v4354, %v4372
        %4374 = vdwg.mxu0
        %4375 = vmatpush.bf16.msra.mxu0 %v2816
        %4376 = vmatpush.bf16.msra.mxu0 %v2808
        %4377 = vmatpush.bf16.msra.mxu0 %v2800
        %4378 = vmatpush.bf16.msra.mxu0 %v2792
        %4379 = vmatpush.bf16.msra.mxu0 %v2784
        %4380 = vmatpush.bf16.msra.mxu0 %v2776
        %4381 = vmatpush.bf16.msra.mxu0 %v2768
        %4382 = vmatpush.bf16.msra.mxu0 %v2760
        %4383 = vmatmul.bf16.gmra.mxu0 %v745
        %v4384 = vpop.f32.mrf.mxu0
        %v4385 = vadd.f32 %v4366, %v4384
        %v4386 = vpop.f32.mrf.mxu0
        %v4387 = vadd.f32 %v4368, %v4386
        %4388 = vmatmul.bf16.gmra.mxu0 %v753
        %v4389 = vpop.f32.mrf.mxu0
        %v4390 = vadd.f32 %v4371, %v4389
        %v4391 = vpop.f32.mrf.mxu0
        %v4392 = vadd.f32 %v4373, %v4391
        %4393 = vdwg.mxu0
        %4394 = vmatpush.bf16.msra.mxu0 %v2369
        %4395 = vmatpush.bf16.msra.mxu0 %v2361
        %4396 = vmatpush.bf16.msra.mxu0 %v2353
        %4397 = vmatpush.bf16.msra.mxu0 %v2345
        %4398 = vmatpush.bf16.msra.mxu0 %v2337
        %4399 = vmatpush.bf16.msra.mxu0 %v2329
        %4400 = vmatpush.bf16.msra.mxu0 %v2321
        %4401 = vmatpush.bf16.msra.mxu0 %v2313
        %4402 = vmatmul.bf16.gmra.mxu0 %v738
        %v4403 = vpop.f32.mrf.mxu0
        %v4404 = vadd.f32 0.0, %v4403
        %v4405 = vpop.f32.mrf.mxu0
        %v4406 = vadd.f32 0.0, %v4405
        %4407 = vmatmul.bf16.gmra.mxu0 %v746
        %v4408 = vpop.f32.mrf.mxu0
        %v4409 = vadd.f32 0.0, %v4408
        %v4410 = vpop.f32.mrf.mxu0
        %v4411 = vadd.f32 0.0, %v4410
        %4412 = vdwg.mxu0
        %4413 = vmatpush.bf16.msra.mxu0 %v2433
        %4414 = vmatpush.bf16.msra.mxu0 %v2425
        %4415 = vmatpush.bf16.msra.mxu0 %v2417
        %4416 = vmatpush.bf16.msra.mxu0 %v2409
        %4417 = vmatpush.bf16.msra.mxu0 %v2401
        %4418 = vmatpush.bf16.msra.mxu0 %v2393
        %4419 = vmatpush.bf16.msra.mxu0 %v2385
        %4420 = vmatpush.bf16.msra.mxu0 %v2377
        %4421 = vmatmul.bf16.gmra.mxu0 %v739
        %v4422 = vpop.f32.mrf.mxu0
        %v4423 = vadd.f32 %v4404, %v4422
        %v4424 = vpop.f32.mrf.mxu0
        %v4425 = vadd.f32 %v4406, %v4424
        %4426 = vmatmul.bf16.gmra.mxu0 %v747
        %v4427 = vpop.f32.mrf.mxu0
        %v4428 = vadd.f32 %v4409, %v4427
        %v4429 = vpop.f32.mrf.mxu0
        %v4430 = vadd.f32 %v4411, %v4429
        %4431 = vdwg.mxu0
        %4432 = vmatpush.bf16.msra.mxu0 %v2497
        %4433 = vmatpush.bf16.msra.mxu0 %v2489
        %4434 = vmatpush.bf16.msra.mxu0 %v2481
        %4435 = vmatpush.bf16.msra.mxu0 %v2473
        %4436 = vmatpush.bf16.msra.mxu0 %v2465
        %4437 = vmatpush.bf16.msra.mxu0 %v2457
        %4438 = vmatpush.bf16.msra.mxu0 %v2449
        %4439 = vmatpush.bf16.msra.mxu0 %v2441
        %4440 = vmatmul.bf16.gmra.mxu0 %v740
        %v4441 = vpop.f32.mrf.mxu0
        %v4442 = vadd.f32 %v4423, %v4441
        %v4443 = vpop.f32.mrf.mxu0
        %v4444 = vadd.f32 %v4425, %v4443
        %4445 = vmatmul.bf16.gmra.mxu0 %v748
        %v4446 = vpop.f32.mrf.mxu0
        %v4447 = vadd.f32 %v4428, %v4446
        %v4448 = vpop.f32.mrf.mxu0
        %v4449 = vadd.f32 %v4430, %v4448
        %4450 = vdwg.mxu0
        %4451 = vmatpush.bf16.msra.mxu0 %v2561
        %4452 = vmatpush.bf16.msra.mxu0 %v2553
        %4453 = vmatpush.bf16.msra.mxu0 %v2545
        %4454 = vmatpush.bf16.msra.mxu0 %v2537
        %4455 = vmatpush.bf16.msra.mxu0 %v2529
        %4456 = vmatpush.bf16.msra.mxu0 %v2521
        %4457 = vmatpush.bf16.msra.mxu0 %v2513
        %4458 = vmatpush.bf16.msra.mxu0 %v2505
        %4459 = vmatmul.bf16.gmra.mxu0 %v741
        %v4460 = vpop.f32.mrf.mxu0
        %v4461 = vadd.f32 %v4442, %v4460
        %v4462 = vpop.f32.mrf.mxu0
        %v4463 = vadd.f32 %v4444, %v4462
        %4464 = vmatmul.bf16.gmra.mxu0 %v749
        %v4465 = vpop.f32.mrf.mxu0
        %v4466 = vadd.f32 %v4447, %v4465
        %v4467 = vpop.f32.mrf.mxu0
        %v4468 = vadd.f32 %v4449, %v4467
        %4469 = vdwg.mxu0
        %4470 = vmatpush.bf16.msra.mxu0 %v2625
        %4471 = vmatpush.bf16.msra.mxu0 %v2617
        %4472 = vmatpush.bf16.msra.mxu0 %v2609
        %4473 = vmatpush.bf16.msra.mxu0 %v2601
        %4474 = vmatpush.bf16.msra.mxu0 %v2593
        %4475 = vmatpush.bf16.msra.mxu0 %v2585
        %4476 = vmatpush.bf16.msra.mxu0 %v2577
        %4477 = vmatpush.bf16.msra.mxu0 %v2569
        %4478 = vmatmul.bf16.gmra.mxu0 %v742
        %v4479 = vpop.f32.mrf.mxu0
        %v4480 = vadd.f32 %v4461, %v4479
        %v4481 = vpop.f32.mrf.mxu0
        %v4482 = vadd.f32 %v4463, %v4481
        %4483 = vmatmul.bf16.gmra.mxu0 %v750
        %v4484 = vpop.f32.mrf.mxu0
        %v4485 = vadd.f32 %v4466, %v4484
        %v4486 = vpop.f32.mrf.mxu0
        %v4487 = vadd.f32 %v4468, %v4486
        %4488 = vdwg.mxu0
        %4489 = vmatpush.bf16.msra.mxu0 %v2689
        %4490 = vmatpush.bf16.msra.mxu0 %v2681
        %4491 = vmatpush.bf16.msra.mxu0 %v2673
        %4492 = vmatpush.bf16.msra.mxu0 %v2665
        %4493 = vmatpush.bf16.msra.mxu0 %v2657
        %4494 = vmatpush.bf16.msra.mxu0 %v2649
        %4495 = vmatpush.bf16.msra.mxu0 %v2641
        %4496 = vmatpush.bf16.msra.mxu0 %v2633
        %4497 = vmatmul.bf16.gmra.mxu0 %v743
        %v4498 = vpop.f32.mrf.mxu0
        %v4499 = vadd.f32 %v4480, %v4498
        %v4500 = vpop.f32.mrf.mxu0
        %v4501 = vadd.f32 %v4482, %v4500
        %4502 = vmatmul.bf16.gmra.mxu0 %v751
        %v4503 = vpop.f32.mrf.mxu0
        %v4504 = vadd.f32 %v4485, %v4503
        %v4505 = vpop.f32.mrf.mxu0
        %v4506 = vadd.f32 %v4487, %v4505
        %4507 = vdwg.mxu0
        %4508 = vmatpush.bf16.msra.mxu0 %v2753
        %4509 = vmatpush.bf16.msra.mxu0 %v2745
        %4510 = vmatpush.bf16.msra.mxu0 %v2737
        %4511 = vmatpush.bf16.msra.mxu0 %v2729
        %4512 = vmatpush.bf16.msra.mxu0 %v2721
        %4513 = vmatpush.bf16.msra.mxu0 %v2713
        %4514 = vmatpush.bf16.msra.mxu0 %v2705
        %4515 = vmatpush.bf16.msra.mxu0 %v2697
        %4516 = vmatmul.bf16.gmra.mxu0 %v744
        %v4517 = vpop.f32.mrf.mxu0
        %v4518 = vadd.f32 %v4499, %v4517
        %v4519 = vpop.f32.mrf.mxu0
        %v4520 = vadd.f32 %v4501, %v4519
        %4521 = vmatmul.bf16.gmra.mxu0 %v752
        %v4522 = vpop.f32.mrf.mxu0
        %v4523 = vadd.f32 %v4504, %v4522
        %v4524 = vpop.f32.mrf.mxu0
        %v4525 = vadd.f32 %v4506, %v4524
        %4526 = vdwg.mxu0
        %4527 = vmatpush.bf16.msra.mxu0 %v2817
        %4528 = vmatpush.bf16.msra.mxu0 %v2809
        %4529 = vmatpush.bf16.msra.mxu0 %v2801
        %4530 = vmatpush.bf16.msra.mxu0 %v2793
        %4531 = vmatpush.bf16.msra.mxu0 %v2785
        %4532 = vmatpush.bf16.msra.mxu0 %v2777
        %4533 = vmatpush.bf16.msra.mxu0 %v2769
        %4534 = vmatpush.bf16.msra.mxu0 %v2761
        %4535 = vmatmul.bf16.gmra.mxu0 %v745
        %v4536 = vpop.f32.mrf.mxu0
        %v4537 = vadd.f32 %v4518, %v4536
        %v4538 = vpop.f32.mrf.mxu0
        %v4539 = vadd.f32 %v4520, %v4538
        %4540 = vmatmul.bf16.gmra.mxu0 %v753
        %v4541 = vpop.f32.mrf.mxu0
        %v4542 = vadd.f32 %v4523, %v4541
        %v4543 = vpop.f32.mrf.mxu0
        %v4544 = vadd.f32 %v4525, %v4543
        %4545 = vdwg.mxu0
        %4546 = vst [vmem:[%s159] sm:$0xff] %v3473
        %4547 = vst [vmem:[%s159 + $0x8] sm:$0xff] %v3625
        %4548 = vst [vmem:[%s159 + $0x10] sm:$0xff] %v3777
        %4549 = vst [vmem:[%s159 + $0x18] sm:$0xff] %v3929
        %4550 = vst [vmem:[%s159 + $0x20] sm:$0xff] %v4081
        %4551 = vst [vmem:[%s159 + $0x28] sm:$0xff] %v4233
        %4552 = vst [vmem:[%s159 + $0x30] sm:$0xff] %v4385
        %4553 = vst [vmem:[%s159 + $0x38] sm:$0xff] %v4537
        %4554 = vst [vmem:[%s159 + $0x40] sm:$0xff] %v3475
        %4555 = vst [vmem:[%s159 + $0x48] sm:$0xff] %v3627
        %4556 = vst [vmem:[%s159 + $0x50] sm:$0xff] %v3779
        %4557 = vst [vmem:[%s159 + $0x58] sm:$0xff] %v3931
        %4558 = vst [vmem:[%s159 + $0x60] sm:$0xff] %v4083
        %4559 = vst [vmem:[%s159 + $0x68] sm:$0xff] %v4235
        %4560 = vst [vmem:[%s159 + $0x70] sm:$0xff] %v4387
        %4561 = vst [vmem:[%s159 + $0x78] sm:$0xff] %v4539
        %4562 = vst [vmem:[%s159 + $0x80] sm:$0xff] %v3478
        %4563 = vst [vmem:[%s159 + $0x88] sm:$0xff] %v3630
        %4564 = vst [vmem:[%s159 + $0x90] sm:$0xff] %v3782
        %4565 = vst [vmem:[%s159 + $0x98] sm:$0xff] %v3934
        %4566 = vst [vmem:[%s159 + $0xa0] sm:$0xff] %v4086
        %4567 = vst [vmem:[%s159 + $0xa8] sm:$0xff] %v4238
        %4568 = vst [vmem:[%s159 + $0xb0] sm:$0xff] %v4390
        %4569 = vst [vmem:[%s159 + $0xb8] sm:$0xff] %v4542
        %4570 = vst [vmem:[%s159 + $0xc0] sm:$0xff] %v3480
        %4571 = vst [vmem:[%s159 + $0xc8] sm:$0xff] %v3632
        %4572 = vst [vmem:[%s159 + $0xd0] sm:$0xff] %v3784
        %4573 = vst [vmem:[%s159 + $0xd8] sm:$0xff] %v3936
        %4574 = vst [vmem:[%s159 + $0xe0] sm:$0xff] %v4088
        %4575 = vst [vmem:[%s159 + $0xe8] sm:$0xff] %v4240
        %4576 = vst [vmem:[%s159 + $0xf0] sm:$0xff] %v4392
        %4577 = vst [vmem:[%s159 + $0xf8] sm:$0xff] %v4544
        %s4578 = sand.u32 %s71, 1
        %s4579 = sand.u32 %s71, 1
        %s4580 = smul.addr %s4579, 256
        %s4581 = scalar_lea.vmem [#allocation4], %s4580
        // Predicated region
        $region33: #{generator_forward.8} parent=27 // pred_check
          %p4582 = pneg %p81
        $region34: #{generator_forward.8} parent=27 // pred_check_branch
          %4584 = sbr.rel (%p4582) target = $region36
        $region35: #{generator_forward.8} parent=27 // pred_region
          %s4585 = smul.u32 8, %s16
          %s4586 = smul.addr %s4585, 8
          %s4587 = scalar_lea.vmem %s2, %s4586
          // Predicated region
          $region37: #{generator_forward.8} parent=35 // pred_check
            _
          $region38: #{generator_forward.8} parent=35 // pred_check_branch
            %4589 = sbr.rel (0) target = $region40
          $region39: #{generator_forward.8} parent=35 // pred_region
            // Predicated region
            $region41: #{generator_forward.8} parent=39 // pred_check
              _
            $region42: #{generator_forward.8} parent=39 // pred_check_branch
              %4591 = sbr.rel (0) target = $region44
            $region43: #{generator_forward.8} parent=39 // pred_region
              loop: start=0, step=1, limit=1
              $region45: #{generator_forward.8} parent=43 // loop_pre_header
                _
              $region46: #{generator_forward.8} parent=43 // loop_header
                %s4593 = sphi 0, %s4597
                %p4594 = scmp.ge.s32.totalorder %s4593, 1
                %s4598 = sphi %s4581, %s4581
                %s4599 = sphi %s4587, %s4587
              $region47: #{generator_forward.8} parent=43 // loop_header_branch
                %4596 = sbr.rel (%p4594) target = $region51
              $region48: #{generator_forward.8} parent=43 // loop_body
                %v4600 = vld [vmem:[%s4598] sm:$0xff]
                %4601 = vst [vmem:[%s4599] sm:$0xff] %v4600
                %v4602 = vld [vmem:[%s4598 + $0x8] sm:$0xff]
                %4603 = vst [vmem:[%s4599 + $0x8] sm:$0xff] %v4602
                %v4604 = vld [vmem:[%s4598 + $0x10] sm:$0xff]
                %4605 = vst [vmem:[%s4599 + $0x10] sm:$0xff] %v4604
                %v4606 = vld [vmem:[%s4598 + $0x18] sm:$0xff]
                %4607 = vst [vmem:[%s4599 + $0x18] sm:$0xff] %v4606
                %v4608 = vld [vmem:[%s4598 + $0x20] sm:$0xff]
                %4609 = vst [vmem:[%s4599 + $0x20] sm:$0xff] %v4608
                %v4610 = vld [vmem:[%s4598 + $0x28] sm:$0xff]
                %4611 = vst [vmem:[%s4599 + $0x28] sm:$0xff] %v4610
                %v4612 = vld [vmem:[%s4598 + $0x30] sm:$0xff]
                %4613 = vst [vmem:[%s4599 + $0x30] sm:$0xff] %v4612
                %v4614 = vld [vmem:[%s4598 + $0x38] sm:$0xff]
                %4615 = vst [vmem:[%s4599 + $0x38] sm:$0xff] %v4614
                %v4616 = vld [vmem:[%s4598 + $0x40] sm:$0xff]
                %4617 = vst [vmem:[%s4599 + $0x200] sm:$0xff] %v4616
                %v4618 = vld [vmem:[%s4598 + $0x48] sm:$0xff]
                %4619 = vst [vmem:[%s4599 + $0x208] sm:$0xff] %v4618
                %v4620 = vld [vmem:[%s4598 + $0x50] sm:$0xff]
                %4621 = vst [vmem:[%s4599 + $0x210] sm:$0xff] %v4620
                %v4622 = vld [vmem:[%s4598 + $0x58] sm:$0xff]
                %4623 = vst [vmem:[%s4599 + $0x218] sm:$0xff] %v4622
                %v4624 = vld [vmem:[%s4598 + $0x60] sm:$0xff]
                %4625 = vst [vmem:[%s4599 + $0x220] sm:$0xff] %v4624
                %v4626 = vld [vmem:[%s4598 + $0x68] sm:$0xff]
                %4627 = vst [vmem:[%s4599 + $0x228] sm:$0xff] %v4626
                %v4628 = vld [vmem:[%s4598 + $0x70] sm:$0xff]
                %4629 = vst [vmem:[%s4599 + $0x230] sm:$0xff] %v4628
                %v4630 = vld [vmem:[%s4598 + $0x78] sm:$0xff]
                %4631 = vst [vmem:[%s4599 + $0x238] sm:$0xff] %v4630
                %v4632 = vld [vmem:[%s4598 + $0x80] sm:$0xff]
                %4633 = vst [vmem:[%s4599 + $0x400] sm:$0xff] %v4632
                %v4634 = vld [vmem:[%s4598 + $0x88] sm:$0xff]
                %4635 = vst [vmem:[%s4599 + $0x408] sm:$0xff] %v4634
                %v4636 = vld [vmem:[%s4598 + $0x90] sm:$0xff]
                %4637 = vst [vmem:[%s4599 + $0x410] sm:$0xff] %v4636
                %v4638 = vld [vmem:[%s4598 + $0x98] sm:$0xff]
                %4639 = vst [vmem:[%s4599 + $0x418] sm:$0xff] %v4638
                %v4640 = vld [vmem:[%s4598 + $0xa0] sm:$0xff]
                %4641 = vst [vmem:[%s4599 + $0x420] sm:$0xff] %v4640
                %v4642 = vld [vmem:[%s4598 + $0xa8] sm:$0xff]
                %4643 = vst [vmem:[%s4599 + $0x428] sm:$0xff] %v4642
                %v4644 = vld [vmem:[%s4598 + $0xb0] sm:$0xff]
                %4645 = vst [vmem:[%s4599 + $0x430] sm:$0xff] %v4644
                %v4646 = vld [vmem:[%s4598 + $0xb8] sm:$0xff]
                %4647 = vst [vmem:[%s4599 + $0x438] sm:$0xff] %v4646
                %v4648 = vld [vmem:[%s4598 + $0xc0] sm:$0xff]
                %4649 = vst [vmem:[%s4599 + $0x600] sm:$0xff] %v4648
                %v4650 = vld [vmem:[%s4598 + $0xc8] sm:$0xff]
                %4651 = vst [vmem:[%s4599 + $0x608] sm:$0xff] %v4650
                %v4652 = vld [vmem:[%s4598 + $0xd0] sm:$0xff]
                %4653 = vst [vmem:[%s4599 + $0x610] sm:$0xff] %v4652
                %v4654 = vld [vmem:[%s4598 + $0xd8] sm:$0xff]
                %4655 = vst [vmem:[%s4599 + $0x618] sm:$0xff] %v4654
                %v4656 = vld [vmem:[%s4598 + $0xe0] sm:$0xff]
                %4657 = vst [vmem:[%s4599 + $0x620] sm:$0xff] %v4656
                %v4658 = vld [vmem:[%s4598 + $0xe8] sm:$0xff]
                %4659 = vst [vmem:[%s4599 + $0x628] sm:$0xff] %v4658
                %v4660 = vld [vmem:[%s4598 + $0xf0] sm:$0xff]
                %4661 = vst [vmem:[%s4599 + $0x630] sm:$0xff] %v4660
                %v4662 = vld [vmem:[%s4598 + $0xf8] sm:$0xff]
                %4663 = vst [vmem:[%s4599 + $0x638] sm:$0xff] %v4662
              $region49: #{generator_forward.8} parent=43 // loop_footer
                %s4597 = sadd.s32 1, %s4593
              $region50: #{generator_forward.8} parent=43 // loop_footer_branch
                %4592 = sbr.rel target = $region46
              $region51: #{generator_forward.8} parent=43 // loop_exit
                _
            $region44: #{generator_forward.8} parent=39 // pred_fallthru
              _
            // Predicated region
            $region52: #{generator_forward.8} parent=39 // pred_check
              _
            $region53: #{generator_forward.8} parent=39 // pred_check_branch
              %4665 = sbr.rel target = $region55
            $region54: #{generator_forward.8} parent=39 // pred_region
              _
            $region55: #{generator_forward.8} parent=39 // pred_fallthru
              _
          $region40: #{generator_forward.8} parent=35 // pred_fallthru
            _
          %4666 = vnop
        $region36: #{generator_forward.8} parent=27 // pred_fallthru
          _
      $region28: #{generator_forward.8} parent=5 // pred_fallthru
        _
      %p4667 = scmp.le.s32.totalorder 2, %s11
      // Predicated region
      $region56: #{generator_forward.8} parent=5 // pred_check
        %p4668 = pneg %p4667
      $region57: #{generator_forward.8} parent=5 // pred_check_branch
        %4670 = sbr.rel (%p4668) target = $region59
      $region58: #{generator_forward.8} parent=5 // pred_region
        %s4671 = ssub.s32 %s11, 2
        // Predicated region
        $region60: #{generator_forward.8} parent=58 // pred_check
          %p4672 = pneg %p87
        $region61: #{generator_forward.8} parent=58 // pred_check_branch
          %4674 = sbr.rel (%p4672) target = $region63
        $region62: #{generator_forward.8} parent=58 // pred_region
          %s4675 = sand.u32 %s72, 1
          %s4676 = sand.u32 %s72, 1
          %s4677 = smul.addr %s4676, 256
          %s4678 = scalar_lea.vmem [#allocation4], %s4677
        $region63: #{generator_forward.8} parent=58 // pred_fallthru
          _
      $region59: #{generator_forward.8} parent=5 // pred_fallthru
        _
    $region6: #{generator_forward.8} parent=1 // loop_footer
      %s15 = sadd.s32 1, %s11
    $region7: #{generator_forward.8} parent=1 // loop_footer_branch
      %10 = sbr.rel target = $region3
    $region8: #{generator_forward.8} parent=1 // loop_exit
      _
    %4679 = vsyncpa [#allocation3], 1
    %s4680 = scalar_lea.sflag [#allocation3], 1
    %4681 = vsyncpa %s4680, 1

// kernel: generator_forward.9
$region0: #{generator_forward.9}
  #allocation0 [shape = 'u32[]', space=smem, size = 0x4, offset = 0x4, fixed_abs, tag = 'smem constant byte address 0x4 - core index']
  #allocation1 [shape = 'u32[72,128]{1,0:T(1,128)}', space=vmem, size = 0x9000, scoped, tag = 'internal scratch']
  %s0 = inlined_call_operand.vmem [shape: f32[128,512], index: 0, kind: input, shape index: {}]
  %s1 = inlined_call_operand.hbm [shape: f32[1,512], index: 1, kind: input, shape index: {}]
  %s2 = inlined_call_operand.hbm [shape: f32[1,512], index: 2, kind: input, shape index: {}]
  %s3 = inlined_call_operand.vmem [shape: f32[128,512], index: 3, kind: output, shape index: {}]
  %s4 = sld [smem:[#allocation0]]
  $region95: #{generator_forward.9} parent=0
    _
  %s6 = ssub.s32 1, %s4
  %s7 = scalar_select 0, %s6, %s4
  $region1: #{generator_forward.9} parent=0
    #allocation2 [shape = 'u8[262144]{0}', space=vmem, size = 0x40000, scoped, tag = 'input window, operand 0']
    #allocation3 [shape = 'u8[2048]{0}', space=vmem, size = 0x800, scoped, tag = 'input window, operand 1']
    #allocation4 [shape = 's32[2]{0}', space=sflag, size = 0x8, scoped, tag = 'scoped memory for generator_forward.9']
    #allocation5 [shape = 'u8[2048]{0}', space=vmem, size = 0x800, scoped, tag = 'input window, operand 2']
    #allocation6 [shape = 's32[2]{0}', space=sflag, size = 0x8, scoped, tag = 'scoped memory for generator_forward.9']
    #allocation7 [shape = 'u8[262144]{0}', space=vmem, size = 0x40000, scoped, tag = 'output window, operand 0']
    %8 = vsyncpa [#allocation4], 0
    %s9 = scalar_lea.sflag [#allocation4], 1
    %10 = vsyncpa %s9, 0
    %11 = vsyncpa [#allocation6], 0
    %s12 = scalar_lea.sflag [#allocation6], 1
    %13 = vsyncpa %s12, 0
    loop: start=0, step=1, limit=4
    $region2: #{generator_forward.9} parent=1 // loop_pre_header
      _
    $region3: #{generator_forward.9} parent=1 // loop_header
      %s15 = sphi 0, %s19
      %p16 = scmp.ge.s32.totalorder %s15, 4
      %s25 = sphi 0, %s27
      %s28 = sphi 0, %s25
      %s29 = sphi 0, %s28
      %s45 = sphi 0, %s29
      %s51 = sphi 0, %s53
      %s54 = sphi 0, %s51
      %s55 = sphi 0, %s54
      %s71 = sphi 0, %s55
      %s77 = sphi 0, %s79
      %s80 = sphi 0, %s77
      %s81 = sphi 0, %s80
      %s97 = sphi 0, %s81
      %s103 = sphi 0, %s105
      %s106 = sphi 0, %s103
      %s107 = sphi 0, %s106
      %s123 = sphi 0, %s107
    $region4: #{generator_forward.9} parent=1 // loop_header_branch
      %18 = sbr.rel (%p16) target = $region8
    $region5: #{generator_forward.9} parent=1 // loop_body
      %s20 = ssub.s32 %s15, 1
      %s21 = ssub.s32 %s15, 2
      %s22 = sadd.s32 %s15, 1
      %s23 = ssub.s32 %s15, %s22
      %p24 = scmp.eq.s32.totalorder %s23, 0
      %s26 = sadd.s32 %s25, 1
      %s27 = scalar_select %p24, %s25, %s26
      %p30 = pneg %p24
      %p31 = scmp.eq.s32.totalorder %s15, 1
      %p32 = por %p30, %p31
      %p33 = scmp.ne.s32.totalorder %s25, %s28
      %p34 = scmp.eq.s32.totalorder %s15, 0
      %p35 = por %p33, %p34
      %p36 = scmp.ne.s32.totalorder %s25, %s28
      %p37 = scmp.eq.s32.totalorder %s20, 1
      %p38 = por %p36, %p37
      %p39 = scmp.ne.s32.totalorder %s28, %s29
      %p40 = scmp.eq.s32.totalorder %s20, 0
      %p41 = por %p39, %p40
      %p42 = scmp.ne.s32.totalorder %s28, %s29
      %p43 = scmp.eq.s32.totalorder %s21, 1
      %p44 = por %p42, %p43
      %p46 = scmp.ne.s32.totalorder %s29, %s45
      %p47 = scmp.eq.s32.totalorder %s21, 0
      %p48 = por %p46, %p47
      %s49 = ssub.s32 %s15, %s22
      %p50 = scmp.eq.s32.totalorder %s49, 0
      %s52 = sadd.s32 %s51, 1
      %s53 = scalar_select %p50, %s51, %s52
      %p56 = pneg %p50
      %p57 = scmp.eq.s32.totalorder %s15, 1
      %p58 = por %p56, %p57
      %p59 = scmp.ne.s32.totalorder %s51, %s54
      %p60 = scmp.eq.s32.totalorder %s15, 0
      %p61 = por %p59, %p60
      %p62 = scmp.ne.s32.totalorder %s51, %s54
      %p63 = scmp.eq.s32.totalorder %s20, 1
      %p64 = por %p62, %p63
      %p65 = scmp.ne.s32.totalorder %s54, %s55
      %p66 = scmp.eq.s32.totalorder %s20, 0
      %p67 = por %p65, %p66
      %p68 = scmp.ne.s32.totalorder %s54, %s55
      %p69 = scmp.eq.s32.totalorder %s21, 1
      %p70 = por %p68, %p69
      %p72 = scmp.ne.s32.totalorder %s55, %s71
      %p73 = scmp.eq.s32.totalorder %s21, 0
      %p74 = por %p72, %p73
      %s75 = ssub.s32 %s15, %s22
      %p76 = scmp.eq.s32.totalorder %s75, 0
      %s78 = sadd.s32 %s77, 1
      %s79 = scalar_select %p76, %s77, %s78
      %p82 = pneg %p76
      %p83 = scmp.eq.s32.totalorder %s15, 1
      %p84 = por %p82, %p83
      %p85 = scmp.ne.s32.totalorder %s77, %s80
      %p86 = scmp.eq.s32.totalorder %s15, 0
      %p87 = por %p85, %p86
      %p88 = scmp.ne.s32.totalorder %s77, %s80
      %p89 = scmp.eq.s32.totalorder %s20, 1
      %p90 = por %p88, %p89
      %p91 = scmp.ne.s32.totalorder %s80, %s81
      %p92 = scmp.eq.s32.totalorder %s20, 0
      %p93 = por %p91, %p92
      %p94 = scmp.ne.s32.totalorder %s80, %s81
      %p95 = scmp.eq.s32.totalorder %s21, 1
      %p96 = por %p94, %p95
      %p98 = scmp.ne.s32.totalorder %s81, %s97
      %p99 = scmp.eq.s32.totalorder %s21, 0
      %p100 = por %p98, %p99
      %s101 = ssub.s32 %s15, %s22
      %p102 = scmp.eq.s32.totalorder %s101, 0
      %s104 = sadd.s32 %s103, 1
      %s105 = scalar_select %p102, %s103, %s104
      %p108 = pneg %p102
      %p109 = scmp.eq.s32.totalorder %s15, 1
      %p110 = por %p108, %p109
      %p111 = scmp.ne.s32.totalorder %s103, %s106
      %p112 = scmp.eq.s32.totalorder %s15, 0
      %p113 = por %p111, %p112
      %p114 = scmp.ne.s32.totalorder %s103, %s106
      %p115 = scmp.eq.s32.totalorder %s20, 1
      %p116 = por %p114, %p115
      %p117 = scmp.ne.s32.totalorder %s106, %s107
      %p118 = scmp.eq.s32.totalorder %s20, 0
      %p119 = por %p117, %p118
      %p120 = scmp.ne.s32.totalorder %s106, %s107
      %p121 = scmp.eq.s32.totalorder %s21, 1
      %p122 = por %p120, %p121
      %p124 = scmp.ne.s32.totalorder %s107, %s123
      %p125 = scmp.eq.s32.totalorder %s21, 0
      %p126 = por %p124, %p125
      %p127 = scmp.le.s32.totalorder 1, %s15
      %p128 = scmp.lt.s32.totalorder %s15, 3
      %p129 = pnand %p127, %p128
      %p130 = pneg %p129
      // Predicated region
      $region9: #{generator_forward.9} parent=5 // pred_check
        _
      $region10: #{generator_forward.9} parent=5 // pred_check_branch
        %132 = sbr.rel (%p129) target = $region12
      $region11: #{generator_forward.9} parent=5 // pred_region
        %s133 = ssub.s32 %s15, 1
      $region12: #{generator_forward.9} parent=5 // pred_fallthru
        _
      %p134 = scmp.lt.s32.totalorder %s15, 2
      // Predicated region
      $region13: #{generator_forward.9} parent=5 // pred_check
        %p135 = pneg %p134
      $region14: #{generator_forward.9} parent=5 // pred_check_branch
        %137 = sbr.rel (%p135) target = $region16
      $region15: #{generator_forward.9} parent=5 // pred_region
        // Predicated region
        $region17: #{generator_forward.9} parent=15 // pred_check
          %p138 = pneg %p35
        $region18: #{generator_forward.9} parent=15 // pred_check_branch
          %140 = sbr.rel (%p138) target = $region20
        $region19: #{generator_forward.9} parent=15 // pred_region
          %s141 = sand.u32 %s25, 1
          %s142 = sand.u32 %s25, 1
          %s143 = smul.addr %s142, 256
          %s144 = scalar_lea.vmem [#allocation2], %s143
          %s145 = smul.u32 2, %s15
          %s146 = smul.addr %s145, 8
          %s147 = scalar_lea.vmem %s0, %s146
          // Predicated region
          $region21: #{generator_forward.9} parent=19 // pred_check
            _
          $region22: #{generator_forward.9} parent=19 // pred_check_branch
            %149 = sbr.rel (0) target = $region24
          $region23: #{generator_forward.9} parent=19 // pred_region
            // Predicated region
            $region25: #{generator_forward.9} parent=23 // pred_check
              _
            $region26: #{generator_forward.9} parent=23 // pred_check_branch
              %151 = sbr.rel (0) target = $region28
            $region27: #{generator_forward.9} parent=23 // pred_region
              loop: start=0, step=1, limit=1
              $region29: #{generator_forward.9} parent=27 // loop_pre_header
                _
              $region30: #{generator_forward.9} parent=27 // loop_header
                %s153 = sphi 0, %s157
                %p154 = scmp.ge.s32.totalorder %s153, 1
                %s158 = sphi %s147, %s147
                %s159 = sphi %s144, %s144
              $region31: #{generator_forward.9} parent=27 // loop_header_branch
                %156 = sbr.rel (%p154) target = $region35
              $region32: #{generator_forward.9} parent=27 // loop_body
                %v160 = vld [vmem:[%s158] sm:$0xff]
                %161 = vst [vmem:[%s159] sm:$0xff] %v160
                %v162 = vld [vmem:[%s158 + $0x8] sm:$0xff]
                %163 = vst [vmem:[%s159 + $0x8] sm:$0xff] %v162
                %v164 = vld [vmem:[%s158 + $0x20] sm:$0xff]
                %165 = vst [vmem:[%s159 + $0x10] sm:$0xff] %v164
                %v166 = vld [vmem:[%s158 + $0x28] sm:$0xff]
                %167 = vst [vmem:[%s159 + $0x18] sm:$0xff] %v166
                %v168 = vld [vmem:[%s158 + $0x40] sm:$0xff]
                %169 = vst [vmem:[%s159 + $0x20] sm:$0xff] %v168
                %v170 = vld [vmem:[%s158 + $0x48] sm:$0xff]
                %171 = vst [vmem:[%s159 + $0x28] sm:$0xff] %v170
                %v172 = vld [vmem:[%s158 + $0x60] sm:$0xff]
                %173 = vst [vmem:[%s159 + $0x30] sm:$0xff] %v172
                %v174 = vld [vmem:[%s158 + $0x68] sm:$0xff]
                %175 = vst [vmem:[%s159 + $0x38] sm:$0xff] %v174
                %v176 = vld [vmem:[%s158 + $0x80] sm:$0xff]
                %177 = vst [vmem:[%s159 + $0x40] sm:$0xff] %v176
                %v178 = vld [vmem:[%s158 + $0x88] sm:$0xff]
                %179 = vst [vmem:[%s159 + $0x48] sm:$0xff] %v178
                %v180 = vld [vmem:[%s158 + $0xa0] sm:$0xff]
                %181 = vst [vmem:[%s159 + $0x50] sm:$0xff] %v180
                %v182 = vld [vmem:[%s158 + $0xa8] sm:$0xff]
                %183 = vst [vmem:[%s159 + $0x58] sm:$0xff] %v182
                %v184 = vld [vmem:[%s158 + $0xc0] sm:$0xff]
                %185 = vst [vmem:[%s159 + $0x60] sm:$0xff] %v184
                %v186 = vld [vmem:[%s158 + $0xc8] sm:$0xff]
                %187 = vst [vmem:[%s159 + $0x68] sm:$0xff] %v186
                %v188 = vld [vmem:[%s158 + $0xe0] sm:$0xff]
                %189 = vst [vmem:[%s159 + $0x70] sm:$0xff] %v188
                %v190 = vld [vmem:[%s158 + $0xe8] sm:$0xff]
                %191 = vst [vmem:[%s159 + $0x78] sm:$0xff] %v190
                %v192 = vld [vmem:[%s158 + $0x100] sm:$0xff]
                %193 = vst [vmem:[%s159 + $0x80] sm:$0xff] %v192
                %v194 = vld [vmem:[%s158 + $0x108] sm:$0xff]
                %195 = vst [vmem:[%s159 + $0x88] sm:$0xff] %v194
                %v196 = vld [vmem:[%s158 + $0x120] sm:$0xff]
                %197 = vst [vmem:[%s159 + $0x90] sm:$0xff] %v196
                %v198 = vld [vmem:[%s158 + $0x128] sm:$0xff]
                %199 = vst [vmem:[%s159 + $0x98] sm:$0xff] %v198
                %v200 = vld [vmem:[%s158 + $0x140] sm:$0xff]
                %201 = vst [vmem:[%s159 + $0xa0] sm:$0xff] %v200
                %v202 = vld [vmem:[%s158 + $0x148] sm:$0xff]
                %203 = vst [vmem:[%s159 + $0xa8] sm:$0xff] %v202
                %v204 = vld [vmem:[%s158 + $0x160] sm:$0xff]
                %205 = vst [vmem:[%s159 + $0xb0] sm:$0xff] %v204
                %v206 = vld [vmem:[%s158 + $0x168] sm:$0xff]
                %207 = vst [vmem:[%s159 + $0xb8] sm:$0xff] %v206
                %v208 = vld [vmem:[%s158 + $0x180] sm:$0xff]
                %209 = vst [vmem:[%s159 + $0xc0] sm:$0xff] %v208
                %v210 = vld [vmem:[%s158 + $0x188] sm:$0xff]
                %211 = vst [vmem:[%s159 + $0xc8] sm:$0xff] %v210
                %v212 = vld [vmem:[%s158 + $0x1a0] sm:$0xff]
                %213 = vst [vmem:[%s159 + $0xd0] sm:$0xff] %v212
                %v214 = vld [vmem:[%s158 + $0x1a8] sm:$0xff]
                %215 = vst [vmem:[%s159 + $0xd8] sm:$0xff] %v214
                %v216 = vld [vmem:[%s158 + $0x1c0] sm:$0xff]
                %217 = vst [vmem:[%s159 + $0xe0] sm:$0xff] %v216
                %v218 = vld [vmem:[%s158 + $0x1c8] sm:$0xff]
                %219 = vst [vmem:[%s159 + $0xe8] sm:$0xff] %v218
                %v220 = vld [vmem:[%s158 + $0x1e0] sm:$0xff]
                %221 = vst [vmem:[%s159 + $0xf0] sm:$0xff] %v220
                %v222 = vld [vmem:[%s158 + $0x1e8] sm:$0xff]
                %223 = vst [vmem:[%s159 + $0xf8] sm:$0xff] %v222
              $region33: #{generator_forward.9} parent=27 // loop_footer
                %s157 = sadd.s32 1, %s153
              $region34: #{generator_forward.9} parent=27 // loop_footer_branch
                %152 = sbr.rel target = $region30
              $region35: #{generator_forward.9} parent=27 // loop_exit
                _
            $region28: #{generator_forward.9} parent=23 // pred_fallthru
              _
            // Predicated region
            $region36: #{generator_forward.9} parent=23 // pred_check
              _
            $region37: #{generator_forward.9} parent=23 // pred_check_branch
              %225 = sbr.rel target = $region39
            $region38: #{generator_forward.9} parent=23 // pred_region
              _
            $region39: #{generator_forward.9} parent=23 // pred_fallthru
              _
          $region24: #{generator_forward.9} parent=19 // pred_fallthru
            _
          %226 = vnop
        $region20: #{generator_forward.9} parent=15 // pred_fallthru
          _
        // Predicated region
        $region40: #{generator_forward.9} parent=15 // pred_check
          %p227 = pneg %p61
        $region41: #{generator_forward.9} parent=15 // pred_check_branch
          %229 = sbr.rel (%p227) target = $region43
        $region42: #{generator_forward.9} parent=15 // pred_region
          %s230 = sand.u32 %s51, 1
          %s231 = scalar_lea.sflag [#allocation4], %s230
          %s232 = sand.u32 %s51, 1
          %s233 = smul.addr %s232, 2
          %s234 = scalar_lea.vmem [#allocation3], %s233
          %s235 = smul.u32 2, %s15
          %237 = vsyncadd %s231, 0
          %s238 = scalar_lea.hbm %s1, %s235
          %s240 = sshll.u32 %s238, 4
          %s241 = int_to_ptr.hbm [resolvable:$true] %s240
          %s242 = sshll.u32 %s234, 4
          %s243 = int_to_ptr.vmem [resolvable:$true] %s242
          %245 = dma.hbm_to_vmem [thread:$0]  %s241, 32, %s243, %s231
        $region43: #{generator_forward.9} parent=15 // pred_fallthru
          _
        // Predicated region
        $region44: #{generator_forward.9} parent=15 // pred_check
          %p246 = pneg %p87
        $region45: #{generator_forward.9} parent=15 // pred_check_branch
          %248 = sbr.rel (%p246) target = $region47
        $region46: #{generator_forward.9} parent=15 // pred_region
          %s249 = sand.u32 %s77, 1
          %s250 = scalar_lea.sflag [#allocation6], %s249
          %s251 = sand.u32 %s77, 1
          %s252 = smul.addr %s251, 2
          %s253 = scalar_lea.vmem [#allocation5], %s252
          %s254 = smul.u32 2, %s15
          %256 = vsyncadd %s250, 0
          %s257 = scalar_lea.hbm %s2, %s254
          %s259 = sshll.u32 %s257, 4
          %s260 = int_to_ptr.hbm [resolvable:$true] %s259
          %s261 = sshll.u32 %s253, 4
          %s262 = int_to_ptr.vmem [resolvable:$true] %s261
          %264 = dma.hbm_to_vmem [thread:$0]  %s260, 32, %s262, %s250
        $region47: #{generator_forward.9} parent=15 // pred_fallthru
          _
      $region16: #{generator_forward.9} parent=5 // pred_fallthru
        _
      %p265 = scmp.le.s32.totalorder 1, %s15
      %p266 = scmp.lt.s32.totalorder %s15, 3
      %p267 = pnand %p265, %p266
      %p268 = pneg %p267
      // Predicated region
      $region48: #{generator_forward.9} parent=5 // pred_check
        _
      $region49: #{generator_forward.9} parent=5 // pred_check_branch
        %270 = sbr.rel (%p267) target = $region51
      $region50: #{generator_forward.9} parent=5 // pred_region
        %s271 = ssub.s32 %s15, 1
        %s272 = sand.u32 %s28, 1
        %s273 = sand.u32 %s28, 1
        %s274 = smul.addr %s273, 256
        %s275 = scalar_lea.vmem [#allocation2], %s274
        // Predicated region
        $region52: #{generator_forward.9} parent=50 // pred_check
          %p276 = pneg %p41
        $region53: #{generator_forward.9} parent=50 // pred_check_branch
          %278 = sbr.rel (%p276) target = $region55
        $region54: #{generator_forward.9} parent=50 // pred_region
          _
        $region55: #{generator_forward.9} parent=50 // pred_fallthru
          _
        %s279 = sand.u32 %s54, 1
        %s280 = scalar_lea.sflag [#allocation4], %s279
        %s281 = sand.u32 %s54, 1
        %s282 = smul.addr %s281, 2
        %s283 = scalar_lea.vmem [#allocation3], %s282
        // Predicated region
        $region56: #{generator_forward.9} parent=50 // pred_check
          %p284 = pneg %p67
        $region57: #{generator_forward.9} parent=50 // pred_check_branch
          %286 = sbr.rel (%p284) target = $region59
        $region58: #{generator_forward.9} parent=50 // pred_region
          %288 = dma.done %s280, 32
        $region59: #{generator_forward.9} parent=50 // pred_fallthru
          _
        %s289 = sand.u32 %s80, 1
        %s290 = scalar_lea.sflag [#allocation6], %s289
        %s291 = sand.u32 %s80, 1
        %s292 = smul.addr %s291, 2
        %s293 = scalar_lea.vmem [#allocation5], %s292
        // Predicated region
        $region60: #{generator_forward.9} parent=50 // pred_check
          %p294 = pneg %p93
        $region61: #{generator_forward.9} parent=50 // pred_check_branch
          %296 = sbr.rel (%p294) target = $region63
        $region62: #{generator_forward.9} parent=50 // pred_region
          %298 = dma.done %s290, 32
        $region63: #{generator_forward.9} parent=50 // pred_fallthru
          _
        %s299 = sand.u32 %s28, 1
        %s300 = sand.u32 %s28, 1
        %s301 = smul.addr %s300, 256
        %s302 = scalar_lea.vmem [#allocation2], %s301
        %p303 = pneg %p41
        %p304 = pneg %p38
        %s305 = sand.u32 %s54, 1
        %s306 = scalar_lea.sflag [#allocation4], %s305
        %s307 = sand.u32 %s54, 1
        %s308 = smul.addr %s307, 2
        %s309 = scalar_lea.vmem [#allocation3], %s308
        %p310 = pneg %p67
        %p311 = pneg %p64
        %s312 = sand.u32 %s80, 1
        %s313 = scalar_lea.sflag [#allocation6], %s312
        %s314 = sand.u32 %s80, 1
        %s315 = smul.addr %s314, 2
        %s316 = scalar_lea.vmem [#allocation5], %s315
        %p317 = pneg %p93
        %p318 = pneg %p90
        %p319 = pneg %p119
        %p320 = pneg %p116
        %s321 = sand.u32 %s106, 1
        %s322 = sand.u32 %s106, 1
        %s323 = smul.addr %s322, 256
        %s324 = scalar_lea.vmem [#allocation7], %s323
        %s325 = smul.u32 2, %s20
        %s326 = smul.u32 2, %s20
        %s327 = smul.u32 2, %s20
        %s328 = smul.u32 2, %s20
        %v329 = vld [vmem:[%s275] sm:$0xff]
        %v330 = vld [vmem:[%s275 + $0x8] sm:$0xff]
        %v331 = vld [vmem:[%s275 + $0x10] sm:$0xff]
        %v332 = vld [vmem:[%s275 + $0x18] sm:$0xff]
        %v333 = vld [vmem:[%s275 + $0x20] sm:$0xff]
        %v334 = vld [vmem:[%s275 + $0x28] sm:$0xff]
        %v335 = vld [vmem:[%s275 + $0x30] sm:$0xff]
        %v336 = vld [vmem:[%s275 + $0x38] sm:$0xff]
        %v337 = vld [vmem:[%s275 + $0x40] sm:$0xff]
        %v338 = vld [vmem:[%s275 + $0x48] sm:$0xff]
        %v339 = vld [vmem:[%s275 + $0x50] sm:$0xff]
        %v340 = vld [vmem:[%s275 + $0x58] sm:$0xff]
        %v341 = vld [vmem:[%s275 + $0x60] sm:$0xff]
        %v342 = vld [vmem:[%s275 + $0x68] sm:$0xff]
        %v343 = vld [vmem:[%s275 + $0x70] sm:$0xff]
        %v344 = vld [vmem:[%s275 + $0x78] sm:$0xff]
        %v345 = vld [vmem:[%s275 + $0x80] sm:$0xff]
        %v346 = vld [vmem:[%s275 + $0x88] sm:$0xff]
        %v347 = vld [vmem:[%s275 + $0x90] sm:$0xff]
        %v348 = vld [vmem:[%s275 + $0x98] sm:$0xff]
        %v349 = vld [vmem:[%s275 + $0xa0] sm:$0xff]
        %v350 = vld [vmem:[%s275 + $0xa8] sm:$0xff]
        %v351 = vld [vmem:[%s275 + $0xb0] sm:$0xff]
        %v352 = vld [vmem:[%s275 + $0xb8] sm:$0xff]
        %v353 = vld [vmem:[%s275 + $0xc0] sm:$0xff]
        %v354 = vld [vmem:[%s275 + $0xc8] sm:$0xff]
        %v355 = vld [vmem:[%s275 + $0xd0] sm:$0xff]
        %v356 = vld [vmem:[%s275 + $0xd8] sm:$0xff]
        %v357 = vld [vmem:[%s275 + $0xe0] sm:$0xff]
        %v358 = vld [vmem:[%s275 + $0xe8] sm:$0xff]
        %v359 = vld [vmem:[%s275 + $0xf0] sm:$0xff]
        %v360 = vld [vmem:[%s275 + $0xf8] sm:$0xff]
        %v361 = vadd.f32 %v329, %v331
        %v362 = vadd.f32 %v361, %v333
        %v363 = vadd.f32 %v362, %v335
        %v364 = vadd.f32 %v363, %v337
        %v365 = vadd.f32 %v364, %v339
        %v366 = vadd.f32 %v365, %v341
        %v367 = vadd.f32 %v366, %v343
        %v368 = vadd.f32 %v367, %v345
        %v369 = vadd.f32 %v368, %v347
        %v370 = vadd.f32 %v369, %v349
        %v371 = vadd.f32 %v370, %v351
        %v372 = vadd.f32 %v371, %v353
        %v373 = vadd.f32 %v372, %v355
        %v374 = vadd.f32 %v373, %v357
        %v375 = vadd.f32 %v374, %v359
        %v376 = vrot.slane %v375, 4
        %v377 = vadd.f32 %v375, %v376
        %v378 = vrot.slane %v377, 2
        %v379 = vadd.f32 %v377, %v378
        %v380 = vrot.slane %v379, 1
        %v381 = vadd.f32 %v379, %v380
        %v382 = vadd.f32 %v330, %v332
        %v383 = vadd.f32 %v382, %v334
        %v384 = vadd.f32 %v383, %v336
        %v385 = vadd.f32 %v384, %v338
        %v386 = vadd.f32 %v385, %v340
        %v387 = vadd.f32 %v386, %v342
        %v388 = vadd.f32 %v387, %v344
        %v389 = vadd.f32 %v388, %v346
        %v390 = vadd.f32 %v389, %v348
        %v391 = vadd.f32 %v390, %v350
        %v392 = vadd.f32 %v391, %v352
        %v393 = vadd.f32 %v392, %v354
        %v394 = vadd.f32 %v393, %v356
        %v395 = vadd.f32 %v394, %v358
        %v396 = vadd.f32 %v395, %v360
        %v397 = vrot.slane %v396, 4
        %v398 = vadd.f32 %v396, %v397
        %v399 = vrot.slane %v398, 2
        %v400 = vadd.f32 %v398, %v399
        %v401 = vrot.slane %v400, 1
        %v402 = vadd.f32 %v400, %v401
        %v403 = vrcp.pop 128.0
        %v404 = vmul.f32 128.0, %v403
        %v405 = vsub.f32 1.0, %v404
        %v406 = vmul.f32 %v403, %v405
        %v407 = vadd.f32 %v403, %v406
        %vm408 = vweird.f32 %v403
        %v409 = vsel %vm408, %v403, %v407
        %v410 = vmul.f32 %v381, %v409
        %v411 = vmul.f32 %v402, %v409
        %v412 = vsub.f32 %v329, %v410
        %v413 = vsub.f32 %v330, %v411
        %v414 = vsub.f32 %v331, %v410
        %v415 = vsub.f32 %v332, %v411
        %v416 = vsub.f32 %v333, %v410
        %v417 = vsub.f32 %v334, %v411
        %v418 = vsub.f32 %v335, %v410
        %v419 = vsub.f32 %v336, %v411
        %v420 = vsub.f32 %v337, %v410
        %v421 = vsub.f32 %v338, %v411
        %v422 = vsub.f32 %v339, %v410
        %v423 = vsub.f32 %v340, %v411
        %v424 = vsub.f32 %v341, %v410
        %v425 = vsub.f32 %v342, %v411
        %v426 = vsub.f32 %v343, %v410
        %v427 = vsub.f32 %v344, %v411
        %v428 = vsub.f32 %v345, %v410
        %v429 = vsub.f32 %v346, %v411
        %v430 = vsub.f32 %v347, %v410
        %v431 = vsub.f32 %v348, %v411
        %v432 = vsub.f32 %v349, %v410
        %v433 = vsub.f32 %v350, %v411
        %v434 = vsub.f32 %v351, %v410
        %v435 = vsub.f32 %v352, %v411
        %v436 = vsub.f32 %v353, %v410
        %v437 = vsub.f32 %v354, %v411
        %v438 = vsub.f32 %v355, %v410
        %v439 = vsub.f32 %v356, %v411
        %v440 = vsub.f32 %v357, %v410
        %v441 = vsub.f32 %v358, %v411
        %v442 = vsub.f32 %v359, %v410
        %v443 = vsub.f32 %v360, %v411
        %v444 = vmul.f32 %v412, %v412
        %v445 = vmul.f32 %v413, %v413
        %v446 = vmul.f32 %v414, %v414
        %v447 = vmul.f32 %v415, %v415
        %v448 = vmul.f32 %v416, %v416
        %v449 = vmul.f32 %v417, %v417
        %v450 = vmul.f32 %v418, %v418
        %v451 = vmul.f32 %v419, %v419
        %v452 = vmul.f32 %v420, %v420
        %v453 = vmul.f32 %v421, %v421
        %v454 = vmul.f32 %v422, %v422
        %v455 = vmul.f32 %v423, %v423
        %v456 = vmul.f32 %v424, %v424
        %v457 = vmul.f32 %v425, %v425
        %v458 = vmul.f32 %v426, %v426
        %v459 = vmul.f32 %v427, %v427
        %v460 = vmul.f32 %v428, %v428
        %v461 = vmul.f32 %v429, %v429
        %v462 = vmul.f32 %v430, %v430
        %v463 = vmul.f32 %v431, %v431
        %v464 = vmul.f32 %v432, %v432
        %v465 = vmul.f32 %v433, %v433
        %v466 = vmul.f32 %v434, %v434
        %v467 = vmul.f32 %v435, %v435
        %v468 = vmul.f32 %v436, %v436
        %v469 = vmul.f32 %v437, %v437
        %v470 = vmul.f32 %v438, %v438
        %v471 = vmul.f32 %v439, %v439
        %v472 = vmul.f32 %v440, %v440
        %v473 = vmul.f32 %v441, %v441
        %v474 = vmul.f32 %v442, %v442
        %v475 = vmul.f32 %v443, %v443
        %v476 = vadd.f32 %v444, %v446
        %v477 = vadd.f32 %v476, %v448
        %v478 = vadd.f32 %v477, %v450
        %v479 = vadd.f32 %v478, %v452
        %v480 = vadd.f32 %v479, %v454
        %v481 = vadd.f32 %v480, %v456
        %v482 = vadd.f32 %v481, %v458
        %v483 = vadd.f32 %v482, %v460
        %v484 = vadd.f32 %v483, %v462
        %v485 = vadd.f32 %v484, %v464
        %v486 = vadd.f32 %v485, %v466
        %v487 = vadd.f32 %v486, %v468
        %v488 = vadd.f32 %v487, %v470
        %v489 = vadd.f32 %v488, %v472
        %v490 = vadd.f32 %v489, %v474
        %v491 = vrot.slane %v490, 4
        %v492 = vadd.f32 %v490, %v491
        %v493 = vrot.slane %v492, 2
        %v494 = vadd.f32 %v492, %v493
        %v495 = vrot.slane %v494, 1
        %v496 = vadd.f32 %v494, %v495
        %v497 = vadd.f32 %v445, %v447
        %v498 = vadd.f32 %v497, %v449
        %v499 = vadd.f32 %v498, %v451
        %v500 = vadd.f32 %v499, %v453
        %v501 = vadd.f32 %v500, %v455
        %v502 = vadd.f32 %v501, %v457
        %v503 = vadd.f32 %v502, %v459
        %v504 = vadd.f32 %v503, %v461
        %v505 = vadd.f32 %v504, %v463
        %v506 = vadd.f32 %v505, %v465
        %v507 = vadd.f32 %v506, %v467
        %v508 = vadd.f32 %v507, %v469
        %v509 = vadd.f32 %v508, %v471
        %v510 = vadd.f32 %v509, %v473
        %v511 = vadd.f32 %v510, %v475
        %v512 = vrot.slane %v511, 4
        %v513 = vadd.f32 %v511, %v512
        %v514 = vrot.slane %v513, 2
        %v515 = vadd.f32 %v513, %v514
        %v516 = vrot.slane %v515, 1
        %v517 = vadd.f32 %v515, %v516
        %v518 = vmul.f32 %v496, %v409
        %v519 = vmul.f32 %v517, %v409
        %v520 = vadd.f32 %v518, 1e-05
        %v521 = vadd.f32 %v519, 1e-05
        %v522 = vrsqrt.pop %v520
        %v523 = vmul.f32 %v522, %v520
        %v524 = vmul.f32 %v523, %v522
        %v525 = vmul.f32 0.5, %v524
        %v526 = vsub.f32 1.5, %v525
        %v527 = vmul.f32 %v522, %v526
        %vm528 = vweird.f32 %v520
        %vm529 = vweird.f32 %v522
        %vm530 = vmor %vm528, %vm529
        %v531 = vsel %vm530, %v522, %v527
        %v532 = vrsqrt.pop %v521
        %v533 = vmul.f32 %v532, %v521
        %v534 = vmul.f32 %v533, %v532
        %v535 = vmul.f32 0.5, %v534
        %v536 = vsub.f32 1.5, %v535
        %v537 = vmul.f32 %v532, %v536
        %vm538 = vweird.f32 %v521
        %vm539 = vweird.f32 %v532
        %vm540 = vmor %vm538, %vm539
        %v541 = vsel %vm540, %v532, %v537
        %v542 = vmul.f32 %v412, %v531
        %v543 = vmul.f32 %v413, %v541
        %v544 = vmul.f32 %v414, %v531
        %v545 = vmul.f32 %v415, %v541
        %v546 = vmul.f32 %v416, %v531
        %v547 = vmul.f32 %v417, %v541
        %v548 = vmul.f32 %v418, %v531
        %v549 = vmul.f32 %v419, %v541
        %v550 = vmul.f32 %v420, %v531
        %v551 = vmul.f32 %v421, %v541
        %v552 = vmul.f32 %v422, %v531
        %v553 = vmul.f32 %v423, %v541
        %v554 = vmul.f32 %v424, %v531
        %v555 = vmul.f32 %v425, %v541
        %v556 = vmul.f32 %v426, %v531
        %v557 = vmul.f32 %v427, %v541
        %v558 = vmul.f32 %v428, %v531
        %v559 = vmul.f32 %v429, %v541
        %v560 = vmul.f32 %v430, %v531
        %v561 = vmul.f32 %v431, %v541
        %v562 = vmul.f32 %v432, %v531
        %v563 = vmul.f32 %v433, %v541
        %v564 = vmul.f32 %v434, %v531
        %v565 = vmul.f32 %v435, %v541
        %v566 = vmul.f32 %v436, %v531
        %v567 = vmul.f32 %v437, %v541
        %v568 = vmul.f32 %v438, %v531
        %v569 = vmul.f32 %v439, %v541
        %v570 = vmul.f32 %v440, %v531
        %v571 = vmul.f32 %v441, %v541
        %v572 = vmul.f32 %v442, %v531
        %v573 = vmul.f32 %v443, %v541
        %v574 = vld [vmem:[%s283] sm:$0x3]
        %v576 = vperm.slane %v574, 0
        %v577 = vperm.slane %v574, 1
        %v580 = vmul.f32 %v542, %v576
        %v581 = vmul.f32 %v543, %v577
        %v582 = vmul.f32 %v544, %v576
        %v583 = vmul.f32 %v545, %v577
        %v584 = vmul.f32 %v546, %v576
        %v585 = vmul.f32 %v547, %v577
        %v586 = vmul.f32 %v548, %v576
        %v587 = vmul.f32 %v549, %v577
        %v588 = vmul.f32 %v550, %v576
        %v589 = vmul.f32 %v551, %v577
        %v590 = vmul.f32 %v552, %v576
        %v591 = vmul.f32 %v553, %v577
        %v592 = vmul.f32 %v554, %v576
        %v593 = vmul.f32 %v555, %v577
        %v594 = vmul.f32 %v556, %v576
        %v595 = vmul.f32 %v557, %v577
        %v596 = vmul.f32 %v558, %v576
        %v597 = vmul.f32 %v559, %v577
        %v598 = vmul.f32 %v560, %v576
        %v599 = vmul.f32 %v561, %v577
        %v600 = vmul.f32 %v562, %v576
        %v601 = vmul.f32 %v563, %v577
        %v602 = vmul.f32 %v564, %v576
        %v603 = vmul.f32 %v565, %v577
        %v604 = vmul.f32 %v566, %v576
        %v605 = vmul.f32 %v567, %v577
        %v606 = vmul.f32 %v568, %v576
        %v607 = vmul.f32 %v569, %v577
        %v608 = vmul.f32 %v570, %v576
        %v609 = vmul.f32 %v571, %v577
        %v610 = vmul.f32 %v572, %v576
        %v611 = vmul.f32 %v573, %v577
        %v612 = vld [vmem:[%s293] sm:$0x3]
        %v614 = vperm.slane %v612, 0
        %v615 = vperm.slane %v612, 1
        %v618 = vadd.f32 %v580, %v614
        %v619 = vadd.f32 %v581, %v615
        %v620 = vadd.f32 %v582, %v614
        %v621 = vadd.f32 %v583, %v615
        %v622 = vadd.f32 %v584, %v614
        %v623 = vadd.f32 %v585, %v615
        %v624 = vadd.f32 %v586, %v614
        %v625 = vadd.f32 %v587, %v615
        %v626 = vadd.f32 %v588, %v614
        %v627 = vadd.f32 %v589, %v615
        %v628 = vadd.f32 %v590, %v614
        %v629 = vadd.f32 %v591, %v615
        %v630 = vadd.f32 %v592, %v614
        %v631 = vadd.f32 %v593, %v615
        %v632 = vadd.f32 %v594, %v614
        %v633 = vadd.f32 %v595, %v615
        %v634 = vadd.f32 %v596, %v614
        %v635 = vadd.f32 %v597, %v615
        %v636 = vadd.f32 %v598, %v614
        %v637 = vadd.f32 %v599, %v615
        %v638 = vadd.f32 %v600, %v614
        %v639 = vadd.f32 %v601, %v615
        %v640 = vadd.f32 %v602, %v614
        %v641 = vadd.f32 %v603, %v615
        %v642 = vadd.f32 %v604, %v614
        %v643 = vadd.f32 %v605, %v615
        %v644 = vadd.f32 %v606, %v614
        %v645 = vadd.f32 %v607, %v615
        %v646 = vadd.f32 %v608, %v614
        %v647 = vadd.f32 %v609, %v615
        %v648 = vadd.f32 %v610, %v614
        %v649 = vadd.f32 %v611, %v615
        %vm650 = vcmp.ge.f32.partialorder %v618, 0.0
        %vm651 = vcmp.ge.f32.partialorder %v619, 0.0
        %vm652 = vcmp.ge.f32.partialorder %v620, 0.0
        %vm653 = vcmp.ge.f32.partialorder %v621, 0.0
        %vm654 = vcmp.ge.f32.partialorder %v622, 0.0
        %vm655 = vcmp.ge.f32.partialorder %v623, 0.0
        %vm656 = vcmp.ge.f32.partialorder %v624, 0.0
        %vm657 = vcmp.ge.f32.partialorder %v625, 0.0
        %vm658 = vcmp.ge.f32.partialorder %v626, 0.0
        %vm659 = vcmp.ge.f32.partialorder %v627, 0.0
        %vm660 = vcmp.ge.f32.partialorder %v628, 0.0
        %vm661 = vcmp.ge.f32.partialorder %v629, 0.0
        %vm662 = vcmp.ge.f32.partialorder %v630, 0.0
        %vm663 = vcmp.ge.f32.partialorder %v631, 0.0
        %vm664 = vcmp.ge.f32.partialorder %v632, 0.0
        %vm665 = vcmp.ge.f32.partialorder %v633, 0.0
        %vm666 = vcmp.ge.f32.partialorder %v634, 0.0
        %vm667 = vcmp.ge.f32.partialorder %v635, 0.0
        %vm668 = vcmp.ge.f32.partialorder %v636, 0.0
        %vm669 = vcmp.ge.f32.partialorder %v637, 0.0
        %vm670 = vcmp.ge.f32.partialorder %v638, 0.0
        %vm671 = vcmp.ge.f32.partialorder %v639, 0.0
        %vm672 = vcmp.ge.f32.partialorder %v640, 0.0
        %vm673 = vcmp.ge.f32.partialorder %v641, 0.0
        %vm674 = vcmp.ge.f32.partialorder %v642, 0.0
        %vm675 = vcmp.ge.f32.partialorder %v643, 0.0
        %vm676 = vcmp.ge.f32.partialorder %v644, 0.0
        %vm677 = vcmp.ge.f32.partialorder %v645, 0.0
        %vm678 = vcmp.ge.f32.partialorder %v646, 0.0
        %vm679 = vcmp.ge.f32.partialorder %v647, 0.0
        %vm680 = vcmp.ge.f32.partialorder %v648, 0.0
        %vm681 = vcmp.ge.f32.partialorder %v649, 0.0
        %v682 = vmul.f32 %v618, 0.01
        %v683 = vmul.f32 %v619, 0.01
        %v684 = vmul.f32 %v620, 0.01
        %v685 = vmul.f32 %v621, 0.01
        %v686 = vmul.f32 %v622, 0.01
        %v687 = vmul.f32 %v623, 0.01
        %v688 = vmul.f32 %v624, 0.01
        %v689 = vmul.f32 %v625, 0.01
        %v690 = vmul.f32 %v626, 0.01
        %v691 = vmul.f32 %v627, 0.01
        %v692 = vmul.f32 %v628, 0.01
        %v693 = vmul.f32 %v629, 0.01
        %v694 = vmul.f32 %v630, 0.01
        %v695 = vmul.f32 %v631, 0.01
        %v696 = vmul.f32 %v632, 0.01
        %v697 = vmul.f32 %v633, 0.01
        %v698 = vmul.f32 %v634, 0.01
        %v699 = vmul.f32 %v635, 0.01
        %v700 = vmul.f32 %v636, 0.01
        %v701 = vmul.f32 %v637, 0.01
        %v702 = vmul.f32 %v638, 0.01
        %v703 = vmul.f32 %v639, 0.01
        %v704 = vmul.f32 %v640, 0.01
        %v705 = vmul.f32 %v641, 0.01
        %v706 = vmul.f32 %v642, 0.01
        %v707 = vmul.f32 %v643, 0.01
        %v708 = vmul.f32 %v644, 0.01
        %v709 = vmul.f32 %v645, 0.01
        %v710 = vmul.f32 %v646, 0.01
        %v711 = vmul.f32 %v647, 0.01
        %v712 = vmul.f32 %v648, 0.01
        %v713 = vmul.f32 %v649, 0.01
        %v714 = vsel %vm650, %v618, %v682
        %v715 = vsel %vm651, %v619, %v683
        %v716 = vsel %vm652, %v620, %v684
        %v717 = vsel %vm653, %v621, %v685
        %v718 = vsel %vm654, %v622, %v686
        %v719 = vsel %vm655, %v623, %v687
        %v720 = vsel %vm656, %v624, %v688
        %v721 = vsel %vm657, %v625, %v689
        %v722 = vsel %vm658, %v626, %v690
        %v723 = vsel %vm659, %v627, %v691
        %v724 = vsel %vm660, %v628, %v692
        %v725 = vsel %vm661, %v629, %v693
        %v726 = vsel %vm662, %v630, %v694
        %v727 = vsel %vm663, %v631, %v695
        %v728 = vsel %vm664, %v632, %v696
        %v729 = vsel %vm665, %v633, %v697
        %v730 = vsel %vm666, %v634, %v698
        %v731 = vsel %vm667, %v635, %v699
        %v732 = vsel %vm668, %v636, %v700
        %v733 = vsel %vm669, %v637, %v701
        %v734 = vsel %vm670, %v638, %v702
        %v735 = vsel %vm671, %v639, %v703
        %v736 = vsel %vm672, %v640, %v704
        %v737 = vsel %vm673, %v641, %v705
        %v738 = vsel %vm674, %v642, %v706
        %v739 = vsel %vm675, %v643, %v707
        %v740 = vsel %vm676, %v644, %v708
        %v741 = vsel %vm677, %v645, %v709
        %v742 = vsel %vm678, %v646, %v710
        %v743 = vsel %vm679, %v647, %v711
        %v744 = vsel %vm680, %v648, %v712
        %v745 = vsel %vm681, %v649, %v713
        %746 = vst [vmem:[%s324] sm:$0xff] %v714
        %747 = vst [vmem:[%s324 + $0x8] sm:$0xff] %v715
        %748 = vst [vmem:[%s324 + $0x10] sm:$0xff] %v716
        %749 = vst [vmem:[%s324 + $0x18] sm:$0xff] %v717
        %750 = vst [vmem:[%s324 + $0x20] sm:$0xff] %v718
        %751 = vst [vmem:[%s324 + $0x28] sm:$0xff] %v719
        %752 = vst [vmem:[%s324 + $0x30] sm:$0xff] %v720
        %753 = vst [vmem:[%s324 + $0x38] sm:$0xff] %v721
        %754 = vst [vmem:[%s324 + $0x40] sm:$0xff] %v722
        %755 = vst [vmem:[%s324 + $0x48] sm:$0xff] %v723
        %756 = vst [vmem:[%s324 + $0x50] sm:$0xff] %v724
        %757 = vst [vmem:[%s324 + $0x58] sm:$0xff] %v725
        %758 = vst [vmem:[%s324 + $0x60] sm:$0xff] %v726
        %759 = vst [vmem:[%s324 + $0x68] sm:$0xff] %v727
        %760 = vst [vmem:[%s324 + $0x70] sm:$0xff] %v728
        %761 = vst [vmem:[%s324 + $0x78] sm:$0xff] %v729
        %762 = vst [vmem:[%s324 + $0x80] sm:$0xff] %v730
        %763 = vst [vmem:[%s324 + $0x88] sm:$0xff] %v731
        %764 = vst [vmem:[%s324 + $0x90] sm:$0xff] %v732
        %765 = vst [vmem:[%s324 + $0x98] sm:$0xff] %v733
        %766 = vst [vmem:[%s324 + $0xa0] sm:$0xff] %v734
        %767 = vst [vmem:[%s324 + $0xa8] sm:$0xff] %v735
        %768 = vst [vmem:[%s324 + $0xb0] sm:$0xff] %v736
        %769 = vst [vmem:[%s324 + $0xb8] sm:$0xff] %v737
        %770 = vst [vmem:[%s324 + $0xc0] sm:$0xff] %v738
        %771 = vst [vmem:[%s324 + $0xc8] sm:$0xff] %v739
        %772 = vst [vmem:[%s324 + $0xd0] sm:$0xff] %v740
        %773 = vst [vmem:[%s324 + $0xd8] sm:$0xff] %v741
        %774 = vst [vmem:[%s324 + $0xe0] sm:$0xff] %v742
        %775 = vst [vmem:[%s324 + $0xe8] sm:$0xff] %v743
        %776 = vst [vmem:[%s324 + $0xf0] sm:$0xff] %v744
        %777 = vst [vmem:[%s324 + $0xf8] sm:$0xff] %v745
        %s778 = sand.u32 %s106, 1
        %s779 = sand.u32 %s106, 1
        %s780 = smul.addr %s779, 256
        %s781 = scalar_lea.vmem [#allocation7], %s780
        // Predicated region
        $region64: #{generator_forward.9} parent=50 // pred_check
          %p782 = pneg %p116
        $region65: #{generator_forward.9} parent=50 // pred_check_branch
          %784 = sbr.rel (%p782) target = $region67
        $region66: #{generator_forward.9} parent=50 // pred_region
          %s785 = smul.u32 2, %s20
          %s786 = smul.addr %s785, 8
          %s787 = scalar_lea.vmem %s3, %s786
          // Predicated region
          $region68: #{generator_forward.9} parent=66 // pred_check
            _
          $region69: #{generator_forward.9} parent=66 // pred_check_branch
            %789 = sbr.rel (0) target = $region71
          $region70: #{generator_forward.9} parent=66 // pred_region
            // Predicated region
            $region72: #{generator_forward.9} parent=70 // pred_check
              _
            $region73: #{generator_forward.9} parent=70 // pred_check_branch
              %791 = sbr.rel (0) target = $region75
            $region74: #{generator_forward.9} parent=70 // pred_region
              loop: start=0, step=1, limit=1
              $region76: #{generator_forward.9} parent=74 // loop_pre_header
                _
              $region77: #{generator_forward.9} parent=74 // loop_header
                %s793 = sphi 0, %s797
                %p794 = scmp.ge.s32.totalorder %s793, 1
                %s798 = sphi %s781, %s781
                %s799 = sphi %s787, %s787
              $region78: #{generator_forward.9} parent=74 // loop_header_branch
                %796 = sbr.rel (%p794) target = $region82
              $region79: #{generator_forward.9} parent=74 // loop_body
                %v800 = vld [vmem:[%s798] sm:$0xff]
                %801 = vst [vmem:[%s799] sm:$0xff] %v800
                %v802 = vld [vmem:[%s798 + $0x8] sm:$0xff]
                %803 = vst [vmem:[%s799 + $0x8] sm:$0xff] %v802
                %v804 = vld [vmem:[%s798 + $0x10] sm:$0xff]
                %805 = vst [vmem:[%s799 + $0x20] sm:$0xff] %v804
                %v806 = vld [vmem:[%s798 + $0x18] sm:$0xff]
                %807 = vst [vmem:[%s799 + $0x28] sm:$0xff] %v806
                %v808 = vld [vmem:[%s798 + $0x20] sm:$0xff]
                %809 = vst [vmem:[%s799 + $0x40] sm:$0xff] %v808
                %v810 = vld [vmem:[%s798 + $0x28] sm:$0xff]
                %811 = vst [vmem:[%s799 + $0x48] sm:$0xff] %v810
                %v812 = vld [vmem:[%s798 + $0x30] sm:$0xff]
                %813 = vst [vmem:[%s799 + $0x60] sm:$0xff] %v812
                %v814 = vld [vmem:[%s798 + $0x38] sm:$0xff]
                %815 = vst [vmem:[%s799 + $0x68] sm:$0xff] %v814
                %v816 = vld [vmem:[%s798 + $0x40] sm:$0xff]
                %817 = vst [vmem:[%s799 + $0x80] sm:$0xff] %v816
                %v818 = vld [vmem:[%s798 + $0x48] sm:$0xff]
                %819 = vst [vmem:[%s799 + $0x88] sm:$0xff] %v818
                %v820 = vld [vmem:[%s798 + $0x50] sm:$0xff]
                %821 = vst [vmem:[%s799 + $0xa0] sm:$0xff] %v820
                %v822 = vld [vmem:[%s798 + $0x58] sm:$0xff]
                %823 = vst [vmem:[%s799 + $0xa8] sm:$0xff] %v822
                %v824 = vld [vmem:[%s798 + $0x60] sm:$0xff]
                %825 = vst [vmem:[%s799 + $0xc0] sm:$0xff] %v824
                %v826 = vld [vmem:[%s798 + $0x68] sm:$0xff]
                %827 = vst [vmem:[%s799 + $0xc8] sm:$0xff] %v826
                %v828 = vld [vmem:[%s798 + $0x70] sm:$0xff]
                %829 = vst [vmem:[%s799 + $0xe0] sm:$0xff] %v828
                %v830 = vld [vmem:[%s798 + $0x78] sm:$0xff]
                %831 = vst [vmem:[%s799 + $0xe8] sm:$0xff] %v830
                %v832 = vld [vmem:[%s798 + $0x80] sm:$0xff]
                %833 = vst [vmem:[%s799 + $0x100] sm:$0xff] %v832
                %v834 = vld [vmem:[%s798 + $0x88] sm:$0xff]
                %835 = vst [vmem:[%s799 + $0x108] sm:$0xff] %v834
                %v836 = vld [vmem:[%s798 + $0x90] sm:$0xff]
                %837 = vst [vmem:[%s799 + $0x120] sm:$0xff] %v836
                %v838 = vld [vmem:[%s798 + $0x98] sm:$0xff]
                %839 = vst [vmem:[%s799 + $0x128] sm:$0xff] %v838
                %v840 = vld [vmem:[%s798 + $0xa0] sm:$0xff]
                %841 = vst [vmem:[%s799 + $0x140] sm:$0xff] %v840
                %v842 = vld [vmem:[%s798 + $0xa8] sm:$0xff]
                %843 = vst [vmem:[%s799 + $0x148] sm:$0xff] %v842
                %v844 = vld [vmem:[%s798 + $0xb0] sm:$0xff]
                %845 = vst [vmem:[%s799 + $0x160] sm:$0xff] %v844
                %v846 = vld [vmem:[%s798 + $0xb8] sm:$0xff]
                %847 = vst [vmem:[%s799 + $0x168] sm:$0xff] %v846
                %v848 = vld [vmem:[%s798 + $0xc0] sm:$0xff]
                %849 = vst [vmem:[%s799 + $0x180] sm:$0xff] %v848
                %v850 = vld [vmem:[%s798 + $0xc8] sm:$0xff]
                %851 = vst [vmem:[%s799 + $0x188] sm:$0xff] %v850
                %v852 = vld [vmem:[%s798 + $0xd0] sm:$0xff]
                %853 = vst [vmem:[%s799 + $0x1a0] sm:$0xff] %v852
                %v854 = vld [vmem:[%s798 + $0xd8] sm:$0xff]
                %855 = vst [vmem:[%s799 + $0x1a8] sm:$0xff] %v854
                %v856 = vld [vmem:[%s798 + $0xe0] sm:$0xff]
                %857 = vst [vmem:[%s799 + $0x1c0] sm:$0xff] %v856
                %v858 = vld [vmem:[%s798 + $0xe8] sm:$0xff]
                %859 = vst [vmem:[%s799 + $0x1c8] sm:$0xff] %v858
                %v860 = vld [vmem:[%s798 + $0xf0] sm:$0xff]
                %861 = vst [vmem:[%s799 + $0x1e0] sm:$0xff] %v860
                %v862 = vld [vmem:[%s798 + $0xf8] sm:$0xff]
                %863 = vst [vmem:[%s799 + $0x1e8] sm:$0xff] %v862
              $region80: #{generator_forward.9} parent=74 // loop_footer
                %s797 = sadd.s32 1, %s793
              $region81: #{generator_forward.9} parent=74 // loop_footer_branch
                %792 = sbr.rel target = $region77
              $region82: #{generator_forward.9} parent=74 // loop_exit
                _
            $region75: #{generator_forward.9} parent=70 // pred_fallthru
              _
            // Predicated region
            $region83: #{generator_forward.9} parent=70 // pred_check
              _
            $region84: #{generator_forward.9} parent=70 // pred_check_branch
              %865 = sbr.rel target = $region86
            $region85: #{generator_forward.9} parent=70 // pred_region
              _
            $region86: #{generator_forward.9} parent=70 // pred_fallthru
              _
          $region71: #{generator_forward.9} parent=66 // pred_fallthru
            _
          %866 = vnop
        $region67: #{generator_forward.9} parent=50 // pred_fallthru
          _
      $region51: #{generator_forward.9} parent=5 // pred_fallthru
        _
      %p867 = scmp.le.s32.totalorder 2, %s15
      // Predicated region
      $region87: #{generator_forward.9} parent=5 // pred_check
        %p868 = pneg %p867
      $region88: #{generator_forward.9} parent=5 // pred_check_branch
        %870 = sbr.rel (%p868) target = $region90
      $region89: #{generator_forward.9} parent=5 // pred_region
        %s871 = ssub.s32 %s15, 2
        // Predicated region
        $region91: #{generator_forward.9} parent=89 // pred_check
          %p872 = pneg %p122
        $region92: #{generator_forward.9} parent=89 // pred_check_branch
          %874 = sbr.rel (%p872) target = $region94
        $region93: #{generator_forward.9} parent=89 // pred_region
          %s875 = sand.u32 %s107, 1
          %s876 = sand.u32 %s107, 1
          %s877 = smul.addr %s876, 256
          %s878 = scalar_lea.vmem [#allocation7], %s877
        $region94: #{generator_forward.9} parent=89 // pred_fallthru
          _
      $region90: #{generator_forward.9} parent=5 // pred_fallthru
        _
    $region6: #{generator_forward.9} parent=1 // loop_footer
      %s19 = sadd.s32 1, %s15
    $region7: #{generator_forward.9} parent=1 // loop_footer_branch
      %14 = sbr.rel target = $region3
    $region8: #{generator_forward.9} parent=1 // loop_exit
      _
    %879 = vsyncpa [#allocation4], 1
    %s880 = scalar_lea.sflag [#allocation4], 1
    %881 = vsyncpa %s880, 1
    %882 = vsyncpa [#allocation6], 1
    %s883 = scalar_lea.sflag [#allocation6], 1
    %884 = vsyncpa %s883, 1

// kernel: generator_forward.10
$region0: #{generator_forward.10}
  #allocation0 [shape = 'u32[]', space=smem, size = 0x4, offset = 0x4, fixed_abs, tag = 'smem constant byte address 0x4 - core index']
  #allocation1 [shape = 'u32[72,128]{1,0:T(1,128)}', space=vmem, size = 0x9000, scoped, tag = 'internal scratch']
  %s0 = inlined_call_operand.vmem [shape: bf16[128,512], index: 0, kind: input, shape index: {}]
  %s1 = inlined_call_operand.hbm [shape: bf16[512,128], index: 1, kind: input, shape index: {}]
  %s2 = inlined_call_operand.vmem [shape: f32[128,128], index: 2, kind: output, shape index: {}]
  %s3 = sld [smem:[#allocation0]]
  $region22: #{generator_forward.10} parent=0
    _
  %s5 = ssub.s32 1, %s3
  %s6 = scalar_select 0, %s5, %s3
  $region1: #{generator_forward.10} parent=0
    #allocation2 [shape = 'u8[131072]{0}', space=vmem, size = 0x20000, scoped, tag = 'input window, operand 1, single buffered']
    #allocation3 [shape = 's32[1]{0}', space=sflag, size = 0x4, scoped, tag = 'scoped memory for generator_forward.10']
    %7 = vsyncpa [#allocation3], 0
    // Predicated region
    $region2: #{generator_forward.10} parent=1 // pred_check
      _
    $region3: #{generator_forward.10} parent=1 // pred_check_branch
      %9 = sbr.rel (0) target = $region5
    $region4: #{generator_forward.10} parent=1 // pred_region
      _
    $region5: #{generator_forward.10} parent=1 // pred_fallthru
      _
    // Predicated region
    $region6: #{generator_forward.10} parent=1 // pred_check
      _
    $region7: #{generator_forward.10} parent=1 // pred_check_branch
      %11 = sbr.rel (0) target = $region9
    $region8: #{generator_forward.10} parent=1 // pred_region
      %13 = vsyncadd [#allocation3], 0
      %s14 = sshll.u32 %s1, 4
      %s15 = int_to_ptr.hbm [resolvable:$true] %s14
      %s16 = sshll.u32 [#allocation2], 4
      %s17 = int_to_ptr.vmem [resolvable:$true] %s16
      %22 = dma.hbm_to_vmem [thread:$0]  %s15, 4096, %s17, [#allocation3], 64, 64, 4
    $region9: #{generator_forward.10} parent=1 // pred_fallthru
      _
    // Predicated region
    $region10: #{generator_forward.10} parent=1 // pred_check
      _
    $region11: #{generator_forward.10} parent=1 // pred_check_branch
      %24 = sbr.rel (0) target = $region13
    $region12: #{generator_forward.10} parent=1 // pred_region
      %26 = dma.done [#allocation3], 4096
    $region13: #{generator_forward.10} parent=1 // pred_fallthru
      _
    %v27 = vld [vmem:[%s0] sm:$0xff]
    %v28 = vld [vmem:[%s0 + $0x8] sm:$0xff]
    %v29 = vld [vmem:[%s0 + $0x10] sm:$0xff]
    %v30 = vld [vmem:[%s0 + $0x18] sm:$0xff]
    %v31 = vld [vmem:[%s0 + $0x20] sm:$0xff]
    %v32 = vld [vmem:[%s0 + $0x28] sm:$0xff]
    %v33 = vld [vmem:[%s0 + $0x30] sm:$0xff]
    %v34 = vld [vmem:[%s0 + $0x38] sm:$0xff]
    %v35 = vld [vmem:[%s0 + $0x40] sm:$0xff]
    %v36 = vld [vmem:[%s0 + $0x48] sm:$0xff]
    %v37 = vld [vmem:[%s0 + $0x50] sm:$0xff]
    %v38 = vld [vmem:[%s0 + $0x58] sm:$0xff]
    %v39 = vld [vmem:[%s0 + $0x60] sm:$0xff]
    %v40 = vld [vmem:[%s0 + $0x68] sm:$0xff]
    %v41 = vld [vmem:[%s0 + $0x70] sm:$0xff]
    %v42 = vld [vmem:[%s0 + $0x78] sm:$0xff]
    %v43 = vld [vmem:[%s0 + $0x80] sm:$0xff]
    %v44 = vld [vmem:[%s0 + $0x88] sm:$0xff]
    %v45 = vld [vmem:[%s0 + $0x90] sm:$0xff]
    %v46 = vld [vmem:[%s0 + $0x98] sm:$0xff]
    %v47 = vld [vmem:[%s0 + $0xa0] sm:$0xff]
    %v48 = vld [vmem:[%s0 + $0xa8] sm:$0xff]
    %v49 = vld [vmem:[%s0 + $0xb0] sm:$0xff]
    %v50 = vld [vmem:[%s0 + $0xb8] sm:$0xff]
    %v51 = vld [vmem:[%s0 + $0xc0] sm:$0xff]
    %v52 = vld [vmem:[%s0 + $0xc8] sm:$0xff]
    %v53 = vld [vmem:[%s0 + $0xd0] sm:$0xff]
    %v54 = vld [vmem:[%s0 + $0xd8] sm:$0xff]
    %v55 = vld [vmem:[%s0 + $0xe0] sm:$0xff]
    %v56 = vld [vmem:[%s0 + $0xe8] sm:$0xff]
    %v57 = vld [vmem:[%s0 + $0xf0] sm:$0xff]
    %v58 = vld [vmem:[%s0 + $0xf8] sm:$0xff]
    %v59 = vld [vmem:[#allocation2] sm:$0xf]
    %v60 = vld [vmem:[#allocation2 + $0x4] sm:$0xf]
    %v61 = vld [vmem:[#allocation2 + $0x8] sm:$0xf]
    %v62 = vld [vmem:[#allocation2 + $0xc] sm:$0xf]
    %v63 = vld [vmem:[#allocation2 + $0x10] sm:$0xf]
    %v64 = vld [vmem:[#allocation2 + $0x14] sm:$0xf]
    %v65 = vld [vmem:[#allocation2 + $0x18] sm:$0xf]
    %v66 = vld [vmem:[#allocation2 + $0x1c] sm:$0xf]
    %v67 = vld [vmem:[#allocation2 + $0x20] sm:$0xf]
    %v68 = vld [vmem:[#allocation2 + $0x24] sm:$0xf]
    %v69 = vld [vmem:[#allocation2 + $0x28] sm:$0xf]
    %v70 = vld [vmem:[#allocation2 + $0x2c] sm:$0xf]
    %v71 = vld [vmem:[#allocation2 + $0x30] sm:$0xf]
    %v72 = vld [vmem:[#allocation2 + $0x34] sm:$0xf]
    %v73 = vld [vmem:[#allocation2 + $0x38] sm:$0xf]
    %v74 = vld [vmem:[#allocation2 + $0x3c] sm:$0xf]
    %v75 = vld [vmem:[#allocation2 + $0x40] sm:$0xf]
    %v76 = vld [vmem:[#allocation2 + $0x44] sm:$0xf]
    %v77 = vld [vmem:[#allocation2 + $0x48] sm:$0xf]
    %v78 = vld [vmem:[#allocation2 + $0x4c] sm:$0xf]
    %v79 = vld [vmem:[#allocation2 + $0x50] sm:$0xf]
    %v80 = vld [vmem:[#allocation2 + $0x54] sm:$0xf]
    %v81 = vld [vmem:[#allocation2 + $0x58] sm:$0xf]
    %v82 = vld [vmem:[#allocation2 + $0x5c] sm:$0xf]
    %v83 = vld [vmem:[#allocation2 + $0x60] sm:$0xf]
    %v84 = vld [vmem:[#allocation2 + $0x64] sm:$0xf]
    %v85 = vld [vmem:[#allocation2 + $0x68] sm:$0xf]
    %v86 = vld [vmem:[#allocation2 + $0x6c] sm:$0xf]
    %v87 = vld [vmem:[#allocation2 + $0x70] sm:$0xf]
    %v88 = vld [vmem:[#allocation2 + $0x74] sm:$0xf]
    %v89 = vld [vmem:[#allocation2 + $0x78] sm:$0xf]
    %v90 = vld [vmem:[#allocation2 + $0x7c] sm:$0xf]
    %v91 = vld [vmem:[#allocation2 + $0x80] sm:$0xf]
    %v92 = vld [vmem:[#allocation2 + $0x84] sm:$0xf]
    %v93 = vld [vmem:[#allocation2 + $0x88] sm:$0xf]
    %v94 = vld [vmem:[#allocation2 + $0x8c] sm:$0xf]
    %v95 = vld [vmem:[#allocation2 + $0x90] sm:$0xf]
    %v96 = vld [vmem:[#allocation2 + $0x94] sm:$0xf]
    %v97 = vld [vmem:[#allocation2 + $0x98] sm:$0xf]
    %v98 = vld [vmem:[#allocation2 + $0x9c] sm:$0xf]
    %v99 = vld [vmem:[#allocation2 + $0xa0] sm:$0xf]
    %v100 = vld [vmem:[#allocation2 + $0xa4] sm:$0xf]
    %v101 = vld [vmem:[#allocation2 + $0xa8] sm:$0xf]
    %v102 = vld [vmem:[#allocation2 + $0xac] sm:$0xf]
    %v103 = vld [vmem:[#allocation2 + $0xb0] sm:$0xf]
    %v104 = vld [vmem:[#allocation2 + $0xb4] sm:$0xf]
    %v105 = vld [vmem:[#allocation2 + $0xb8] sm:$0xf]
    %v106 = vld [vmem:[#allocation2 + $0xbc] sm:$0xf]
    %v107 = vld [vmem:[#allocation2 + $0xc0] sm:$0xf]
    %v108 = vld [vmem:[#allocation2 + $0xc4] sm:$0xf]
    %v109 = vld [vmem:[#allocation2 + $0xc8] sm:$0xf]
    %v110 = vld [vmem:[#allocation2 + $0xcc] sm:$0xf]
    %v111 = vld [vmem:[#allocation2 + $0xd0] sm:$0xf]
    %v112 = vld [vmem:[#allocation2 + $0xd4] sm:$0xf]
    %v113 = vld [vmem:[#allocation2 + $0xd8] sm:$0xf]
    %v114 = vld [vmem:[#allocation2 + $0xdc] sm:$0xf]
    %v115 = vld [vmem:[#allocation2 + $0xe0] sm:$0xf]
    %v116 = vld [vmem:[#allocation2 + $0xe4] sm:$0xf]
    %v117 = vld [vmem:[#allocation2 + $0xe8] sm:$0xf]
    %v118 = vld [vmem:[#allocation2 + $0xec] sm:$0xf]
    %v119 = vld [vmem:[#allocation2 + $0xf0] sm:$0xf]
    %v120 = vld [vmem:[#allocation2 + $0xf4] sm:$0xf]
    %v121 = vld [vmem:[#allocation2 + $0xf8] sm:$0xf]
    %v122 = vld [vmem:[#allocation2 + $0xfc] sm:$0xf]
    %v155 = vunpack.c.l.b16 %v27
    %v156 = vunpack.c.h.b16 %v27
    %v157 = vunpack.c.l.b16 %v28
    %v158 = vunpack.c.h.b16 %v28
    %v159 = vunpack.c.l.b16 %v29
    %v160 = vunpack.c.h.b16 %v29
    %v161 = vunpack.c.l.b16 %v30
    %v162 = vunpack.c.h.b16 %v30
    %v163 = vunpack.c.l.b16 %v31
    %v164 = vunpack.c.h.b16 %v31
    %v165 = vunpack.c.l.b16 %v32
    %v166 = vunpack.c.h.b16 %v32
    %v167 = vunpack.c.l.b16 %v33
    %v168 = vunpack.c.h.b16 %v33
    %v169 = vunpack.c.l.b16 %v34
    %v170 = vunpack.c.h.b16 %v34
    %v171 = vunpack.c.l.b16 %v35
    %v172 = vunpack.c.h.b16 %v35
    %v173 = vunpack.c.l.b16 %v36
    %v174 = vunpack.c.h.b16 %v36
    %v175 = vunpack.c.l.b16 %v37
    %v176 = vunpack.c.h.b16 %v37
    %v177 = vunpack.c.l.b16 %v38
    %v178 = vunpack.c.h.b16 %v38
    %v179 = vunpack.c.l.b16 %v39
    %v180 = vunpack.c.h.b16 %v39
    %v181 = vunpack.c.l.b16 %v40
    %v182 = vunpack.c.h.b16 %v40
    %v183 = vunpack.c.l.b16 %v41
    %v184 = vunpack.c.h.b16 %v41
    %v185 = vunpack.c.l.b16 %v42
    %v186 = vunpack.c.h.b16 %v42
    %v187 = vunpack.c.l.b16 %v43
    %v188 = vunpack.c.h.b16 %v43
    %v189 = vunpack.c.l.b16 %v44
    %v190 = vunpack.c.h.b16 %v44
    %v191 = vunpack.c.l.b16 %v45
    %v192 = vunpack.c.h.b16 %v45
    %v193 = vunpack.c.l.b16 %v46
    %v194 = vunpack.c.h.b16 %v46
    %v195 = vunpack.c.l.b16 %v47
    %v196 = vunpack.c.h.b16 %v47
    %v197 = vunpack.c.l.b16 %v48
    %v198 = vunpack.c.h.b16 %v48
    %v199 = vunpack.c.l.b16 %v49
    %v200 = vunpack.c.h.b16 %v49
    %v201 = vunpack.c.l.b16 %v50
    %v202 = vunpack.c.h.b16 %v50
    %v203 = vunpack.c.l.b16 %v51
    %v204 = vunpack.c.h.b16 %v51
    %v205 = vunpack.c.l.b16 %v52
    %v206 = vunpack.c.h.b16 %v52
    %v207 = vunpack.c.l.b16 %v53
    %v208 = vunpack.c.h.b16 %v53
    %v209 = vunpack.c.l.b16 %v54
    %v210 = vunpack.c.h.b16 %v54
    %v211 = vunpack.c.l.b16 %v55
    %v212 = vunpack.c.h.b16 %v55
    %v213 = vunpack.c.l.b16 %v56
    %v214 = vunpack.c.h.b16 %v56
    %v215 = vunpack.c.l.b16 %v57
    %v216 = vunpack.c.h.b16 %v57
    %v217 = vunpack.c.l.b16 %v58
    %v218 = vunpack.c.h.b16 %v58
    %v219 = vpack.c.b16 %v159, %v155
    %v220 = vpack.c.b16 %v160, %v156
    %v221 = vpack.c.b16 %v161, %v157
    %v222 = vpack.c.b16 %v162, %v158
    %v223 = vpack.c.b16 %v167, %v163
    %v224 = vpack.c.b16 %v168, %v164
    %v225 = vpack.c.b16 %v169, %v165
    %v226 = vpack.c.b16 %v170, %v166
    %v227 = vpack.c.b16 %v175, %v171
    %v228 = vpack.c.b16 %v176, %v172
    %v229 = vpack.c.b16 %v177, %v173
    %v230 = vpack.c.b16 %v178, %v174
    %v231 = vpack.c.b16 %v183, %v179
    %v232 = vpack.c.b16 %v184, %v180
    %v233 = vpack.c.b16 %v185, %v181
    %v234 = vpack.c.b16 %v186, %v182
    %v235 = vpack.c.b16 %v191, %v187
    %v236 = vpack.c.b16 %v192, %v188
    %v237 = vpack.c.b16 %v193, %v189
    %v238 = vpack.c.b16 %v194, %v190
    %v239 = vpack.c.b16 %v199, %v195
    %v240 = vpack.c.b16 %v200, %v196
    %v241 = vpack.c.b16 %v201, %v197
    %v242 = vpack.c.b16 %v202, %v198
    %v243 = vpack.c.b16 %v207, %v203
    %v244 = vpack.c.b16 %v208, %v204
    %v245 = vpack.c.b16 %v209, %v205
    %v246 = vpack.c.b16 %v210, %v206
    %v247 = vpack.c.b16 %v215, %v211
    %v248 = vpack.c.b16 %v216, %v212
    %v249 = vpack.c.b16 %v217, %v213
    %v250 = vpack.c.b16 %v218, %v214
    %v347 = vunpack.c.l.b16 %v59
    %v348 = vunpack.c.l.b16 %v60
    %v349 = vunpack.c.l.b16 %v61
    %v350 = vunpack.c.l.b16 %v62
    %v351 = vunpack.c.l.b16 %v63
    %v352 = vunpack.c.l.b16 %v64
    %v353 = vunpack.c.l.b16 %v65
    %v354 = vunpack.c.l.b16 %v66
    %v355 = vunpack.c.l.b16 %v67
    %v356 = vunpack.c.l.b16 %v68
    %v357 = vunpack.c.l.b16 %v69
    %v358 = vunpack.c.l.b16 %v70
    %v359 = vunpack.c.l.b16 %v71
    %v360 = vunpack.c.l.b16 %v72
    %v361 = vunpack.c.l.b16 %v73
    %v362 = vunpack.c.l.b16 %v74
    %v363 = vunpack.c.l.b16 %v75
    %v364 = vunpack.c.l.b16 %v76
    %v365 = vunpack.c.l.b16 %v77
    %v366 = vunpack.c.l.b16 %v78
    %v367 = vunpack.c.l.b16 %v79
    %v368 = vunpack.c.l.b16 %v80
    %v369 = vunpack.c.l.b16 %v81
    %v370 = vunpack.c.l.b16 %v82
    %v371 = vunpack.c.l.b16 %v83
    %v372 = vunpack.c.l.b16 %v84
    %v373 = vunpack.c.l.b16 %v85
    %v374 = vunpack.c.l.b16 %v86
    %v375 = vunpack.c.l.b16 %v87
    %v376 = vunpack.c.l.b16 %v88
    %v377 = vunpack.c.l.b16 %v89
    %v378 = vunpack.c.l.b16 %v90
    %v379 = vunpack.c.l.b16 %v91
    %v380 = vunpack.c.l.b16 %v92
    %v381 = vunpack.c.l.b16 %v93
    %v382 = vunpack.c.l.b16 %v94
    %v383 = vunpack.c.l.b16 %v95
    %v384 = vunpack.c.l.b16 %v96
    %v385 = vunpack.c.l.b16 %v97
    %v386 = vunpack.c.l.b16 %v98
    %v387 = vunpack.c.l.b16 %v99
    %v388 = vunpack.c.l.b16 %v100
    %v389 = vunpack.c.l.b16 %v101
    %v390 = vunpack.c.l.b16 %v102
    %v391 = vunpack.c.l.b16 %v103
    %v392 = vunpack.c.l.b16 %v104
    %v393 = vunpack.c.l.b16 %v105
    %v394 = vunpack.c.l.b16 %v106
    %v395 = vunpack.c.l.b16 %v107
    %v396 = vunpack.c.l.b16 %v108
    %v397 = vunpack.c.l.b16 %v109
    %v398 = vunpack.c.l.b16 %v110
    %v399 = vunpack.c.l.b16 %v111
    %v400 = vunpack.c.l.b16 %v112
    %v401 = vunpack.c.l.b16 %v113
    %v402 = vunpack.c.l.b16 %v114
    %v403 = vunpack.c.l.b16 %v115
    %v404 = vunpack.c.l.b16 %v116
    %v405 = vunpack.c.l.b16 %v117
    %v406 = vunpack.c.l.b16 %v118
    %v407 = vunpack.c.l.b16 %v119
    %v408 = vunpack.c.l.b16 %v120
    %v409 = vunpack.c.l.b16 %v121
    %v410 = vunpack.c.l.b16 %v122
    %v411 = vpack.c.b16 %v348, %v347
    %v412 = vpack.c.b16 %v350, %v349
    %v413 = vpack.c.b16 %v352, %v351
    %v414 = vpack.c.b16 %v354, %v353
    %v415 = vpack.c.b16 %v356, %v355
    %v416 = vpack.c.b16 %v358, %v357
    %v417 = vpack.c.b16 %v360, %v359
    %v418 = vpack.c.b16 %v362, %v361
    %v419 = vpack.c.b16 %v364, %v363
    %v420 = vpack.c.b16 %v366, %v365
    %v421 = vpack.c.b16 %v368, %v367
    %v422 = vpack.c.b16 %v370, %v369
    %v423 = vpack.c.b16 %v372, %v371
    %v424 = vpack.c.b16 %v374, %v373
    %v425 = vpack.c.b16 %v376, %v375
    %v426 = vpack.c.b16 %v378, %v377
    %v427 = vpack.c.b16 %v380, %v379
    %v428 = vpack.c.b16 %v382, %v381
    %v429 = vpack.c.b16 %v384, %v383
    %v430 = vpack.c.b16 %v386, %v385
    %v431 = vpack.c.b16 %v388, %v387
    %v432 = vpack.c.b16 %v390, %v389
    %v433 = vpack.c.b16 %v392, %v391
    %v434 = vpack.c.b16 %v394, %v393
    %v435 = vpack.c.b16 %v396, %v395
    %v436 = vpack.c.b16 %v398, %v397
    %v437 = vpack.c.b16 %v400, %v399
    %v438 = vpack.c.b16 %v402, %v401
    %v439 = vpack.c.b16 %v404, %v403
    %v440 = vpack.c.b16 %v406, %v405
    %v441 = vpack.c.b16 %v408, %v407
    %v442 = vpack.c.b16 %v410, %v409
    %475 = vmatpush.bf16.msra.mxu0 %v418
    %476 = vmatpush.bf16.msra.mxu0 %v417
    %477 = vmatpush.bf16.msra.mxu0 %v416
    %478 = vmatpush.bf16.msra.mxu0 %v415
    %479 = vmatpush.bf16.msra.mxu0 %v414
    %480 = vmatpush.bf16.msra.mxu0 %v413
    %481 = vmatpush.bf16.msra.mxu0 %v412
    %482 = vmatpush.bf16.msra.mxu0 %v411
    %483 = vmatmul.bf16.gmra.mxu0 %v219
    %v484 = vpop.f32.mrf.mxu0
    %v485 = vadd.f32 0.0, %v484
    %v486 = vpop.f32.mrf.mxu0
    %v487 = vadd.f32 0.0, %v486
    %488 = vmatmul.bf16.gmra.mxu0 %v223
    %v489 = vpop.f32.mrf.mxu0
    %v490 = vadd.f32 0.0, %v489
    %v491 = vpop.f32.mrf.mxu0
    %v492 = vadd.f32 0.0, %v491
    %493 = vmatmul.bf16.gmra.mxu0 %v227
    %v494 = vpop.f32.mrf.mxu0
    %v495 = vadd.f32 0.0, %v494
    %v496 = vpop.f32.mrf.mxu0
    %v497 = vadd.f32 0.0, %v496
    %498 = vmatmul.bf16.gmra.mxu0 %v231
    %v499 = vpop.f32.mrf.mxu0
    %v500 = vadd.f32 0.0, %v499
    %v501 = vpop.f32.mrf.mxu0
    %v502 = vadd.f32 0.0, %v501
    %503 = vmatmul.bf16.gmra.mxu0 %v235
    %v504 = vpop.f32.mrf.mxu0
    %v505 = vadd.f32 0.0, %v504
    %v506 = vpop.f32.mrf.mxu0
    %v507 = vadd.f32 0.0, %v506
    %508 = vmatmul.bf16.gmra.mxu0 %v239
    %v509 = vpop.f32.mrf.mxu0
    %v510 = vadd.f32 0.0, %v509
    %v511 = vpop.f32.mrf.mxu0
    %v512 = vadd.f32 0.0, %v511
    %513 = vmatmul.bf16.gmra.mxu0 %v243
    %v514 = vpop.f32.mrf.mxu0
    %v515 = vadd.f32 0.0, %v514
    %v516 = vpop.f32.mrf.mxu0
    %v517 = vadd.f32 0.0, %v516
    %518 = vmatmul.bf16.gmra.mxu0 %v247
    %v519 = vpop.f32.mrf.mxu0
    %v520 = vadd.f32 0.0, %v519
    %v521 = vpop.f32.mrf.mxu0
    %v522 = vadd.f32 0.0, %v521
    %523 = vdwg.mxu0
    %524 = vmatpush.bf16.msra.mxu0 %v426
    %525 = vmatpush.bf16.msra.mxu0 %v425
    %526 = vmatpush.bf16.msra.mxu0 %v424
    %527 = vmatpush.bf16.msra.mxu0 %v423
    %528 = vmatpush.bf16.msra.mxu0 %v422
    %529 = vmatpush.bf16.msra.mxu0 %v421
    %530 = vmatpush.bf16.msra.mxu0 %v420
    %531 = vmatpush.bf16.msra.mxu0 %v419
    %532 = vmatmul.bf16.gmra.mxu0 %v220
    %v533 = vpop.f32.mrf.mxu0
    %v534 = vadd.f32 %v485, %v533
    %v535 = vpop.f32.mrf.mxu0
    %v536 = vadd.f32 %v487, %v535
    %537 = vmatmul.bf16.gmra.mxu0 %v224
    %v538 = vpop.f32.mrf.mxu0
    %v539 = vadd.f32 %v490, %v538
    %v540 = vpop.f32.mrf.mxu0
    %v541 = vadd.f32 %v492, %v540
    %542 = vmatmul.bf16.gmra.mxu0 %v228
    %v543 = vpop.f32.mrf.mxu0
    %v544 = vadd.f32 %v495, %v543
    %v545 = vpop.f32.mrf.mxu0
    %v546 = vadd.f32 %v497, %v545
    %547 = vmatmul.bf16.gmra.mxu0 %v232
    %v548 = vpop.f32.mrf.mxu0
    %v549 = vadd.f32 %v500, %v548
    %v550 = vpop.f32.mrf.mxu0
    %v551 = vadd.f32 %v502, %v550
    %552 = vmatmul.bf16.gmra.mxu0 %v236
    %v553 = vpop.f32.mrf.mxu0
    %v554 = vadd.f32 %v505, %v553
    %v555 = vpop.f32.mrf.mxu0
    %v556 = vadd.f32 %v507, %v555
    %557 = vmatmul.bf16.gmra.mxu0 %v240
    %v558 = vpop.f32.mrf.mxu0
    %v559 = vadd.f32 %v510, %v558
    %v560 = vpop.f32.mrf.mxu0
    %v561 = vadd.f32 %v512, %v560
    %562 = vmatmul.bf16.gmra.mxu0 %v244
    %v563 = vpop.f32.mrf.mxu0
    %v564 = vadd.f32 %v515, %v563
    %v565 = vpop.f32.mrf.mxu0
    %v566 = vadd.f32 %v517, %v565
    %567 = vmatmul.bf16.gmra.mxu0 %v248
    %v568 = vpop.f32.mrf.mxu0
    %v569 = vadd.f32 %v520, %v568
    %v570 = vpop.f32.mrf.mxu0
    %v571 = vadd.f32 %v522, %v570
    %572 = vdwg.mxu0
    %573 = vmatpush.bf16.msra.mxu0 %v434
    %574 = vmatpush.bf16.msra.mxu0 %v433
    %575 = vmatpush.bf16.msra.mxu0 %v432
    %576 = vmatpush.bf16.msra.mxu0 %v431
    %577 = vmatpush.bf16.msra.mxu0 %v430
    %578 = vmatpush.bf16.msra.mxu0 %v429
    %579 = vmatpush.bf16.msra.mxu0 %v428
    %580 = vmatpush.bf16.msra.mxu0 %v427
    %581 = vmatmul.bf16.gmra.mxu0 %v221
    %v582 = vpop.f32.mrf.mxu0
    %v583 = vadd.f32 %v534, %v582
    %v584 = vpop.f32.mrf.mxu0
    %v585 = vadd.f32 %v536, %v584
    %586 = vmatmul.bf16.gmra.mxu0 %v225
    %v587 = vpop.f32.mrf.mxu0
    %v588 = vadd.f32 %v539, %v587
    %v589 = vpop.f32.mrf.mxu0
    %v590 = vadd.f32 %v541, %v589
    %591 = vmatmul.bf16.gmra.mxu0 %v229
    %v592 = vpop.f32.mrf.mxu0
    %v593 = vadd.f32 %v544, %v592
    %v594 = vpop.f32.mrf.mxu0
    %v595 = vadd.f32 %v546, %v594
    %596 = vmatmul.bf16.gmra.mxu0 %v233
    %v597 = vpop.f32.mrf.mxu0
    %v598 = vadd.f32 %v549, %v597
    %v599 = vpop.f32.mrf.mxu0
    %v600 = vadd.f32 %v551, %v599
    %601 = vmatmul.bf16.gmra.mxu0 %v237
    %v602 = vpop.f32.mrf.mxu0
    %v603 = vadd.f32 %v554, %v602
    %v604 = vpop.f32.mrf.mxu0
    %v605 = vadd.f32 %v556, %v604
    %606 = vmatmul.bf16.gmra.mxu0 %v241
    %v607 = vpop.f32.mrf.mxu0
    %v608 = vadd.f32 %v559, %v607
    %v609 = vpop.f32.mrf.mxu0
    %v610 = vadd.f32 %v561, %v609
    %611 = vmatmul.bf16.gmra.mxu0 %v245
    %v612 = vpop.f32.mrf.mxu0
    %v613 = vadd.f32 %v564, %v612
    %v614 = vpop.f32.mrf.mxu0
    %v615 = vadd.f32 %v566, %v614
    %616 = vmatmul.bf16.gmra.mxu0 %v249
    %v617 = vpop.f32.mrf.mxu0
    %v618 = vadd.f32 %v569, %v617
    %v619 = vpop.f32.mrf.mxu0
    %v620 = vadd.f32 %v571, %v619
    %621 = vdwg.mxu0
    %622 = vmatpush.bf16.msra.mxu0 %v442
    %623 = vmatpush.bf16.msra.mxu0 %v441
    %624 = vmatpush.bf16.msra.mxu0 %v440
    %625 = vmatpush.bf16.msra.mxu0 %v439
    %626 = vmatpush.bf16.msra.mxu0 %v438
    %627 = vmatpush.bf16.msra.mxu0 %v437
    %628 = vmatpush.bf16.msra.mxu0 %v436
    %629 = vmatpush.bf16.msra.mxu0 %v435
    %630 = vmatmul.bf16.gmra.mxu0 %v222
    %v631 = vpop.f32.mrf.mxu0
    %v632 = vadd.f32 %v583, %v631
    %v633 = vpop.f32.mrf.mxu0
    %v634 = vadd.f32 %v585, %v633
    %635 = vmatmul.bf16.gmra.mxu0 %v226
    %v636 = vpop.f32.mrf.mxu0
    %v637 = vadd.f32 %v588, %v636
    %v638 = vpop.f32.mrf.mxu0
    %v639 = vadd.f32 %v590, %v638
    %640 = vmatmul.bf16.gmra.mxu0 %v230
    %v641 = vpop.f32.mrf.mxu0
    %v642 = vadd.f32 %v593, %v641
    %v643 = vpop.f32.mrf.mxu0
    %v644 = vadd.f32 %v595, %v643
    %645 = vmatmul.bf16.gmra.mxu0 %v234
    %v646 = vpop.f32.mrf.mxu0
    %v647 = vadd.f32 %v598, %v646
    %v648 = vpop.f32.mrf.mxu0
    %v649 = vadd.f32 %v600, %v648
    %650 = vmatmul.bf16.gmra.mxu0 %v238
    %v651 = vpop.f32.mrf.mxu0
    %v652 = vadd.f32 %v603, %v651
    %v653 = vpop.f32.mrf.mxu0
    %v654 = vadd.f32 %v605, %v653
    %655 = vmatmul.bf16.gmra.mxu0 %v242
    %v656 = vpop.f32.mrf.mxu0
    %v657 = vadd.f32 %v608, %v656
    %v658 = vpop.f32.mrf.mxu0
    %v659 = vadd.f32 %v610, %v658
    %660 = vmatmul.bf16.gmra.mxu0 %v246
    %v661 = vpop.f32.mrf.mxu0
    %v662 = vadd.f32 %v613, %v661
    %v663 = vpop.f32.mrf.mxu0
    %v664 = vadd.f32 %v615, %v663
    %665 = vmatmul.bf16.gmra.mxu0 %v250
    %v666 = vpop.f32.mrf.mxu0
    %v667 = vadd.f32 %v618, %v666
    %v668 = vpop.f32.mrf.mxu0
    %v669 = vadd.f32 %v620, %v668
    %670 = vdwg.mxu0
    %671 = vst [vmem:[%s2] sm:$0xff] %v632
    %672 = vst [vmem:[%s2 + $0x8] sm:$0xff] %v634
    %673 = vst [vmem:[%s2 + $0x10] sm:$0xff] %v637
    %674 = vst [vmem:[%s2 + $0x18] sm:$0xff] %v639
    %675 = vst [vmem:[%s2 + $0x20] sm:$0xff] %v642
    %676 = vst [vmem:[%s2 + $0x28] sm:$0xff] %v644
    %677 = vst [vmem:[%s2 + $0x30] sm:$0xff] %v647
    %678 = vst [vmem:[%s2 + $0x38] sm:$0xff] %v649
    %679 = vst [vmem:[%s2 + $0x40] sm:$0xff] %v652
    %680 = vst [vmem:[%s2 + $0x48] sm:$0xff] %v654
    %681 = vst [vmem:[%s2 + $0x50] sm:$0xff] %v657
    %682 = vst [vmem:[%s2 + $0x58] sm:$0xff] %v659
    %683 = vst [vmem:[%s2 + $0x60] sm:$0xff] %v662
    %684 = vst [vmem:[%s2 + $0x68] sm:$0xff] %v664
    %685 = vst [vmem:[%s2 + $0x70] sm:$0xff] %v667
    %686 = vst [vmem:[%s2 + $0x78] sm:$0xff] %v669
    // Predicated region
    $region14: #{generator_forward.10} parent=1 // pred_check
      _
    $region15: #{generator_forward.10} parent=1 // pred_check_branch
      %688 = sbr.rel (0) target = $region17
    $region16: #{generator_forward.10} parent=1 // pred_region
      _
    $region17: #{generator_forward.10} parent=1 // pred_fallthru
      _
    // Predicated region
    $region18: #{generator_forward.10} parent=1 // pred_check
      _
    $region19: #{generator_forward.10} parent=1 // pred_check_branch
      %690 = sbr.rel (0) target = $region21
    $region20: #{generator_forward.10} parent=1 // pred_region
      _
    $region21: #{generator_forward.10} parent=1 // pred_fallthru
      _
    %691 = vsyncpa [#allocation3], 1

// kernel: generator_forward.11
$region0: #{generator_forward.11}
  #allocation0 [shape = 'u32[]', space=smem, size = 0x4, offset = 0x4, fixed_abs, tag = 'smem constant byte address 0x4 - core index']
  #allocation1 [shape = 'u32[72,128]{1,0:T(1,128)}', space=vmem, size = 0x9000, scoped, tag = 'internal scratch']
  %s0 = inlined_call_operand.vmem [shape: f32[512,3], index: 0, kind: input, shape index: {}]
  %s1 = inlined_call_operand.hbm [shape: f32[1,3], index: 1, kind: input, shape index: {}]
  %s2 = inlined_call_operand.vmem [shape: f32[512,3], index: 2, kind: output, shape index: {}]
  %s3 = sld [smem:[#allocation0]]
  $region22: #{generator_forward.11} parent=0
    _
  %s5 = ssub.s32 1, %s3
  %s6 = scalar_select 0, %s5, %s3
  $region1: #{generator_forward.11} parent=0
    #allocation2 [shape = 'u8[512]{0}', space=vmem, size = 0x400, scoped, tag = 'input window, operand 1, single buffered']
    #allocation3 [shape = 's32[1]{0}', space=sflag, size = 0x4, scoped, tag = 'scoped memory for generator_forward.11']
    %7 = vsyncpa [#allocation3], 0
    // Predicated region
    $region2: #{generator_forward.11} parent=1 // pred_check
      _
    $region3: #{generator_forward.11} parent=1 // pred_check_branch
      %9 = sbr.rel (0) target = $region5
    $region4: #{generator_forward.11} parent=1 // pred_region
      _
    $region5: #{generator_forward.11} parent=1 // pred_fallthru
      _
    // Predicated region
    $region6: #{generator_forward.11} parent=1 // pred_check
      _
    $region7: #{generator_forward.11} parent=1 // pred_check_branch
      %11 = sbr.rel (0) target = $region9
    $region8: #{generator_forward.11} parent=1 // pred_region
      %13 = vsyncadd [#allocation3], 0
      %s15 = sshll.u32 %s1, 4
      %s16 = int_to_ptr.hbm [resolvable:$true] %s15
      %s17 = sshll.u32 [#allocation2], 4
      %s18 = int_to_ptr.vmem [resolvable:$true] %s17
      %20 = dma.hbm_to_vmem [thread:$0]  %s16, 16, %s18, [#allocation3]
    $region9: #{generator_forward.11} parent=1 // pred_fallthru
      _
    // Predicated region
    $region10: #{generator_forward.11} parent=1 // pred_check
      _
    $region11: #{generator_forward.11} parent=1 // pred_check_branch
      %22 = sbr.rel (0) target = $region13
    $region12: #{generator_forward.11} parent=1 // pred_region
      %24 = dma.done [#allocation3], 16
    $region13: #{generator_forward.11} parent=1 // pred_fallthru
      _
    %v25 = vld [vmem:[%s0] sm:$0xff]
    %v26 = vld [vmem:[%s0 + $0x8] sm:$0xff]
    %v27 = vld [vmem:[%s0 + $0x10] sm:$0xff]
    %v28 = vld [vmem:[%s0 + $0x18] sm:$0xff]
    %v29 = vld [vmem:[%s0 + $0x20] sm:$0xff]
    %v30 = vld [vmem:[%s0 + $0x28] sm:$0xff]
    %v31 = vld [vmem:[%s0 + $0x30] sm:$0xff]
    %v32 = vld [vmem:[%s0 + $0x38] sm:$0xff]
    %v33 = vld [vmem:[%s0 + $0x40] sm:$0xff]
    %v34 = vld [vmem:[%s0 + $0x48] sm:$0xff]
    %v35 = vld [vmem:[%s0 + $0x50] sm:$0xff]
    %v36 = vld [vmem:[%s0 + $0x58] sm:$0xff]
    %v37 = vld [vmem:[%s0 + $0x60] sm:$0xff]
    %v38 = vld [vmem:[%s0 + $0x68] sm:$0xff]
    %v39 = vld [vmem:[%s0 + $0x70] sm:$0xff]
    %v40 = vld [vmem:[%s0 + $0x78] sm:$0xff]
    %v41 = vld [vmem:[%s0 + $0x80] sm:$0xff]
    %v42 = vld [vmem:[%s0 + $0x88] sm:$0xff]
    %v43 = vld [vmem:[%s0 + $0x90] sm:$0xff]
    %v44 = vld [vmem:[%s0 + $0x98] sm:$0xff]
    %v45 = vld [vmem:[%s0 + $0xa0] sm:$0xff]
    %v46 = vld [vmem:[%s0 + $0xa8] sm:$0xff]
    %v47 = vld [vmem:[%s0 + $0xb0] sm:$0xff]
    %v48 = vld [vmem:[%s0 + $0xb8] sm:$0xff]
    %v49 = vld [vmem:[%s0 + $0xc0] sm:$0xff]
    %v50 = vld [vmem:[%s0 + $0xc8] sm:$0xff]
    %v51 = vld [vmem:[%s0 + $0xd0] sm:$0xff]
    %v52 = vld [vmem:[%s0 + $0xd8] sm:$0xff]
    %v53 = vld [vmem:[%s0 + $0xe0] sm:$0xff]
    %v54 = vld [vmem:[%s0 + $0xe8] sm:$0xff]
    %v55 = vld [vmem:[%s0 + $0xf0] sm:$0xff]
    %v56 = vld [vmem:[%s0 + $0xf8] sm:$0xff]
    %v57 = vld [vmem:[%s0 + $0x100] sm:$0xff]
    %v58 = vld [vmem:[%s0 + $0x108] sm:$0xff]
    %v59 = vld [vmem:[%s0 + $0x110] sm:$0xff]
    %v60 = vld [vmem:[%s0 + $0x118] sm:$0xff]
    %v61 = vld [vmem:[%s0 + $0x120] sm:$0xff]
    %v62 = vld [vmem:[%s0 + $0x128] sm:$0xff]
    %v63 = vld [vmem:[%s0 + $0x130] sm:$0xff]
    %v64 = vld [vmem:[%s0 + $0x138] sm:$0xff]
    %v65 = vld [vmem:[%s0 + $0x140] sm:$0xff]
    %v66 = vld [vmem:[%s0 + $0x148] sm:$0xff]
    %v67 = vld [vmem:[%s0 + $0x150] sm:$0xff]
    %v68 = vld [vmem:[%s0 + $0x158] sm:$0xff]
    %v69 = vld [vmem:[%s0 + $0x160] sm:$0xff]
    %v70 = vld [vmem:[%s0 + $0x168] sm:$0xff]
    %v71 = vld [vmem:[%s0 + $0x170] sm:$0xff]
    %v72 = vld [vmem:[%s0 + $0x178] sm:$0xff]
    %v73 = vld [vmem:[%s0 + $0x180] sm:$0xff]
    %v74 = vld [vmem:[%s0 + $0x188] sm:$0xff]
    %v75 = vld [vmem:[%s0 + $0x190] sm:$0xff]
    %v76 = vld [vmem:[%s0 + $0x198] sm:$0xff]
    %v77 = vld [vmem:[%s0 + $0x1a0] sm:$0xff]
    %v78 = vld [vmem:[%s0 + $0x1a8] sm:$0xff]
    %v79 = vld [vmem:[%s0 + $0x1b0] sm:$0xff]
    %v80 = vld [vmem:[%s0 + $0x1b8] sm:$0xff]
    %v81 = vld [vmem:[%s0 + $0x1c0] sm:$0xff]
    %v82 = vld [vmem:[%s0 + $0x1c8] sm:$0xff]
    %v83 = vld [vmem:[%s0 + $0x1d0] sm:$0xff]
    %v84 = vld [vmem:[%s0 + $0x1d8] sm:$0xff]
    %v85 = vld [vmem:[%s0 + $0x1e0] sm:$0xff]
    %v86 = vld [vmem:[%s0 + $0x1e8] sm:$0xff]
    %v87 = vld [vmem:[%s0 + $0x1f0] sm:$0xff]
    %v88 = vld [vmem:[%s0 + $0x1f8] sm:$0xff]
    %v89 = vld [vmem:[#allocation2] sm:$0x1]
    %v91 = vperm.slane %v89, 0
    %v93 = vadd.f32 %v25, %v91
    %v94 = vadd.f32 %v26, %v91
    %v95 = vadd.f32 %v27, %v91
    %v96 = vadd.f32 %v28, %v91
    %v97 = vadd.f32 %v29, %v91
    %v98 = vadd.f32 %v30, %v91
    %v99 = vadd.f32 %v31, %v91
    %v100 = vadd.f32 %v32, %v91
    %v101 = vadd.f32 %v33, %v91
    %v102 = vadd.f32 %v34, %v91
    %v103 = vadd.f32 %v35, %v91
    %v104 = vadd.f32 %v36, %v91
    %v105 = vadd.f32 %v37, %v91
    %v106 = vadd.f32 %v38, %v91
    %v107 = vadd.f32 %v39, %v91
    %v108 = vadd.f32 %v40, %v91
    %v109 = vadd.f32 %v41, %v91
    %v110 = vadd.f32 %v42, %v91
    %v111 = vadd.f32 %v43, %v91
    %v112 = vadd.f32 %v44, %v91
    %v113 = vadd.f32 %v45, %v91
    %v114 = vadd.f32 %v46, %v91
    %v115 = vadd.f32 %v47, %v91
    %v116 = vadd.f32 %v48, %v91
    %v117 = vadd.f32 %v49, %v91
    %v118 = vadd.f32 %v50, %v91
    %v119 = vadd.f32 %v51, %v91
    %v120 = vadd.f32 %v52, %v91
    %v121 = vadd.f32 %v53, %v91
    %v122 = vadd.f32 %v54, %v91
    %v123 = vadd.f32 %v55, %v91
    %v124 = vadd.f32 %v56, %v91
    %v125 = vadd.f32 %v57, %v91
    %v126 = vadd.f32 %v58, %v91
    %v127 = vadd.f32 %v59, %v91
    %v128 = vadd.f32 %v60, %v91
    %v129 = vadd.f32 %v61, %v91
    %v130 = vadd.f32 %v62, %v91
    %v131 = vadd.f32 %v63, %v91
    %v132 = vadd.f32 %v64, %v91
    %v133 = vadd.f32 %v65, %v91
    %v134 = vadd.f32 %v66, %v91
    %v135 = vadd.f32 %v67, %v91
    %v136 = vadd.f32 %v68, %v91
    %v137 = vadd.f32 %v69, %v91
    %v138 = vadd.f32 %v70, %v91
    %v139 = vadd.f32 %v71, %v91
    %v140 = vadd.f32 %v72, %v91
    %v141 = vadd.f32 %v73, %v91
    %v142 = vadd.f32 %v74, %v91
    %v143 = vadd.f32 %v75, %v91
    %v144 = vadd.f32 %v76, %v91
    %v145 = vadd.f32 %v77, %v91
    %v146 = vadd.f32 %v78, %v91
    %v147 = vadd.f32 %v79, %v91
    %v148 = vadd.f32 %v80, %v91
    %v149 = vadd.f32 %v81, %v91
    %v150 = vadd.f32 %v82, %v91
    %v151 = vadd.f32 %v83, %v91
    %v152 = vadd.f32 %v84, %v91
    %v153 = vadd.f32 %v85, %v91
    %v154 = vadd.f32 %v86, %v91
    %v155 = vadd.f32 %v87, %v91
    %v156 = vadd.f32 %v88, %v91
    %v157 = vtanh.pop %v93
    %v158 = vtanh.pop %v94
    %v159 = vtanh.pop %v95
    %v160 = vtanh.pop %v96
    %v161 = vtanh.pop %v97
    %v162 = vtanh.pop %v98
    %v163 = vtanh.pop %v99
    %v164 = vtanh.pop %v100
    %v165 = vtanh.pop %v101
    %v166 = vtanh.pop %v102
    %v167 = vtanh.pop %v103
    %v168 = vtanh.pop %v104
    %v169 = vtanh.pop %v105
    %v170 = vtanh.pop %v106
    %v171 = vtanh.pop %v107
    %v172 = vtanh.pop %v108
    %v173 = vtanh.pop %v109
    %v174 = vtanh.pop %v110
    %v175 = vtanh.pop %v111
    %v176 = vtanh.pop %v112
    %v177 = vtanh.pop %v113
    %v178 = vtanh.pop %v114
    %v179 = vtanh.pop %v115
    %v180 = vtanh.pop %v116
    %v181 = vtanh.pop %v117
    %v182 = vtanh.pop %v118
    %v183 = vtanh.pop %v119
    %v184 = vtanh.pop %v120
    %v185 = vtanh.pop %v121
    %v186 = vtanh.pop %v122
    %v187 = vtanh.pop %v123
    %v188 = vtanh.pop %v124
    %v189 = vtanh.pop %v125
    %v190 = vtanh.pop %v126
    %v191 = vtanh.pop %v127
    %v192 = vtanh.pop %v128
    %v193 = vtanh.pop %v129
    %v194 = vtanh.pop %v130
    %v195 = vtanh.pop %v131
    %v196 = vtanh.pop %v132
    %v197 = vtanh.pop %v133
    %v198 = vtanh.pop %v134
    %v199 = vtanh.pop %v135
    %v200 = vtanh.pop %v136
    %v201 = vtanh.pop %v137
    %v202 = vtanh.pop %v138
    %v203 = vtanh.pop %v139
    %v204 = vtanh.pop %v140
    %v205 = vtanh.pop %v141
    %v206 = vtanh.pop %v142
    %v207 = vtanh.pop %v143
    %v208 = vtanh.pop %v144
    %v209 = vtanh.pop %v145
    %v210 = vtanh.pop %v146
    %v211 = vtanh.pop %v147
    %v212 = vtanh.pop %v148
    %v213 = vtanh.pop %v149
    %v214 = vtanh.pop %v150
    %v215 = vtanh.pop %v151
    %v216 = vtanh.pop %v152
    %v217 = vtanh.pop %v153
    %v218 = vtanh.pop %v154
    %v219 = vtanh.pop %v155
    %v220 = vtanh.pop %v156
    %vm221 = vcmask 23552
    %222 = vst.msk [vmem:[%s2] sm:$0xff] %vm221, %v157
    %223 = vst.msk [vmem:[%s2 + $0x8] sm:$0xff] %vm221, %v158
    %224 = vst.msk [vmem:[%s2 + $0x10] sm:$0xff] %vm221, %v159
    %225 = vst.msk [vmem:[%s2 + $0x18] sm:$0xff] %vm221, %v160
    %226 = vst.msk [vmem:[%s2 + $0x20] sm:$0xff] %vm221, %v161
    %227 = vst.msk [vmem:[%s2 + $0x28] sm:$0xff] %vm221, %v162
    %228 = vst.msk [vmem:[%s2 + $0x30] sm:$0xff] %vm221, %v163
    %229 = vst.msk [vmem:[%s2 + $0x38] sm:$0xff] %vm221, %v164
    %230 = vst.msk [vmem:[%s2 + $0x40] sm:$0xff] %vm221, %v165
    %231 = vst.msk [vmem:[%s2 + $0x48] sm:$0xff] %vm221, %v166
    %232 = vst.msk [vmem:[%s2 + $0x50] sm:$0xff] %vm221, %v167
    %233 = vst.msk [vmem:[%s2 + $0x58] sm:$0xff] %vm221, %v168
    %234 = vst.msk [vmem:[%s2 + $0x60] sm:$0xff] %vm221, %v169
    %235 = vst.msk [vmem:[%s2 + $0x68] sm:$0xff] %vm221, %v170
    %236 = vst.msk [vmem:[%s2 + $0x70] sm:$0xff] %vm221, %v171
    %237 = vst.msk [vmem:[%s2 + $0x78] sm:$0xff] %vm221, %v172
    %238 = vst.msk [vmem:[%s2 + $0x80] sm:$0xff] %vm221, %v173
    %239 = vst.msk [vmem:[%s2 + $0x88] sm:$0xff] %vm221, %v174
    %240 = vst.msk [vmem:[%s2 + $0x90] sm:$0xff] %vm221, %v175
    %241 = vst.msk [vmem:[%s2 + $0x98] sm:$0xff] %vm221, %v176
    %242 = vst.msk [vmem:[%s2 + $0xa0] sm:$0xff] %vm221, %v177
    %243 = vst.msk [vmem:[%s2 + $0xa8] sm:$0xff] %vm221, %v178
    %244 = vst.msk [vmem:[%s2 + $0xb0] sm:$0xff] %vm221, %v179
    %245 = vst.msk [vmem:[%s2 + $0xb8] sm:$0xff] %vm221, %v180
    %246 = vst.msk [vmem:[%s2 + $0xc0] sm:$0xff] %vm221, %v181
    %247 = vst.msk [vmem:[%s2 + $0xc8] sm:$0xff] %vm221, %v182
    %248 = vst.msk [vmem:[%s2 + $0xd0] sm:$0xff] %vm221, %v183
    %249 = vst.msk [vmem:[%s2 + $0xd8] sm:$0xff] %vm221, %v184
    %250 = vst.msk [vmem:[%s2 + $0xe0] sm:$0xff] %vm221, %v185
    %251 = vst.msk [vmem:[%s2 + $0xe8] sm:$0xff] %vm221, %v186
    %252 = vst.msk [vmem:[%s2 + $0xf0] sm:$0xff] %vm221, %v187
    %253 = vst.msk [vmem:[%s2 + $0xf8] sm:$0xff] %vm221, %v188
    %254 = vst.msk [vmem:[%s2 + $0x100] sm:$0xff] %vm221, %v189
    %255 = vst.msk [vmem:[%s2 + $0x108] sm:$0xff] %vm221, %v190
    %256 = vst.msk [vmem:[%s2 + $0x110] sm:$0xff] %vm221, %v191
    %257 = vst.msk [vmem:[%s2 + $0x118] sm:$0xff] %vm221, %v192
    %258 = vst.msk [vmem:[%s2 + $0x120] sm:$0xff] %vm221, %v193
    %259 = vst.msk [vmem:[%s2 + $0x128] sm:$0xff] %vm221, %v194
    %260 = vst.msk [vmem:[%s2 + $0x130] sm:$0xff] %vm221, %v195
    %261 = vst.msk [vmem:[%s2 + $0x138] sm:$0xff] %vm221, %v196
    %262 = vst.msk [vmem:[%s2 + $0x140] sm:$0xff] %vm221, %v197
    %263 = vst.msk [vmem:[%s2 + $0x148] sm:$0xff] %vm221, %v198
    %264 = vst.msk [vmem:[%s2 + $0x150] sm:$0xff] %vm221, %v199
    %265 = vst.msk [vmem:[%s2 + $0x158] sm:$0xff] %vm221, %v200
    %266 = vst.msk [vmem:[%s2 + $0x160] sm:$0xff] %vm221, %v201
    %267 = vst.msk [vmem:[%s2 + $0x168] sm:$0xff] %vm221, %v202
    %268 = vst.msk [vmem:[%s2 + $0x170] sm:$0xff] %vm221, %v203
    %269 = vst.msk [vmem:[%s2 + $0x178] sm:$0xff] %vm221, %v204
    %270 = vst.msk [vmem:[%s2 + $0x180] sm:$0xff] %vm221, %v205
    %271 = vst.msk [vmem:[%s2 + $0x188] sm:$0xff] %vm221, %v206
    %272 = vst.msk [vmem:[%s2 + $0x190] sm:$0xff] %vm221, %v207
    %273 = vst.msk [vmem:[%s2 + $0x198] sm:$0xff] %vm221, %v208
    %274 = vst.msk [vmem:[%s2 + $0x1a0] sm:$0xff] %vm221, %v209
    %275 = vst.msk [vmem:[%s2 + $0x1a8] sm:$0xff] %vm221, %v210
    %276 = vst.msk [vmem:[%s2 + $0x1b0] sm:$0xff] %vm221, %v211
    %277 = vst.msk [vmem:[%s2 + $0x1b8] sm:$0xff] %vm221, %v212
    %278 = vst.msk [vmem:[%s2 + $0x1c0] sm:$0xff] %vm221, %v213
    %279 = vst.msk [vmem:[%s2 + $0x1c8] sm:$0xff] %vm221, %v214
    %280 = vst.msk [vmem:[%s2 + $0x1d0] sm:$0xff] %vm221, %v215
    %281 = vst.msk [vmem:[%s2 + $0x1d8] sm:$0xff] %vm221, %v216
    %282 = vst.msk [vmem:[%s2 + $0x1e0] sm:$0xff] %vm221, %v217
    %283 = vst.msk [vmem:[%s2 + $0x1e8] sm:$0xff] %vm221, %v218
    %284 = vst.msk [vmem:[%s2 + $0x1f0] sm:$0xff] %vm221, %v219
    %285 = vst.msk [vmem:[%s2 + $0x1f8] sm:$0xff] %vm221, %v220
    // Predicated region
    $region14: #{generator_forward.11} parent=1 // pred_check
      _
    $region15: #{generator_forward.11} parent=1 // pred_check_branch
      %287 = sbr.rel (0) target = $region17
    $region16: #{generator_forward.11} parent=1 // pred_region
      _
    $region17: #{generator_forward.11} parent=1 // pred_fallthru
      _
    // Predicated region
    $region18: #{generator_forward.11} parent=1 // pred_check
      _
    $region19: #{generator_forward.11} parent=1 // pred_check_branch
      %289 = sbr.rel (0) target = $region21
    $region20: #{generator_forward.11} parent=1 // pred_region
      _
    $region21: #{generator_forward.11} parent=1 // pred_fallthru
      _
    %290 = vsyncpa [#allocation3], 1

</llo_original>
